<compile_context>
chip_gen: v6e
topology: v6e:2x2x1
jax: 0.10.0
libtpu: 0.0.40
codegen_flags: <defaults>
</compile_context>

<pallas_src>
import functools

import jax
import jax.numpy as jnp
import numpy as np
from jax.experimental import pallas as pl
from jax.experimental.pallas import tpu as pltpu


def _round_up(x, m):
    return ((x + m - 1) // m) * m


# ----------------------------------------------------------------------------
# Fused kernel: all LSTM layers + linear + sigmoid
# ----------------------------------------------------------------------------
def _lstmc_fused_kernel(x_ref, wih_ref, whh_ref, b_ref, linw_ref, linb_ref,
                        out_ref, buf_a, buf_b, xproj_ref,
                        *, seq_len, b_pad, h_pad, n_layers):
    """x_ref: (S*Bp, Hp) layer-0 input (features zero-padded to Hp lanes).
    wih_ref/whh_ref: (L, Hp, 4*Hp); b_ref: (L, 1, 4*Hp)   (gate-lane-aligned, zero-padded)
    linw_ref: (Hp, Cp); linb_ref: (1, Cp); out_ref: (Bp, Cp)
    buf_a/buf_b: (S*Bp, Hp) activation double-buffer; xproj_ref: (S*Bp, 4*Hp)."""
    Hp = h_pad
    bufs = (buf_a, buf_b)

    in_ref = x_ref
    h = None
    for layer in range(n_layers):
        # --- hoisted input projection for all timesteps (one big MXU matmul) ---
        xin = in_ref[...]                                     # (S*Bp, Hp)
        xproj_ref[...] = (
            jnp.dot(xin, wih_ref[layer], preferred_element_type=jnp.float32)
            + b_ref[layer]
        )                                                     # (S*Bp, 4*Hp)

        out_buf = bufs[layer % 2]
        write_out = layer < n_layers - 1                      # last layer: only final h needed

        h = jnp.zeros((b_pad, Hp), jnp.float32)
        c = jnp.zeros((b_pad, Hp), jnp.float32)

        # --- sequential recurrence: one small matmul + elementwise per step ---
        for t in range(seq_len):
            row = t * b_pad                                   # sublane-aligned (b_pad % 8 == 0)
            gates = xproj_ref[pl.ds(row, b_pad), :] + jnp.dot(
                h, whh_ref[layer], preferred_element_type=jnp.float32)

            # lane-aligned 128-wide gate slices (gate k starts at k*Hp)
            i_g = jax.nn.sigmoid(gates[:, 0 * Hp:1 * Hp])
            f_g = jax.nn.sigmoid(gates[:, 1 * Hp:2 * Hp])
            g_g = jnp.tanh(gates[:, 2 * Hp:3 * Hp])
            o_g = jax.nn.sigmoid(gates[:, 3 * Hp:4 * Hp])

            c = f_g * c + i_g * g_g
            h = o_g * jnp.tanh(c)

            if write_out:
                out_buf[pl.ds(row, b_pad), :] = h             # dense 128-lane store

        in_ref = out_buf

    # --- classifier head on the last timestep's hidden state ---
    out_ref[...] = jax.nn.sigmoid(
        jnp.dot(h, linw_ref[...], preferred_element_type=jnp.float32)
        + linb_ref[...]
    ).astype(out_ref.dtype)


# ----------------------------------------------------------------------------
# Wrapper
# ----------------------------------------------------------------------------
def lstmc_forward(x, packed):
    """x: (S, B, nb_features) f32.  packed: output of pack_params().  -> (B, n_class)."""
    S, B, F = x.shape
    L, Hp, G = packed["wih"].shape          # G == 4 * Hp
    Cp = packed["lin_w"].shape[1]
    Bp = _round_up(B, 8)

    # Pad batch -> Bp sublanes, features -> Hp lanes; flatten time into rows.
    xp = jnp.zeros((S, Bp, Hp), jnp.float32).at[:, :B, :F].set(x)
    xp = xp.reshape(S * Bp, Hp)

    kernel = functools.partial(
        _lstmc_fused_kernel,
        seq_len=S, b_pad=Bp, h_pad=Hp, n_layers=L,
    )

    out = pl.pallas_call(
        kernel,
        out_shape=jax.ShapeDtypeStruct((Bp, Cp), jnp.float32),
        grid_spec=pltpu.PrefetchScalarGridSpec(
            num_scalar_prefetch=0,
            grid=(1,),
            in_specs=[
                pl.BlockSpec((S * Bp, Hp), lambda i: (0, 0)),    # x (flattened)
                pl.BlockSpec((L, Hp, G), lambda i: (0, 0, 0)),   # W_ih (stacked, padded)
                pl.BlockSpec((L, Hp, G), lambda i: (0, 0, 0)),   # W_hh (stacked, padded)
                pl.BlockSpec((L, 1, G), lambda i: (0, 0, 0)),    # b_ih + b_hh
                pl.BlockSpec((Hp, Cp), lambda i: (0, 0)),        # linear W^T (padded)
                pl.BlockSpec((1, Cp), lambda i: (0, 0)),         # linear b
            ],
            out_specs=pl.BlockSpec((Bp, Cp), lambda i: (0, 0)),
            scratch_shapes=[
                pltpu.VMEM((S * Bp, Hp), jnp.float32),   # activation buffer A
                pltpu.VMEM((S * Bp, Hp), jnp.float32),   # activation buffer B
                pltpu.VMEM((S * Bp, G), jnp.float32),    # hoisted x-projection
            ],
        ),
        compiler_params=pltpu.CompilerParams(
            dimension_semantics=("arbitrary",),          # serial work; don't shard across TCs
        ),
    )(xp, packed["wih"], packed["whh"], packed["b"],
      packed["lin_w"], packed["lin_b"])

    return out[:B, :packed["n_class"]]


# ----------------------------------------------------------------------------
# Parameter init (torch-like shapes) and packing to the padded kernel layout
# ----------------------------------------------------------------------------
def init_params(key, nb_features, hidden_size, nb_layers, n_class):
    bound = 1.0 / np.sqrt(hidden_size)
    lstm_params = []
    for layer in range(nb_layers):
        in_dim = nb_features if layer == 0 else hidden_size
        key, k1, k2, k3, k4 = jax.random.split(key, 5)
        w_ih = jax.random.uniform(k1, (4 * hidden_size, in_dim), jnp.float32,
                                  -bound, bound)
        w_hh = jax.random.uniform(k2, (4 * hidden_size, hidden_size), jnp.float32,
                                  -bound, bound)
        b_ih = jax.random.uniform(k3, (4 * hidden_size,), jnp.float32, -bound, bound)
        b_hh = jax.random.uniform(k4, (4 * hidden_size,), jnp.float32, -bound, bound)
        lstm_params.append((w_ih.T, w_hh.T, b_ih + b_hh))     # (in,4H), (H,4H), (4H,)
    key, k1, k2 = jax.random.split(key, 3)
    lin_w = jax.random.uniform(k1, (n_class, hidden_size), jnp.float32, -bound, bound)
    lin_b = jax.random.uniform(k2, (n_class,), jnp.float32, -bound, bound)
    return {"lstm": lstm_params, "lin_w_t": lin_w.T, "lin_b": lin_b,
            "hidden_size": hidden_size, "n_class": n_class,
            "nb_features": nb_features}


def pack_params(params, lane=128):
    """Pad hidden to a lane multiple, lay gates out on 128-lane boundaries, stack layers."""
    H = params["hidden_size"]
    C = params["n_class"]
    F = params["nb_features"]
    L = len(params["lstm"])
    Hp = _round_up(max(H, F), lane)      # H=100 (or 32) -> 128; 4*Hp = 512 (256-multiple)
    Cp = _round_up(C, lane)
    G = 4 * Hp

    wih = np.zeros((L, Hp, G), np.float32)
    whh = np.zeros((L, Hp, G), np.float32)
    b = np.zeros((L, 1, G), np.float32)
    for l, (w_ih_t, w_hh_t, bias) in enumerate(params["lstm"]):
        in_dim = w_ih_t.shape[0]
        w_ih_t = np.asarray(w_ih_t)
        w_hh_t = np.asarray(w_hh_t)
        bias = np.asarray(bias)
        for k in range(4):               # gate k -> columns [k*Hp, k*Hp + H); rest zero
            wih[l, :in_dim, k * Hp:k * Hp + H] = w_ih_t[:, k * H:(k + 1) * H]
            whh[l, :H, k * Hp:k * Hp + H] = w_hh_t[:, k * H:(k + 1) * H]
            b[l, 0, k * Hp:k * Hp + H] = bias[k * H:(k + 1) * H]

    lin_w = np.zeros((Hp, Cp), np.float32)
    lin_w[:H, :C] = np.asarray(params["lin_w_t"])
    lin_b = np.zeros((1, Cp), np.float32)
    lin_b[0, :C] = np.asarray(params["lin_b"])

    return {"wih": jnp.asarray(wih), "whh": jnp.asarray(whh), "b": jnp.asarray(b),
            "lin_w": jnp.asarray(lin_w), "lin_b": jnp.asarray(lin_b),
            "n_class": C}


# ----------------------------------------------------------------------------
# Pure-JAX reference (unpadded) for correctness check
# ----------------------------------------------------------------------------
def lstmc_reference(x, params):
    H = params["hidden_size"]
    out = x
    for (w_ih_t, w_hh_t, bias) in params["lstm"]:
        S, B, _ = out.shape
        h = jnp.zeros((B, H), jnp.float32)
        c = jnp.zeros((B, H), jnp.float32)
        hs = []
        for t in range(S):
            gates = out[t] @ w_ih_t + h @ w_hh_t + bias
            i = jax.nn.sigmoid(gates[:, 0 * H:1 * H])
            f = jax.nn.sigmoid(gates[:, 1 * H:2 * H])
            g = jnp.tanh(gates[:, 2 * H:3 * H])
            o = jax.nn.sigmoid(gates[:, 3 * H:4 * H])
            c = f * c + i * g
            h = o * jnp.tanh(c)
            hs.append(h)
        out = jnp.stack(hs, axis=0)
    return jax.nn.sigmoid(out[-1] @ params["lin_w_t"] + params["lin_b"])


# ----------------------------------------------------------------------------
if __name__ == "__main__":
    # Small, module-consistent shapes: nb_features=1, n_class=4, nb_layers=5,
    # time_step (seq) = 5, batch = 4, hidden = 32 (small stand-in for 100).
    SEQ, BATCH, NB_FEATURES = 5, 4, 1
    HIDDEN, NB_LAYERS, N_CLASS = 32, 5, 4

    key = jax.random.PRNGKey(0)
    key, kx = jax.random.split(key)
    x = jax.random.normal(kx, (SEQ, BATCH, NB_FEATURES), jnp.float32)

    params = init_params(key, NB_FEATURES, HIDDEN, NB_LAYERS, N_CLASS)
    packed = pack_params(params)

    out = lstmc_forward(x, packed)
    out = jax.block_until_ready(out)

    ref = lstmc_reference(x, params)
    np.testing.assert_allclose(np.asarray(out), np.asarray(ref),
                               rtol=1e-5, atol=2e-5)

    assert out.shape == (BATCH, N_CLASS)
    print("KERNEL_OK")
</pallas_src>

<mosaic_0001>
module attributes {stable_mosaic.version = 11 : i64} {
  func.func @_lstmc_fused_kernel(%arg0: i32, %arg1: memref<40x128xf32, #tpu.memory_space<vmem>>, %arg2: memref<5x128x512xf32, #tpu.memory_space<vmem>>, %arg3: memref<5x128x512xf32, #tpu.memory_space<vmem>>, %arg4: memref<5x1x512xf32, #tpu.memory_space<vmem>>, %arg5: memref<128x128xf32, #tpu.memory_space<vmem>>, %arg6: memref<1x128xf32, #tpu.memory_space<vmem>>, %arg7: memref<8x128xf32, #tpu.memory_space<vmem>>, %arg8: memref<40x128xf32, #tpu.memory_space<vmem>>, %arg9: memref<40x128xf32, #tpu.memory_space<vmem>>, %arg10: memref<40x512xf32, #tpu.memory_space<vmem>>) attributes {dimension_semantics = [#tpu.dimension_semantics<arbitrary>], iteration_bounds = array<i64: 1>, scalar_prefetch = 0 : i64, scratch_operands = 3 : i64, tpu.core_type = #tpu.core_type<tc>, window_params = [{pipeline_mode = #tpu.pipeline_mode<synchronous>, transform_indices = @transform_0, window_bounds = array<i64: 40, 128>}, {pipeline_mode = #tpu.pipeline_mode<synchronous>, transform_indices = @transform_1, window_bounds = array<i64: 5, 128, 512>}, {pipeline_mode = #tpu.pipeline_mode<synchronous>, transform_indices = @transform_2, window_bounds = array<i64: 5, 128, 512>}, {pipeline_mode = #tpu.pipeline_mode<synchronous>, transform_indices = @transform_3, window_bounds = array<i64: 5, 1, 512>}, {pipeline_mode = #tpu.pipeline_mode<synchronous>, transform_indices = @transform_4, window_bounds = array<i64: 128, 128>}, {pipeline_mode = #tpu.pipeline_mode<synchronous>, transform_indices = @transform_5, window_bounds = array<i64: 1, 128>}, {pipeline_mode = #tpu.pipeline_mode<synchronous>, transform_indices = @transform_6, window_bounds = array<i64: 8, 128>}]} {
    %c0 = arith.constant 0 : index
    %c0_0 = arith.constant 0 : index
    %0 = vector.load %arg1[%c0, %c0_0] : memref<40x128xf32, #tpu.memory_space<vmem>>, vector<40x128xf32>
    %c0_1 = arith.constant 0 : index
    %c0_2 = arith.constant 0 : index
    %c0_3 = arith.constant 0 : index
    %1 = vector.load %arg2[%c0_1, %c0_2, %c0_3] : memref<5x128x512xf32, #tpu.memory_space<vmem>>, vector<1x128x512xf32>
    %2 = vector.shape_cast %1 : vector<1x128x512xf32> to vector<128x512xf32>
    %cst = arith.constant dense<0.000000e+00> : vector<40x512xf32>
    %3 = tpu.matmul %0, %2, %cst {dimension_numbers = #tpu.dot_dimension_numbers<[1], [0], [0], [1], [0, 0, 1, 1], [], []>} : vector<40x128xf32>, vector<128x512xf32>, vector<40x512xf32> -> vector<40x512xf32>
    %c0_4 = arith.constant 0 : index
    %c0_5 = arith.constant 0 : index
    %c0_6 = arith.constant 0 : index
    %4 = vector.load %arg4[%c0_4, %c0_5, %c0_6] : memref<5x1x512xf32, #tpu.memory_space<vmem>>, vector<1x1x512xf32>
    %5 = vector.shape_cast %4 : vector<1x1x512xf32> to vector<1x512xf32>
    %6 = vector.broadcast %5 : vector<1x512xf32> to vector<40x512xf32>
    %7 = arith.addf %3, %6 : vector<40x512xf32>
    %c0_7 = arith.constant 0 : index
    %c0_8 = arith.constant 0 : index
    %8 = vector.load %arg10[%c0_7, %c0_8] : memref<40x512xf32, #tpu.memory_space<vmem>>, vector<40x512xf32>
    tpu.vector_store %arg10[%c0_7, %c0_8], %7 {strides = array<i32>} : memref<40x512xf32, #tpu.memory_space<vmem>>, vector<40x512xf32>,
    %cst_9 = arith.constant 0.000000e+00 : f32
    %9 = vector.broadcast %cst_9 : f32 to vector<8x128xf32>
    %cst_10 = arith.constant 0.000000e+00 : f32
    %10 = vector.broadcast %cst_10 : f32 to vector<8x128xf32>
    %c0_11 = arith.constant 0 : index
    %c0_12 = arith.constant 0 : index
    %11 = vector.load %arg10[%c0_11, %c0_12] : memref<40x512xf32, #tpu.memory_space<vmem>>, vector<8x512xf32>
    %c0_13 = arith.constant 0 : index
    %c0_14 = arith.constant 0 : index
    %c0_15 = arith.constant 0 : index
    %12 = vector.load %arg3[%c0_13, %c0_14, %c0_15] : memref<5x128x512xf32, #tpu.memory_space<vmem>>, vector<1x128x512xf32>
    %13 = vector.shape_cast %12 : vector<1x128x512xf32> to vector<128x512xf32>
    %cst_16 = arith.constant dense<0.000000e+00> : vector<8x512xf32>
    %14 = tpu.matmul %9, %13, %cst_16 {dimension_numbers = #tpu.dot_dimension_numbers<[1], [0], [0], [1], [0, 0, 1, 1], [], []>} : vector<8x128xf32>, vector<128x512xf32>, vector<8x512xf32> -> vector<8x512xf32>
    %15 = arith.addf %11, %14 : vector<8x512xf32>
    %16 = vector.extract_strided_slice %15 {offsets = [0, 0], sizes = [8, 128], strides = [1, 1]} : vector<8x512xf32> to vector<8x128xf32>
    %17 = arith.negf %16 : vector<8x128xf32>
    %18 = math.exp %17 : vector<8x128xf32>
    %cst_17 = arith.constant 1.000000e+00 : f32
    %19 = vector.broadcast %cst_17 : f32 to vector<8x128xf32>
    %20 = arith.addf %19, %18 : vector<8x128xf32>
    %21 = arith.divf %19, %20 : vector<8x128xf32>
    %22 = vector.extract_strided_slice %15 {offsets = [0, 128], sizes = [8, 128], strides = [1, 1]} : vector<8x512xf32> to vector<8x128xf32>
    %23 = arith.negf %22 : vector<8x128xf32>
    %24 = math.exp %23 : vector<8x128xf32>
    %cst_18 = arith.constant 1.000000e+00 : f32
    %25 = vector.broadcast %cst_18 : f32 to vector<8x128xf32>
    %26 = arith.addf %25, %24 : vector<8x128xf32>
    %27 = arith.divf %25, %26 : vector<8x128xf32>
    %28 = vector.extract_strided_slice %15 {offsets = [0, 256], sizes = [8, 128], strides = [1, 1]} : vector<8x512xf32> to vector<8x128xf32>
    %29 = math.tanh %28 : vector<8x128xf32>
    %30 = vector.extract_strided_slice %15 {offsets = [0, 384], sizes = [8, 128], strides = [1, 1]} : vector<8x512xf32> to vector<8x128xf32>
    %31 = arith.negf %30 : vector<8x128xf32>
    %32 = math.exp %31 : vector<8x128xf32>
    %cst_19 = arith.constant 1.000000e+00 : f32
    %33 = vector.broadcast %cst_19 : f32 to vector<8x128xf32>
    %34 = arith.addf %33, %32 : vector<8x128xf32>
    %35 = arith.divf %33, %34 : vector<8x128xf32>
    %36 = arith.mulf %27, %10 : vector<8x128xf32>
    %37 = arith.mulf %21, %29 : vector<8x128xf32>
    %38 = arith.addf %36, %37 : vector<8x128xf32>
    %39 = math.tanh %38 : vector<8x128xf32>
    %40 = arith.mulf %35, %39 : vector<8x128xf32>
    %c0_20 = arith.constant 0 : index
    %c0_21 = arith.constant 0 : index
    %41 = vector.load %arg8[%c0_20, %c0_21] : memref<40x128xf32, #tpu.memory_space<vmem>>, vector<8x128xf32>
    tpu.vector_store %arg8[%c0_20, %c0_21], %40 {strides = array<i32>} : memref<40x128xf32, #tpu.memory_space<vmem>>, vector<8x128xf32>,
    %c8 = arith.constant 8 : index
    %c0_22 = arith.constant 0 : index
    %42 = vector.load %arg10[%c8, %c0_22] : memref<40x512xf32, #tpu.memory_space<vmem>>, vector<8x512xf32>
    %c0_23 = arith.constant 0 : index
    %c0_24 = arith.constant 0 : index
    %c0_25 = arith.constant 0 : index
    %43 = vector.load %arg3[%c0_23, %c0_24, %c0_25] : memref<5x128x512xf32, #tpu.memory_space<vmem>>, vector<1x128x512xf32>
    %44 = vector.shape_cast %43 : vector<1x128x512xf32> to vector<128x512xf32>
    %cst_26 = arith.constant dense<0.000000e+00> : vector<8x512xf32>
    %45 = tpu.matmul %40, %44, %cst_26 {dimension_numbers = #tpu.dot_dimension_numbers<[1], [0], [0], [1], [0, 0, 1, 1], [], []>} : vector<8x128xf32>, vector<128x512xf32>, vector<8x512xf32> -> vector<8x512xf32>
    %46 = arith.addf %42, %45 : vector<8x512xf32>
    %47 = vector.extract_strided_slice %46 {offsets = [0, 0], sizes = [8, 128], strides = [1, 1]} : vector<8x512xf32> to vector<8x128xf32>
    %48 = arith.negf %47 : vector<8x128xf32>
    %49 = math.exp %48 : vector<8x128xf32>
    %cst_27 = arith.constant 1.000000e+00 : f32
    %50 = vector.broadcast %cst_27 : f32 to vector<8x128xf32>
    %51 = arith.addf %50, %49 : vector<8x128xf32>
    %52 = arith.divf %50, %51 : vector<8x128xf32>
    %53 = vector.extract_strided_slice %46 {offsets = [0, 128], sizes = [8, 128], strides = [1, 1]} : vector<8x512xf32> to vector<8x128xf32>
    %54 = arith.negf %53 : vector<8x128xf32>
    %55 = math.exp %54 : vector<8x128xf32>
    %cst_28 = arith.constant 1.000000e+00 : f32
    %56 = vector.broadcast %cst_28 : f32 to vector<8x128xf32>
    %57 = arith.addf %56, %55 : vector<8x128xf32>
    %58 = arith.divf %56, %57 : vector<8x128xf32>
    %59 = vector.extract_strided_slice %46 {offsets = [0, 256], sizes = [8, 128], strides = [1, 1]} : vector<8x512xf32> to vector<8x128xf32>
    %60 = math.tanh %59 : vector<8x128xf32>
    %61 = vector.extract_strided_slice %46 {offsets = [0, 384], sizes = [8, 128], strides = [1, 1]} : vector<8x512xf32> to vector<8x128xf32>
    %62 = arith.negf %61 : vector<8x128xf32>
    %63 = math.exp %62 : vector<8x128xf32>
    %cst_29 = arith.constant 1.000000e+00 : f32
    %64 = vector.broadcast %cst_29 : f32 to vector<8x128xf32>
    %65 = arith.addf %64, %63 : vector<8x128xf32>
    %66 = arith.divf %64, %65 : vector<8x128xf32>
    %67 = arith.mulf %58, %38 : vector<8x128xf32>
    %68 = arith.mulf %52, %60 : vector<8x128xf32>
    %69 = arith.addf %67, %68 : vector<8x128xf32>
    %70 = math.tanh %69 : vector<8x128xf32>
    %71 = arith.mulf %66, %70 : vector<8x128xf32>
    %c8_30 = arith.constant 8 : index
    %c0_31 = arith.constant 0 : index
    %72 = vector.load %arg8[%c8_30, %c0_31] : memref<40x128xf32, #tpu.memory_space<vmem>>, vector<8x128xf32>
    tpu.vector_store %arg8[%c8_30, %c0_31], %71 {strides = array<i32>} : memref<40x128xf32, #tpu.memory_space<vmem>>, vector<8x128xf32>,
    %c16 = arith.constant 16 : index
    %c0_32 = arith.constant 0 : index
    %73 = vector.load %arg10[%c16, %c0_32] : memref<40x512xf32, #tpu.memory_space<vmem>>, vector<8x512xf32>
    %c0_33 = arith.constant 0 : index
    %c0_34 = arith.constant 0 : index
    %c0_35 = arith.constant 0 : index
    %74 = vector.load %arg3[%c0_33, %c0_34, %c0_35] : memref<5x128x512xf32, #tpu.memory_space<vmem>>, vector<1x128x512xf32>
    %75 = vector.shape_cast %74 : vector<1x128x512xf32> to vector<128x512xf32>
    %cst_36 = arith.constant dense<0.000000e+00> : vector<8x512xf32>
    %76 = tpu.matmul %71, %75, %cst_36 {dimension_numbers = #tpu.dot_dimension_numbers<[1], [0], [0], [1], [0, 0, 1, 1], [], []>} : vector<8x128xf32>, vector<128x512xf32>, vector<8x512xf32> -> vector<8x512xf32>
    %77 = arith.addf %73, %76 : vector<8x512xf32>
    %78 = vector.extract_strided_slice %77 {offsets = [0, 0], sizes = [8, 128], strides = [1, 1]} : vector<8x512xf32> to vector<8x128xf32>
    %79 = arith.negf %78 : vector<8x128xf32>
    %80 = math.exp %79 : vector<8x128xf32>
    %cst_37 = arith.constant 1.000000e+00 : f32
    %81 = vector.broadcast %cst_37 : f32 to vector<8x128xf32>
    %82 = arith.addf %81, %80 : vector<8x128xf32>
    %83 = arith.divf %81, %82 : vector<8x128xf32>
    %84 = vector.extract_strided_slice %77 {offsets = [0, 128], sizes = [8, 128], strides = [1, 1]} : vector<8x512xf32> to vector<8x128xf32>
    %85 = arith.negf %84 : vector<8x128xf32>
    %86 = math.exp %85 : vector<8x128xf32>
    %cst_38 = arith.constant 1.000000e+00 : f32
    %87 = vector.broadcast %cst_38 : f32 to vector<8x128xf32>
    %88 = arith.addf %87, %86 : vector<8x128xf32>
    %89 = arith.divf %87, %88 : vector<8x128xf32>
    %90 = vector.extract_strided_slice %77 {offsets = [0, 256], sizes = [8, 128], strides = [1, 1]} : vector<8x512xf32> to vector<8x128xf32>
    %91 = math.tanh %90 : vector<8x128xf32>
    %92 = vector.extract_strided_slice %77 {offsets = [0, 384], sizes = [8, 128], strides = [1, 1]} : vector<8x512xf32> to vector<8x128xf32>
    %93 = arith.negf %92 : vector<8x128xf32>
    %94 = math.exp %93 : vector<8x128xf32>
    %cst_39 = arith.constant 1.000000e+00 : f32
    %95 = vector.broadcast %cst_39 : f32 to vector<8x128xf32>
    %96 = arith.addf %95, %94 : vector<8x128xf32>
    %97 = arith.divf %95, %96 : vector<8x128xf32>
    %98 = arith.mulf %89, %69 : vector<8x128xf32>
    %99 = arith.mulf %83, %91 : vector<8x128xf32>
    %100 = arith.addf %98, %99 : vector<8x128xf32>
    %101 = math.tanh %100 : vector<8x128xf32>
    %102 = arith.mulf %97, %101 : vector<8x128xf32>
    %c16_40 = arith.constant 16 : index
    %c0_41 = arith.constant 0 : index
    %103 = vector.load %arg8[%c16_40, %c0_41] : memref<40x128xf32, #tpu.memory_space<vmem>>, vector<8x128xf32>
    tpu.vector_store %arg8[%c16_40, %c0_41], %102 {strides = array<i32>} : memref<40x128xf32, #tpu.memory_space<vmem>>, vector<8x128xf32>,
    %c24 = arith.constant 24 : index
    %c0_42 = arith.constant 0 : index
    %104 = vector.load %arg10[%c24, %c0_42] : memref<40x512xf32, #tpu.memory_space<vmem>>, vector<8x512xf32>
    %c0_43 = arith.constant 0 : index
    %c0_44 = arith.constant 0 : index
    %c0_45 = arith.constant 0 : index
    %105 = vector.load %arg3[%c0_43, %c0_44, %c0_45] : memref<5x128x512xf32, #tpu.memory_space<vmem>>, vector<1x128x512xf32>
    %106 = vector.shape_cast %105 : vector<1x128x512xf32> to vector<128x512xf32>
    %cst_46 = arith.constant dense<0.000000e+00> : vector<8x512xf32>
    %107 = tpu.matmul %102, %106, %cst_46 {dimension_numbers = #tpu.dot_dimension_numbers<[1], [0], [0], [1], [0, 0, 1, 1], [], []>} : vector<8x128xf32>, vector<128x512xf32>, vector<8x512xf32> -> vector<8x512xf32>
    %108 = arith.addf %104, %107 : vector<8x512xf32>
    %109 = vector.extract_strided_slice %108 {offsets = [0, 0], sizes = [8, 128], strides = [1, 1]} : vector<8x512xf32> to vector<8x128xf32>
    %110 = arith.negf %109 : vector<8x128xf32>
    %111 = math.exp %110 : vector<8x128xf32>
    %cst_47 = arith.constant 1.000000e+00 : f32
    %112 = vector.broadcast %cst_47 : f32 to vector<8x128xf32>
    %113 = arith.addf %112, %111 : vector<8x128xf32>
    %114 = arith.divf %112, %113 : vector<8x128xf32>
    %115 = vector.extract_strided_slice %108 {offsets = [0, 128], sizes = [8, 128], strides = [1, 1]} : vector<8x512xf32> to vector<8x128xf32>
    %116 = arith.negf %115 : vector<8x128xf32>
    %117 = math.exp %116 : vector<8x128xf32>
    %cst_48 = arith.constant 1.000000e+00 : f32
    %118 = vector.broadcast %cst_48 : f32 to vector<8x128xf32>
    %119 = arith.addf %118, %117 : vector<8x128xf32>
    %120 = arith.divf %118, %119 : vector<8x128xf32>
    %121 = vector.extract_strided_slice %108 {offsets = [0, 256], sizes = [8, 128], strides = [1, 1]} : vector<8x512xf32> to vector<8x128xf32>
    %122 = math.tanh %121 : vector<8x128xf32>
    %123 = vector.extract_strided_slice %108 {offsets = [0, 384], sizes = [8, 128], strides = [1, 1]} : vector<8x512xf32> to vector<8x128xf32>
    %124 = arith.negf %123 : vector<8x128xf32>
    %125 = math.exp %124 : vector<8x128xf32>
    %cst_49 = arith.constant 1.000000e+00 : f32
    %126 = vector.broadcast %cst_49 : f32 to vector<8x128xf32>
    %127 = arith.addf %126, %125 : vector<8x128xf32>
    %128 = arith.divf %126, %127 : vector<8x128xf32>
    %129 = arith.mulf %120, %100 : vector<8x128xf32>
    %130 = arith.mulf %114, %122 : vector<8x128xf32>
    %131 = arith.addf %129, %130 : vector<8x128xf32>
    %132 = math.tanh %131 : vector<8x128xf32>
    %133 = arith.mulf %128, %132 : vector<8x128xf32>
    %c24_50 = arith.constant 24 : index
    %c0_51 = arith.constant 0 : index
    %134 = vector.load %arg8[%c24_50, %c0_51] : memref<40x128xf32, #tpu.memory_space<vmem>>, vector<8x128xf32>
    tpu.vector_store %arg8[%c24_50, %c0_51], %133 {strides = array<i32>} : memref<40x128xf32, #tpu.memory_space<vmem>>, vector<8x128xf32>,
    %c32 = arith.constant 32 : index
    %c0_52 = arith.constant 0 : index
    %135 = vector.load %arg10[%c32, %c0_52] : memref<40x512xf32, #tpu.memory_space<vmem>>, vector<8x512xf32>
    %c0_53 = arith.constant 0 : index
    %c0_54 = arith.constant 0 : index
    %c0_55 = arith.constant 0 : index
    %136 = vector.load %arg3[%c0_53, %c0_54, %c0_55] : memref<5x128x512xf32, #tpu.memory_space<vmem>>, vector<1x128x512xf32>
    %137 = vector.shape_cast %136 : vector<1x128x512xf32> to vector<128x512xf32>
    %cst_56 = arith.constant dense<0.000000e+00> : vector<8x512xf32>
    %138 = tpu.matmul %133, %137, %cst_56 {dimension_numbers = #tpu.dot_dimension_numbers<[1], [0], [0], [1], [0, 0, 1, 1], [], []>} : vector<8x128xf32>, vector<128x512xf32>, vector<8x512xf32> -> vector<8x512xf32>
    %139 = arith.addf %135, %138 : vector<8x512xf32>
    %140 = vector.extract_strided_slice %139 {offsets = [0, 0], sizes = [8, 128], strides = [1, 1]} : vector<8x512xf32> to vector<8x128xf32>
    %141 = arith.negf %140 : vector<8x128xf32>
    %142 = math.exp %141 : vector<8x128xf32>
    %cst_57 = arith.constant 1.000000e+00 : f32
    %143 = vector.broadcast %cst_57 : f32 to vector<8x128xf32>
    %144 = arith.addf %143, %142 : vector<8x128xf32>
    %145 = arith.divf %143, %144 : vector<8x128xf32>
    %146 = vector.extract_strided_slice %139 {offsets = [0, 128], sizes = [8, 128], strides = [1, 1]} : vector<8x512xf32> to vector<8x128xf32>
    %147 = arith.negf %146 : vector<8x128xf32>
    %148 = math.exp %147 : vector<8x128xf32>
    %cst_58 = arith.constant 1.000000e+00 : f32
    %149 = vector.broadcast %cst_58 : f32 to vector<8x128xf32>
    %150 = arith.addf %149, %148 : vector<8x128xf32>
    %151 = arith.divf %149, %150 : vector<8x128xf32>
    %152 = vector.extract_strided_slice %139 {offsets = [0, 256], sizes = [8, 128], strides = [1, 1]} : vector<8x512xf32> to vector<8x128xf32>
    %153 = math.tanh %152 : vector<8x128xf32>
    %154 = vector.extract_strided_slice %139 {offsets = [0, 384], sizes = [8, 128], strides = [1, 1]} : vector<8x512xf32> to vector<8x128xf32>
    %155 = arith.negf %154 : vector<8x128xf32>
    %156 = math.exp %155 : vector<8x128xf32>
    %cst_59 = arith.constant 1.000000e+00 : f32
    %157 = vector.broadcast %cst_59 : f32 to vector<8x128xf32>
    %158 = arith.addf %157, %156 : vector<8x128xf32>
    %159 = arith.divf %157, %158 : vector<8x128xf32>
    %160 = arith.mulf %151, %131 : vector<8x128xf32>
    %161 = arith.mulf %145, %153 : vector<8x128xf32>
    %162 = arith.addf %160, %161 : vector<8x128xf32>
    %163 = math.tanh %162 : vector<8x128xf32>
    %164 = arith.mulf %159, %163 : vector<8x128xf32>
    %c32_60 = arith.constant 32 : index
    %c0_61 = arith.constant 0 : index
    %165 = vector.load %arg8[%c32_60, %c0_61] : memref<40x128xf32, #tpu.memory_space<vmem>>, vector<8x128xf32>
    tpu.vector_store %arg8[%c32_60, %c0_61], %164 {strides = array<i32>} : memref<40x128xf32, #tpu.memory_space<vmem>>, vector<8x128xf32>,
    %c0_62 = arith.constant 0 : index
    %c0_63 = arith.constant 0 : index
    %166 = vector.load %arg8[%c0_62, %c0_63] : memref<40x128xf32, #tpu.memory_space<vmem>>, vector<40x128xf32>
    %c1 = arith.constant 1 : index
    %c0_64 = arith.constant 0 : index
    %c0_65 = arith.constant 0 : index
    %167 = vector.load %arg2[%c1, %c0_64, %c0_65] : memref<5x128x512xf32, #tpu.memory_space<vmem>>, vector<1x128x512xf32>
    %168 = vector.shape_cast %167 : vector<1x128x512xf32> to vector<128x512xf32>
    %cst_66 = arith.constant dense<0.000000e+00> : vector<40x512xf32>
    %169 = tpu.matmul %166, %168, %cst_66 {dimension_numbers = #tpu.dot_dimension_numbers<[1], [0], [0], [1], [0, 0, 1, 1], [], []>} : vector<40x128xf32>, vector<128x512xf32>, vector<40x512xf32> -> vector<40x512xf32>
    %c1_67 = arith.constant 1 : index
    %c0_68 = arith.constant 0 : index
    %c0_69 = arith.constant 0 : index
    %170 = vector.load %arg4[%c1_67, %c0_68, %c0_69] : memref<5x1x512xf32, #tpu.memory_space<vmem>>, vector<1x1x512xf32>
    %171 = vector.shape_cast %170 : vector<1x1x512xf32> to vector<1x512xf32>
    %172 = vector.broadcast %171 : vector<1x512xf32> to vector<40x512xf32>
    %173 = arith.addf %169, %172 : vector<40x512xf32>
    %c0_70 = arith.constant 0 : index
    %c0_71 = arith.constant 0 : index
    %174 = vector.load %arg10[%c0_70, %c0_71] : memref<40x512xf32, #tpu.memory_space<vmem>>, vector<40x512xf32>
    tpu.vector_store %arg10[%c0_70, %c0_71], %173 {strides = array<i32>} : memref<40x512xf32, #tpu.memory_space<vmem>>, vector<40x512xf32>,
    %cst_72 = arith.constant 0.000000e+00 : f32
    %175 = vector.broadcast %cst_72 : f32 to vector<8x128xf32>
    %cst_73 = arith.constant 0.000000e+00 : f32
    %176 = vector.broadcast %cst_73 : f32 to vector<8x128xf32>
    %c0_74 = arith.constant 0 : index
    %c0_75 = arith.constant 0 : index
    %177 = vector.load %arg10[%c0_74, %c0_75] : memref<40x512xf32, #tpu.memory_space<vmem>>, vector<8x512xf32>
    %c1_76 = arith.constant 1 : index
    %c0_77 = arith.constant 0 : index
    %c0_78 = arith.constant 0 : index
    %178 = vector.load %arg3[%c1_76, %c0_77, %c0_78] : memref<5x128x512xf32, #tpu.memory_space<vmem>>, vector<1x128x512xf32>
    %179 = vector.shape_cast %178 : vector<1x128x512xf32> to vector<128x512xf32>
    %cst_79 = arith.constant dense<0.000000e+00> : vector<8x512xf32>
    %180 = tpu.matmul %175, %179, %cst_79 {dimension_numbers = #tpu.dot_dimension_numbers<[1], [0], [0], [1], [0, 0, 1, 1], [], []>} : vector<8x128xf32>, vector<128x512xf32>, vector<8x512xf32> -> vector<8x512xf32>
    %181 = arith.addf %177, %180 : vector<8x512xf32>
    %182 = vector.extract_strided_slice %181 {offsets = [0, 0], sizes = [8, 128], strides = [1, 1]} : vector<8x512xf32> to vector<8x128xf32>
    %183 = arith.negf %182 : vector<8x128xf32>
    %184 = math.exp %183 : vector<8x128xf32>
    %cst_80 = arith.constant 1.000000e+00 : f32
    %185 = vector.broadcast %cst_80 : f32 to vector<8x128xf32>
    %186 = arith.addf %185, %184 : vector<8x128xf32>
    %187 = arith.divf %185, %186 : vector<8x128xf32>
    %188 = vector.extract_strided_slice %181 {offsets = [0, 128], sizes = [8, 128], strides = [1, 1]} : vector<8x512xf32> to vector<8x128xf32>
    %189 = arith.negf %188 : vector<8x128xf32>
    %190 = math.exp %189 : vector<8x128xf32>
    %cst_81 = arith.constant 1.000000e+00 : f32
    %191 = vector.broadcast %cst_81 : f32 to vector<8x128xf32>
    %192 = arith.addf %191, %190 : vector<8x128xf32>
    %193 = arith.divf %191, %192 : vector<8x128xf32>
    %194 = vector.extract_strided_slice %181 {offsets = [0, 256], sizes = [8, 128], strides = [1, 1]} : vector<8x512xf32> to vector<8x128xf32>
    %195 = math.tanh %194 : vector<8x128xf32>
    %196 = vector.extract_strided_slice %181 {offsets = [0, 384], sizes = [8, 128], strides = [1, 1]} : vector<8x512xf32> to vector<8x128xf32>
    %197 = arith.negf %196 : vector<8x128xf32>
    %198 = math.exp %197 : vector<8x128xf32>
    %cst_82 = arith.constant 1.000000e+00 : f32
    %199 = vector.broadcast %cst_82 : f32 to vector<8x128xf32>
    %200 = arith.addf %199, %198 : vector<8x128xf32>
    %201 = arith.divf %199, %200 : vector<8x128xf32>
    %202 = arith.mulf %193, %176 : vector<8x128xf32>
    %203 = arith.mulf %187, %195 : vector<8x128xf32>
    %204 = arith.addf %202, %203 : vector<8x128xf32>
    %205 = math.tanh %204 : vector<8x128xf32>
    %206 = arith.mulf %201, %205 : vector<8x128xf32>
    %c0_83 = arith.constant 0 : index
    %c0_84 = arith.constant 0 : index
    %207 = vector.load %arg9[%c0_83, %c0_84] : memref<40x128xf32, #tpu.memory_space<vmem>>, vector<8x128xf32>
    tpu.vector_store %arg9[%c0_83, %c0_84], %206 {strides = array<i32>} : memref<40x128xf32, #tpu.memory_space<vmem>>, vector<8x128xf32>,
    %c8_85 = arith.constant 8 : index
    %c0_86 = arith.constant 0 : index
    %208 = vector.load %arg10[%c8_85, %c0_86] : memref<40x512xf32, #tpu.memory_space<vmem>>, vector<8x512xf32>
    %c1_87 = arith.constant 1 : index
    %c0_88 = arith.constant 0 : index
    %c0_89 = arith.constant 0 : index
    %209 = vector.load %arg3[%c1_87, %c0_88, %c0_89] : memref<5x128x512xf32, #tpu.memory_space<vmem>>, vector<1x128x512xf32>
    %210 = vector.shape_cast %209 : vector<1x128x512xf32> to vector<128x512xf32>
    %cst_90 = arith.constant dense<0.000000e+00> : vector<8x512xf32>
    %211 = tpu.matmul %206, %210, %cst_90 {dimension_numbers = #tpu.dot_dimension_numbers<[1], [0], [0], [1], [0, 0, 1, 1], [], []>} : vector<8x128xf32>, vector<128x512xf32>, vector<8x512xf32> -> vector<8x512xf32>
    %212 = arith.addf %208, %211 : vector<8x512xf32>
    %213 = vector.extract_strided_slice %212 {offsets = [0, 0], sizes = [8, 128], strides = [1, 1]} : vector<8x512xf32> to vector<8x128xf32>
    %214 = arith.negf %213 : vector<8x128xf32>
    %215 = math.exp %214 : vector<8x128xf32>
    %cst_91 = arith.constant 1.000000e+00 : f32
    %216 = vector.broadcast %cst_91 : f32 to vector<8x128xf32>
    %217 = arith.addf %216, %215 : vector<8x128xf32>
    %218 = arith.divf %216, %217 : vector<8x128xf32>
    %219 = vector.extract_strided_slice %212 {offsets = [0, 128], sizes = [8, 128], strides = [1, 1]} : vector<8x512xf32> to vector<8x128xf32>
    %220 = arith.negf %219 : vector<8x128xf32>
    %221 = math.exp %220 : vector<8x128xf32>
    %cst_92 = arith.constant 1.000000e+00 : f32
    %222 = vector.broadcast %cst_92 : f32 to vector<8x128xf32>
    %223 = arith.addf %222, %221 : vector<8x128xf32>
    %224 = arith.divf %222, %223 : vector<8x128xf32>
    %225 = vector.extract_strided_slice %212 {offsets = [0, 256], sizes = [8, 128], strides = [1, 1]} : vector<8x512xf32> to vector<8x128xf32>
    %226 = math.tanh %225 : vector<8x128xf32>
    %227 = vector.extract_strided_slice %212 {offsets = [0, 384], sizes = [8, 128], strides = [1, 1]} : vector<8x512xf32> to vector<8x128xf32>
    %228 = arith.negf %227 : vector<8x128xf32>
    %229 = math.exp %228 : vector<8x128xf32>
    %cst_93 = arith.constant 1.000000e+00 : f32
    %230 = vector.broadcast %cst_93 : f32 to vector<8x128xf32>
    %231 = arith.addf %230, %229 : vector<8x128xf32>
    %232 = arith.divf %230, %231 : vector<8x128xf32>
    %233 = arith.mulf %224, %204 : vector<8x128xf32>
    %234 = arith.mulf %218, %226 : vector<8x128xf32>
    %235 = arith.addf %233, %234 : vector<8x128xf32>
    %236 = math.tanh %235 : vector<8x128xf32>
    %237 = arith.mulf %232, %236 : vector<8x128xf32>
    %c8_94 = arith.constant 8 : index
    %c0_95 = arith.constant 0 : index
    %238 = vector.load %arg9[%c8_94, %c0_95] : memref<40x128xf32, #tpu.memory_space<vmem>>, vector<8x128xf32>
    tpu.vector_store %arg9[%c8_94, %c0_95], %237 {strides = array<i32>} : memref<40x128xf32, #tpu.memory_space<vmem>>, vector<8x128xf32>,
    %c16_96 = arith.constant 16 : index
    %c0_97 = arith.constant 0 : index
    %239 = vector.load %arg10[%c16_96, %c0_97] : memref<40x512xf32, #tpu.memory_space<vmem>>, vector<8x512xf32>
    %c1_98 = arith.constant 1 : index
    %c0_99 = arith.constant 0 : index
    %c0_100 = arith.constant 0 : index
    %240 = vector.load %arg3[%c1_98, %c0_99, %c0_100] : memref<5x128x512xf32, #tpu.memory_space<vmem>>, vector<1x128x512xf32>
    %241 = vector.shape_cast %240 : vector<1x128x512xf32> to vector<128x512xf32>
    %cst_101 = arith.constant dense<0.000000e+00> : vector<8x512xf32>
    %242 = tpu.matmul %237, %241, %cst_101 {dimension_numbers = #tpu.dot_dimension_numbers<[1], [0], [0], [1], [0, 0, 1, 1], [], []>} : vector<8x128xf32>, vector<128x512xf32>, vector<8x512xf32> -> vector<8x512xf32>
    %243 = arith.addf %239, %242 : vector<8x512xf32>
    %244 = vector.extract_strided_slice %243 {offsets = [0, 0], sizes = [8, 128], strides = [1, 1]} : vector<8x512xf32> to vector<8x128xf32>
    %245 = arith.negf %244 : vector<8x128xf32>
    %246 = math.exp %245 : vector<8x128xf32>
    %cst_102 = arith.constant 1.000000e+00 : f32
    %247 = vector.broadcast %cst_102 : f32 to vector<8x128xf32>
    %248 = arith.addf %247, %246 : vector<8x128xf32>
    %249 = arith.divf %247, %248 : vector<8x128xf32>
    %250 = vector.extract_strided_slice %243 {offsets = [0, 128], sizes = [8, 128], strides = [1, 1]} : vector<8x512xf32> to vector<8x128xf32>
    %251 = arith.negf %250 : vector<8x128xf32>
    %252 = math.exp %251 : vector<8x128xf32>
    %cst_103 = arith.constant 1.000000e+00 : f32
    %253 = vector.broadcast %cst_103 : f32 to vector<8x128xf32>
    %254 = arith.addf %253, %252 : vector<8x128xf32>
    %255 = arith.divf %253, %254 : vector<8x128xf32>
    %256 = vector.extract_strided_slice %243 {offsets = [0, 256], sizes = [8, 128], strides = [1, 1]} : vector<8x512xf32> to vector<8x128xf32>
    %257 = math.tanh %256 : vector<8x128xf32>
    %258 = vector.extract_strided_slice %243 {offsets = [0, 384], sizes = [8, 128], strides = [1, 1]} : vector<8x512xf32> to vector<8x128xf32>
    %259 = arith.negf %258 : vector<8x128xf32>
    %260 = math.exp %259 : vector<8x128xf32>
    %cst_104 = arith.constant 1.000000e+00 : f32
    %261 = vector.broadcast %cst_104 : f32 to vector<8x128xf32>
    %262 = arith.addf %261, %260 : vector<8x128xf32>
    %263 = arith.divf %261, %262 : vector<8x128xf32>
    %264 = arith.mulf %255, %235 : vector<8x128xf32>
    %265 = arith.mulf %249, %257 : vector<8x128xf32>
    %266 = arith.addf %264, %265 : vector<8x128xf32>
    %267 = math.tanh %266 : vector<8x128xf32>
    %268 = arith.mulf %263, %267 : vector<8x128xf32>
    %c16_105 = arith.constant 16 : index
    %c0_106 = arith.constant 0 : index
    %269 = vector.load %arg9[%c16_105, %c0_106] : memref<40x128xf32, #tpu.memory_space<vmem>>, vector<8x128xf32>
    tpu.vector_store %arg9[%c16_105, %c0_106], %268 {strides = array<i32>} : memref<40x128xf32, #tpu.memory_space<vmem>>, vector<8x128xf32>,
    %c24_107 = arith.constant 24 : index
    %c0_108 = arith.constant 0 : index
    %270 = vector.load %arg10[%c24_107, %c0_108] : memref<40x512xf32, #tpu.memory_space<vmem>>, vector<8x512xf32>
    %c1_109 = arith.constant 1 : index
    %c0_110 = arith.constant 0 : index
    %c0_111 = arith.constant 0 : index
    %271 = vector.load %arg3[%c1_109, %c0_110, %c0_111] : memref<5x128x512xf32, #tpu.memory_space<vmem>>, vector<1x128x512xf32>
    %272 = vector.shape_cast %271 : vector<1x128x512xf32> to vector<128x512xf32>
    %cst_112 = arith.constant dense<0.000000e+00> : vector<8x512xf32>
    %273 = tpu.matmul %268, %272, %cst_112 {dimension_numbers = #tpu.dot_dimension_numbers<[1], [0], [0], [1], [0, 0, 1, 1], [], []>} : vector<8x128xf32>, vector<128x512xf32>, vector<8x512xf32> -> vector<8x512xf32>
    %274 = arith.addf %270, %273 : vector<8x512xf32>
    %275 = vector.extract_strided_slice %274 {offsets = [0, 0], sizes = [8, 128], strides = [1, 1]} : vector<8x512xf32> to vector<8x128xf32>
    %276 = arith.negf %275 : vector<8x128xf32>
    %277 = math.exp %276 : vector<8x128xf32>
    %cst_113 = arith.constant 1.000000e+00 : f32
    %278 = vector.broadcast %cst_113 : f32 to vector<8x128xf32>
    %279 = arith.addf %278, %277 : vector<8x128xf32>
    %280 = arith.divf %278, %279 : vector<8x128xf32>
    %281 = vector.extract_strided_slice %274 {offsets = [0, 128], sizes = [8, 128], strides = [1, 1]} : vector<8x512xf32> to vector<8x128xf32>
    %282 = arith.negf %281 : vector<8x128xf32>
    %283 = math.exp %282 : vector<8x128xf32>
    %cst_114 = arith.constant 1.000000e+00 : f32
    %284 = vector.broadcast %cst_114 : f32 to vector<8x128xf32>
    %285 = arith.addf %284, %283 : vector<8x128xf32>
    %286 = arith.divf %284, %285 : vector<8x128xf32>
    %287 = vector.extract_strided_slice %274 {offsets = [0, 256], sizes = [8, 128], strides = [1, 1]} : vector<8x512xf32> to vector<8x128xf32>
    %288 = math.tanh %287 : vector<8x128xf32>
    %289 = vector.extract_strided_slice %274 {offsets = [0, 384], sizes = [8, 128], strides = [1, 1]} : vector<8x512xf32> to vector<8x128xf32>
    %290 = arith.negf %289 : vector<8x128xf32>
    %291 = math.exp %290 : vector<8x128xf32>
    %cst_115 = arith.constant 1.000000e+00 : f32
    %292 = vector.broadcast %cst_115 : f32 to vector<8x128xf32>
    %293 = arith.addf %292, %291 : vector<8x128xf32>
    %294 = arith.divf %292, %293 : vector<8x128xf32>
    %295 = arith.mulf %286, %266 : vector<8x128xf32>
    %296 = arith.mulf %280, %288 : vector<8x128xf32>
    %297 = arith.addf %295, %296 : vector<8x128xf32>
    %298 = math.tanh %297 : vector<8x128xf32>
    %299 = arith.mulf %294, %298 : vector<8x128xf32>
    %c24_116 = arith.constant 24 : index
    %c0_117 = arith.constant 0 : index
    %300 = vector.load %arg9[%c24_116, %c0_117] : memref<40x128xf32, #tpu.memory_space<vmem>>, vector<8x128xf32>
    tpu.vector_store %arg9[%c24_116, %c0_117], %299 {strides = array<i32>} : memref<40x128xf32, #tpu.memory_space<vmem>>, vector<8x128xf32>,
    %c32_118 = arith.constant 32 : index
    %c0_119 = arith.constant 0 : index
    %301 = vector.load %arg10[%c32_118, %c0_119] : memref<40x512xf32, #tpu.memory_space<vmem>>, vector<8x512xf32>
    %c1_120 = arith.constant 1 : index
    %c0_121 = arith.constant 0 : index
    %c0_122 = arith.constant 0 : index
    %302 = vector.load %arg3[%c1_120, %c0_121, %c0_122] : memref<5x128x512xf32, #tpu.memory_space<vmem>>, vector<1x128x512xf32>
    %303 = vector.shape_cast %302 : vector<1x128x512xf32> to vector<128x512xf32>
    %cst_123 = arith.constant dense<0.000000e+00> : vector<8x512xf32>
    %304 = tpu.matmul %299, %303, %cst_123 {dimension_numbers = #tpu.dot_dimension_numbers<[1], [0], [0], [1], [0, 0, 1, 1], [], []>} : vector<8x128xf32>, vector<128x512xf32>, vector<8x512xf32> -> vector<8x512xf32>
    %305 = arith.addf %301, %304 : vector<8x512xf32>
    %306 = vector.extract_strided_slice %305 {offsets = [0, 0], sizes = [8, 128], strides = [1, 1]} : vector<8x512xf32> to vector<8x128xf32>
    %307 = arith.negf %306 : vector<8x128xf32>
    %308 = math.exp %307 : vector<8x128xf32>
    %cst_124 = arith.constant 1.000000e+00 : f32
    %309 = vector.broadcast %cst_124 : f32 to vector<8x128xf32>
    %310 = arith.addf %309, %308 : vector<8x128xf32>
    %311 = arith.divf %309, %310 : vector<8x128xf32>
    %312 = vector.extract_strided_slice %305 {offsets = [0, 128], sizes = [8, 128], strides = [1, 1]} : vector<8x512xf32> to vector<8x128xf32>
    %313 = arith.negf %312 : vector<8x128xf32>
    %314 = math.exp %313 : vector<8x128xf32>
    %cst_125 = arith.constant 1.000000e+00 : f32
    %315 = vector.broadcast %cst_125 : f32 to vector<8x128xf32>
    %316 = arith.addf %315, %314 : vector<8x128xf32>
    %317 = arith.divf %315, %316 : vector<8x128xf32>
    %318 = vector.extract_strided_slice %305 {offsets = [0, 256], sizes = [8, 128], strides = [1, 1]} : vector<8x512xf32> to vector<8x128xf32>
    %319 = math.tanh %318 : vector<8x128xf32>
    %320 = vector.extract_strided_slice %305 {offsets = [0, 384], sizes = [8, 128], strides = [1, 1]} : vector<8x512xf32> to vector<8x128xf32>
    %321 = arith.negf %320 : vector<8x128xf32>
    %322 = math.exp %321 : vector<8x128xf32>
    %cst_126 = arith.constant 1.000000e+00 : f32
    %323 = vector.broadcast %cst_126 : f32 to vector<8x128xf32>
    %324 = arith.addf %323, %322 : vector<8x128xf32>
    %325 = arith.divf %323, %324 : vector<8x128xf32>
    %326 = arith.mulf %317, %297 : vector<8x128xf32>
    %327 = arith.mulf %311, %319 : vector<8x128xf32>
    %328 = arith.addf %326, %327 : vector<8x128xf32>
    %329 = math.tanh %328 : vector<8x128xf32>
    %330 = arith.mulf %325, %329 : vector<8x128xf32>
    %c32_127 = arith.constant 32 : index
    %c0_128 = arith.constant 0 : index
    %331 = vector.load %arg9[%c32_127, %c0_128] : memref<40x128xf32, #tpu.memory_space<vmem>>, vector<8x128xf32>
    tpu.vector_store %arg9[%c32_127, %c0_128], %330 {strides = array<i32>} : memref<40x128xf32, #tpu.memory_space<vmem>>, vector<8x128xf32>,
    %c0_129 = arith.constant 0 : index
    %c0_130 = arith.constant 0 : index
    %332 = vector.load %arg9[%c0_129, %c0_130] : memref<40x128xf32, #tpu.memory_space<vmem>>, vector<40x128xf32>
    %c2 = arith.constant 2 : index
    %c0_131 = arith.constant 0 : index
    %c0_132 = arith.constant 0 : index
    %333 = vector.load %arg2[%c2, %c0_131, %c0_132] : memref<5x128x512xf32, #tpu.memory_space<vmem>>, vector<1x128x512xf32>
    %334 = vector.shape_cast %333 : vector<1x128x512xf32> to vector<128x512xf32>
    %cst_133 = arith.constant dense<0.000000e+00> : vector<40x512xf32>
    %335 = tpu.matmul %332, %334, %cst_133 {dimension_numbers = #tpu.dot_dimension_numbers<[1], [0], [0], [1], [0, 0, 1, 1], [], []>} : vector<40x128xf32>, vector<128x512xf32>, vector<40x512xf32> -> vector<40x512xf32>
    %c2_134 = arith.constant 2 : index
    %c0_135 = arith.constant 0 : index
    %c0_136 = arith.constant 0 : index
    %336 = vector.load %arg4[%c2_134, %c0_135, %c0_136] : memref<5x1x512xf32, #tpu.memory_space<vmem>>, vector<1x1x512xf32>
    %337 = vector.shape_cast %336 : vector<1x1x512xf32> to vector<1x512xf32>
    %338 = vector.broadcast %337 : vector<1x512xf32> to vector<40x512xf32>
    %339 = arith.addf %335, %338 : vector<40x512xf32>
    %c0_137 = arith.constant 0 : index
    %c0_138 = arith.constant 0 : index
    %340 = vector.load %arg10[%c0_137, %c0_138] : memref<40x512xf32, #tpu.memory_space<vmem>>, vector<40x512xf32>
    tpu.vector_store %arg10[%c0_137, %c0_138], %339 {strides = array<i32>} : memref<40x512xf32, #tpu.memory_space<vmem>>, vector<40x512xf32>,
    %cst_139 = arith.constant 0.000000e+00 : f32
    %341 = vector.broadcast %cst_139 : f32 to vector<8x128xf32>
    %cst_140 = arith.constant 0.000000e+00 : f32
    %342 = vector.broadcast %cst_140 : f32 to vector<8x128xf32>
    %c0_141 = arith.constant 0 : index
    %c0_142 = arith.constant 0 : index
    %343 = vector.load %arg10[%c0_141, %c0_142] : memref<40x512xf32, #tpu.memory_space<vmem>>, vector<8x512xf32>
    %c2_143 = arith.constant 2 : index
    %c0_144 = arith.constant 0 : index
    %c0_145 = arith.constant 0 : index
    %344 = vector.load %arg3[%c2_143, %c0_144, %c0_145] : memref<5x128x512xf32, #tpu.memory_space<vmem>>, vector<1x128x512xf32>
    %345 = vector.shape_cast %344 : vector<1x128x512xf32> to vector<128x512xf32>
    %cst_146 = arith.constant dense<0.000000e+00> : vector<8x512xf32>
    %346 = tpu.matmul %341, %345, %cst_146 {dimension_numbers = #tpu.dot_dimension_numbers<[1], [0], [0], [1], [0, 0, 1, 1], [], []>} : vector<8x128xf32>, vector<128x512xf32>, vector<8x512xf32> -> vector<8x512xf32>
    %347 = arith.addf %343, %346 : vector<8x512xf32>
    %348 = vector.extract_strided_slice %347 {offsets = [0, 0], sizes = [8, 128], strides = [1, 1]} : vector<8x512xf32> to vector<8x128xf32>
    %349 = arith.negf %348 : vector<8x128xf32>
    %350 = math.exp %349 : vector<8x128xf32>
    %cst_147 = arith.constant 1.000000e+00 : f32
    %351 = vector.broadcast %cst_147 : f32 to vector<8x128xf32>
    %352 = arith.addf %351, %350 : vector<8x128xf32>
    %353 = arith.divf %351, %352 : vector<8x128xf32>
    %354 = vector.extract_strided_slice %347 {offsets = [0, 128], sizes = [8, 128], strides = [1, 1]} : vector<8x512xf32> to vector<8x128xf32>
    %355 = arith.negf %354 : vector<8x128xf32>
    %356 = math.exp %355 : vector<8x128xf32>
    %cst_148 = arith.constant 1.000000e+00 : f32
    %357 = vector.broadcast %cst_148 : f32 to vector<8x128xf32>
    %358 = arith.addf %357, %356 : vector<8x128xf32>
    %359 = arith.divf %357, %358 : vector<8x128xf32>
    %360 = vector.extract_strided_slice %347 {offsets = [0, 256], sizes = [8, 128], strides = [1, 1]} : vector<8x512xf32> to vector<8x128xf32>
    %361 = math.tanh %360 : vector<8x128xf32>
    %362 = vector.extract_strided_slice %347 {offsets = [0, 384], sizes = [8, 128], strides = [1, 1]} : vector<8x512xf32> to vector<8x128xf32>
    %363 = arith.negf %362 : vector<8x128xf32>
    %364 = math.exp %363 : vector<8x128xf32>
    %cst_149 = arith.constant 1.000000e+00 : f32
    %365 = vector.broadcast %cst_149 : f32 to vector<8x128xf32>
    %366 = arith.addf %365, %364 : vector<8x128xf32>
    %367 = arith.divf %365, %366 : vector<8x128xf32>
    %368 = arith.mulf %359, %342 : vector<8x128xf32>
    %369 = arith.mulf %353, %361 : vector<8x128xf32>
    %370 = arith.addf %368, %369 : vector<8x128xf32>
    %371 = math.tanh %370 : vector<8x128xf32>
    %372 = arith.mulf %367, %371 : vector<8x128xf32>
    %c0_150 = arith.constant 0 : index
    %c0_151 = arith.constant 0 : index
    %373 = vector.load %arg8[%c0_150, %c0_151] : memref<40x128xf32, #tpu.memory_space<vmem>>, vector<8x128xf32>
    tpu.vector_store %arg8[%c0_150, %c0_151], %372 {strides = array<i32>} : memref<40x128xf32, #tpu.memory_space<vmem>>, vector<8x128xf32>,
    %c8_152 = arith.constant 8 : index
    %c0_153 = arith.constant 0 : index
    %374 = vector.load %arg10[%c8_152, %c0_153] : memref<40x512xf32, #tpu.memory_space<vmem>>, vector<8x512xf32>
    %c2_154 = arith.constant 2 : index
    %c0_155 = arith.constant 0 : index
    %c0_156 = arith.constant 0 : index
    %375 = vector.load %arg3[%c2_154, %c0_155, %c0_156] : memref<5x128x512xf32, #tpu.memory_space<vmem>>, vector<1x128x512xf32>
    %376 = vector.shape_cast %375 : vector<1x128x512xf32> to vector<128x512xf32>
    %cst_157 = arith.constant dense<0.000000e+00> : vector<8x512xf32>
    %377 = tpu.matmul %372, %376, %cst_157 {dimension_numbers = #tpu.dot_dimension_numbers<[1], [0], [0], [1], [0, 0, 1, 1], [], []>} : vector<8x128xf32>, vector<128x512xf32>, vector<8x512xf32> -> vector<8x512xf32>
    %378 = arith.addf %374, %377 : vector<8x512xf32>
    %379 = vector.extract_strided_slice %378 {offsets = [0, 0], sizes = [8, 128], strides = [1, 1]} : vector<8x512xf32> to vector<8x128xf32>
    %380 = arith.negf %379 : vector<8x128xf32>
    %381 = math.exp %380 : vector<8x128xf32>
    %cst_158 = arith.constant 1.000000e+00 : f32
    %382 = vector.broadcast %cst_158 : f32 to vector<8x128xf32>
    %383 = arith.addf %382, %381 : vector<8x128xf32>
    %384 = arith.divf %382, %383 : vector<8x128xf32>
    %385 = vector.extract_strided_slice %378 {offsets = [0, 128], sizes = [8, 128], strides = [1, 1]} : vector<8x512xf32> to vector<8x128xf32>
    %386 = arith.negf %385 : vector<8x128xf32>
    %387 = math.exp %386 : vector<8x128xf32>
    %cst_159 = arith.constant 1.000000e+00 : f32
    %388 = vector.broadcast %cst_159 : f32 to vector<8x128xf32>
    %389 = arith.addf %388, %387 : vector<8x128xf32>
    %390 = arith.divf %388, %389 : vector<8x128xf32>
    %391 = vector.extract_strided_slice %378 {offsets = [0, 256], sizes = [8, 128], strides = [1, 1]} : vector<8x512xf32> to vector<8x128xf32>
    %392 = math.tanh %391 : vector<8x128xf32>
    %393 = vector.extract_strided_slice %378 {offsets = [0, 384], sizes = [8, 128], strides = [1, 1]} : vector<8x512xf32> to vector<8x128xf32>
    %394 = arith.negf %393 : vector<8x128xf32>
    %395 = math.exp %394 : vector<8x128xf32>
    %cst_160 = arith.constant 1.000000e+00 : f32
    %396 = vector.broadcast %cst_160 : f32 to vector<8x128xf32>
    %397 = arith.addf %396, %395 : vector<8x128xf32>
    %398 = arith.divf %396, %397 : vector<8x128xf32>
    %399 = arith.mulf %390, %370 : vector<8x128xf32>
    %400 = arith.mulf %384, %392 : vector<8x128xf32>
    %401 = arith.addf %399, %400 : vector<8x128xf32>
    %402 = math.tanh %401 : vector<8x128xf32>
    %403 = arith.mulf %398, %402 : vector<8x128xf32>
    %c8_161 = arith.constant 8 : index
    %c0_162 = arith.constant 0 : index
    %404 = vector.load %arg8[%c8_161, %c0_162] : memref<40x128xf32, #tpu.memory_space<vmem>>, vector<8x128xf32>
    tpu.vector_store %arg8[%c8_161, %c0_162], %403 {strides = array<i32>} : memref<40x128xf32, #tpu.memory_space<vmem>>, vector<8x128xf32>,
    %c16_163 = arith.constant 16 : index
    %c0_164 = arith.constant 0 : index
    %405 = vector.load %arg10[%c16_163, %c0_164] : memref<40x512xf32, #tpu.memory_space<vmem>>, vector<8x512xf32>
    %c2_165 = arith.constant 2 : index
    %c0_166 = arith.constant 0 : index
    %c0_167 = arith.constant 0 : index
    %406 = vector.load %arg3[%c2_165, %c0_166, %c0_167] : memref<5x128x512xf32, #tpu.memory_space<vmem>>, vector<1x128x512xf32>
    %407 = vector.shape_cast %406 : vector<1x128x512xf32> to vector<128x512xf32>
    %cst_168 = arith.constant dense<0.000000e+00> : vector<8x512xf32>
    %408 = tpu.matmul %403, %407, %cst_168 {dimension_numbers = #tpu.dot_dimension_numbers<[1], [0], [0], [1], [0, 0, 1, 1], [], []>} : vector<8x128xf32>, vector<128x512xf32>, vector<8x512xf32> -> vector<8x512xf32>
    %409 = arith.addf %405, %408 : vector<8x512xf32>
    %410 = vector.extract_strided_slice %409 {offsets = [0, 0], sizes = [8, 128], strides = [1, 1]} : vector<8x512xf32> to vector<8x128xf32>
    %411 = arith.negf %410 : vector<8x128xf32>
    %412 = math.exp %411 : vector<8x128xf32>
    %cst_169 = arith.constant 1.000000e+00 : f32
    %413 = vector.broadcast %cst_169 : f32 to vector<8x128xf32>
    %414 = arith.addf %413, %412 : vector<8x128xf32>
    %415 = arith.divf %413, %414 : vector<8x128xf32>
    %416 = vector.extract_strided_slice %409 {offsets = [0, 128], sizes = [8, 128], strides = [1, 1]} : vector<8x512xf32> to vector<8x128xf32>
    %417 = arith.negf %416 : vector<8x128xf32>
    %418 = math.exp %417 : vector<8x128xf32>
    %cst_170 = arith.constant 1.000000e+00 : f32
    %419 = vector.broadcast %cst_170 : f32 to vector<8x128xf32>
    %420 = arith.addf %419, %418 : vector<8x128xf32>
    %421 = arith.divf %419, %420 : vector<8x128xf32>
    %422 = vector.extract_strided_slice %409 {offsets = [0, 256], sizes = [8, 128], strides = [1, 1]} : vector<8x512xf32> to vector<8x128xf32>
    %423 = math.tanh %422 : vector<8x128xf32>
    %424 = vector.extract_strided_slice %409 {offsets = [0, 384], sizes = [8, 128], strides = [1, 1]} : vector<8x512xf32> to vector<8x128xf32>
    %425 = arith.negf %424 : vector<8x128xf32>
    %426 = math.exp %425 : vector<8x128xf32>
    %cst_171 = arith.constant 1.000000e+00 : f32
    %427 = vector.broadcast %cst_171 : f32 to vector<8x128xf32>
    %428 = arith.addf %427, %426 : vector<8x128xf32>
    %429 = arith.divf %427, %428 : vector<8x128xf32>
    %430 = arith.mulf %421, %401 : vector<8x128xf32>
    %431 = arith.mulf %415, %423 : vector<8x128xf32>
    %432 = arith.addf %430, %431 : vector<8x128xf32>
    %433 = math.tanh %432 : vector<8x128xf32>
    %434 = arith.mulf %429, %433 : vector<8x128xf32>
    %c16_172 = arith.constant 16 : index
    %c0_173 = arith.constant 0 : index
    %435 = vector.load %arg8[%c16_172, %c0_173] : memref<40x128xf32, #tpu.memory_space<vmem>>, vector<8x128xf32>
    tpu.vector_store %arg8[%c16_172, %c0_173], %434 {strides = array<i32>} : memref<40x128xf32, #tpu.memory_space<vmem>>, vector<8x128xf32>,
    %c24_174 = arith.constant 24 : index
    %c0_175 = arith.constant 0 : index
    %436 = vector.load %arg10[%c24_174, %c0_175] : memref<40x512xf32, #tpu.memory_space<vmem>>, vector<8x512xf32>
    %c2_176 = arith.constant 2 : index
    %c0_177 = arith.constant 0 : index
    %c0_178 = arith.constant 0 : index
    %437 = vector.load %arg3[%c2_176, %c0_177, %c0_178] : memref<5x128x512xf32, #tpu.memory_space<vmem>>, vector<1x128x512xf32>
    %438 = vector.shape_cast %437 : vector<1x128x512xf32> to vector<128x512xf32>
    %cst_179 = arith.constant dense<0.000000e+00> : vector<8x512xf32>
    %439 = tpu.matmul %434, %438, %cst_179 {dimension_numbers = #tpu.dot_dimension_numbers<[1], [0], [0], [1], [0, 0, 1, 1], [], []>} : vector<8x128xf32>, vector<128x512xf32>, vector<8x512xf32> -> vector<8x512xf32>
    %440 = arith.addf %436, %439 : vector<8x512xf32>
    %441 = vector.extract_strided_slice %440 {offsets = [0, 0], sizes = [8, 128], strides = [1, 1]} : vector<8x512xf32> to vector<8x128xf32>
    %442 = arith.negf %441 : vector<8x128xf32>
    %443 = math.exp %442 : vector<8x128xf32>
    %cst_180 = arith.constant 1.000000e+00 : f32
    %444 = vector.broadcast %cst_180 : f32 to vector<8x128xf32>
    %445 = arith.addf %444, %443 : vector<8x128xf32>
    %446 = arith.divf %444, %445 : vector<8x128xf32>
    %447 = vector.extract_strided_slice %440 {offsets = [0, 128], sizes = [8, 128], strides = [1, 1]} : vector<8x512xf32> to vector<8x128xf32>
    %448 = arith.negf %447 : vector<8x128xf32>
    %449 = math.exp %448 : vector<8x128xf32>
    %cst_181 = arith.constant 1.000000e+00 : f32
    %450 = vector.broadcast %cst_181 : f32 to vector<8x128xf32>
    %451 = arith.addf %450, %449 : vector<8x128xf32>
    %452 = arith.divf %450, %451 : vector<8x128xf32>
    %453 = vector.extract_strided_slice %440 {offsets = [0, 256], sizes = [8, 128], strides = [1, 1]} : vector<8x512xf32> to vector<8x128xf32>
    %454 = math.tanh %453 : vector<8x128xf32>
    %455 = vector.extract_strided_slice %440 {offsets = [0, 384], sizes = [8, 128], strides = [1, 1]} : vector<8x512xf32> to vector<8x128xf32>
    %456 = arith.negf %455 : vector<8x128xf32>
    %457 = math.exp %456 : vector<8x128xf32>
    %cst_182 = arith.constant 1.000000e+00 : f32
    %458 = vector.broadcast %cst_182 : f32 to vector<8x128xf32>
    %459 = arith.addf %458, %457 : vector<8x128xf32>
    %460 = arith.divf %458, %459 : vector<8x128xf32>
    %461 = arith.mulf %452, %432 : vector<8x128xf32>
    %462 = arith.mulf %446, %454 : vector<8x128xf32>
    %463 = arith.addf %461, %462 : vector<8x128xf32>
    %464 = math.tanh %463 : vector<8x128xf32>
    %465 = arith.mulf %460, %464 : vector<8x128xf32>
    %c24_183 = arith.constant 24 : index
    %c0_184 = arith.constant 0 : index
    %466 = vector.load %arg8[%c24_183, %c0_184] : memref<40x128xf32, #tpu.memory_space<vmem>>, vector<8x128xf32>
    tpu.vector_store %arg8[%c24_183, %c0_184], %465 {strides = array<i32>} : memref<40x128xf32, #tpu.memory_space<vmem>>, vector<8x128xf32>,
    %c32_185 = arith.constant 32 : index
    %c0_186 = arith.constant 0 : index
    %467 = vector.load %arg10[%c32_185, %c0_186] : memref<40x512xf32, #tpu.memory_space<vmem>>, vector<8x512xf32>
    %c2_187 = arith.constant 2 : index
    %c0_188 = arith.constant 0 : index
    %c0_189 = arith.constant 0 : index
    %468 = vector.load %arg3[%c2_187, %c0_188, %c0_189] : memref<5x128x512xf32, #tpu.memory_space<vmem>>, vector<1x128x512xf32>
    %469 = vector.shape_cast %468 : vector<1x128x512xf32> to vector<128x512xf32>
    %cst_190 = arith.constant dense<0.000000e+00> : vector<8x512xf32>
    %470 = tpu.matmul %465, %469, %cst_190 {dimension_numbers = #tpu.dot_dimension_numbers<[1], [0], [0], [1], [0, 0, 1, 1], [], []>} : vector<8x128xf32>, vector<128x512xf32>, vector<8x512xf32> -> vector<8x512xf32>
    %471 = arith.addf %467, %470 : vector<8x512xf32>
    %472 = vector.extract_strided_slice %471 {offsets = [0, 0], sizes = [8, 128], strides = [1, 1]} : vector<8x512xf32> to vector<8x128xf32>
    %473 = arith.negf %472 : vector<8x128xf32>
    %474 = math.exp %473 : vector<8x128xf32>
    %cst_191 = arith.constant 1.000000e+00 : f32
    %475 = vector.broadcast %cst_191 : f32 to vector<8x128xf32>
    %476 = arith.addf %475, %474 : vector<8x128xf32>
    %477 = arith.divf %475, %476 : vector<8x128xf32>
    %478 = vector.extract_strided_slice %471 {offsets = [0, 128], sizes = [8, 128], strides = [1, 1]} : vector<8x512xf32> to vector<8x128xf32>
    %479 = arith.negf %478 : vector<8x128xf32>
    %480 = math.exp %479 : vector<8x128xf32>
    %cst_192 = arith.constant 1.000000e+00 : f32
    %481 = vector.broadcast %cst_192 : f32 to vector<8x128xf32>
    %482 = arith.addf %481, %480 : vector<8x128xf32>
    %483 = arith.divf %481, %482 : vector<8x128xf32>
    %484 = vector.extract_strided_slice %471 {offsets = [0, 256], sizes = [8, 128], strides = [1, 1]} : vector<8x512xf32> to vector<8x128xf32>
    %485 = math.tanh %484 : vector<8x128xf32>
    %486 = vector.extract_strided_slice %471 {offsets = [0, 384], sizes = [8, 128], strides = [1, 1]} : vector<8x512xf32> to vector<8x128xf32>
    %487 = arith.negf %486 : vector<8x128xf32>
    %488 = math.exp %487 : vector<8x128xf32>
    %cst_193 = arith.constant 1.000000e+00 : f32
    %489 = vector.broadcast %cst_193 : f32 to vector<8x128xf32>
    %490 = arith.addf %489, %488 : vector<8x128xf32>
    %491 = arith.divf %489, %490 : vector<8x128xf32>
    %492 = arith.mulf %483, %463 : vector<8x128xf32>
    %493 = arith.mulf %477, %485 : vector<8x128xf32>
    %494 = arith.addf %492, %493 : vector<8x128xf32>
    %495 = math.tanh %494 : vector<8x128xf32>
    %496 = arith.mulf %491, %495 : vector<8x128xf32>
    %c32_194 = arith.constant 32 : index
    %c0_195 = arith.constant 0 : index
    %497 = vector.load %arg8[%c32_194, %c0_195] : memref<40x128xf32, #tpu.memory_space<vmem>>, vector<8x128xf32>
    tpu.vector_store %arg8[%c32_194, %c0_195], %496 {strides = array<i32>} : memref<40x128xf32, #tpu.memory_space<vmem>>, vector<8x128xf32>,
    %c0_196 = arith.constant 0 : index
    %c0_197 = arith.constant 0 : index
    %498 = vector.load %arg8[%c0_196, %c0_197] : memref<40x128xf32, #tpu.memory_space<vmem>>, vector<40x128xf32>
    %c3 = arith.constant 3 : index
    %c0_198 = arith.constant 0 : index
    %c0_199 = arith.constant 0 : index
    %499 = vector.load %arg2[%c3, %c0_198, %c0_199] : memref<5x128x512xf32, #tpu.memory_space<vmem>>, vector<1x128x512xf32>
    %500 = vector.shape_cast %499 : vector<1x128x512xf32> to vector<128x512xf32>
    %cst_200 = arith.constant dense<0.000000e+00> : vector<40x512xf32>
    %501 = tpu.matmul %498, %500, %cst_200 {dimension_numbers = #tpu.dot_dimension_numbers<[1], [0], [0], [1], [0, 0, 1, 1], [], []>} : vector<40x128xf32>, vector<128x512xf32>, vector<40x512xf32> -> vector<40x512xf32>
    %c3_201 = arith.constant 3 : index
    %c0_202 = arith.constant 0 : index
    %c0_203 = arith.constant 0 : index
    %502 = vector.load %arg4[%c3_201, %c0_202, %c0_203] : memref<5x1x512xf32, #tpu.memory_space<vmem>>, vector<1x1x512xf32>
    %503 = vector.shape_cast %502 : vector<1x1x512xf32> to vector<1x512xf32>
    %504 = vector.broadcast %503 : vector<1x512xf32> to vector<40x512xf32>
    %505 = arith.addf %501, %504 : vector<40x512xf32>
    %c0_204 = arith.constant 0 : index
    %c0_205 = arith.constant 0 : index
    %506 = vector.load %arg10[%c0_204, %c0_205] : memref<40x512xf32, #tpu.memory_space<vmem>>, vector<40x512xf32>
    tpu.vector_store %arg10[%c0_204, %c0_205], %505 {strides = array<i32>} : memref<40x512xf32, #tpu.memory_space<vmem>>, vector<40x512xf32>,
    %cst_206 = arith.constant 0.000000e+00 : f32
    %507 = vector.broadcast %cst_206 : f32 to vector<8x128xf32>
    %cst_207 = arith.constant 0.000000e+00 : f32
    %508 = vector.broadcast %cst_207 : f32 to vector<8x128xf32>
    %c0_208 = arith.constant 0 : index
    %c0_209 = arith.constant 0 : index
    %509 = vector.load %arg10[%c0_208, %c0_209] : memref<40x512xf32, #tpu.memory_space<vmem>>, vector<8x512xf32>
    %c3_210 = arith.constant 3 : index
    %c0_211 = arith.constant 0 : index
    %c0_212 = arith.constant 0 : index
    %510 = vector.load %arg3[%c3_210, %c0_211, %c0_212] : memref<5x128x512xf32, #tpu.memory_space<vmem>>, vector<1x128x512xf32>
    %511 = vector.shape_cast %510 : vector<1x128x512xf32> to vector<128x512xf32>
    %cst_213 = arith.constant dense<0.000000e+00> : vector<8x512xf32>
    %512 = tpu.matmul %507, %511, %cst_213 {dimension_numbers = #tpu.dot_dimension_numbers<[1], [0], [0], [1], [0, 0, 1, 1], [], []>} : vector<8x128xf32>, vector<128x512xf32>, vector<8x512xf32> -> vector<8x512xf32>
    %513 = arith.addf %509, %512 : vector<8x512xf32>
    %514 = vector.extract_strided_slice %513 {offsets = [0, 0], sizes = [8, 128], strides = [1, 1]} : vector<8x512xf32> to vector<8x128xf32>
    %515 = arith.negf %514 : vector<8x128xf32>
    %516 = math.exp %515 : vector<8x128xf32>
    %cst_214 = arith.constant 1.000000e+00 : f32
    %517 = vector.broadcast %cst_214 : f32 to vector<8x128xf32>
    %518 = arith.addf %517, %516 : vector<8x128xf32>
    %519 = arith.divf %517, %518 : vector<8x128xf32>
    %520 = vector.extract_strided_slice %513 {offsets = [0, 128], sizes = [8, 128], strides = [1, 1]} : vector<8x512xf32> to vector<8x128xf32>
    %521 = arith.negf %520 : vector<8x128xf32>
    %522 = math.exp %521 : vector<8x128xf32>
    %cst_215 = arith.constant 1.000000e+00 : f32
    %523 = vector.broadcast %cst_215 : f32 to vector<8x128xf32>
    %524 = arith.addf %523, %522 : vector<8x128xf32>
    %525 = arith.divf %523, %524 : vector<8x128xf32>
    %526 = vector.extract_strided_slice %513 {offsets = [0, 256], sizes = [8, 128], strides = [1, 1]} : vector<8x512xf32> to vector<8x128xf32>
    %527 = math.tanh %526 : vector<8x128xf32>
    %528 = vector.extract_strided_slice %513 {offsets = [0, 384], sizes = [8, 128], strides = [1, 1]} : vector<8x512xf32> to vector<8x128xf32>
    %529 = arith.negf %528 : vector<8x128xf32>
    %530 = math.exp %529 : vector<8x128xf32>
    %cst_216 = arith.constant 1.000000e+00 : f32
    %531 = vector.broadcast %cst_216 : f32 to vector<8x128xf32>
    %532 = arith.addf %531, %530 : vector<8x128xf32>
    %533 = arith.divf %531, %532 : vector<8x128xf32>
    %534 = arith.mulf %525, %508 : vector<8x128xf32>
    %535 = arith.mulf %519, %527 : vector<8x128xf32>
    %536 = arith.addf %534, %535 : vector<8x128xf32>
    %537 = math.tanh %536 : vector<8x128xf32>
    %538 = arith.mulf %533, %537 : vector<8x128xf32>
    %c0_217 = arith.constant 0 : index
    %c0_218 = arith.constant 0 : index
    %539 = vector.load %arg9[%c0_217, %c0_218] : memref<40x128xf32, #tpu.memory_space<vmem>>, vector<8x128xf32>
    tpu.vector_store %arg9[%c0_217, %c0_218], %538 {strides = array<i32>} : memref<40x128xf32, #tpu.memory_space<vmem>>, vector<8x128xf32>,
    %c8_219 = arith.constant 8 : index
    %c0_220 = arith.constant 0 : index
    %540 = vector.load %arg10[%c8_219, %c0_220] : memref<40x512xf32, #tpu.memory_space<vmem>>, vector<8x512xf32>
    %c3_221 = arith.constant 3 : index
    %c0_222 = arith.constant 0 : index
    %c0_223 = arith.constant 0 : index
    %541 = vector.load %arg3[%c3_221, %c0_222, %c0_223] : memref<5x128x512xf32, #tpu.memory_space<vmem>>, vector<1x128x512xf32>
    %542 = vector.shape_cast %541 : vector<1x128x512xf32> to vector<128x512xf32>
    %cst_224 = arith.constant dense<0.000000e+00> : vector<8x512xf32>
    %543 = tpu.matmul %538, %542, %cst_224 {dimension_numbers = #tpu.dot_dimension_numbers<[1], [0], [0], [1], [0, 0, 1, 1], [], []>} : vector<8x128xf32>, vector<128x512xf32>, vector<8x512xf32> -> vector<8x512xf32>
    %544 = arith.addf %540, %543 : vector<8x512xf32>
    %545 = vector.extract_strided_slice %544 {offsets = [0, 0], sizes = [8, 128], strides = [1, 1]} : vector<8x512xf32> to vector<8x128xf32>
    %546 = arith.negf %545 : vector<8x128xf32>
    %547 = math.exp %546 : vector<8x128xf32>
    %cst_225 = arith.constant 1.000000e+00 : f32
    %548 = vector.broadcast %cst_225 : f32 to vector<8x128xf32>
    %549 = arith.addf %548, %547 : vector<8x128xf32>
    %550 = arith.divf %548, %549 : vector<8x128xf32>
    %551 = vector.extract_strided_slice %544 {offsets = [0, 128], sizes = [8, 128], strides = [1, 1]} : vector<8x512xf32> to vector<8x128xf32>
    %552 = arith.negf %551 : vector<8x128xf32>
    %553 = math.exp %552 : vector<8x128xf32>
    %cst_226 = arith.constant 1.000000e+00 : f32
    %554 = vector.broadcast %cst_226 : f32 to vector<8x128xf32>
    %555 = arith.addf %554, %553 : vector<8x128xf32>
    %556 = arith.divf %554, %555 : vector<8x128xf32>
    %557 = vector.extract_strided_slice %544 {offsets = [0, 256], sizes = [8, 128], strides = [1, 1]} : vector<8x512xf32> to vector<8x128xf32>
    %558 = math.tanh %557 : vector<8x128xf32>
    %559 = vector.extract_strided_slice %544 {offsets = [0, 384], sizes = [8, 128], strides = [1, 1]} : vector<8x512xf32> to vector<8x128xf32>
    %560 = arith.negf %559 : vector<8x128xf32>
    %561 = math.exp %560 : vector<8x128xf32>
    %cst_227 = arith.constant 1.000000e+00 : f32
    %562 = vector.broadcast %cst_227 : f32 to vector<8x128xf32>
    %563 = arith.addf %562, %561 : vector<8x128xf32>
    %564 = arith.divf %562, %563 : vector<8x128xf32>
    %565 = arith.mulf %556, %536 : vector<8x128xf32>
    %566 = arith.mulf %550, %558 : vector<8x128xf32>
    %567 = arith.addf %565, %566 : vector<8x128xf32>
    %568 = math.tanh %567 : vector<8x128xf32>
    %569 = arith.mulf %564, %568 : vector<8x128xf32>
    %c8_228 = arith.constant 8 : index
    %c0_229 = arith.constant 0 : index
    %570 = vector.load %arg9[%c8_228, %c0_229] : memref<40x128xf32, #tpu.memory_space<vmem>>, vector<8x128xf32>
    tpu.vector_store %arg9[%c8_228, %c0_229], %569 {strides = array<i32>} : memref<40x128xf32, #tpu.memory_space<vmem>>, vector<8x128xf32>,
    %c16_230 = arith.constant 16 : index
    %c0_231 = arith.constant 0 : index
    %571 = vector.load %arg10[%c16_230, %c0_231] : memref<40x512xf32, #tpu.memory_space<vmem>>, vector<8x512xf32>
    %c3_232 = arith.constant 3 : index
    %c0_233 = arith.constant 0 : index
    %c0_234 = arith.constant 0 : index
    %572 = vector.load %arg3[%c3_232, %c0_233, %c0_234] : memref<5x128x512xf32, #tpu.memory_space<vmem>>, vector<1x128x512xf32>
    %573 = vector.shape_cast %572 : vector<1x128x512xf32> to vector<128x512xf32>
    %cst_235 = arith.constant dense<0.000000e+00> : vector<8x512xf32>
    %574 = tpu.matmul %569, %573, %cst_235 {dimension_numbers = #tpu.dot_dimension_numbers<[1], [0], [0], [1], [0, 0, 1, 1], [], []>} : vector<8x128xf32>, vector<128x512xf32>, vector<8x512xf32> -> vector<8x512xf32>
    %575 = arith.addf %571, %574 : vector<8x512xf32>
    %576 = vector.extract_strided_slice %575 {offsets = [0, 0], sizes = [8, 128], strides = [1, 1]} : vector<8x512xf32> to vector<8x128xf32>
    %577 = arith.negf %576 : vector<8x128xf32>
    %578 = math.exp %577 : vector<8x128xf32>
    %cst_236 = arith.constant 1.000000e+00 : f32
    %579 = vector.broadcast %cst_236 : f32 to vector<8x128xf32>
    %580 = arith.addf %579, %578 : vector<8x128xf32>
    %581 = arith.divf %579, %580 : vector<8x128xf32>
    %582 = vector.extract_strided_slice %575 {offsets = [0, 128], sizes = [8, 128], strides = [1, 1]} : vector<8x512xf32> to vector<8x128xf32>
    %583 = arith.negf %582 : vector<8x128xf32>
    %584 = math.exp %583 : vector<8x128xf32>
    %cst_237 = arith.constant 1.000000e+00 : f32
    %585 = vector.broadcast %cst_237 : f32 to vector<8x128xf32>
    %586 = arith.addf %585, %584 : vector<8x128xf32>
    %587 = arith.divf %585, %586 : vector<8x128xf32>
    %588 = vector.extract_strided_slice %575 {offsets = [0, 256], sizes = [8, 128], strides = [1, 1]} : vector<8x512xf32> to vector<8x128xf32>
    %589 = math.tanh %588 : vector<8x128xf32>
    %590 = vector.extract_strided_slice %575 {offsets = [0, 384], sizes = [8, 128], strides = [1, 1]} : vector<8x512xf32> to vector<8x128xf32>
    %591 = arith.negf %590 : vector<8x128xf32>
    %592 = math.exp %591 : vector<8x128xf32>
    %cst_238 = arith.constant 1.000000e+00 : f32
    %593 = vector.broadcast %cst_238 : f32 to vector<8x128xf32>
    %594 = arith.addf %593, %592 : vector<8x128xf32>
    %595 = arith.divf %593, %594 : vector<8x128xf32>
    %596 = arith.mulf %587, %567 : vector<8x128xf32>
    %597 = arith.mulf %581, %589 : vector<8x128xf32>
    %598 = arith.addf %596, %597 : vector<8x128xf32>
    %599 = math.tanh %598 : vector<8x128xf32>
    %600 = arith.mulf %595, %599 : vector<8x128xf32>
    %c16_239 = arith.constant 16 : index
    %c0_240 = arith.constant 0 : index
    %601 = vector.load %arg9[%c16_239, %c0_240] : memref<40x128xf32, #tpu.memory_space<vmem>>, vector<8x128xf32>
    tpu.vector_store %arg9[%c16_239, %c0_240], %600 {strides = array<i32>} : memref<40x128xf32, #tpu.memory_space<vmem>>, vector<8x128xf32>,
    %c24_241 = arith.constant 24 : index
    %c0_242 = arith.constant 0 : index
    %602 = vector.load %arg10[%c24_241, %c0_242] : memref<40x512xf32, #tpu.memory_space<vmem>>, vector<8x512xf32>
    %c3_243 = arith.constant 3 : index
    %c0_244 = arith.constant 0 : index
    %c0_245 = arith.constant 0 : index
    %603 = vector.load %arg3[%c3_243, %c0_244, %c0_245] : memref<5x128x512xf32, #tpu.memory_space<vmem>>, vector<1x128x512xf32>
    %604 = vector.shape_cast %603 : vector<1x128x512xf32> to vector<128x512xf32>
    %cst_246 = arith.constant dense<0.000000e+00> : vector<8x512xf32>
    %605 = tpu.matmul %600, %604, %cst_246 {dimension_numbers = #tpu.dot_dimension_numbers<[1], [0], [0], [1], [0, 0, 1, 1], [], []>} : vector<8x128xf32>, vector<128x512xf32>, vector<8x512xf32> -> vector<8x512xf32>
    %606 = arith.addf %602, %605 : vector<8x512xf32>
    %607 = vector.extract_strided_slice %606 {offsets = [0, 0], sizes = [8, 128], strides = [1, 1]} : vector<8x512xf32> to vector<8x128xf32>
    %608 = arith.negf %607 : vector<8x128xf32>
    %609 = math.exp %608 : vector<8x128xf32>
    %cst_247 = arith.constant 1.000000e+00 : f32
    %610 = vector.broadcast %cst_247 : f32 to vector<8x128xf32>
    %611 = arith.addf %610, %609 : vector<8x128xf32>
    %612 = arith.divf %610, %611 : vector<8x128xf32>
    %613 = vector.extract_strided_slice %606 {offsets = [0, 128], sizes = [8, 128], strides = [1, 1]} : vector<8x512xf32> to vector<8x128xf32>
    %614 = arith.negf %613 : vector<8x128xf32>
    %615 = math.exp %614 : vector<8x128xf32>
    %cst_248 = arith.constant 1.000000e+00 : f32
    %616 = vector.broadcast %cst_248 : f32 to vector<8x128xf32>
    %617 = arith.addf %616, %615 : vector<8x128xf32>
    %618 = arith.divf %616, %617 : vector<8x128xf32>
    %619 = vector.extract_strided_slice %606 {offsets = [0, 256], sizes = [8, 128], strides = [1, 1]} : vector<8x512xf32> to vector<8x128xf32>
    %620 = math.tanh %619 : vector<8x128xf32>
    %621 = vector.extract_strided_slice %606 {offsets = [0, 384], sizes = [8, 128], strides = [1, 1]} : vector<8x512xf32> to vector<8x128xf32>
    %622 = arith.negf %621 : vector<8x128xf32>
    %623 = math.exp %622 : vector<8x128xf32>
    %cst_249 = arith.constant 1.000000e+00 : f32
    %624 = vector.broadcast %cst_249 : f32 to vector<8x128xf32>
    %625 = arith.addf %624, %623 : vector<8x128xf32>
    %626 = arith.divf %624, %625 : vector<8x128xf32>
    %627 = arith.mulf %618, %598 : vector<8x128xf32>
    %628 = arith.mulf %612, %620 : vector<8x128xf32>
    %629 = arith.addf %627, %628 : vector<8x128xf32>
    %630 = math.tanh %629 : vector<8x128xf32>
    %631 = arith.mulf %626, %630 : vector<8x128xf32>
    %c24_250 = arith.constant 24 : index
    %c0_251 = arith.constant 0 : index
    %632 = vector.load %arg9[%c24_250, %c0_251] : memref<40x128xf32, #tpu.memory_space<vmem>>, vector<8x128xf32>
    tpu.vector_store %arg9[%c24_250, %c0_251], %631 {strides = array<i32>} : memref<40x128xf32, #tpu.memory_space<vmem>>, vector<8x128xf32>,
    %c32_252 = arith.constant 32 : index
    %c0_253 = arith.constant 0 : index
    %633 = vector.load %arg10[%c32_252, %c0_253] : memref<40x512xf32, #tpu.memory_space<vmem>>, vector<8x512xf32>
    %c3_254 = arith.constant 3 : index
    %c0_255 = arith.constant 0 : index
    %c0_256 = arith.constant 0 : index
    %634 = vector.load %arg3[%c3_254, %c0_255, %c0_256] : memref<5x128x512xf32, #tpu.memory_space<vmem>>, vector<1x128x512xf32>
    %635 = vector.shape_cast %634 : vector<1x128x512xf32> to vector<128x512xf32>
    %cst_257 = arith.constant dense<0.000000e+00> : vector<8x512xf32>
    %636 = tpu.matmul %631, %635, %cst_257 {dimension_numbers = #tpu.dot_dimension_numbers<[1], [0], [0], [1], [0, 0, 1, 1], [], []>} : vector<8x128xf32>, vector<128x512xf32>, vector<8x512xf32> -> vector<8x512xf32>
    %637 = arith.addf %633, %636 : vector<8x512xf32>
    %638 = vector.extract_strided_slice %637 {offsets = [0, 0], sizes = [8, 128], strides = [1, 1]} : vector<8x512xf32> to vector<8x128xf32>
    %639 = arith.negf %638 : vector<8x128xf32>
    %640 = math.exp %639 : vector<8x128xf32>
    %cst_258 = arith.constant 1.000000e+00 : f32
    %641 = vector.broadcast %cst_258 : f32 to vector<8x128xf32>
    %642 = arith.addf %641, %640 : vector<8x128xf32>
    %643 = arith.divf %641, %642 : vector<8x128xf32>
    %644 = vector.extract_strided_slice %637 {offsets = [0, 128], sizes = [8, 128], strides = [1, 1]} : vector<8x512xf32> to vector<8x128xf32>
    %645 = arith.negf %644 : vector<8x128xf32>
    %646 = math.exp %645 : vector<8x128xf32>
    %cst_259 = arith.constant 1.000000e+00 : f32
    %647 = vector.broadcast %cst_259 : f32 to vector<8x128xf32>
    %648 = arith.addf %647, %646 : vector<8x128xf32>
    %649 = arith.divf %647, %648 : vector<8x128xf32>
    %650 = vector.extract_strided_slice %637 {offsets = [0, 256], sizes = [8, 128], strides = [1, 1]} : vector<8x512xf32> to vector<8x128xf32>
    %651 = math.tanh %650 : vector<8x128xf32>
    %652 = vector.extract_strided_slice %637 {offsets = [0, 384], sizes = [8, 128], strides = [1, 1]} : vector<8x512xf32> to vector<8x128xf32>
    %653 = arith.negf %652 : vector<8x128xf32>
    %654 = math.exp %653 : vector<8x128xf32>
    %cst_260 = arith.constant 1.000000e+00 : f32
    %655 = vector.broadcast %cst_260 : f32 to vector<8x128xf32>
    %656 = arith.addf %655, %654 : vector<8x128xf32>
    %657 = arith.divf %655, %656 : vector<8x128xf32>
    %658 = arith.mulf %649, %629 : vector<8x128xf32>
    %659 = arith.mulf %643, %651 : vector<8x128xf32>
    %660 = arith.addf %658, %659 : vector<8x128xf32>
    %661 = math.tanh %660 : vector<8x128xf32>
    %662 = arith.mulf %657, %661 : vector<8x128xf32>
    %c32_261 = arith.constant 32 : index
    %c0_262 = arith.constant 0 : index
    %663 = vector.load %arg9[%c32_261, %c0_262] : memref<40x128xf32, #tpu.memory_space<vmem>>, vector<8x128xf32>
    tpu.vector_store %arg9[%c32_261, %c0_262], %662 {strides = array<i32>} : memref<40x128xf32, #tpu.memory_space<vmem>>, vector<8x128xf32>,
    %c0_263 = arith.constant 0 : index
    %c0_264 = arith.constant 0 : index
    %664 = vector.load %arg9[%c0_263, %c0_264] : memref<40x128xf32, #tpu.memory_space<vmem>>, vector<40x128xf32>
    %c4 = arith.constant 4 : index
    %c0_265 = arith.constant 0 : index
    %c0_266 = arith.constant 0 : index
    %665 = vector.load %arg2[%c4, %c0_265, %c0_266] : memref<5x128x512xf32, #tpu.memory_space<vmem>>, vector<1x128x512xf32>
    %666 = vector.shape_cast %665 : vector<1x128x512xf32> to vector<128x512xf32>
    %cst_267 = arith.constant dense<0.000000e+00> : vector<40x512xf32>
    %667 = tpu.matmul %664, %666, %cst_267 {dimension_numbers = #tpu.dot_dimension_numbers<[1], [0], [0], [1], [0, 0, 1, 1], [], []>} : vector<40x128xf32>, vector<128x512xf32>, vector<40x512xf32> -> vector<40x512xf32>
    %c4_268 = arith.constant 4 : index
    %c0_269 = arith.constant 0 : index
    %c0_270 = arith.constant 0 : index
    %668 = vector.load %arg4[%c4_268, %c0_269, %c0_270] : memref<5x1x512xf32, #tpu.memory_space<vmem>>, vector<1x1x512xf32>
    %669 = vector.shape_cast %668 : vector<1x1x512xf32> to vector<1x512xf32>
    %670 = vector.broadcast %669 : vector<1x512xf32> to vector<40x512xf32>
    %671 = arith.addf %667, %670 : vector<40x512xf32>
    %c0_271 = arith.constant 0 : index
    %c0_272 = arith.constant 0 : index
    %672 = vector.load %arg10[%c0_271, %c0_272] : memref<40x512xf32, #tpu.memory_space<vmem>>, vector<40x512xf32>
    tpu.vector_store %arg10[%c0_271, %c0_272], %671 {strides = array<i32>} : memref<40x512xf32, #tpu.memory_space<vmem>>, vector<40x512xf32>,
    %cst_273 = arith.constant 0.000000e+00 : f32
    %673 = vector.broadcast %cst_273 : f32 to vector<8x128xf32>
    %cst_274 = arith.constant 0.000000e+00 : f32
    %674 = vector.broadcast %cst_274 : f32 to vector<8x128xf32>
    %c0_275 = arith.constant 0 : index
    %c0_276 = arith.constant 0 : index
    %675 = vector.load %arg10[%c0_275, %c0_276] : memref<40x512xf32, #tpu.memory_space<vmem>>, vector<8x512xf32>
    %c4_277 = arith.constant 4 : index
    %c0_278 = arith.constant 0 : index
    %c0_279 = arith.constant 0 : index
    %676 = vector.load %arg3[%c4_277, %c0_278, %c0_279] : memref<5x128x512xf32, #tpu.memory_space<vmem>>, vector<1x128x512xf32>
    %677 = vector.shape_cast %676 : vector<1x128x512xf32> to vector<128x512xf32>
    %cst_280 = arith.constant dense<0.000000e+00> : vector<8x512xf32>
    %678 = tpu.matmul %673, %677, %cst_280 {dimension_numbers = #tpu.dot_dimension_numbers<[1], [0], [0], [1], [0, 0, 1, 1], [], []>} : vector<8x128xf32>, vector<128x512xf32>, vector<8x512xf32> -> vector<8x512xf32>
    %679 = arith.addf %675, %678 : vector<8x512xf32>
    %680 = vector.extract_strided_slice %679 {offsets = [0, 0], sizes = [8, 128], strides = [1, 1]} : vector<8x512xf32> to vector<8x128xf32>
    %681 = arith.negf %680 : vector<8x128xf32>
    %682 = math.exp %681 : vector<8x128xf32>
    %cst_281 = arith.constant 1.000000e+00 : f32
    %683 = vector.broadcast %cst_281 : f32 to vector<8x128xf32>
    %684 = arith.addf %683, %682 : vector<8x128xf32>
    %685 = arith.divf %683, %684 : vector<8x128xf32>
    %686 = vector.extract_strided_slice %679 {offsets = [0, 128], sizes = [8, 128], strides = [1, 1]} : vector<8x512xf32> to vector<8x128xf32>
    %687 = arith.negf %686 : vector<8x128xf32>
    %688 = math.exp %687 : vector<8x128xf32>
    %cst_282 = arith.constant 1.000000e+00 : f32
    %689 = vector.broadcast %cst_282 : f32 to vector<8x128xf32>
    %690 = arith.addf %689, %688 : vector<8x128xf32>
    %691 = arith.divf %689, %690 : vector<8x128xf32>
    %692 = vector.extract_strided_slice %679 {offsets = [0, 256], sizes = [8, 128], strides = [1, 1]} : vector<8x512xf32> to vector<8x128xf32>
    %693 = math.tanh %692 : vector<8x128xf32>
    %694 = vector.extract_strided_slice %679 {offsets = [0, 384], sizes = [8, 128], strides = [1, 1]} : vector<8x512xf32> to vector<8x128xf32>
    %695 = arith.negf %694 : vector<8x128xf32>
    %696 = math.exp %695 : vector<8x128xf32>
    %cst_283 = arith.constant 1.000000e+00 : f32
    %697 = vector.broadcast %cst_283 : f32 to vector<8x128xf32>
    %698 = arith.addf %697, %696 : vector<8x128xf32>
    %699 = arith.divf %697, %698 : vector<8x128xf32>
    %700 = arith.mulf %691, %674 : vector<8x128xf32>
    %701 = arith.mulf %685, %693 : vector<8x128xf32>
    %702 = arith.addf %700, %701 : vector<8x128xf32>
    %703 = math.tanh %702 : vector<8x128xf32>
    %704 = arith.mulf %699, %703 : vector<8x128xf32>
    %c8_284 = arith.constant 8 : index
    %c0_285 = arith.constant 0 : index
    %705 = vector.load %arg10[%c8_284, %c0_285] : memref<40x512xf32, #tpu.memory_space<vmem>>, vector<8x512xf32>
    %c4_286 = arith.constant 4 : index
    %c0_287 = arith.constant 0 : index
    %c0_288 = arith.constant 0 : index
    %706 = vector.load %arg3[%c4_286, %c0_287, %c0_288] : memref<5x128x512xf32, #tpu.memory_space<vmem>>, vector<1x128x512xf32>
    %707 = vector.shape_cast %706 : vector<1x128x512xf32> to vector<128x512xf32>
    %cst_289 = arith.constant dense<0.000000e+00> : vector<8x512xf32>
    %708 = tpu.matmul %704, %707, %cst_289 {dimension_numbers = #tpu.dot_dimension_numbers<[1], [0], [0], [1], [0, 0, 1, 1], [], []>} : vector<8x128xf32>, vector<128x512xf32>, vector<8x512xf32> -> vector<8x512xf32>
    %709 = arith.addf %705, %708 : vector<8x512xf32>
    %710 = vector.extract_strided_slice %709 {offsets = [0, 0], sizes = [8, 128], strides = [1, 1]} : vector<8x512xf32> to vector<8x128xf32>
    %711 = arith.negf %710 : vector<8x128xf32>
    %712 = math.exp %711 : vector<8x128xf32>
    %cst_290 = arith.constant 1.000000e+00 : f32
    %713 = vector.broadcast %cst_290 : f32 to vector<8x128xf32>
    %714 = arith.addf %713, %712 : vector<8x128xf32>
    %715 = arith.divf %713, %714 : vector<8x128xf32>
    %716 = vector.extract_strided_slice %709 {offsets = [0, 128], sizes = [8, 128], strides = [1, 1]} : vector<8x512xf32> to vector<8x128xf32>
    %717 = arith.negf %716 : vector<8x128xf32>
    %718 = math.exp %717 : vector<8x128xf32>
    %cst_291 = arith.constant 1.000000e+00 : f32
    %719 = vector.broadcast %cst_291 : f32 to vector<8x128xf32>
    %720 = arith.addf %719, %718 : vector<8x128xf32>
    %721 = arith.divf %719, %720 : vector<8x128xf32>
    %722 = vector.extract_strided_slice %709 {offsets = [0, 256], sizes = [8, 128], strides = [1, 1]} : vector<8x512xf32> to vector<8x128xf32>
    %723 = math.tanh %722 : vector<8x128xf32>
    %724 = vector.extract_strided_slice %709 {offsets = [0, 384], sizes = [8, 128], strides = [1, 1]} : vector<8x512xf32> to vector<8x128xf32>
    %725 = arith.negf %724 : vector<8x128xf32>
    %726 = math.exp %725 : vector<8x128xf32>
    %cst_292 = arith.constant 1.000000e+00 : f32
    %727 = vector.broadcast %cst_292 : f32 to vector<8x128xf32>
    %728 = arith.addf %727, %726 : vector<8x128xf32>
    %729 = arith.divf %727, %728 : vector<8x128xf32>
    %730 = arith.mulf %721, %702 : vector<8x128xf32>
    %731 = arith.mulf %715, %723 : vector<8x128xf32>
    %732 = arith.addf %730, %731 : vector<8x128xf32>
    %733 = math.tanh %732 : vector<8x128xf32>
    %734 = arith.mulf %729, %733 : vector<8x128xf32>
    %c16_293 = arith.constant 16 : index
    %c0_294 = arith.constant 0 : index
    %735 = vector.load %arg10[%c16_293, %c0_294] : memref<40x512xf32, #tpu.memory_space<vmem>>, vector<8x512xf32>
    %c4_295 = arith.constant 4 : index
    %c0_296 = arith.constant 0 : index
    %c0_297 = arith.constant 0 : index
    %736 = vector.load %arg3[%c4_295, %c0_296, %c0_297] : memref<5x128x512xf32, #tpu.memory_space<vmem>>, vector<1x128x512xf32>
    %737 = vector.shape_cast %736 : vector<1x128x512xf32> to vector<128x512xf32>
    %cst_298 = arith.constant dense<0.000000e+00> : vector<8x512xf32>
    %738 = tpu.matmul %734, %737, %cst_298 {dimension_numbers = #tpu.dot_dimension_numbers<[1], [0], [0], [1], [0, 0, 1, 1], [], []>} : vector<8x128xf32>, vector<128x512xf32>, vector<8x512xf32> -> vector<8x512xf32>
    %739 = arith.addf %735, %738 : vector<8x512xf32>
    %740 = vector.extract_strided_slice %739 {offsets = [0, 0], sizes = [8, 128], strides = [1, 1]} : vector<8x512xf32> to vector<8x128xf32>
    %741 = arith.negf %740 : vector<8x128xf32>
    %742 = math.exp %741 : vector<8x128xf32>
    %cst_299 = arith.constant 1.000000e+00 : f32
    %743 = vector.broadcast %cst_299 : f32 to vector<8x128xf32>
    %744 = arith.addf %743, %742 : vector<8x128xf32>
    %745 = arith.divf %743, %744 : vector<8x128xf32>
    %746 = vector.extract_strided_slice %739 {offsets = [0, 128], sizes = [8, 128], strides = [1, 1]} : vector<8x512xf32> to vector<8x128xf32>
    %747 = arith.negf %746 : vector<8x128xf32>
    %748 = math.exp %747 : vector<8x128xf32>
    %cst_300 = arith.constant 1.000000e+00 : f32
    %749 = vector.broadcast %cst_300 : f32 to vector<8x128xf32>
    %750 = arith.addf %749, %748 : vector<8x128xf32>
    %751 = arith.divf %749, %750 : vector<8x128xf32>
    %752 = vector.extract_strided_slice %739 {offsets = [0, 256], sizes = [8, 128], strides = [1, 1]} : vector<8x512xf32> to vector<8x128xf32>
    %753 = math.tanh %752 : vector<8x128xf32>
    %754 = vector.extract_strided_slice %739 {offsets = [0, 384], sizes = [8, 128], strides = [1, 1]} : vector<8x512xf32> to vector<8x128xf32>
    %755 = arith.negf %754 : vector<8x128xf32>
    %756 = math.exp %755 : vector<8x128xf32>
    %cst_301 = arith.constant 1.000000e+00 : f32
    %757 = vector.broadcast %cst_301 : f32 to vector<8x128xf32>
    %758 = arith.addf %757, %756 : vector<8x128xf32>
    %759 = arith.divf %757, %758 : vector<8x128xf32>
    %760 = arith.mulf %751, %732 : vector<8x128xf32>
    %761 = arith.mulf %745, %753 : vector<8x128xf32>
    %762 = arith.addf %760, %761 : vector<8x128xf32>
    %763 = math.tanh %762 : vector<8x128xf32>
    %764 = arith.mulf %759, %763 : vector<8x128xf32>
    %c24_302 = arith.constant 24 : index
    %c0_303 = arith.constant 0 : index
    %765 = vector.load %arg10[%c24_302, %c0_303] : memref<40x512xf32, #tpu.memory_space<vmem>>, vector<8x512xf32>
    %c4_304 = arith.constant 4 : index
    %c0_305 = arith.constant 0 : index
    %c0_306 = arith.constant 0 : index
    %766 = vector.load %arg3[%c4_304, %c0_305, %c0_306] : memref<5x128x512xf32, #tpu.memory_space<vmem>>, vector<1x128x512xf32>
    %767 = vector.shape_cast %766 : vector<1x128x512xf32> to vector<128x512xf32>
    %cst_307 = arith.constant dense<0.000000e+00> : vector<8x512xf32>
    %768 = tpu.matmul %764, %767, %cst_307 {dimension_numbers = #tpu.dot_dimension_numbers<[1], [0], [0], [1], [0, 0, 1, 1], [], []>} : vector<8x128xf32>, vector<128x512xf32>, vector<8x512xf32> -> vector<8x512xf32>
    %769 = arith.addf %765, %768 : vector<8x512xf32>
    %770 = vector.extract_strided_slice %769 {offsets = [0, 0], sizes = [8, 128], strides = [1, 1]} : vector<8x512xf32> to vector<8x128xf32>
    %771 = arith.negf %770 : vector<8x128xf32>
    %772 = math.exp %771 : vector<8x128xf32>
    %cst_308 = arith.constant 1.000000e+00 : f32
    %773 = vector.broadcast %cst_308 : f32 to vector<8x128xf32>
    %774 = arith.addf %773, %772 : vector<8x128xf32>
    %775 = arith.divf %773, %774 : vector<8x128xf32>
    %776 = vector.extract_strided_slice %769 {offsets = [0, 128], sizes = [8, 128], strides = [1, 1]} : vector<8x512xf32> to vector<8x128xf32>
    %777 = arith.negf %776 : vector<8x128xf32>
    %778 = math.exp %777 : vector<8x128xf32>
    %cst_309 = arith.constant 1.000000e+00 : f32
    %779 = vector.broadcast %cst_309 : f32 to vector<8x128xf32>
    %780 = arith.addf %779, %778 : vector<8x128xf32>
    %781 = arith.divf %779, %780 : vector<8x128xf32>
    %782 = vector.extract_strided_slice %769 {offsets = [0, 256], sizes = [8, 128], strides = [1, 1]} : vector<8x512xf32> to vector<8x128xf32>
    %783 = math.tanh %782 : vector<8x128xf32>
    %784 = vector.extract_strided_slice %769 {offsets = [0, 384], sizes = [8, 128], strides = [1, 1]} : vector<8x512xf32> to vector<8x128xf32>
    %785 = arith.negf %784 : vector<8x128xf32>
    %786 = math.exp %785 : vector<8x128xf32>
    %cst_310 = arith.constant 1.000000e+00 : f32
    %787 = vector.broadcast %cst_310 : f32 to vector<8x128xf32>
    %788 = arith.addf %787, %786 : vector<8x128xf32>
    %789 = arith.divf %787, %788 : vector<8x128xf32>
    %790 = arith.mulf %781, %762 : vector<8x128xf32>
    %791 = arith.mulf %775, %783 : vector<8x128xf32>
    %792 = arith.addf %790, %791 : vector<8x128xf32>
    %793 = math.tanh %792 : vector<8x128xf32>
    %794 = arith.mulf %789, %793 : vector<8x128xf32>
    %c32_311 = arith.constant 32 : index
    %c0_312 = arith.constant 0 : index
    %795 = vector.load %arg10[%c32_311, %c0_312] : memref<40x512xf32, #tpu.memory_space<vmem>>, vector<8x512xf32>
    %c4_313 = arith.constant 4 : index
    %c0_314 = arith.constant 0 : index
    %c0_315 = arith.constant 0 : index
    %796 = vector.load %arg3[%c4_313, %c0_314, %c0_315] : memref<5x128x512xf32, #tpu.memory_space<vmem>>, vector<1x128x512xf32>
    %797 = vector.shape_cast %796 : vector<1x128x512xf32> to vector<128x512xf32>
    %cst_316 = arith.constant dense<0.000000e+00> : vector<8x512xf32>
    %798 = tpu.matmul %794, %797, %cst_316 {dimension_numbers = #tpu.dot_dimension_numbers<[1], [0], [0], [1], [0, 0, 1, 1], [], []>} : vector<8x128xf32>, vector<128x512xf32>, vector<8x512xf32> -> vector<8x512xf32>
    %799 = arith.addf %795, %798 : vector<8x512xf32>
    %800 = vector.extract_strided_slice %799 {offsets = [0, 0], sizes = [8, 128], strides = [1, 1]} : vector<8x512xf32> to vector<8x128xf32>
    %801 = arith.negf %800 : vector<8x128xf32>
    %802 = math.exp %801 : vector<8x128xf32>
    %cst_317 = arith.constant 1.000000e+00 : f32
    %803 = vector.broadcast %cst_317 : f32 to vector<8x128xf32>
    %804 = arith.addf %803, %802 : vector<8x128xf32>
    %805 = arith.divf %803, %804 : vector<8x128xf32>
    %806 = vector.extract_strided_slice %799 {offsets = [0, 128], sizes = [8, 128], strides = [1, 1]} : vector<8x512xf32> to vector<8x128xf32>
    %807 = arith.negf %806 : vector<8x128xf32>
    %808 = math.exp %807 : vector<8x128xf32>
    %cst_318 = arith.constant 1.000000e+00 : f32
    %809 = vector.broadcast %cst_318 : f32 to vector<8x128xf32>
    %810 = arith.addf %809, %808 : vector<8x128xf32>
    %811 = arith.divf %809, %810 : vector<8x128xf32>
    %812 = vector.extract_strided_slice %799 {offsets = [0, 256], sizes = [8, 128], strides = [1, 1]} : vector<8x512xf32> to vector<8x128xf32>
    %813 = math.tanh %812 : vector<8x128xf32>
    %814 = vector.extract_strided_slice %799 {offsets = [0, 384], sizes = [8, 128], strides = [1, 1]} : vector<8x512xf32> to vector<8x128xf32>
    %815 = arith.negf %814 : vector<8x128xf32>
    %816 = math.exp %815 : vector<8x128xf32>
    %cst_319 = arith.constant 1.000000e+00 : f32
    %817 = vector.broadcast %cst_319 : f32 to vector<8x128xf32>
    %818 = arith.addf %817, %816 : vector<8x128xf32>
    %819 = arith.divf %817, %818 : vector<8x128xf32>
    %820 = arith.mulf %811, %792 : vector<8x128xf32>
    %821 = arith.mulf %805, %813 : vector<8x128xf32>
    %822 = arith.addf %820, %821 : vector<8x128xf32>
    %823 = math.tanh %822 : vector<8x128xf32>
    %824 = arith.mulf %819, %823 : vector<8x128xf32>
    %c0_320 = arith.constant 0 : index
    %c0_321 = arith.constant 0 : index
    %825 = vector.load %arg5[%c0_320, %c0_321] : memref<128x128xf32, #tpu.memory_space<vmem>>, vector<128x128xf32>
    %cst_322 = arith.constant dense<0.000000e+00> : vector<8x128xf32>
    %826 = tpu.matmul %824, %825, %cst_322 {dimension_numbers = #tpu.dot_dimension_numbers<[1], [0], [0], [1], [0, 0, 1, 1], [], []>} : vector<8x128xf32>, vector<128x128xf32>, vector<8x128xf32> -> vector<8x128xf32>
    %c0_323 = arith.constant 0 : index
    %c0_324 = arith.constant 0 : index
    %827 = vector.load %arg6[%c0_323, %c0_324] : memref<1x128xf32, #tpu.memory_space<vmem>>, vector<1x128xf32>
    %828 = vector.broadcast %827 : vector<1x128xf32> to vector<8x128xf32>
    %829 = arith.addf %826, %828 : vector<8x128xf32>
    %830 = arith.negf %829 : vector<8x128xf32>
    %831 = math.exp %830 : vector<8x128xf32>
    %cst_325 = arith.constant 1.000000e+00 : f32
    %832 = vector.broadcast %cst_325 : f32 to vector<8x128xf32>
    %833 = arith.addf %832, %831 : vector<8x128xf32>
    %834 = arith.divf %832, %833 : vector<8x128xf32>
    %c0_326 = arith.constant 0 : index
    %c0_327 = arith.constant 0 : index
    %835 = vector.load %arg7[%c0_326, %c0_327] : memref<8x128xf32, #tpu.memory_space<vmem>>, vector<8x128xf32>
    tpu.vector_store %arg7[%c0_326, %c0_327], %834 {strides = array<i32>} : memref<8x128xf32, #tpu.memory_space<vmem>>, vector<8x128xf32>,
    return
  }
  func.func @transform_0(%arg0: i32) -> (i32, i32) {
    %c0_i32 = arith.constant 0 : i32
    %c0_i32_0 = arith.constant 0 : i32
    %c0_i32_1 = arith.constant 0 : i32
    return %c0_i32, %c0_i32_0 : i32, i32
  }
  func.func @transform_1(%arg0: i32) -> (i32, i32, i32) {
    %c0_i32 = arith.constant 0 : i32
    %c0_i32_0 = arith.constant 0 : i32
    %c0_i32_1 = arith.constant 0 : i32
    %c0_i32_2 = arith.constant 0 : i32
    return %c0_i32, %c0_i32_0, %c0_i32_1 : i32, i32, i32
  }
  func.func @transform_2(%arg0: i32) -> (i32, i32, i32) {
    %c0_i32 = arith.constant 0 : i32
    %c0_i32_0 = arith.constant 0 : i32
    %c0_i32_1 = arith.constant 0 : i32
    %c0_i32_2 = arith.constant 0 : i32
    return %c0_i32, %c0_i32_0, %c0_i32_1 : i32, i32, i32
  }
  func.func @transform_3(%arg0: i32) -> (i32, i32, i32) {
    %c0_i32 = arith.constant 0 : i32
    %c0_i32_0 = arith.constant 0 : i32
    %c0_i32_1 = arith.constant 0 : i32
    %c0_i32_2 = arith.constant 0 : i32
    return %c0_i32, %c0_i32_0, %c0_i32_1 : i32, i32, i32
  }
  func.func @transform_4(%arg0: i32) -> (i32, i32) {
    %c0_i32 = arith.constant 0 : i32
    %c0_i32_0 = arith.constant 0 : i32
    %c0_i32_1 = arith.constant 0 : i32
    return %c0_i32, %c0_i32_0 : i32, i32
  }
  func.func @transform_5(%arg0: i32) -> (i32, i32) {
    %c0_i32 = arith.constant 0 : i32
    %c0_i32_0 = arith.constant 0 : i32
    %c0_i32_1 = arith.constant 0 : i32
    return %c0_i32, %c0_i32_0 : i32, i32
  }
  func.func @transform_6(%arg0: i32) -> (i32, i32) {
    %c0_i32 = arith.constant 0 : i32
    %c0_i32_0 = arith.constant 0 : i32
    %c0_i32_1 = arith.constant 0 : i32
    return %c0_i32, %c0_i32_0 : i32, i32
  }
}

</mosaic_0001>

<llo_original>
// kernel: tpu_custom_call.1
$region0: #{tpu_custom_call.1}
  #allocation0 [shape = 'u32[]', space=smem, size = 0x4, offset = 0x4, fixed_abs, tag = 'smem constant byte address 0x4 - core index']
  #allocation1 [shape = 'u32[144,128]{1,0:T(1,128)}', space=vmem, size = 0x12000, scoped, tag = 'internal scratch']
  #allocation2 [shape = 'f32[40,128]{1,0:T(8,128)}', space=vmem, size = 0x5000, scoped, tag = 'scratch operand']
  #allocation3 [shape = 'f32[40,128]{1,0:T(8,128)}', space=vmem, size = 0x5000, scoped, tag = 'scratch operand']
  #allocation4 [shape = 'f32[40,512]{1,0:T(8,128)}', space=vmem, size = 0x14000, scoped, tag = 'scratch operand']
  %s0 = inlined_call_operand.hbm [shape: f32[40,128], index: 0, kind: input, shape index: {}]
  %s1 = inlined_call_operand.hbm [shape: f32[5,128,512], index: 1, kind: input, shape index: {}]
  %s2 = inlined_call_operand.hbm [shape: f32[5,128,512], index: 2, kind: input, shape index: {}]
  %s3 = inlined_call_operand.hbm [shape: f32[5,1,512], index: 3, kind: input, shape index: {}]
  %s4 = inlined_call_operand.hbm [shape: f32[128,128], index: 4, kind: input, shape index: {}]
  %s5 = inlined_call_operand.hbm [shape: f32[1,128], index: 5, kind: input, shape index: {}]
  %s6 = inlined_call_operand.hbm [shape: f32[8,128], index: 6, kind: output, shape index: {}]
  %s7 = sld [smem:[#allocation0]]
  $region58: #{tpu_custom_call.1} parent=0
    _
  %s9 = ssub.s32 1, %s7
  %s10 = scalar_select 0, %s9, %s7
  $region1: #{tpu_custom_call.1} parent=0
    #allocation5 [shape = 'u8[20480]{0}', space=vmem, size = 0x5000, scoped, tag = 'input window, operand 0, single buffered']
    #allocation6 [shape = 's32[1]{0}', space=sflag, size = 0x4, scoped, tag = 'scoped memory for tpu_custom_call.1']
    #allocation7 [shape = 's32[1]{0}', space=sflag, size = 0x4, scoped, tag = 'scoped memory for tpu_custom_call.1']
    #allocation8 [shape = 'u8[1310720]{0}', space=vmem, size = 0x140000, scoped, tag = 'input window, operand 1, single buffered']
    #allocation9 [shape = 's32[1]{0}', space=sflag, size = 0x4, scoped, tag = 'scoped memory for tpu_custom_call.1']
    #allocation10 [shape = 'u8[1310720]{0}', space=vmem, size = 0x140000, scoped, tag = 'input window, operand 2, single buffered']
    #allocation11 [shape = 'u8[10240]{0}', space=vmem, size = 0x2800, scoped, tag = 'input window, operand 3, single buffered']
    #allocation12 [shape = 's32[1]{0}', space=sflag, size = 0x4, scoped, tag = 'scoped memory for tpu_custom_call.1']
    #allocation13 [shape = 'u8[65536]{0}', space=vmem, size = 0x10000, scoped, tag = 'input window, operand 4, single buffered']
    #allocation14 [shape = 'u8[512]{0}', space=vmem, size = 0x400, scoped, tag = 'input window, operand 5, single buffered']
    #allocation15 [shape = 's32[1]{0}', space=sflag, size = 0x4, scoped, tag = 'scoped memory for tpu_custom_call.1']
    #allocation16 [shape = 'u8[4096]{0}', space=vmem, size = 0x1000, scoped, tag = 'output window, operand 0, single buffered']
    %11 = vsyncpa [#allocation6], 0
    %12 = vsyncpa [#allocation9], 0
    %13 = vsyncpa [#allocation12], 0
    %14 = vsyncpa [#allocation15], 0
    %15 = vsyncpa [#allocation7], 0
    // Predicated region
    $region2: #{tpu_custom_call.1} parent=1 // pred_check
      _
    $region3: #{tpu_custom_call.1} parent=1 // pred_check_branch
      %17 = sbr.rel (0) target = $region5
    $region4: #{tpu_custom_call.1} parent=1 // pred_region
      %s19 = ssub.s32 640, 640
      %20 = vsyncadd [#allocation6], %s19
      %s21 = sshll.u32 [#allocation5], 4
      %s22 = int_to_ptr.vmem [resolvable:$true] %s21
      %27 = dma.hbm_to_vmem [thread:$0]  %s0, 640, %s22, [#allocation6], 128, 128, 8
    $region5: #{tpu_custom_call.1} parent=1 // pred_fallthru
      _
    // Predicated region
    $region6: #{tpu_custom_call.1} parent=1 // pred_check
      _
    $region7: #{tpu_custom_call.1} parent=1 // pred_check_branch
      %29 = sbr.rel (0) target = $region9
    $region8: #{tpu_custom_call.1} parent=1 // pred_region
      %s31 = ssub.s32 40960, 40960
      %32 = vsyncadd [#allocation9], %s31
      %s33 = sshll.u32 [#allocation8], 4
      %s34 = int_to_ptr.vmem [resolvable:$true] %s33
      %39 = dma.hbm_to_vmem [thread:$0]  %s1, 40960, %s34, [#allocation9], 512, 512, 32
    $region9: #{tpu_custom_call.1} parent=1 // pred_fallthru
      _
    // Predicated region
    $region10: #{tpu_custom_call.1} parent=1 // pred_check
      _
    $region11: #{tpu_custom_call.1} parent=1 // pred_check_branch
      %41 = sbr.rel (0) target = $region13
    $region12: #{tpu_custom_call.1} parent=1 // pred_region
      %s43 = ssub.s32 40960, 40960
      %44 = vsyncadd [#allocation9], %s43
      %s45 = sshll.u32 [#allocation10], 4
      %s46 = int_to_ptr.vmem [resolvable:$true] %s45
      %51 = dma.hbm_to_vmem [thread:$0]  %s2, 40960, %s46, [#allocation9], 512, 512, 32
    $region13: #{tpu_custom_call.1} parent=1 // pred_fallthru
      _
    // Predicated region
    $region14: #{tpu_custom_call.1} parent=1 // pred_check
      _
    $region15: #{tpu_custom_call.1} parent=1 // pred_check_branch
      %53 = sbr.rel (0) target = $region17
    $region16: #{tpu_custom_call.1} parent=1 // pred_region
      %s55 = ssub.s32 320, 320
      %56 = vsyncadd [#allocation12], %s55
      %s57 = sshll.u32 [#allocation11], 4
      %s58 = int_to_ptr.vmem [resolvable:$true] %s57
      %63 = dma.hbm_to_vmem [thread:$0]  %s3, 320, %s58, [#allocation12], 64, 64, 4
    $region17: #{tpu_custom_call.1} parent=1 // pred_fallthru
      _
    // Predicated region
    $region18: #{tpu_custom_call.1} parent=1 // pred_check
      _
    $region19: #{tpu_custom_call.1} parent=1 // pred_check_branch
      %65 = sbr.rel (0) target = $region21
    $region20: #{tpu_custom_call.1} parent=1 // pred_region
      %s67 = ssub.s32 2048, 2048
      %68 = vsyncadd [#allocation12], %s67
      %s69 = sshll.u32 [#allocation13], 4
      %s70 = int_to_ptr.vmem [resolvable:$true] %s69
      %75 = dma.hbm_to_vmem [thread:$0]  %s4, 2048, %s70, [#allocation12], 128, 128, 8
    $region21: #{tpu_custom_call.1} parent=1 // pred_fallthru
      _
    // Predicated region
    $region22: #{tpu_custom_call.1} parent=1 // pred_check
      _
    $region23: #{tpu_custom_call.1} parent=1 // pred_check_branch
      %77 = sbr.rel (0) target = $region25
    $region24: #{tpu_custom_call.1} parent=1 // pred_region
      %s79 = ssub.s32 16, 16
      %80 = vsyncadd [#allocation15], %s79
      %s82 = sshll.u32 [#allocation14], 4
      %s83 = int_to_ptr.vmem [resolvable:$true] %s82
      %85 = dma.hbm_to_vmem [thread:$0]  %s5, 16, %s83, [#allocation15]
    $region25: #{tpu_custom_call.1} parent=1 // pred_fallthru
      _
    // Predicated region
    $region26: #{tpu_custom_call.1} parent=1 // pred_check
      _
    $region27: #{tpu_custom_call.1} parent=1 // pred_check_branch
      %87 = sbr.rel (0) target = $region29
    $region28: #{tpu_custom_call.1} parent=1 // pred_region
      %88 = dma.done [#allocation6], 640
    $region29: #{tpu_custom_call.1} parent=1 // pred_fallthru
      _
    // Predicated region
    $region30: #{tpu_custom_call.1} parent=1 // pred_check
      _
    $region31: #{tpu_custom_call.1} parent=1 // pred_check_branch
      %90 = sbr.rel (0) target = $region33
    $region32: #{tpu_custom_call.1} parent=1 // pred_region
      %91 = dma.done [#allocation9], 40960
    $region33: #{tpu_custom_call.1} parent=1 // pred_fallthru
      _
    // Predicated region
    $region34: #{tpu_custom_call.1} parent=1 // pred_check
      _
    $region35: #{tpu_custom_call.1} parent=1 // pred_check_branch
      %93 = sbr.rel (0) target = $region37
    $region36: #{tpu_custom_call.1} parent=1 // pred_region
      %94 = dma.done [#allocation9], 40960
    $region37: #{tpu_custom_call.1} parent=1 // pred_fallthru
      _
    // Predicated region
    $region38: #{tpu_custom_call.1} parent=1 // pred_check
      _
    $region39: #{tpu_custom_call.1} parent=1 // pred_check_branch
      %96 = sbr.rel (0) target = $region41
    $region40: #{tpu_custom_call.1} parent=1 // pred_region
      %97 = dma.done [#allocation12], 320
    $region41: #{tpu_custom_call.1} parent=1 // pred_fallthru
      _
    // Predicated region
    $region42: #{tpu_custom_call.1} parent=1 // pred_check
      _
    $region43: #{tpu_custom_call.1} parent=1 // pred_check_branch
      %99 = sbr.rel (0) target = $region45
    $region44: #{tpu_custom_call.1} parent=1 // pred_region
      %100 = dma.done [#allocation12], 2048
    $region45: #{tpu_custom_call.1} parent=1 // pred_fallthru
      _
    // Predicated region
    $region46: #{tpu_custom_call.1} parent=1 // pred_check
      _
    $region47: #{tpu_custom_call.1} parent=1 // pred_check_branch
      %102 = sbr.rel (0) target = $region49
    $region48: #{tpu_custom_call.1} parent=1 // pred_region
      %103 = dma.done [#allocation15], 16
    $region49: #{tpu_custom_call.1} parent=1 // pred_fallthru
      _
    %v104 = vld [vmem:[#allocation5] sm:$0xff]
    %v105 = vld [vmem:[#allocation5 + $0x8] sm:$0xff]
    %v106 = vld [vmem:[#allocation5 + $0x10] sm:$0xff]
    %v107 = vld [vmem:[#allocation5 + $0x18] sm:$0xff]
    %v108 = vld [vmem:[#allocation5 + $0x20] sm:$0xff]
    %v109 = vld [vmem:[#allocation8] sm:$0xff]
    %v110 = vld [vmem:[#allocation8 + $0x8] sm:$0xff]
    %v111 = vld [vmem:[#allocation8 + $0x10] sm:$0xff]
    %v112 = vld [vmem:[#allocation8 + $0x18] sm:$0xff]
    %v113 = vld [vmem:[#allocation8 + $0x20] sm:$0xff]
    %v114 = vld [vmem:[#allocation8 + $0x28] sm:$0xff]
    %v115 = vld [vmem:[#allocation8 + $0x30] sm:$0xff]
    %v116 = vld [vmem:[#allocation8 + $0x38] sm:$0xff]
    %v117 = vld [vmem:[#allocation8 + $0x40] sm:$0xff]
    %v118 = vld [vmem:[#allocation8 + $0x48] sm:$0xff]
    %v119 = vld [vmem:[#allocation8 + $0x50] sm:$0xff]
    %v120 = vld [vmem:[#allocation8 + $0x58] sm:$0xff]
    %v121 = vld [vmem:[#allocation8 + $0x60] sm:$0xff]
    %v122 = vld [vmem:[#allocation8 + $0x68] sm:$0xff]
    %v123 = vld [vmem:[#allocation8 + $0x70] sm:$0xff]
    %v124 = vld [vmem:[#allocation8 + $0x78] sm:$0xff]
    %v125 = vld [vmem:[#allocation8 + $0x80] sm:$0xff]
    %v126 = vld [vmem:[#allocation8 + $0x88] sm:$0xff]
    %v127 = vld [vmem:[#allocation8 + $0x90] sm:$0xff]
    %v128 = vld [vmem:[#allocation8 + $0x98] sm:$0xff]
    %v129 = vld [vmem:[#allocation8 + $0xa0] sm:$0xff]
    %v130 = vld [vmem:[#allocation8 + $0xa8] sm:$0xff]
    %v131 = vld [vmem:[#allocation8 + $0xb0] sm:$0xff]
    %v132 = vld [vmem:[#allocation8 + $0xb8] sm:$0xff]
    %v133 = vld [vmem:[#allocation8 + $0xc0] sm:$0xff]
    %v134 = vld [vmem:[#allocation8 + $0xc8] sm:$0xff]
    %v135 = vld [vmem:[#allocation8 + $0xd0] sm:$0xff]
    %v136 = vld [vmem:[#allocation8 + $0xd8] sm:$0xff]
    %v137 = vld [vmem:[#allocation8 + $0xe0] sm:$0xff]
    %v138 = vld [vmem:[#allocation8 + $0xe8] sm:$0xff]
    %v139 = vld [vmem:[#allocation8 + $0xf0] sm:$0xff]
    %v140 = vld [vmem:[#allocation8 + $0xf8] sm:$0xff]
    %v141 = vld [vmem:[#allocation8 + $0x100] sm:$0xff]
    %v142 = vld [vmem:[#allocation8 + $0x108] sm:$0xff]
    %v143 = vld [vmem:[#allocation8 + $0x110] sm:$0xff]
    %v144 = vld [vmem:[#allocation8 + $0x118] sm:$0xff]
    %v145 = vld [vmem:[#allocation8 + $0x120] sm:$0xff]
    %v146 = vld [vmem:[#allocation8 + $0x128] sm:$0xff]
    %v147 = vld [vmem:[#allocation8 + $0x130] sm:$0xff]
    %v148 = vld [vmem:[#allocation8 + $0x138] sm:$0xff]
    %v149 = vld [vmem:[#allocation8 + $0x140] sm:$0xff]
    %v150 = vld [vmem:[#allocation8 + $0x148] sm:$0xff]
    %v151 = vld [vmem:[#allocation8 + $0x150] sm:$0xff]
    %v152 = vld [vmem:[#allocation8 + $0x158] sm:$0xff]
    %v153 = vld [vmem:[#allocation8 + $0x160] sm:$0xff]
    %v154 = vld [vmem:[#allocation8 + $0x168] sm:$0xff]
    %v155 = vld [vmem:[#allocation8 + $0x170] sm:$0xff]
    %v156 = vld [vmem:[#allocation8 + $0x178] sm:$0xff]
    %v157 = vld [vmem:[#allocation8 + $0x180] sm:$0xff]
    %v158 = vld [vmem:[#allocation8 + $0x188] sm:$0xff]
    %v159 = vld [vmem:[#allocation8 + $0x190] sm:$0xff]
    %v160 = vld [vmem:[#allocation8 + $0x198] sm:$0xff]
    %v161 = vld [vmem:[#allocation8 + $0x1a0] sm:$0xff]
    %v162 = vld [vmem:[#allocation8 + $0x1a8] sm:$0xff]
    %v163 = vld [vmem:[#allocation8 + $0x1b0] sm:$0xff]
    %v164 = vld [vmem:[#allocation8 + $0x1b8] sm:$0xff]
    %v165 = vld [vmem:[#allocation8 + $0x1c0] sm:$0xff]
    %v166 = vld [vmem:[#allocation8 + $0x1c8] sm:$0xff]
    %v167 = vld [vmem:[#allocation8 + $0x1d0] sm:$0xff]
    %v168 = vld [vmem:[#allocation8 + $0x1d8] sm:$0xff]
    %v169 = vld [vmem:[#allocation8 + $0x1e0] sm:$0xff]
    %v170 = vld [vmem:[#allocation8 + $0x1e8] sm:$0xff]
    %v171 = vld [vmem:[#allocation8 + $0x1f0] sm:$0xff]
    %v172 = vld [vmem:[#allocation8 + $0x1f8] sm:$0xff]
    %v173 = vld [vmem:[#allocation11] sm:$0xf]
    %v175 = vlaneseq
    %v176 = vshrl.u32 %v175, 7
    %v177 = vsub.s32 0, %v176
    %v178 = vrot.slane %v173, %v177
    %v179 = vlaneseq
    %v180 = vshrl.u32 %v179, 7
    %v181 = vsub.s32 1, %v180
    %v182 = vrot.slane %v173, %v181
    %v183 = vlaneseq
    %v184 = vshrl.u32 %v183, 7
    %v185 = vsub.s32 2, %v184
    %v186 = vrot.slane %v173, %v185
    %v187 = vlaneseq
    %v188 = vshrl.u32 %v187, 7
    %v189 = vsub.s32 3, %v188
    %v190 = vrot.slane %v173, %v189
    %195 = vmatprep.subr.mxu0 %v170
    %196 = vmatpush1.msra.mxu0 %v169
    %197 = vmatprep.subr.mxu0 %v166
    %198 = vmatpush1.msra.mxu0 %v165
    %199 = vmatprep.subr.mxu0 %v162
    %200 = vmatpush1.msra.mxu0 %v161
    %201 = vmatprep.subr.mxu0 %v158
    %202 = vmatpush1.msra.mxu0 %v157
    %203 = vmatprep.subr.mxu0 %v154
    %204 = vmatpush1.msra.mxu0 %v153
    %205 = vmatprep.subr.mxu0 %v150
    %206 = vmatpush1.msra.mxu0 %v149
    %207 = vmatprep.subr.mxu0 %v146
    %208 = vmatpush1.msra.mxu0 %v145
    %209 = vmatprep.subr.mxu0 %v142
    %210 = vmatpush1.msra.mxu0 %v141
    %211 = vmatprep.subr.mxu0 %v138
    %212 = vmatpush1.msra.mxu0 %v137
    %213 = vmatprep.subr.mxu0 %v134
    %214 = vmatpush1.msra.mxu0 %v133
    %215 = vmatprep.subr.mxu0 %v130
    %216 = vmatpush1.msra.mxu0 %v129
    %217 = vmatprep.subr.mxu0 %v126
    %218 = vmatpush1.msra.mxu0 %v125
    %219 = vmatprep.subr.mxu0 %v122
    %220 = vmatpush1.msra.mxu0 %v121
    %221 = vmatprep.subr.mxu0 %v118
    %222 = vmatpush1.msra.mxu0 %v117
    %223 = vmatprep.subr.mxu0 %v114
    %224 = vmatpush1.msra.mxu0 %v113
    %225 = vmatprep.subr.mxu0 %v110
    %226 = vmatpush1.msra.mxu0 %v109
    %227 = vmatprep.subr.mxu0 0.0
    %228 = vmatpush2.msra.mxu0 0.0
    %229 = vmatprep.subr.mxu0 0.0
    %230 = vmatpush2.msra.mxu0 0.0
    %231 = vmatprep.subr.mxu0 0.0
    %232 = vmatpush2.msra.mxu0 0.0
    %233 = vmatprep.subr.mxu0 0.0
    %234 = vmatpush2.msra.mxu0 0.0
    %235 = vmatprep.subr.mxu0 0.0
    %236 = vmatpush2.msra.mxu0 0.0
    %237 = vmatprep.subr.mxu0 0.0
    %238 = vmatpush2.msra.mxu0 0.0
    %239 = vmatprep.subr.mxu0 0.0
    %240 = vmatpush2.msra.mxu0 0.0
    %241 = vmatprep.subr.mxu0 0.0
    %242 = vmatpush2.msra.mxu0 0.0
    %243 = vmatprep.subr.mxu0 0.0
    %244 = vmatpush2.msra.mxu0 0.0
    %245 = vmatprep.subr.mxu0 0.0
    %246 = vmatpush2.msra.mxu0 0.0
    %247 = vmatprep.subr.mxu0 0.0
    %248 = vmatpush2.msra.mxu0 0.0
    %249 = vmatprep.subr.mxu0 0.0
    %250 = vmatpush2.msra.mxu0 0.0
    %251 = vmatprep.subr.mxu0 0.0
    %252 = vmatpush2.msra.mxu0 0.0
    %253 = vmatprep.subr.mxu0 0.0
    %254 = vmatpush2.msra.mxu0 0.0
    %255 = vmatprep.subr.mxu0 0.0
    %256 = vmatpush2.msra.mxu0 0.0
    %257 = vmatprep.subr.mxu0 0.0
    %258 = vmatpush2.msra.mxu0 0.0
    %259 = vmatprep.mubr.f32.mxu0 0.0
    %260 = vmatmul.mubr.f32.gmra.mxu0 %v104
    %v261 = vpop.f32.mrf.mxu0
    %v262 = vadd.f32 %v178, %v261
    %v263 = vpop.f32.mrf.mxu0
    %v264 = vadd.f32 %v182, %v263
    %265 = vmatprep.mubr.f32.mxu0 0.0
    %266 = vmatmul.mubr.f32.gmra.mxu0 %v105
    %v267 = vpop.f32.mrf.mxu0
    %v268 = vadd.f32 %v178, %v267
    %v269 = vpop.f32.mrf.mxu0
    %v270 = vadd.f32 %v182, %v269
    %271 = vmatprep.mubr.f32.mxu0 0.0
    %272 = vmatmul.mubr.f32.gmra.mxu0 %v106
    %v273 = vpop.f32.mrf.mxu0
    %v274 = vadd.f32 %v178, %v273
    %v275 = vpop.f32.mrf.mxu0
    %v276 = vadd.f32 %v182, %v275
    %277 = vmatprep.mubr.f32.mxu0 0.0
    %278 = vmatmul.mubr.f32.gmra.mxu0 %v107
    %v279 = vpop.f32.mrf.mxu0
    %v280 = vadd.f32 %v178, %v279
    %v281 = vpop.f32.mrf.mxu0
    %v282 = vadd.f32 %v182, %v281
    %283 = vmatprep.mubr.f32.mxu0 0.0
    %284 = vmatmul.mubr.f32.gmra.mxu0 %v108
    %v285 = vpop.f32.mrf.mxu0
    %v286 = vadd.f32 %v178, %v285
    %v287 = vpop.f32.mrf.mxu0
    %v288 = vadd.f32 %v182, %v287
    %289 = vdwg.mxu0
    %290 = vmatprep.subr.mxu0 %v172
    %291 = vmatpush1.msra.mxu0 %v171
    %292 = vmatprep.subr.mxu0 %v168
    %293 = vmatpush1.msra.mxu0 %v167
    %294 = vmatprep.subr.mxu0 %v164
    %295 = vmatpush1.msra.mxu0 %v163
    %296 = vmatprep.subr.mxu0 %v160
    %297 = vmatpush1.msra.mxu0 %v159
    %298 = vmatprep.subr.mxu0 %v156
    %299 = vmatpush1.msra.mxu0 %v155
    %300 = vmatprep.subr.mxu0 %v152
    %301 = vmatpush1.msra.mxu0 %v151
    %302 = vmatprep.subr.mxu0 %v148
    %303 = vmatpush1.msra.mxu0 %v147
    %304 = vmatprep.subr.mxu0 %v144
    %305 = vmatpush1.msra.mxu0 %v143
    %306 = vmatprep.subr.mxu0 %v140
    %307 = vmatpush1.msra.mxu0 %v139
    %308 = vmatprep.subr.mxu0 %v136
    %309 = vmatpush1.msra.mxu0 %v135
    %310 = vmatprep.subr.mxu0 %v132
    %311 = vmatpush1.msra.mxu0 %v131
    %312 = vmatprep.subr.mxu0 %v128
    %313 = vmatpush1.msra.mxu0 %v127
    %314 = vmatprep.subr.mxu0 %v124
    %315 = vmatpush1.msra.mxu0 %v123
    %316 = vmatprep.subr.mxu0 %v120
    %317 = vmatpush1.msra.mxu0 %v119
    %318 = vmatprep.subr.mxu0 %v116
    %319 = vmatpush1.msra.mxu0 %v115
    %320 = vmatprep.subr.mxu0 %v112
    %321 = vmatpush1.msra.mxu0 %v111
    %322 = vmatprep.subr.mxu0 0.0
    %323 = vmatpush2.msra.mxu0 0.0
    %324 = vmatprep.subr.mxu0 0.0
    %325 = vmatpush2.msra.mxu0 0.0
    %326 = vmatprep.subr.mxu0 0.0
    %327 = vmatpush2.msra.mxu0 0.0
    %328 = vmatprep.subr.mxu0 0.0
    %329 = vmatpush2.msra.mxu0 0.0
    %330 = vmatprep.subr.mxu0 0.0
    %331 = vmatpush2.msra.mxu0 0.0
    %332 = vmatprep.subr.mxu0 0.0
    %333 = vmatpush2.msra.mxu0 0.0
    %334 = vmatprep.subr.mxu0 0.0
    %335 = vmatpush2.msra.mxu0 0.0
    %336 = vmatprep.subr.mxu0 0.0
    %337 = vmatpush2.msra.mxu0 0.0
    %338 = vmatprep.subr.mxu0 0.0
    %339 = vmatpush2.msra.mxu0 0.0
    %340 = vmatprep.subr.mxu0 0.0
    %341 = vmatpush2.msra.mxu0 0.0
    %342 = vmatprep.subr.mxu0 0.0
    %343 = vmatpush2.msra.mxu0 0.0
    %344 = vmatprep.subr.mxu0 0.0
    %345 = vmatpush2.msra.mxu0 0.0
    %346 = vmatprep.subr.mxu0 0.0
    %347 = vmatpush2.msra.mxu0 0.0
    %348 = vmatprep.subr.mxu0 0.0
    %349 = vmatpush2.msra.mxu0 0.0
    %350 = vmatprep.subr.mxu0 0.0
    %351 = vmatpush2.msra.mxu0 0.0
    %352 = vmatprep.subr.mxu0 0.0
    %353 = vmatpush2.msra.mxu0 0.0
    %354 = vmatprep.mubr.f32.mxu0 0.0
    %355 = vmatmul.mubr.f32.gmra.mxu0 %v104
    %v356 = vpop.f32.mrf.mxu0
    %v357 = vadd.f32 %v186, %v356
    %v358 = vpop.f32.mrf.mxu0
    %v359 = vadd.f32 %v190, %v358
    %360 = vmatprep.mubr.f32.mxu0 0.0
    %361 = vmatmul.mubr.f32.gmra.mxu0 %v105
    %v362 = vpop.f32.mrf.mxu0
    %v363 = vadd.f32 %v186, %v362
    %v364 = vpop.f32.mrf.mxu0
    %v365 = vadd.f32 %v190, %v364
    %366 = vmatprep.mubr.f32.mxu0 0.0
    %367 = vmatmul.mubr.f32.gmra.mxu0 %v106
    %v368 = vpop.f32.mrf.mxu0
    %v369 = vadd.f32 %v186, %v368
    %v370 = vpop.f32.mrf.mxu0
    %v371 = vadd.f32 %v190, %v370
    %372 = vmatprep.mubr.f32.mxu0 0.0
    %373 = vmatmul.mubr.f32.gmra.mxu0 %v107
    %v374 = vpop.f32.mrf.mxu0
    %v375 = vadd.f32 %v186, %v374
    %v376 = vpop.f32.mrf.mxu0
    %v377 = vadd.f32 %v190, %v376
    %378 = vmatprep.mubr.f32.mxu0 0.0
    %379 = vmatmul.mubr.f32.gmra.mxu0 %v108
    %v380 = vpop.f32.mrf.mxu0
    %v381 = vadd.f32 %v186, %v380
    %v382 = vpop.f32.mrf.mxu0
    %v383 = vadd.f32 %v190, %v382
    %384 = vdwg.mxu0
    %385 = vst [vmem:[#allocation4] sm:$0xff] %v262
    %386 = vst [vmem:[#allocation4 + $0x8] sm:$0xff] %v264
    %387 = vst [vmem:[#allocation4 + $0x10] sm:$0xff] %v357
    %388 = vst [vmem:[#allocation4 + $0x18] sm:$0xff] %v359
    %389 = vst [vmem:[#allocation4 + $0x20] sm:$0xff] %v268
    %390 = vst [vmem:[#allocation4 + $0x28] sm:$0xff] %v270
    %391 = vst [vmem:[#allocation4 + $0x30] sm:$0xff] %v363
    %392 = vst [vmem:[#allocation4 + $0x38] sm:$0xff] %v365
    %393 = vst [vmem:[#allocation4 + $0x40] sm:$0xff] %v274
    %394 = vst [vmem:[#allocation4 + $0x48] sm:$0xff] %v276
    %395 = vst [vmem:[#allocation4 + $0x50] sm:$0xff] %v369
    %396 = vst [vmem:[#allocation4 + $0x58] sm:$0xff] %v371
    %397 = vst [vmem:[#allocation4 + $0x60] sm:$0xff] %v280
    %398 = vst [vmem:[#allocation4 + $0x68] sm:$0xff] %v282
    %399 = vst [vmem:[#allocation4 + $0x70] sm:$0xff] %v375
    %400 = vst [vmem:[#allocation4 + $0x78] sm:$0xff] %v377
    %401 = vst [vmem:[#allocation4 + $0x80] sm:$0xff] %v286
    %402 = vst [vmem:[#allocation4 + $0x88] sm:$0xff] %v288
    %403 = vst [vmem:[#allocation4 + $0x90] sm:$0xff] %v381
    %404 = vst [vmem:[#allocation4 + $0x98] sm:$0xff] %v383
    %v405 = vld [vmem:[#allocation4] sm:$0xff]
    %v406 = vld [vmem:[#allocation4 + $0x8] sm:$0xff]
    %v407 = vld [vmem:[#allocation4 + $0x10] sm:$0xff]
    %v408 = vld [vmem:[#allocation4 + $0x18] sm:$0xff]
    %v409 = vld [vmem:[#allocation10] sm:$0xff]
    %v410 = vld [vmem:[#allocation10 + $0x8] sm:$0xff]
    %v411 = vld [vmem:[#allocation10 + $0x10] sm:$0xff]
    %v412 = vld [vmem:[#allocation10 + $0x18] sm:$0xff]
    %v413 = vld [vmem:[#allocation10 + $0x20] sm:$0xff]
    %v414 = vld [vmem:[#allocation10 + $0x28] sm:$0xff]
    %v415 = vld [vmem:[#allocation10 + $0x30] sm:$0xff]
    %v416 = vld [vmem:[#allocation10 + $0x38] sm:$0xff]
    %v417 = vld [vmem:[#allocation10 + $0x40] sm:$0xff]
    %v418 = vld [vmem:[#allocation10 + $0x48] sm:$0xff]
    %v419 = vld [vmem:[#allocation10 + $0x50] sm:$0xff]
    %v420 = vld [vmem:[#allocation10 + $0x58] sm:$0xff]
    %v421 = vld [vmem:[#allocation10 + $0x60] sm:$0xff]
    %v422 = vld [vmem:[#allocation10 + $0x68] sm:$0xff]
    %v423 = vld [vmem:[#allocation10 + $0x70] sm:$0xff]
    %v424 = vld [vmem:[#allocation10 + $0x78] sm:$0xff]
    %v425 = vld [vmem:[#allocation10 + $0x80] sm:$0xff]
    %v426 = vld [vmem:[#allocation10 + $0x88] sm:$0xff]
    %v427 = vld [vmem:[#allocation10 + $0x90] sm:$0xff]
    %v428 = vld [vmem:[#allocation10 + $0x98] sm:$0xff]
    %v429 = vld [vmem:[#allocation10 + $0xa0] sm:$0xff]
    %v430 = vld [vmem:[#allocation10 + $0xa8] sm:$0xff]
    %v431 = vld [vmem:[#allocation10 + $0xb0] sm:$0xff]
    %v432 = vld [vmem:[#allocation10 + $0xb8] sm:$0xff]
    %v433 = vld [vmem:[#allocation10 + $0xc0] sm:$0xff]
    %v434 = vld [vmem:[#allocation10 + $0xc8] sm:$0xff]
    %v435 = vld [vmem:[#allocation10 + $0xd0] sm:$0xff]
    %v436 = vld [vmem:[#allocation10 + $0xd8] sm:$0xff]
    %v437 = vld [vmem:[#allocation10 + $0xe0] sm:$0xff]
    %v438 = vld [vmem:[#allocation10 + $0xe8] sm:$0xff]
    %v439 = vld [vmem:[#allocation10 + $0xf0] sm:$0xff]
    %v440 = vld [vmem:[#allocation10 + $0xf8] sm:$0xff]
    %v441 = vld [vmem:[#allocation10 + $0x100] sm:$0xff]
    %v442 = vld [vmem:[#allocation10 + $0x108] sm:$0xff]
    %v443 = vld [vmem:[#allocation10 + $0x110] sm:$0xff]
    %v444 = vld [vmem:[#allocation10 + $0x118] sm:$0xff]
    %v445 = vld [vmem:[#allocation10 + $0x120] sm:$0xff]
    %v446 = vld [vmem:[#allocation10 + $0x128] sm:$0xff]
    %v447 = vld [vmem:[#allocation10 + $0x130] sm:$0xff]
    %v448 = vld [vmem:[#allocation10 + $0x138] sm:$0xff]
    %v449 = vld [vmem:[#allocation10 + $0x140] sm:$0xff]
    %v450 = vld [vmem:[#allocation10 + $0x148] sm:$0xff]
    %v451 = vld [vmem:[#allocation10 + $0x150] sm:$0xff]
    %v452 = vld [vmem:[#allocation10 + $0x158] sm:$0xff]
    %v453 = vld [vmem:[#allocation10 + $0x160] sm:$0xff]
    %v454 = vld [vmem:[#allocation10 + $0x168] sm:$0xff]
    %v455 = vld [vmem:[#allocation10 + $0x170] sm:$0xff]
    %v456 = vld [vmem:[#allocation10 + $0x178] sm:$0xff]
    %v457 = vld [vmem:[#allocation10 + $0x180] sm:$0xff]
    %v458 = vld [vmem:[#allocation10 + $0x188] sm:$0xff]
    %v459 = vld [vmem:[#allocation10 + $0x190] sm:$0xff]
    %v460 = vld [vmem:[#allocation10 + $0x198] sm:$0xff]
    %v461 = vld [vmem:[#allocation10 + $0x1a0] sm:$0xff]
    %v462 = vld [vmem:[#allocation10 + $0x1a8] sm:$0xff]
    %v463 = vld [vmem:[#allocation10 + $0x1b0] sm:$0xff]
    %v464 = vld [vmem:[#allocation10 + $0x1b8] sm:$0xff]
    %v465 = vld [vmem:[#allocation10 + $0x1c0] sm:$0xff]
    %v466 = vld [vmem:[#allocation10 + $0x1c8] sm:$0xff]
    %v467 = vld [vmem:[#allocation10 + $0x1d0] sm:$0xff]
    %v468 = vld [vmem:[#allocation10 + $0x1d8] sm:$0xff]
    %v469 = vld [vmem:[#allocation10 + $0x1e0] sm:$0xff]
    %v470 = vld [vmem:[#allocation10 + $0x1e8] sm:$0xff]
    %v471 = vld [vmem:[#allocation10 + $0x1f0] sm:$0xff]
    %v472 = vld [vmem:[#allocation10 + $0x1f8] sm:$0xff]
    %473 = vmatprep.subr.mxu0 %v470
    %474 = vmatpush1.msra.mxu0 %v469
    %475 = vmatprep.subr.mxu0 %v466
    %476 = vmatpush1.msra.mxu0 %v465
    %477 = vmatprep.subr.mxu0 %v462
    %478 = vmatpush1.msra.mxu0 %v461
    %479 = vmatprep.subr.mxu0 %v458
    %480 = vmatpush1.msra.mxu0 %v457
    %481 = vmatprep.subr.mxu0 %v454
    %482 = vmatpush1.msra.mxu0 %v453
    %483 = vmatprep.subr.mxu0 %v450
    %484 = vmatpush1.msra.mxu0 %v449
    %485 = vmatprep.subr.mxu0 %v446
    %486 = vmatpush1.msra.mxu0 %v445
    %487 = vmatprep.subr.mxu0 %v442
    %488 = vmatpush1.msra.mxu0 %v441
    %489 = vmatprep.subr.mxu0 %v438
    %490 = vmatpush1.msra.mxu0 %v437
    %491 = vmatprep.subr.mxu0 %v434
    %492 = vmatpush1.msra.mxu0 %v433
    %493 = vmatprep.subr.mxu0 %v430
    %494 = vmatpush1.msra.mxu0 %v429
    %495 = vmatprep.subr.mxu0 %v426
    %496 = vmatpush1.msra.mxu0 %v425
    %497 = vmatprep.subr.mxu0 %v422
    %498 = vmatpush1.msra.mxu0 %v421
    %499 = vmatprep.subr.mxu0 %v418
    %500 = vmatpush1.msra.mxu0 %v417
    %501 = vmatprep.subr.mxu0 %v414
    %502 = vmatpush1.msra.mxu0 %v413
    %503 = vmatprep.subr.mxu0 %v410
    %504 = vmatpush1.msra.mxu0 %v409
    %505 = vmatprep.subr.mxu0 0.0
    %506 = vmatpush2.msra.mxu0 0.0
    %507 = vmatprep.subr.mxu0 0.0
    %508 = vmatpush2.msra.mxu0 0.0
    %509 = vmatprep.subr.mxu0 0.0
    %510 = vmatpush2.msra.mxu0 0.0
    %511 = vmatprep.subr.mxu0 0.0
    %512 = vmatpush2.msra.mxu0 0.0
    %513 = vmatprep.subr.mxu0 0.0
    %514 = vmatpush2.msra.mxu0 0.0
    %515 = vmatprep.subr.mxu0 0.0
    %516 = vmatpush2.msra.mxu0 0.0
    %517 = vmatprep.subr.mxu0 0.0
    %518 = vmatpush2.msra.mxu0 0.0
    %519 = vmatprep.subr.mxu0 0.0
    %520 = vmatpush2.msra.mxu0 0.0
    %521 = vmatprep.subr.mxu0 0.0
    %522 = vmatpush2.msra.mxu0 0.0
    %523 = vmatprep.subr.mxu0 0.0
    %524 = vmatpush2.msra.mxu0 0.0
    %525 = vmatprep.subr.mxu0 0.0
    %526 = vmatpush2.msra.mxu0 0.0
    %527 = vmatprep.subr.mxu0 0.0
    %528 = vmatpush2.msra.mxu0 0.0
    %529 = vmatprep.subr.mxu0 0.0
    %530 = vmatpush2.msra.mxu0 0.0
    %531 = vmatprep.subr.mxu0 0.0
    %532 = vmatpush2.msra.mxu0 0.0
    %533 = vmatprep.subr.mxu0 0.0
    %534 = vmatpush2.msra.mxu0 0.0
    %535 = vmatprep.subr.mxu0 0.0
    %536 = vmatpush2.msra.mxu0 0.0
    %537 = vmatprep.mubr.f32.mxu0 0.0
    %538 = vmatmul.mubr.f32.gmra.mxu0 0.0
    %v539 = vpop.f32.mrf.mxu0
    %v540 = vadd.f32 0.0, %v539
    %v541 = vpop.f32.mrf.mxu0
    %v542 = vadd.f32 0.0, %v541
    %543 = vdwg.mxu0
    %544 = vmatprep.subr.mxu0 %v472
    %545 = vmatpush1.msra.mxu0 %v471
    %546 = vmatprep.subr.mxu0 %v468
    %547 = vmatpush1.msra.mxu0 %v467
    %548 = vmatprep.subr.mxu0 %v464
    %549 = vmatpush1.msra.mxu0 %v463
    %550 = vmatprep.subr.mxu0 %v460
    %551 = vmatpush1.msra.mxu0 %v459
    %552 = vmatprep.subr.mxu0 %v456
    %553 = vmatpush1.msra.mxu0 %v455
    %554 = vmatprep.subr.mxu0 %v452
    %555 = vmatpush1.msra.mxu0 %v451
    %556 = vmatprep.subr.mxu0 %v448
    %557 = vmatpush1.msra.mxu0 %v447
    %558 = vmatprep.subr.mxu0 %v444
    %559 = vmatpush1.msra.mxu0 %v443
    %560 = vmatprep.subr.mxu0 %v440
    %561 = vmatpush1.msra.mxu0 %v439
    %562 = vmatprep.subr.mxu0 %v436
    %563 = vmatpush1.msra.mxu0 %v435
    %564 = vmatprep.subr.mxu0 %v432
    %565 = vmatpush1.msra.mxu0 %v431
    %566 = vmatprep.subr.mxu0 %v428
    %567 = vmatpush1.msra.mxu0 %v427
    %568 = vmatprep.subr.mxu0 %v424
    %569 = vmatpush1.msra.mxu0 %v423
    %570 = vmatprep.subr.mxu0 %v420
    %571 = vmatpush1.msra.mxu0 %v419
    %572 = vmatprep.subr.mxu0 %v416
    %573 = vmatpush1.msra.mxu0 %v415
    %574 = vmatprep.subr.mxu0 %v412
    %575 = vmatpush1.msra.mxu0 %v411
    %576 = vmatprep.subr.mxu0 0.0
    %577 = vmatpush2.msra.mxu0 0.0
    %578 = vmatprep.subr.mxu0 0.0
    %579 = vmatpush2.msra.mxu0 0.0
    %580 = vmatprep.subr.mxu0 0.0
    %581 = vmatpush2.msra.mxu0 0.0
    %582 = vmatprep.subr.mxu0 0.0
    %583 = vmatpush2.msra.mxu0 0.0
    %584 = vmatprep.subr.mxu0 0.0
    %585 = vmatpush2.msra.mxu0 0.0
    %586 = vmatprep.subr.mxu0 0.0
    %587 = vmatpush2.msra.mxu0 0.0
    %588 = vmatprep.subr.mxu0 0.0
    %589 = vmatpush2.msra.mxu0 0.0
    %590 = vmatprep.subr.mxu0 0.0
    %591 = vmatpush2.msra.mxu0 0.0
    %592 = vmatprep.subr.mxu0 0.0
    %593 = vmatpush2.msra.mxu0 0.0
    %594 = vmatprep.subr.mxu0 0.0
    %595 = vmatpush2.msra.mxu0 0.0
    %596 = vmatprep.subr.mxu0 0.0
    %597 = vmatpush2.msra.mxu0 0.0
    %598 = vmatprep.subr.mxu0 0.0
    %599 = vmatpush2.msra.mxu0 0.0
    %600 = vmatprep.subr.mxu0 0.0
    %601 = vmatpush2.msra.mxu0 0.0
    %602 = vmatprep.subr.mxu0 0.0
    %603 = vmatpush2.msra.mxu0 0.0
    %604 = vmatprep.subr.mxu0 0.0
    %605 = vmatpush2.msra.mxu0 0.0
    %606 = vmatprep.subr.mxu0 0.0
    %607 = vmatpush2.msra.mxu0 0.0
    %608 = vmatprep.mubr.f32.mxu0 0.0
    %609 = vmatmul.mubr.f32.gmra.mxu0 0.0
    %v610 = vpop.f32.mrf.mxu0
    %v611 = vadd.f32 0.0, %v610
    %v612 = vpop.f32.mrf.mxu0
    %v613 = vadd.f32 0.0, %v612
    %614 = vdwg.mxu0
    %v615 = vadd.f32 %v405, %v540
    %v616 = vadd.f32 %v406, %v542
    %v617 = vadd.f32 %v407, %v611
    %v618 = vadd.f32 %v408, %v613
    %v619 = vxor.u32 %v615, 2147483648
    %v620 = vmul.f32 %v619, 1.442695
    %v621 = vpow.pop %v620
    %v622 = vadd.f32 %v621, 1.0
    %v623 = vrcp.pop %v622
    %v624 = vmul.f32 1.0, %v623
    %v625 = vxor.u32 %v616, 2147483648
    %v626 = vmul.f32 %v625, 1.442695
    %v627 = vpow.pop %v626
    %v628 = vadd.f32 %v627, 1.0
    %v629 = vrcp.pop %v628
    %v630 = vmul.f32 1.0, %v629
    %v631 = vtanh.pop %v617
    %v632 = vxor.u32 %v618, 2147483648
    %v633 = vmul.f32 %v632, 1.442695
    %v634 = vpow.pop %v633
    %v635 = vadd.f32 %v634, 1.0
    %v636 = vrcp.pop %v635
    %v637 = vmul.f32 1.0, %v636
    %v638 = vmul.f32 %v630, 0.0
    %v639 = vmul.f32 %v624, %v631
    %v640 = vadd.f32 %v638, %v639
    %v641 = vtanh.pop %v640
    %v642 = vmul.f32 %v637, %v641
    %643 = vst [vmem:[#allocation2] sm:$0xff] %v642
    %v644 = vld [vmem:[#allocation4 + $0x20] sm:$0xff]
    %v645 = vld [vmem:[#allocation4 + $0x28] sm:$0xff]
    %v646 = vld [vmem:[#allocation4 + $0x30] sm:$0xff]
    %v647 = vld [vmem:[#allocation4 + $0x38] sm:$0xff]
    %v648 = vld [vmem:[#allocation10] sm:$0xff]
    %v649 = vld [vmem:[#allocation10 + $0x8] sm:$0xff]
    %v650 = vld [vmem:[#allocation10 + $0x10] sm:$0xff]
    %v651 = vld [vmem:[#allocation10 + $0x18] sm:$0xff]
    %v652 = vld [vmem:[#allocation10 + $0x20] sm:$0xff]
    %v653 = vld [vmem:[#allocation10 + $0x28] sm:$0xff]
    %v654 = vld [vmem:[#allocation10 + $0x30] sm:$0xff]
    %v655 = vld [vmem:[#allocation10 + $0x38] sm:$0xff]
    %v656 = vld [vmem:[#allocation10 + $0x40] sm:$0xff]
    %v657 = vld [vmem:[#allocation10 + $0x48] sm:$0xff]
    %v658 = vld [vmem:[#allocation10 + $0x50] sm:$0xff]
    %v659 = vld [vmem:[#allocation10 + $0x58] sm:$0xff]
    %v660 = vld [vmem:[#allocation10 + $0x60] sm:$0xff]
    %v661 = vld [vmem:[#allocation10 + $0x68] sm:$0xff]
    %v662 = vld [vmem:[#allocation10 + $0x70] sm:$0xff]
    %v663 = vld [vmem:[#allocation10 + $0x78] sm:$0xff]
    %v664 = vld [vmem:[#allocation10 + $0x80] sm:$0xff]
    %v665 = vld [vmem:[#allocation10 + $0x88] sm:$0xff]
    %v666 = vld [vmem:[#allocation10 + $0x90] sm:$0xff]
    %v667 = vld [vmem:[#allocation10 + $0x98] sm:$0xff]
    %v668 = vld [vmem:[#allocation10 + $0xa0] sm:$0xff]
    %v669 = vld [vmem:[#allocation10 + $0xa8] sm:$0xff]
    %v670 = vld [vmem:[#allocation10 + $0xb0] sm:$0xff]
    %v671 = vld [vmem:[#allocation10 + $0xb8] sm:$0xff]
    %v672 = vld [vmem:[#allocation10 + $0xc0] sm:$0xff]
    %v673 = vld [vmem:[#allocation10 + $0xc8] sm:$0xff]
    %v674 = vld [vmem:[#allocation10 + $0xd0] sm:$0xff]
    %v675 = vld [vmem:[#allocation10 + $0xd8] sm:$0xff]
    %v676 = vld [vmem:[#allocation10 + $0xe0] sm:$0xff]
    %v677 = vld [vmem:[#allocation10 + $0xe8] sm:$0xff]
    %v678 = vld [vmem:[#allocation10 + $0xf0] sm:$0xff]
    %v679 = vld [vmem:[#allocation10 + $0xf8] sm:$0xff]
    %v680 = vld [vmem:[#allocation10 + $0x100] sm:$0xff]
    %v681 = vld [vmem:[#allocation10 + $0x108] sm:$0xff]
    %v682 = vld [vmem:[#allocation10 + $0x110] sm:$0xff]
    %v683 = vld [vmem:[#allocation10 + $0x118] sm:$0xff]
    %v684 = vld [vmem:[#allocation10 + $0x120] sm:$0xff]
    %v685 = vld [vmem:[#allocation10 + $0x128] sm:$0xff]
    %v686 = vld [vmem:[#allocation10 + $0x130] sm:$0xff]
    %v687 = vld [vmem:[#allocation10 + $0x138] sm:$0xff]
    %v688 = vld [vmem:[#allocation10 + $0x140] sm:$0xff]
    %v689 = vld [vmem:[#allocation10 + $0x148] sm:$0xff]
    %v690 = vld [vmem:[#allocation10 + $0x150] sm:$0xff]
    %v691 = vld [vmem:[#allocation10 + $0x158] sm:$0xff]
    %v692 = vld [vmem:[#allocation10 + $0x160] sm:$0xff]
    %v693 = vld [vmem:[#allocation10 + $0x168] sm:$0xff]
    %v694 = vld [vmem:[#allocation10 + $0x170] sm:$0xff]
    %v695 = vld [vmem:[#allocation10 + $0x178] sm:$0xff]
    %v696 = vld [vmem:[#allocation10 + $0x180] sm:$0xff]
    %v697 = vld [vmem:[#allocation10 + $0x188] sm:$0xff]
    %v698 = vld [vmem:[#allocation10 + $0x190] sm:$0xff]
    %v699 = vld [vmem:[#allocation10 + $0x198] sm:$0xff]
    %v700 = vld [vmem:[#allocation10 + $0x1a0] sm:$0xff]
    %v701 = vld [vmem:[#allocation10 + $0x1a8] sm:$0xff]
    %v702 = vld [vmem:[#allocation10 + $0x1b0] sm:$0xff]
    %v703 = vld [vmem:[#allocation10 + $0x1b8] sm:$0xff]
    %v704 = vld [vmem:[#allocation10 + $0x1c0] sm:$0xff]
    %v705 = vld [vmem:[#allocation10 + $0x1c8] sm:$0xff]
    %v706 = vld [vmem:[#allocation10 + $0x1d0] sm:$0xff]
    %v707 = vld [vmem:[#allocation10 + $0x1d8] sm:$0xff]
    %v708 = vld [vmem:[#allocation10 + $0x1e0] sm:$0xff]
    %v709 = vld [vmem:[#allocation10 + $0x1e8] sm:$0xff]
    %v710 = vld [vmem:[#allocation10 + $0x1f0] sm:$0xff]
    %v711 = vld [vmem:[#allocation10 + $0x1f8] sm:$0xff]
    %712 = vmatprep.subr.mxu0 %v709
    %713 = vmatpush1.msra.mxu0 %v708
    %714 = vmatprep.subr.mxu0 %v705
    %715 = vmatpush1.msra.mxu0 %v704
    %716 = vmatprep.subr.mxu0 %v701
    %717 = vmatpush1.msra.mxu0 %v700
    %718 = vmatprep.subr.mxu0 %v697
    %719 = vmatpush1.msra.mxu0 %v696
    %720 = vmatprep.subr.mxu0 %v693
    %721 = vmatpush1.msra.mxu0 %v692
    %722 = vmatprep.subr.mxu0 %v689
    %723 = vmatpush1.msra.mxu0 %v688
    %724 = vmatprep.subr.mxu0 %v685
    %725 = vmatpush1.msra.mxu0 %v684
    %726 = vmatprep.subr.mxu0 %v681
    %727 = vmatpush1.msra.mxu0 %v680
    %728 = vmatprep.subr.mxu0 %v677
    %729 = vmatpush1.msra.mxu0 %v676
    %730 = vmatprep.subr.mxu0 %v673
    %731 = vmatpush1.msra.mxu0 %v672
    %732 = vmatprep.subr.mxu0 %v669
    %733 = vmatpush1.msra.mxu0 %v668
    %734 = vmatprep.subr.mxu0 %v665
    %735 = vmatpush1.msra.mxu0 %v664
    %736 = vmatprep.subr.mxu0 %v661
    %737 = vmatpush1.msra.mxu0 %v660
    %738 = vmatprep.subr.mxu0 %v657
    %739 = vmatpush1.msra.mxu0 %v656
    %740 = vmatprep.subr.mxu0 %v653
    %741 = vmatpush1.msra.mxu0 %v652
    %742 = vmatprep.subr.mxu0 %v649
    %743 = vmatpush1.msra.mxu0 %v648
    %744 = vmatprep.subr.mxu0 0.0
    %745 = vmatpush2.msra.mxu0 0.0
    %746 = vmatprep.subr.mxu0 0.0
    %747 = vmatpush2.msra.mxu0 0.0
    %748 = vmatprep.subr.mxu0 0.0
    %749 = vmatpush2.msra.mxu0 0.0
    %750 = vmatprep.subr.mxu0 0.0
    %751 = vmatpush2.msra.mxu0 0.0
    %752 = vmatprep.subr.mxu0 0.0
    %753 = vmatpush2.msra.mxu0 0.0
    %754 = vmatprep.subr.mxu0 0.0
    %755 = vmatpush2.msra.mxu0 0.0
    %756 = vmatprep.subr.mxu0 0.0
    %757 = vmatpush2.msra.mxu0 0.0
    %758 = vmatprep.subr.mxu0 0.0
    %759 = vmatpush2.msra.mxu0 0.0
    %760 = vmatprep.subr.mxu0 0.0
    %761 = vmatpush2.msra.mxu0 0.0
    %762 = vmatprep.subr.mxu0 0.0
    %763 = vmatpush2.msra.mxu0 0.0
    %764 = vmatprep.subr.mxu0 0.0
    %765 = vmatpush2.msra.mxu0 0.0
    %766 = vmatprep.subr.mxu0 0.0
    %767 = vmatpush2.msra.mxu0 0.0
    %768 = vmatprep.subr.mxu0 0.0
    %769 = vmatpush2.msra.mxu0 0.0
    %770 = vmatprep.subr.mxu0 0.0
    %771 = vmatpush2.msra.mxu0 0.0
    %772 = vmatprep.subr.mxu0 0.0
    %773 = vmatpush2.msra.mxu0 0.0
    %774 = vmatprep.subr.mxu0 0.0
    %775 = vmatpush2.msra.mxu0 0.0
    %776 = vmatprep.mubr.f32.mxu0 0.0
    %777 = vmatmul.mubr.f32.gmra.mxu0 %v642
    %v778 = vpop.f32.mrf.mxu0
    %v779 = vadd.f32 0.0, %v778
    %v780 = vpop.f32.mrf.mxu0
    %v781 = vadd.f32 0.0, %v780
    %782 = vdwg.mxu0
    %783 = vmatprep.subr.mxu0 %v711
    %784 = vmatpush1.msra.mxu0 %v710
    %785 = vmatprep.subr.mxu0 %v707
    %786 = vmatpush1.msra.mxu0 %v706
    %787 = vmatprep.subr.mxu0 %v703
    %788 = vmatpush1.msra.mxu0 %v702
    %789 = vmatprep.subr.mxu0 %v699
    %790 = vmatpush1.msra.mxu0 %v698
    %791 = vmatprep.subr.mxu0 %v695
    %792 = vmatpush1.msra.mxu0 %v694
    %793 = vmatprep.subr.mxu0 %v691
    %794 = vmatpush1.msra.mxu0 %v690
    %795 = vmatprep.subr.mxu0 %v687
    %796 = vmatpush1.msra.mxu0 %v686
    %797 = vmatprep.subr.mxu0 %v683
    %798 = vmatpush1.msra.mxu0 %v682
    %799 = vmatprep.subr.mxu0 %v679
    %800 = vmatpush1.msra.mxu0 %v678
    %801 = vmatprep.subr.mxu0 %v675
    %802 = vmatpush1.msra.mxu0 %v674
    %803 = vmatprep.subr.mxu0 %v671
    %804 = vmatpush1.msra.mxu0 %v670
    %805 = vmatprep.subr.mxu0 %v667
    %806 = vmatpush1.msra.mxu0 %v666
    %807 = vmatprep.subr.mxu0 %v663
    %808 = vmatpush1.msra.mxu0 %v662
    %809 = vmatprep.subr.mxu0 %v659
    %810 = vmatpush1.msra.mxu0 %v658
    %811 = vmatprep.subr.mxu0 %v655
    %812 = vmatpush1.msra.mxu0 %v654
    %813 = vmatprep.subr.mxu0 %v651
    %814 = vmatpush1.msra.mxu0 %v650
    %815 = vmatprep.subr.mxu0 0.0
    %816 = vmatpush2.msra.mxu0 0.0
    %817 = vmatprep.subr.mxu0 0.0
    %818 = vmatpush2.msra.mxu0 0.0
    %819 = vmatprep.subr.mxu0 0.0
    %820 = vmatpush2.msra.mxu0 0.0
    %821 = vmatprep.subr.mxu0 0.0
    %822 = vmatpush2.msra.mxu0 0.0
    %823 = vmatprep.subr.mxu0 0.0
    %824 = vmatpush2.msra.mxu0 0.0
    %825 = vmatprep.subr.mxu0 0.0
    %826 = vmatpush2.msra.mxu0 0.0
    %827 = vmatprep.subr.mxu0 0.0
    %828 = vmatpush2.msra.mxu0 0.0
    %829 = vmatprep.subr.mxu0 0.0
    %830 = vmatpush2.msra.mxu0 0.0
    %831 = vmatprep.subr.mxu0 0.0
    %832 = vmatpush2.msra.mxu0 0.0
    %833 = vmatprep.subr.mxu0 0.0
    %834 = vmatpush2.msra.mxu0 0.0
    %835 = vmatprep.subr.mxu0 0.0
    %836 = vmatpush2.msra.mxu0 0.0
    %837 = vmatprep.subr.mxu0 0.0
    %838 = vmatpush2.msra.mxu0 0.0
    %839 = vmatprep.subr.mxu0 0.0
    %840 = vmatpush2.msra.mxu0 0.0
    %841 = vmatprep.subr.mxu0 0.0
    %842 = vmatpush2.msra.mxu0 0.0
    %843 = vmatprep.subr.mxu0 0.0
    %844 = vmatpush2.msra.mxu0 0.0
    %845 = vmatprep.subr.mxu0 0.0
    %846 = vmatpush2.msra.mxu0 0.0
    %847 = vmatprep.mubr.f32.mxu0 0.0
    %848 = vmatmul.mubr.f32.gmra.mxu0 %v642
    %v849 = vpop.f32.mrf.mxu0
    %v850 = vadd.f32 0.0, %v849
    %v851 = vpop.f32.mrf.mxu0
    %v852 = vadd.f32 0.0, %v851
    %853 = vdwg.mxu0
    %v854 = vadd.f32 %v644, %v779
    %v855 = vadd.f32 %v645, %v781
    %v856 = vadd.f32 %v646, %v850
    %v857 = vadd.f32 %v647, %v852
    %v858 = vxor.u32 %v854, 2147483648
    %v859 = vmul.f32 %v858, 1.442695
    %v860 = vpow.pop %v859
    %v861 = vadd.f32 %v860, 1.0
    %v862 = vrcp.pop %v861
    %v863 = vmul.f32 1.0, %v862
    %v864 = vxor.u32 %v855, 2147483648
    %v865 = vmul.f32 %v864, 1.442695
    %v866 = vpow.pop %v865
    %v867 = vadd.f32 %v866, 1.0
    %v868 = vrcp.pop %v867
    %v869 = vmul.f32 1.0, %v868
    %v870 = vtanh.pop %v856
    %v871 = vxor.u32 %v857, 2147483648
    %v872 = vmul.f32 %v871, 1.442695
    %v873 = vpow.pop %v872
    %v874 = vadd.f32 %v873, 1.0
    %v875 = vrcp.pop %v874
    %v876 = vmul.f32 1.0, %v875
    %v877 = vmul.f32 %v869, %v640
    %v878 = vmul.f32 %v863, %v870
    %v879 = vadd.f32 %v877, %v878
    %v880 = vtanh.pop %v879
    %v881 = vmul.f32 %v876, %v880
    %882 = vst [vmem:[#allocation2 + $0x8] sm:$0xff] %v881
    %v883 = vld [vmem:[#allocation4 + $0x40] sm:$0xff]
    %v884 = vld [vmem:[#allocation4 + $0x48] sm:$0xff]
    %v885 = vld [vmem:[#allocation4 + $0x50] sm:$0xff]
    %v886 = vld [vmem:[#allocation4 + $0x58] sm:$0xff]
    %v887 = vld [vmem:[#allocation10] sm:$0xff]
    %v888 = vld [vmem:[#allocation10 + $0x8] sm:$0xff]
    %v889 = vld [vmem:[#allocation10 + $0x10] sm:$0xff]
    %v890 = vld [vmem:[#allocation10 + $0x18] sm:$0xff]
    %v891 = vld [vmem:[#allocation10 + $0x20] sm:$0xff]
    %v892 = vld [vmem:[#allocation10 + $0x28] sm:$0xff]
    %v893 = vld [vmem:[#allocation10 + $0x30] sm:$0xff]
    %v894 = vld [vmem:[#allocation10 + $0x38] sm:$0xff]
    %v895 = vld [vmem:[#allocation10 + $0x40] sm:$0xff]
    %v896 = vld [vmem:[#allocation10 + $0x48] sm:$0xff]
    %v897 = vld [vmem:[#allocation10 + $0x50] sm:$0xff]
    %v898 = vld [vmem:[#allocation10 + $0x58] sm:$0xff]
    %v899 = vld [vmem:[#allocation10 + $0x60] sm:$0xff]
    %v900 = vld [vmem:[#allocation10 + $0x68] sm:$0xff]
    %v901 = vld [vmem:[#allocation10 + $0x70] sm:$0xff]
    %v902 = vld [vmem:[#allocation10 + $0x78] sm:$0xff]
    %v903 = vld [vmem:[#allocation10 + $0x80] sm:$0xff]
    %v904 = vld [vmem:[#allocation10 + $0x88] sm:$0xff]
    %v905 = vld [vmem:[#allocation10 + $0x90] sm:$0xff]
    %v906 = vld [vmem:[#allocation10 + $0x98] sm:$0xff]
    %v907 = vld [vmem:[#allocation10 + $0xa0] sm:$0xff]
    %v908 = vld [vmem:[#allocation10 + $0xa8] sm:$0xff]
    %v909 = vld [vmem:[#allocation10 + $0xb0] sm:$0xff]
    %v910 = vld [vmem:[#allocation10 + $0xb8] sm:$0xff]
    %v911 = vld [vmem:[#allocation10 + $0xc0] sm:$0xff]
    %v912 = vld [vmem:[#allocation10 + $0xc8] sm:$0xff]
    %v913 = vld [vmem:[#allocation10 + $0xd0] sm:$0xff]
    %v914 = vld [vmem:[#allocation10 + $0xd8] sm:$0xff]
    %v915 = vld [vmem:[#allocation10 + $0xe0] sm:$0xff]
    %v916 = vld [vmem:[#allocation10 + $0xe8] sm:$0xff]
    %v917 = vld [vmem:[#allocation10 + $0xf0] sm:$0xff]
    %v918 = vld [vmem:[#allocation10 + $0xf8] sm:$0xff]
    %v919 = vld [vmem:[#allocation10 + $0x100] sm:$0xff]
    %v920 = vld [vmem:[#allocation10 + $0x108] sm:$0xff]
    %v921 = vld [vmem:[#allocation10 + $0x110] sm:$0xff]
    %v922 = vld [vmem:[#allocation10 + $0x118] sm:$0xff]
    %v923 = vld [vmem:[#allocation10 + $0x120] sm:$0xff]
    %v924 = vld [vmem:[#allocation10 + $0x128] sm:$0xff]
    %v925 = vld [vmem:[#allocation10 + $0x130] sm:$0xff]
    %v926 = vld [vmem:[#allocation10 + $0x138] sm:$0xff]
    %v927 = vld [vmem:[#allocation10 + $0x140] sm:$0xff]
    %v928 = vld [vmem:[#allocation10 + $0x148] sm:$0xff]
    %v929 = vld [vmem:[#allocation10 + $0x150] sm:$0xff]
    %v930 = vld [vmem:[#allocation10 + $0x158] sm:$0xff]
    %v931 = vld [vmem:[#allocation10 + $0x160] sm:$0xff]
    %v932 = vld [vmem:[#allocation10 + $0x168] sm:$0xff]
    %v933 = vld [vmem:[#allocation10 + $0x170] sm:$0xff]
    %v934 = vld [vmem:[#allocation10 + $0x178] sm:$0xff]
    %v935 = vld [vmem:[#allocation10 + $0x180] sm:$0xff]
    %v936 = vld [vmem:[#allocation10 + $0x188] sm:$0xff]
    %v937 = vld [vmem:[#allocation10 + $0x190] sm:$0xff]
    %v938 = vld [vmem:[#allocation10 + $0x198] sm:$0xff]
    %v939 = vld [vmem:[#allocation10 + $0x1a0] sm:$0xff]
    %v940 = vld [vmem:[#allocation10 + $0x1a8] sm:$0xff]
    %v941 = vld [vmem:[#allocation10 + $0x1b0] sm:$0xff]
    %v942 = vld [vmem:[#allocation10 + $0x1b8] sm:$0xff]
    %v943 = vld [vmem:[#allocation10 + $0x1c0] sm:$0xff]
    %v944 = vld [vmem:[#allocation10 + $0x1c8] sm:$0xff]
    %v945 = vld [vmem:[#allocation10 + $0x1d0] sm:$0xff]
    %v946 = vld [vmem:[#allocation10 + $0x1d8] sm:$0xff]
    %v947 = vld [vmem:[#allocation10 + $0x1e0] sm:$0xff]
    %v948 = vld [vmem:[#allocation10 + $0x1e8] sm:$0xff]
    %v949 = vld [vmem:[#allocation10 + $0x1f0] sm:$0xff]
    %v950 = vld [vmem:[#allocation10 + $0x1f8] sm:$0xff]
    %951 = vmatprep.subr.mxu0 %v948
    %952 = vmatpush1.msra.mxu0 %v947
    %953 = vmatprep.subr.mxu0 %v944
    %954 = vmatpush1.msra.mxu0 %v943
    %955 = vmatprep.subr.mxu0 %v940
    %956 = vmatpush1.msra.mxu0 %v939
    %957 = vmatprep.subr.mxu0 %v936
    %958 = vmatpush1.msra.mxu0 %v935
    %959 = vmatprep.subr.mxu0 %v932
    %960 = vmatpush1.msra.mxu0 %v931
    %961 = vmatprep.subr.mxu0 %v928
    %962 = vmatpush1.msra.mxu0 %v927
    %963 = vmatprep.subr.mxu0 %v924
    %964 = vmatpush1.msra.mxu0 %v923
    %965 = vmatprep.subr.mxu0 %v920
    %966 = vmatpush1.msra.mxu0 %v919
    %967 = vmatprep.subr.mxu0 %v916
    %968 = vmatpush1.msra.mxu0 %v915
    %969 = vmatprep.subr.mxu0 %v912
    %970 = vmatpush1.msra.mxu0 %v911
    %971 = vmatprep.subr.mxu0 %v908
    %972 = vmatpush1.msra.mxu0 %v907
    %973 = vmatprep.subr.mxu0 %v904
    %974 = vmatpush1.msra.mxu0 %v903
    %975 = vmatprep.subr.mxu0 %v900
    %976 = vmatpush1.msra.mxu0 %v899
    %977 = vmatprep.subr.mxu0 %v896
    %978 = vmatpush1.msra.mxu0 %v895
    %979 = vmatprep.subr.mxu0 %v892
    %980 = vmatpush1.msra.mxu0 %v891
    %981 = vmatprep.subr.mxu0 %v888
    %982 = vmatpush1.msra.mxu0 %v887
    %983 = vmatprep.subr.mxu0 0.0
    %984 = vmatpush2.msra.mxu0 0.0
    %985 = vmatprep.subr.mxu0 0.0
    %986 = vmatpush2.msra.mxu0 0.0
    %987 = vmatprep.subr.mxu0 0.0
    %988 = vmatpush2.msra.mxu0 0.0
    %989 = vmatprep.subr.mxu0 0.0
    %990 = vmatpush2.msra.mxu0 0.0
    %991 = vmatprep.subr.mxu0 0.0
    %992 = vmatpush2.msra.mxu0 0.0
    %993 = vmatprep.subr.mxu0 0.0
    %994 = vmatpush2.msra.mxu0 0.0
    %995 = vmatprep.subr.mxu0 0.0
    %996 = vmatpush2.msra.mxu0 0.0
    %997 = vmatprep.subr.mxu0 0.0
    %998 = vmatpush2.msra.mxu0 0.0
    %999 = vmatprep.subr.mxu0 0.0
    %1000 = vmatpush2.msra.mxu0 0.0
    %1001 = vmatprep.subr.mxu0 0.0
    %1002 = vmatpush2.msra.mxu0 0.0
    %1003 = vmatprep.subr.mxu0 0.0
    %1004 = vmatpush2.msra.mxu0 0.0
    %1005 = vmatprep.subr.mxu0 0.0
    %1006 = vmatpush2.msra.mxu0 0.0
    %1007 = vmatprep.subr.mxu0 0.0
    %1008 = vmatpush2.msra.mxu0 0.0
    %1009 = vmatprep.subr.mxu0 0.0
    %1010 = vmatpush2.msra.mxu0 0.0
    %1011 = vmatprep.subr.mxu0 0.0
    %1012 = vmatpush2.msra.mxu0 0.0
    %1013 = vmatprep.subr.mxu0 0.0
    %1014 = vmatpush2.msra.mxu0 0.0
    %1015 = vmatprep.mubr.f32.mxu0 0.0
    %1016 = vmatmul.mubr.f32.gmra.mxu0 %v881
    %v1017 = vpop.f32.mrf.mxu0
    %v1018 = vadd.f32 0.0, %v1017
    %v1019 = vpop.f32.mrf.mxu0
    %v1020 = vadd.f32 0.0, %v1019
    %1021 = vdwg.mxu0
    %1022 = vmatprep.subr.mxu0 %v950
    %1023 = vmatpush1.msra.mxu0 %v949
    %1024 = vmatprep.subr.mxu0 %v946
    %1025 = vmatpush1.msra.mxu0 %v945
    %1026 = vmatprep.subr.mxu0 %v942
    %1027 = vmatpush1.msra.mxu0 %v941
    %1028 = vmatprep.subr.mxu0 %v938
    %1029 = vmatpush1.msra.mxu0 %v937
    %1030 = vmatprep.subr.mxu0 %v934
    %1031 = vmatpush1.msra.mxu0 %v933
    %1032 = vmatprep.subr.mxu0 %v930
    %1033 = vmatpush1.msra.mxu0 %v929
    %1034 = vmatprep.subr.mxu0 %v926
    %1035 = vmatpush1.msra.mxu0 %v925
    %1036 = vmatprep.subr.mxu0 %v922
    %1037 = vmatpush1.msra.mxu0 %v921
    %1038 = vmatprep.subr.mxu0 %v918
    %1039 = vmatpush1.msra.mxu0 %v917
    %1040 = vmatprep.subr.mxu0 %v914
    %1041 = vmatpush1.msra.mxu0 %v913
    %1042 = vmatprep.subr.mxu0 %v910
    %1043 = vmatpush1.msra.mxu0 %v909
    %1044 = vmatprep.subr.mxu0 %v906
    %1045 = vmatpush1.msra.mxu0 %v905
    %1046 = vmatprep.subr.mxu0 %v902
    %1047 = vmatpush1.msra.mxu0 %v901
    %1048 = vmatprep.subr.mxu0 %v898
    %1049 = vmatpush1.msra.mxu0 %v897
    %1050 = vmatprep.subr.mxu0 %v894
    %1051 = vmatpush1.msra.mxu0 %v893
    %1052 = vmatprep.subr.mxu0 %v890
    %1053 = vmatpush1.msra.mxu0 %v889
    %1054 = vmatprep.subr.mxu0 0.0
    %1055 = vmatpush2.msra.mxu0 0.0
    %1056 = vmatprep.subr.mxu0 0.0
    %1057 = vmatpush2.msra.mxu0 0.0
    %1058 = vmatprep.subr.mxu0 0.0
    %1059 = vmatpush2.msra.mxu0 0.0
    %1060 = vmatprep.subr.mxu0 0.0
    %1061 = vmatpush2.msra.mxu0 0.0
    %1062 = vmatprep.subr.mxu0 0.0
    %1063 = vmatpush2.msra.mxu0 0.0
    %1064 = vmatprep.subr.mxu0 0.0
    %1065 = vmatpush2.msra.mxu0 0.0
    %1066 = vmatprep.subr.mxu0 0.0
    %1067 = vmatpush2.msra.mxu0 0.0
    %1068 = vmatprep.subr.mxu0 0.0
    %1069 = vmatpush2.msra.mxu0 0.0
    %1070 = vmatprep.subr.mxu0 0.0
    %1071 = vmatpush2.msra.mxu0 0.0
    %1072 = vmatprep.subr.mxu0 0.0
    %1073 = vmatpush2.msra.mxu0 0.0
    %1074 = vmatprep.subr.mxu0 0.0
    %1075 = vmatpush2.msra.mxu0 0.0
    %1076 = vmatprep.subr.mxu0 0.0
    %1077 = vmatpush2.msra.mxu0 0.0
    %1078 = vmatprep.subr.mxu0 0.0
    %1079 = vmatpush2.msra.mxu0 0.0
    %1080 = vmatprep.subr.mxu0 0.0
    %1081 = vmatpush2.msra.mxu0 0.0
    %1082 = vmatprep.subr.mxu0 0.0
    %1083 = vmatpush2.msra.mxu0 0.0
    %1084 = vmatprep.subr.mxu0 0.0
    %1085 = vmatpush2.msra.mxu0 0.0
    %1086 = vmatprep.mubr.f32.mxu0 0.0
    %1087 = vmatmul.mubr.f32.gmra.mxu0 %v881
    %v1088 = vpop.f32.mrf.mxu0
    %v1089 = vadd.f32 0.0, %v1088
    %v1090 = vpop.f32.mrf.mxu0
    %v1091 = vadd.f32 0.0, %v1090
    %1092 = vdwg.mxu0
    %v1093 = vadd.f32 %v883, %v1018
    %v1094 = vadd.f32 %v884, %v1020
    %v1095 = vadd.f32 %v885, %v1089
    %v1096 = vadd.f32 %v886, %v1091
    %v1097 = vxor.u32 %v1093, 2147483648
    %v1098 = vmul.f32 %v1097, 1.442695
    %v1099 = vpow.pop %v1098
    %v1100 = vadd.f32 %v1099, 1.0
    %v1101 = vrcp.pop %v1100
    %v1102 = vmul.f32 1.0, %v1101
    %v1103 = vxor.u32 %v1094, 2147483648
    %v1104 = vmul.f32 %v1103, 1.442695
    %v1105 = vpow.pop %v1104
    %v1106 = vadd.f32 %v1105, 1.0
    %v1107 = vrcp.pop %v1106
    %v1108 = vmul.f32 1.0, %v1107
    %v1109 = vtanh.pop %v1095
    %v1110 = vxor.u32 %v1096, 2147483648
    %v1111 = vmul.f32 %v1110, 1.442695
    %v1112 = vpow.pop %v1111
    %v1113 = vadd.f32 %v1112, 1.0
    %v1114 = vrcp.pop %v1113
    %v1115 = vmul.f32 1.0, %v1114
    %v1116 = vmul.f32 %v1108, %v879
    %v1117 = vmul.f32 %v1102, %v1109
    %v1118 = vadd.f32 %v1116, %v1117
    %v1119 = vtanh.pop %v1118
    %v1120 = vmul.f32 %v1115, %v1119
    %1121 = vst [vmem:[#allocation2 + $0x10] sm:$0xff] %v1120
    %v1122 = vld [vmem:[#allocation4 + $0x60] sm:$0xff]
    %v1123 = vld [vmem:[#allocation4 + $0x68] sm:$0xff]
    %v1124 = vld [vmem:[#allocation4 + $0x70] sm:$0xff]
    %v1125 = vld [vmem:[#allocation4 + $0x78] sm:$0xff]
    %v1126 = vld [vmem:[#allocation10] sm:$0xff]
    %v1127 = vld [vmem:[#allocation10 + $0x8] sm:$0xff]
    %v1128 = vld [vmem:[#allocation10 + $0x10] sm:$0xff]
    %v1129 = vld [vmem:[#allocation10 + $0x18] sm:$0xff]
    %v1130 = vld [vmem:[#allocation10 + $0x20] sm:$0xff]
    %v1131 = vld [vmem:[#allocation10 + $0x28] sm:$0xff]
    %v1132 = vld [vmem:[#allocation10 + $0x30] sm:$0xff]
    %v1133 = vld [vmem:[#allocation10 + $0x38] sm:$0xff]
    %v1134 = vld [vmem:[#allocation10 + $0x40] sm:$0xff]
    %v1135 = vld [vmem:[#allocation10 + $0x48] sm:$0xff]
    %v1136 = vld [vmem:[#allocation10 + $0x50] sm:$0xff]
    %v1137 = vld [vmem:[#allocation10 + $0x58] sm:$0xff]
    %v1138 = vld [vmem:[#allocation10 + $0x60] sm:$0xff]
    %v1139 = vld [vmem:[#allocation10 + $0x68] sm:$0xff]
    %v1140 = vld [vmem:[#allocation10 + $0x70] sm:$0xff]
    %v1141 = vld [vmem:[#allocation10 + $0x78] sm:$0xff]
    %v1142 = vld [vmem:[#allocation10 + $0x80] sm:$0xff]
    %v1143 = vld [vmem:[#allocation10 + $0x88] sm:$0xff]
    %v1144 = vld [vmem:[#allocation10 + $0x90] sm:$0xff]
    %v1145 = vld [vmem:[#allocation10 + $0x98] sm:$0xff]
    %v1146 = vld [vmem:[#allocation10 + $0xa0] sm:$0xff]
    %v1147 = vld [vmem:[#allocation10 + $0xa8] sm:$0xff]
    %v1148 = vld [vmem:[#allocation10 + $0xb0] sm:$0xff]
    %v1149 = vld [vmem:[#allocation10 + $0xb8] sm:$0xff]
    %v1150 = vld [vmem:[#allocation10 + $0xc0] sm:$0xff]
    %v1151 = vld [vmem:[#allocation10 + $0xc8] sm:$0xff]
    %v1152 = vld [vmem:[#allocation10 + $0xd0] sm:$0xff]
    %v1153 = vld [vmem:[#allocation10 + $0xd8] sm:$0xff]
    %v1154 = vld [vmem:[#allocation10 + $0xe0] sm:$0xff]
    %v1155 = vld [vmem:[#allocation10 + $0xe8] sm:$0xff]
    %v1156 = vld [vmem:[#allocation10 + $0xf0] sm:$0xff]
    %v1157 = vld [vmem:[#allocation10 + $0xf8] sm:$0xff]
    %v1158 = vld [vmem:[#allocation10 + $0x100] sm:$0xff]
    %v1159 = vld [vmem:[#allocation10 + $0x108] sm:$0xff]
    %v1160 = vld [vmem:[#allocation10 + $0x110] sm:$0xff]
    %v1161 = vld [vmem:[#allocation10 + $0x118] sm:$0xff]
    %v1162 = vld [vmem:[#allocation10 + $0x120] sm:$0xff]
    %v1163 = vld [vmem:[#allocation10 + $0x128] sm:$0xff]
    %v1164 = vld [vmem:[#allocation10 + $0x130] sm:$0xff]
    %v1165 = vld [vmem:[#allocation10 + $0x138] sm:$0xff]
    %v1166 = vld [vmem:[#allocation10 + $0x140] sm:$0xff]
    %v1167 = vld [vmem:[#allocation10 + $0x148] sm:$0xff]
    %v1168 = vld [vmem:[#allocation10 + $0x150] sm:$0xff]
    %v1169 = vld [vmem:[#allocation10 + $0x158] sm:$0xff]
    %v1170 = vld [vmem:[#allocation10 + $0x160] sm:$0xff]
    %v1171 = vld [vmem:[#allocation10 + $0x168] sm:$0xff]
    %v1172 = vld [vmem:[#allocation10 + $0x170] sm:$0xff]
    %v1173 = vld [vmem:[#allocation10 + $0x178] sm:$0xff]
    %v1174 = vld [vmem:[#allocation10 + $0x180] sm:$0xff]
    %v1175 = vld [vmem:[#allocation10 + $0x188] sm:$0xff]
    %v1176 = vld [vmem:[#allocation10 + $0x190] sm:$0xff]
    %v1177 = vld [vmem:[#allocation10 + $0x198] sm:$0xff]
    %v1178 = vld [vmem:[#allocation10 + $0x1a0] sm:$0xff]
    %v1179 = vld [vmem:[#allocation10 + $0x1a8] sm:$0xff]
    %v1180 = vld [vmem:[#allocation10 + $0x1b0] sm:$0xff]
    %v1181 = vld [vmem:[#allocation10 + $0x1b8] sm:$0xff]
    %v1182 = vld [vmem:[#allocation10 + $0x1c0] sm:$0xff]
    %v1183 = vld [vmem:[#allocation10 + $0x1c8] sm:$0xff]
    %v1184 = vld [vmem:[#allocation10 + $0x1d0] sm:$0xff]
    %v1185 = vld [vmem:[#allocation10 + $0x1d8] sm:$0xff]
    %v1186 = vld [vmem:[#allocation10 + $0x1e0] sm:$0xff]
    %v1187 = vld [vmem:[#allocation10 + $0x1e8] sm:$0xff]
    %v1188 = vld [vmem:[#allocation10 + $0x1f0] sm:$0xff]
    %v1189 = vld [vmem:[#allocation10 + $0x1f8] sm:$0xff]
    %1190 = vmatprep.subr.mxu0 %v1187
    %1191 = vmatpush1.msra.mxu0 %v1186
    %1192 = vmatprep.subr.mxu0 %v1183
    %1193 = vmatpush1.msra.mxu0 %v1182
    %1194 = vmatprep.subr.mxu0 %v1179
    %1195 = vmatpush1.msra.mxu0 %v1178
    %1196 = vmatprep.subr.mxu0 %v1175
    %1197 = vmatpush1.msra.mxu0 %v1174
    %1198 = vmatprep.subr.mxu0 %v1171
    %1199 = vmatpush1.msra.mxu0 %v1170
    %1200 = vmatprep.subr.mxu0 %v1167
    %1201 = vmatpush1.msra.mxu0 %v1166
    %1202 = vmatprep.subr.mxu0 %v1163
    %1203 = vmatpush1.msra.mxu0 %v1162
    %1204 = vmatprep.subr.mxu0 %v1159
    %1205 = vmatpush1.msra.mxu0 %v1158
    %1206 = vmatprep.subr.mxu0 %v1155
    %1207 = vmatpush1.msra.mxu0 %v1154
    %1208 = vmatprep.subr.mxu0 %v1151
    %1209 = vmatpush1.msra.mxu0 %v1150
    %1210 = vmatprep.subr.mxu0 %v1147
    %1211 = vmatpush1.msra.mxu0 %v1146
    %1212 = vmatprep.subr.mxu0 %v1143
    %1213 = vmatpush1.msra.mxu0 %v1142
    %1214 = vmatprep.subr.mxu0 %v1139
    %1215 = vmatpush1.msra.mxu0 %v1138
    %1216 = vmatprep.subr.mxu0 %v1135
    %1217 = vmatpush1.msra.mxu0 %v1134
    %1218 = vmatprep.subr.mxu0 %v1131
    %1219 = vmatpush1.msra.mxu0 %v1130
    %1220 = vmatprep.subr.mxu0 %v1127
    %1221 = vmatpush1.msra.mxu0 %v1126
    %1222 = vmatprep.subr.mxu0 0.0
    %1223 = vmatpush2.msra.mxu0 0.0
    %1224 = vmatprep.subr.mxu0 0.0
    %1225 = vmatpush2.msra.mxu0 0.0
    %1226 = vmatprep.subr.mxu0 0.0
    %1227 = vmatpush2.msra.mxu0 0.0
    %1228 = vmatprep.subr.mxu0 0.0
    %1229 = vmatpush2.msra.mxu0 0.0
    %1230 = vmatprep.subr.mxu0 0.0
    %1231 = vmatpush2.msra.mxu0 0.0
    %1232 = vmatprep.subr.mxu0 0.0
    %1233 = vmatpush2.msra.mxu0 0.0
    %1234 = vmatprep.subr.mxu0 0.0
    %1235 = vmatpush2.msra.mxu0 0.0
    %1236 = vmatprep.subr.mxu0 0.0
    %1237 = vmatpush2.msra.mxu0 0.0
    %1238 = vmatprep.subr.mxu0 0.0
    %1239 = vmatpush2.msra.mxu0 0.0
    %1240 = vmatprep.subr.mxu0 0.0
    %1241 = vmatpush2.msra.mxu0 0.0
    %1242 = vmatprep.subr.mxu0 0.0
    %1243 = vmatpush2.msra.mxu0 0.0
    %1244 = vmatprep.subr.mxu0 0.0
    %1245 = vmatpush2.msra.mxu0 0.0
    %1246 = vmatprep.subr.mxu0 0.0
    %1247 = vmatpush2.msra.mxu0 0.0
    %1248 = vmatprep.subr.mxu0 0.0
    %1249 = vmatpush2.msra.mxu0 0.0
    %1250 = vmatprep.subr.mxu0 0.0
    %1251 = vmatpush2.msra.mxu0 0.0
    %1252 = vmatprep.subr.mxu0 0.0
    %1253 = vmatpush2.msra.mxu0 0.0
    %1254 = vmatprep.mubr.f32.mxu0 0.0
    %1255 = vmatmul.mubr.f32.gmra.mxu0 %v1120
    %v1256 = vpop.f32.mrf.mxu0
    %v1257 = vadd.f32 0.0, %v1256
    %v1258 = vpop.f32.mrf.mxu0
    %v1259 = vadd.f32 0.0, %v1258
    %1260 = vdwg.mxu0
    %1261 = vmatprep.subr.mxu0 %v1189
    %1262 = vmatpush1.msra.mxu0 %v1188
    %1263 = vmatprep.subr.mxu0 %v1185
    %1264 = vmatpush1.msra.mxu0 %v1184
    %1265 = vmatprep.subr.mxu0 %v1181
    %1266 = vmatpush1.msra.mxu0 %v1180
    %1267 = vmatprep.subr.mxu0 %v1177
    %1268 = vmatpush1.msra.mxu0 %v1176
    %1269 = vmatprep.subr.mxu0 %v1173
    %1270 = vmatpush1.msra.mxu0 %v1172
    %1271 = vmatprep.subr.mxu0 %v1169
    %1272 = vmatpush1.msra.mxu0 %v1168
    %1273 = vmatprep.subr.mxu0 %v1165
    %1274 = vmatpush1.msra.mxu0 %v1164
    %1275 = vmatprep.subr.mxu0 %v1161
    %1276 = vmatpush1.msra.mxu0 %v1160
    %1277 = vmatprep.subr.mxu0 %v1157
    %1278 = vmatpush1.msra.mxu0 %v1156
    %1279 = vmatprep.subr.mxu0 %v1153
    %1280 = vmatpush1.msra.mxu0 %v1152
    %1281 = vmatprep.subr.mxu0 %v1149
    %1282 = vmatpush1.msra.mxu0 %v1148
    %1283 = vmatprep.subr.mxu0 %v1145
    %1284 = vmatpush1.msra.mxu0 %v1144
    %1285 = vmatprep.subr.mxu0 %v1141
    %1286 = vmatpush1.msra.mxu0 %v1140
    %1287 = vmatprep.subr.mxu0 %v1137
    %1288 = vmatpush1.msra.mxu0 %v1136
    %1289 = vmatprep.subr.mxu0 %v1133
    %1290 = vmatpush1.msra.mxu0 %v1132
    %1291 = vmatprep.subr.mxu0 %v1129
    %1292 = vmatpush1.msra.mxu0 %v1128
    %1293 = vmatprep.subr.mxu0 0.0
    %1294 = vmatpush2.msra.mxu0 0.0
    %1295 = vmatprep.subr.mxu0 0.0
    %1296 = vmatpush2.msra.mxu0 0.0
    %1297 = vmatprep.subr.mxu0 0.0
    %1298 = vmatpush2.msra.mxu0 0.0
    %1299 = vmatprep.subr.mxu0 0.0
    %1300 = vmatpush2.msra.mxu0 0.0
    %1301 = vmatprep.subr.mxu0 0.0
    %1302 = vmatpush2.msra.mxu0 0.0
    %1303 = vmatprep.subr.mxu0 0.0
    %1304 = vmatpush2.msra.mxu0 0.0
    %1305 = vmatprep.subr.mxu0 0.0
    %1306 = vmatpush2.msra.mxu0 0.0
    %1307 = vmatprep.subr.mxu0 0.0
    %1308 = vmatpush2.msra.mxu0 0.0
    %1309 = vmatprep.subr.mxu0 0.0
    %1310 = vmatpush2.msra.mxu0 0.0
    %1311 = vmatprep.subr.mxu0 0.0
    %1312 = vmatpush2.msra.mxu0 0.0
    %1313 = vmatprep.subr.mxu0 0.0
    %1314 = vmatpush2.msra.mxu0 0.0
    %1315 = vmatprep.subr.mxu0 0.0
    %1316 = vmatpush2.msra.mxu0 0.0
    %1317 = vmatprep.subr.mxu0 0.0
    %1318 = vmatpush2.msra.mxu0 0.0
    %1319 = vmatprep.subr.mxu0 0.0
    %1320 = vmatpush2.msra.mxu0 0.0
    %1321 = vmatprep.subr.mxu0 0.0
    %1322 = vmatpush2.msra.mxu0 0.0
    %1323 = vmatprep.subr.mxu0 0.0
    %1324 = vmatpush2.msra.mxu0 0.0
    %1325 = vmatprep.mubr.f32.mxu0 0.0
    %1326 = vmatmul.mubr.f32.gmra.mxu0 %v1120
    %v1327 = vpop.f32.mrf.mxu0
    %v1328 = vadd.f32 0.0, %v1327
    %v1329 = vpop.f32.mrf.mxu0
    %v1330 = vadd.f32 0.0, %v1329
    %1331 = vdwg.mxu0
    %v1332 = vadd.f32 %v1122, %v1257
    %v1333 = vadd.f32 %v1123, %v1259
    %v1334 = vadd.f32 %v1124, %v1328
    %v1335 = vadd.f32 %v1125, %v1330
    %v1336 = vxor.u32 %v1332, 2147483648
    %v1337 = vmul.f32 %v1336, 1.442695
    %v1338 = vpow.pop %v1337
    %v1339 = vadd.f32 %v1338, 1.0
    %v1340 = vrcp.pop %v1339
    %v1341 = vmul.f32 1.0, %v1340
    %v1342 = vxor.u32 %v1333, 2147483648
    %v1343 = vmul.f32 %v1342, 1.442695
    %v1344 = vpow.pop %v1343
    %v1345 = vadd.f32 %v1344, 1.0
    %v1346 = vrcp.pop %v1345
    %v1347 = vmul.f32 1.0, %v1346
    %v1348 = vtanh.pop %v1334
    %v1349 = vxor.u32 %v1335, 2147483648
    %v1350 = vmul.f32 %v1349, 1.442695
    %v1351 = vpow.pop %v1350
    %v1352 = vadd.f32 %v1351, 1.0
    %v1353 = vrcp.pop %v1352
    %v1354 = vmul.f32 1.0, %v1353
    %v1355 = vmul.f32 %v1347, %v1118
    %v1356 = vmul.f32 %v1341, %v1348
    %v1357 = vadd.f32 %v1355, %v1356
    %v1358 = vtanh.pop %v1357
    %v1359 = vmul.f32 %v1354, %v1358
    %1360 = vst [vmem:[#allocation2 + $0x18] sm:$0xff] %v1359
    %v1361 = vld [vmem:[#allocation4 + $0x80] sm:$0xff]
    %v1362 = vld [vmem:[#allocation4 + $0x88] sm:$0xff]
    %v1363 = vld [vmem:[#allocation4 + $0x90] sm:$0xff]
    %v1364 = vld [vmem:[#allocation4 + $0x98] sm:$0xff]
    %v1365 = vld [vmem:[#allocation10] sm:$0xff]
    %v1366 = vld [vmem:[#allocation10 + $0x8] sm:$0xff]
    %v1367 = vld [vmem:[#allocation10 + $0x10] sm:$0xff]
    %v1368 = vld [vmem:[#allocation10 + $0x18] sm:$0xff]
    %v1369 = vld [vmem:[#allocation10 + $0x20] sm:$0xff]
    %v1370 = vld [vmem:[#allocation10 + $0x28] sm:$0xff]
    %v1371 = vld [vmem:[#allocation10 + $0x30] sm:$0xff]
    %v1372 = vld [vmem:[#allocation10 + $0x38] sm:$0xff]
    %v1373 = vld [vmem:[#allocation10 + $0x40] sm:$0xff]
    %v1374 = vld [vmem:[#allocation10 + $0x48] sm:$0xff]
    %v1375 = vld [vmem:[#allocation10 + $0x50] sm:$0xff]
    %v1376 = vld [vmem:[#allocation10 + $0x58] sm:$0xff]
    %v1377 = vld [vmem:[#allocation10 + $0x60] sm:$0xff]
    %v1378 = vld [vmem:[#allocation10 + $0x68] sm:$0xff]
    %v1379 = vld [vmem:[#allocation10 + $0x70] sm:$0xff]
    %v1380 = vld [vmem:[#allocation10 + $0x78] sm:$0xff]
    %v1381 = vld [vmem:[#allocation10 + $0x80] sm:$0xff]
    %v1382 = vld [vmem:[#allocation10 + $0x88] sm:$0xff]
    %v1383 = vld [vmem:[#allocation10 + $0x90] sm:$0xff]
    %v1384 = vld [vmem:[#allocation10 + $0x98] sm:$0xff]
    %v1385 = vld [vmem:[#allocation10 + $0xa0] sm:$0xff]
    %v1386 = vld [vmem:[#allocation10 + $0xa8] sm:$0xff]
    %v1387 = vld [vmem:[#allocation10 + $0xb0] sm:$0xff]
    %v1388 = vld [vmem:[#allocation10 + $0xb8] sm:$0xff]
    %v1389 = vld [vmem:[#allocation10 + $0xc0] sm:$0xff]
    %v1390 = vld [vmem:[#allocation10 + $0xc8] sm:$0xff]
    %v1391 = vld [vmem:[#allocation10 + $0xd0] sm:$0xff]
    %v1392 = vld [vmem:[#allocation10 + $0xd8] sm:$0xff]
    %v1393 = vld [vmem:[#allocation10 + $0xe0] sm:$0xff]
    %v1394 = vld [vmem:[#allocation10 + $0xe8] sm:$0xff]
    %v1395 = vld [vmem:[#allocation10 + $0xf0] sm:$0xff]
    %v1396 = vld [vmem:[#allocation10 + $0xf8] sm:$0xff]
    %v1397 = vld [vmem:[#allocation10 + $0x100] sm:$0xff]
    %v1398 = vld [vmem:[#allocation10 + $0x108] sm:$0xff]
    %v1399 = vld [vmem:[#allocation10 + $0x110] sm:$0xff]
    %v1400 = vld [vmem:[#allocation10 + $0x118] sm:$0xff]
    %v1401 = vld [vmem:[#allocation10 + $0x120] sm:$0xff]
    %v1402 = vld [vmem:[#allocation10 + $0x128] sm:$0xff]
    %v1403 = vld [vmem:[#allocation10 + $0x130] sm:$0xff]
    %v1404 = vld [vmem:[#allocation10 + $0x138] sm:$0xff]
    %v1405 = vld [vmem:[#allocation10 + $0x140] sm:$0xff]
    %v1406 = vld [vmem:[#allocation10 + $0x148] sm:$0xff]
    %v1407 = vld [vmem:[#allocation10 + $0x150] sm:$0xff]
    %v1408 = vld [vmem:[#allocation10 + $0x158] sm:$0xff]
    %v1409 = vld [vmem:[#allocation10 + $0x160] sm:$0xff]
    %v1410 = vld [vmem:[#allocation10 + $0x168] sm:$0xff]
    %v1411 = vld [vmem:[#allocation10 + $0x170] sm:$0xff]
    %v1412 = vld [vmem:[#allocation10 + $0x178] sm:$0xff]
    %v1413 = vld [vmem:[#allocation10 + $0x180] sm:$0xff]
    %v1414 = vld [vmem:[#allocation10 + $0x188] sm:$0xff]
    %v1415 = vld [vmem:[#allocation10 + $0x190] sm:$0xff]
    %v1416 = vld [vmem:[#allocation10 + $0x198] sm:$0xff]
    %v1417 = vld [vmem:[#allocation10 + $0x1a0] sm:$0xff]
    %v1418 = vld [vmem:[#allocation10 + $0x1a8] sm:$0xff]
    %v1419 = vld [vmem:[#allocation10 + $0x1b0] sm:$0xff]
    %v1420 = vld [vmem:[#allocation10 + $0x1b8] sm:$0xff]
    %v1421 = vld [vmem:[#allocation10 + $0x1c0] sm:$0xff]
    %v1422 = vld [vmem:[#allocation10 + $0x1c8] sm:$0xff]
    %v1423 = vld [vmem:[#allocation10 + $0x1d0] sm:$0xff]
    %v1424 = vld [vmem:[#allocation10 + $0x1d8] sm:$0xff]
    %v1425 = vld [vmem:[#allocation10 + $0x1e0] sm:$0xff]
    %v1426 = vld [vmem:[#allocation10 + $0x1e8] sm:$0xff]
    %v1427 = vld [vmem:[#allocation10 + $0x1f0] sm:$0xff]
    %v1428 = vld [vmem:[#allocation10 + $0x1f8] sm:$0xff]
    %1429 = vmatprep.subr.mxu0 %v1426
    %1430 = vmatpush1.msra.mxu0 %v1425
    %1431 = vmatprep.subr.mxu0 %v1422
    %1432 = vmatpush1.msra.mxu0 %v1421
    %1433 = vmatprep.subr.mxu0 %v1418
    %1434 = vmatpush1.msra.mxu0 %v1417
    %1435 = vmatprep.subr.mxu0 %v1414
    %1436 = vmatpush1.msra.mxu0 %v1413
    %1437 = vmatprep.subr.mxu0 %v1410
    %1438 = vmatpush1.msra.mxu0 %v1409
    %1439 = vmatprep.subr.mxu0 %v1406
    %1440 = vmatpush1.msra.mxu0 %v1405
    %1441 = vmatprep.subr.mxu0 %v1402
    %1442 = vmatpush1.msra.mxu0 %v1401
    %1443 = vmatprep.subr.mxu0 %v1398
    %1444 = vmatpush1.msra.mxu0 %v1397
    %1445 = vmatprep.subr.mxu0 %v1394
    %1446 = vmatpush1.msra.mxu0 %v1393
    %1447 = vmatprep.subr.mxu0 %v1390
    %1448 = vmatpush1.msra.mxu0 %v1389
    %1449 = vmatprep.subr.mxu0 %v1386
    %1450 = vmatpush1.msra.mxu0 %v1385
    %1451 = vmatprep.subr.mxu0 %v1382
    %1452 = vmatpush1.msra.mxu0 %v1381
    %1453 = vmatprep.subr.mxu0 %v1378
    %1454 = vmatpush1.msra.mxu0 %v1377
    %1455 = vmatprep.subr.mxu0 %v1374
    %1456 = vmatpush1.msra.mxu0 %v1373
    %1457 = vmatprep.subr.mxu0 %v1370
    %1458 = vmatpush1.msra.mxu0 %v1369
    %1459 = vmatprep.subr.mxu0 %v1366
    %1460 = vmatpush1.msra.mxu0 %v1365
    %1461 = vmatprep.subr.mxu0 0.0
    %1462 = vmatpush2.msra.mxu0 0.0
    %1463 = vmatprep.subr.mxu0 0.0
    %1464 = vmatpush2.msra.mxu0 0.0
    %1465 = vmatprep.subr.mxu0 0.0
    %1466 = vmatpush2.msra.mxu0 0.0
    %1467 = vmatprep.subr.mxu0 0.0
    %1468 = vmatpush2.msra.mxu0 0.0
    %1469 = vmatprep.subr.mxu0 0.0
    %1470 = vmatpush2.msra.mxu0 0.0
    %1471 = vmatprep.subr.mxu0 0.0
    %1472 = vmatpush2.msra.mxu0 0.0
    %1473 = vmatprep.subr.mxu0 0.0
    %1474 = vmatpush2.msra.mxu0 0.0
    %1475 = vmatprep.subr.mxu0 0.0
    %1476 = vmatpush2.msra.mxu0 0.0
    %1477 = vmatprep.subr.mxu0 0.0
    %1478 = vmatpush2.msra.mxu0 0.0
    %1479 = vmatprep.subr.mxu0 0.0
    %1480 = vmatpush2.msra.mxu0 0.0
    %1481 = vmatprep.subr.mxu0 0.0
    %1482 = vmatpush2.msra.mxu0 0.0
    %1483 = vmatprep.subr.mxu0 0.0
    %1484 = vmatpush2.msra.mxu0 0.0
    %1485 = vmatprep.subr.mxu0 0.0
    %1486 = vmatpush2.msra.mxu0 0.0
    %1487 = vmatprep.subr.mxu0 0.0
    %1488 = vmatpush2.msra.mxu0 0.0
    %1489 = vmatprep.subr.mxu0 0.0
    %1490 = vmatpush2.msra.mxu0 0.0
    %1491 = vmatprep.subr.mxu0 0.0
    %1492 = vmatpush2.msra.mxu0 0.0
    %1493 = vmatprep.mubr.f32.mxu0 0.0
    %1494 = vmatmul.mubr.f32.gmra.mxu0 %v1359
    %v1495 = vpop.f32.mrf.mxu0
    %v1496 = vadd.f32 0.0, %v1495
    %v1497 = vpop.f32.mrf.mxu0
    %v1498 = vadd.f32 0.0, %v1497
    %1499 = vdwg.mxu0
    %1500 = vmatprep.subr.mxu0 %v1428
    %1501 = vmatpush1.msra.mxu0 %v1427
    %1502 = vmatprep.subr.mxu0 %v1424
    %1503 = vmatpush1.msra.mxu0 %v1423
    %1504 = vmatprep.subr.mxu0 %v1420
    %1505 = vmatpush1.msra.mxu0 %v1419
    %1506 = vmatprep.subr.mxu0 %v1416
    %1507 = vmatpush1.msra.mxu0 %v1415
    %1508 = vmatprep.subr.mxu0 %v1412
    %1509 = vmatpush1.msra.mxu0 %v1411
    %1510 = vmatprep.subr.mxu0 %v1408
    %1511 = vmatpush1.msra.mxu0 %v1407
    %1512 = vmatprep.subr.mxu0 %v1404
    %1513 = vmatpush1.msra.mxu0 %v1403
    %1514 = vmatprep.subr.mxu0 %v1400
    %1515 = vmatpush1.msra.mxu0 %v1399
    %1516 = vmatprep.subr.mxu0 %v1396
    %1517 = vmatpush1.msra.mxu0 %v1395
    %1518 = vmatprep.subr.mxu0 %v1392
    %1519 = vmatpush1.msra.mxu0 %v1391
    %1520 = vmatprep.subr.mxu0 %v1388
    %1521 = vmatpush1.msra.mxu0 %v1387
    %1522 = vmatprep.subr.mxu0 %v1384
    %1523 = vmatpush1.msra.mxu0 %v1383
    %1524 = vmatprep.subr.mxu0 %v1380
    %1525 = vmatpush1.msra.mxu0 %v1379
    %1526 = vmatprep.subr.mxu0 %v1376
    %1527 = vmatpush1.msra.mxu0 %v1375
    %1528 = vmatprep.subr.mxu0 %v1372
    %1529 = vmatpush1.msra.mxu0 %v1371
    %1530 = vmatprep.subr.mxu0 %v1368
    %1531 = vmatpush1.msra.mxu0 %v1367
    %1532 = vmatprep.subr.mxu0 0.0
    %1533 = vmatpush2.msra.mxu0 0.0
    %1534 = vmatprep.subr.mxu0 0.0
    %1535 = vmatpush2.msra.mxu0 0.0
    %1536 = vmatprep.subr.mxu0 0.0
    %1537 = vmatpush2.msra.mxu0 0.0
    %1538 = vmatprep.subr.mxu0 0.0
    %1539 = vmatpush2.msra.mxu0 0.0
    %1540 = vmatprep.subr.mxu0 0.0
    %1541 = vmatpush2.msra.mxu0 0.0
    %1542 = vmatprep.subr.mxu0 0.0
    %1543 = vmatpush2.msra.mxu0 0.0
    %1544 = vmatprep.subr.mxu0 0.0
    %1545 = vmatpush2.msra.mxu0 0.0
    %1546 = vmatprep.subr.mxu0 0.0
    %1547 = vmatpush2.msra.mxu0 0.0
    %1548 = vmatprep.subr.mxu0 0.0
    %1549 = vmatpush2.msra.mxu0 0.0
    %1550 = vmatprep.subr.mxu0 0.0
    %1551 = vmatpush2.msra.mxu0 0.0
    %1552 = vmatprep.subr.mxu0 0.0
    %1553 = vmatpush2.msra.mxu0 0.0
    %1554 = vmatprep.subr.mxu0 0.0
    %1555 = vmatpush2.msra.mxu0 0.0
    %1556 = vmatprep.subr.mxu0 0.0
    %1557 = vmatpush2.msra.mxu0 0.0
    %1558 = vmatprep.subr.mxu0 0.0
    %1559 = vmatpush2.msra.mxu0 0.0
    %1560 = vmatprep.subr.mxu0 0.0
    %1561 = vmatpush2.msra.mxu0 0.0
    %1562 = vmatprep.subr.mxu0 0.0
    %1563 = vmatpush2.msra.mxu0 0.0
    %1564 = vmatprep.mubr.f32.mxu0 0.0
    %1565 = vmatmul.mubr.f32.gmra.mxu0 %v1359
    %v1566 = vpop.f32.mrf.mxu0
    %v1567 = vadd.f32 0.0, %v1566
    %v1568 = vpop.f32.mrf.mxu0
    %v1569 = vadd.f32 0.0, %v1568
    %1570 = vdwg.mxu0
    %v1571 = vadd.f32 %v1361, %v1496
    %v1572 = vadd.f32 %v1362, %v1498
    %v1573 = vadd.f32 %v1363, %v1567
    %v1574 = vadd.f32 %v1364, %v1569
    %v1575 = vxor.u32 %v1571, 2147483648
    %v1576 = vmul.f32 %v1575, 1.442695
    %v1577 = vpow.pop %v1576
    %v1578 = vadd.f32 %v1577, 1.0
    %v1579 = vrcp.pop %v1578
    %v1580 = vmul.f32 1.0, %v1579
    %v1581 = vxor.u32 %v1572, 2147483648
    %v1582 = vmul.f32 %v1581, 1.442695
    %v1583 = vpow.pop %v1582
    %v1584 = vadd.f32 %v1583, 1.0
    %v1585 = vrcp.pop %v1584
    %v1586 = vmul.f32 1.0, %v1585
    %v1587 = vtanh.pop %v1573
    %v1588 = vxor.u32 %v1574, 2147483648
    %v1589 = vmul.f32 %v1588, 1.442695
    %v1590 = vpow.pop %v1589
    %v1591 = vadd.f32 %v1590, 1.0
    %v1592 = vrcp.pop %v1591
    %v1593 = vmul.f32 1.0, %v1592
    %v1594 = vmul.f32 %v1586, %v1357
    %v1595 = vmul.f32 %v1580, %v1587
    %v1596 = vadd.f32 %v1594, %v1595
    %v1597 = vtanh.pop %v1596
    %v1598 = vmul.f32 %v1593, %v1597
    %1599 = vst [vmem:[#allocation2 + $0x20] sm:$0xff] %v1598
    %v1600 = vld [vmem:[#allocation2] sm:$0xff]
    %v1601 = vld [vmem:[#allocation2 + $0x8] sm:$0xff]
    %v1602 = vld [vmem:[#allocation2 + $0x10] sm:$0xff]
    %v1603 = vld [vmem:[#allocation2 + $0x18] sm:$0xff]
    %v1604 = vld [vmem:[#allocation2 + $0x20] sm:$0xff]
    %s1605 = scalar_lea.vmem [#allocation8], 512
    %v1606 = vld [vmem:[%s1605] sm:$0xff]
    %v1607 = vld [vmem:[%s1605 + $0x8] sm:$0xff]
    %v1608 = vld [vmem:[%s1605 + $0x10] sm:$0xff]
    %v1609 = vld [vmem:[%s1605 + $0x18] sm:$0xff]
    %v1610 = vld [vmem:[%s1605 + $0x20] sm:$0xff]
    %v1611 = vld [vmem:[%s1605 + $0x28] sm:$0xff]
    %v1612 = vld [vmem:[%s1605 + $0x30] sm:$0xff]
    %v1613 = vld [vmem:[%s1605 + $0x38] sm:$0xff]
    %v1614 = vld [vmem:[%s1605 + $0x40] sm:$0xff]
    %v1615 = vld [vmem:[%s1605 + $0x48] sm:$0xff]
    %v1616 = vld [vmem:[%s1605 + $0x50] sm:$0xff]
    %v1617 = vld [vmem:[%s1605 + $0x58] sm:$0xff]
    %v1618 = vld [vmem:[%s1605 + $0x60] sm:$0xff]
    %v1619 = vld [vmem:[%s1605 + $0x68] sm:$0xff]
    %v1620 = vld [vmem:[%s1605 + $0x70] sm:$0xff]
    %v1621 = vld [vmem:[%s1605 + $0x78] sm:$0xff]
    %v1622 = vld [vmem:[%s1605 + $0x80] sm:$0xff]
    %v1623 = vld [vmem:[%s1605 + $0x88] sm:$0xff]
    %v1624 = vld [vmem:[%s1605 + $0x90] sm:$0xff]
    %v1625 = vld [vmem:[%s1605 + $0x98] sm:$0xff]
    %v1626 = vld [vmem:[%s1605 + $0xa0] sm:$0xff]
    %v1627 = vld [vmem:[%s1605 + $0xa8] sm:$0xff]
    %v1628 = vld [vmem:[%s1605 + $0xb0] sm:$0xff]
    %v1629 = vld [vmem:[%s1605 + $0xb8] sm:$0xff]
    %v1630 = vld [vmem:[%s1605 + $0xc0] sm:$0xff]
    %v1631 = vld [vmem:[%s1605 + $0xc8] sm:$0xff]
    %v1632 = vld [vmem:[%s1605 + $0xd0] sm:$0xff]
    %v1633 = vld [vmem:[%s1605 + $0xd8] sm:$0xff]
    %v1634 = vld [vmem:[%s1605 + $0xe0] sm:$0xff]
    %v1635 = vld [vmem:[%s1605 + $0xe8] sm:$0xff]
    %v1636 = vld [vmem:[%s1605 + $0xf0] sm:$0xff]
    %v1637 = vld [vmem:[%s1605 + $0xf8] sm:$0xff]
    %v1638 = vld [vmem:[%s1605 + $0x100] sm:$0xff]
    %v1639 = vld [vmem:[%s1605 + $0x108] sm:$0xff]
    %v1640 = vld [vmem:[%s1605 + $0x110] sm:$0xff]
    %v1641 = vld [vmem:[%s1605 + $0x118] sm:$0xff]
    %v1642 = vld [vmem:[%s1605 + $0x120] sm:$0xff]
    %v1643 = vld [vmem:[%s1605 + $0x128] sm:$0xff]
    %v1644 = vld [vmem:[%s1605 + $0x130] sm:$0xff]
    %v1645 = vld [vmem:[%s1605 + $0x138] sm:$0xff]
    %v1646 = vld [vmem:[%s1605 + $0x140] sm:$0xff]
    %v1647 = vld [vmem:[%s1605 + $0x148] sm:$0xff]
    %v1648 = vld [vmem:[%s1605 + $0x150] sm:$0xff]
    %v1649 = vld [vmem:[%s1605 + $0x158] sm:$0xff]
    %v1650 = vld [vmem:[%s1605 + $0x160] sm:$0xff]
    %v1651 = vld [vmem:[%s1605 + $0x168] sm:$0xff]
    %v1652 = vld [vmem:[%s1605 + $0x170] sm:$0xff]
    %v1653 = vld [vmem:[%s1605 + $0x178] sm:$0xff]
    %v1654 = vld [vmem:[%s1605 + $0x180] sm:$0xff]
    %v1655 = vld [vmem:[%s1605 + $0x188] sm:$0xff]
    %v1656 = vld [vmem:[%s1605 + $0x190] sm:$0xff]
    %v1657 = vld [vmem:[%s1605 + $0x198] sm:$0xff]
    %v1658 = vld [vmem:[%s1605 + $0x1a0] sm:$0xff]
    %v1659 = vld [vmem:[%s1605 + $0x1a8] sm:$0xff]
    %v1660 = vld [vmem:[%s1605 + $0x1b0] sm:$0xff]
    %v1661 = vld [vmem:[%s1605 + $0x1b8] sm:$0xff]
    %v1662 = vld [vmem:[%s1605 + $0x1c0] sm:$0xff]
    %v1663 = vld [vmem:[%s1605 + $0x1c8] sm:$0xff]
    %v1664 = vld [vmem:[%s1605 + $0x1d0] sm:$0xff]
    %v1665 = vld [vmem:[%s1605 + $0x1d8] sm:$0xff]
    %v1666 = vld [vmem:[%s1605 + $0x1e0] sm:$0xff]
    %v1667 = vld [vmem:[%s1605 + $0x1e8] sm:$0xff]
    %v1668 = vld [vmem:[%s1605 + $0x1f0] sm:$0xff]
    %v1669 = vld [vmem:[%s1605 + $0x1f8] sm:$0xff]
    %s1670 = scalar_lea.vmem [#allocation11], 4
    %v1671 = vld [vmem:[%s1670] sm:$0xf]
    %v1673 = vlaneseq
    %v1674 = vshrl.u32 %v1673, 7
    %v1675 = vsub.s32 0, %v1674
    %v1676 = vrot.slane %v1671, %v1675
    %v1677 = vlaneseq
    %v1678 = vshrl.u32 %v1677, 7
    %v1679 = vsub.s32 1, %v1678
    %v1680 = vrot.slane %v1671, %v1679
    %v1681 = vlaneseq
    %v1682 = vshrl.u32 %v1681, 7
    %v1683 = vsub.s32 2, %v1682
    %v1684 = vrot.slane %v1671, %v1683
    %v1685 = vlaneseq
    %v1686 = vshrl.u32 %v1685, 7
    %v1687 = vsub.s32 3, %v1686
    %v1688 = vrot.slane %v1671, %v1687
    %1693 = vmatprep.subr.mxu0 %v1667
    %1694 = vmatpush1.msra.mxu0 %v1666
    %1695 = vmatprep.subr.mxu0 %v1663
    %1696 = vmatpush1.msra.mxu0 %v1662
    %1697 = vmatprep.subr.mxu0 %v1659
    %1698 = vmatpush1.msra.mxu0 %v1658
    %1699 = vmatprep.subr.mxu0 %v1655
    %1700 = vmatpush1.msra.mxu0 %v1654
    %1701 = vmatprep.subr.mxu0 %v1651
    %1702 = vmatpush1.msra.mxu0 %v1650
    %1703 = vmatprep.subr.mxu0 %v1647
    %1704 = vmatpush1.msra.mxu0 %v1646
    %1705 = vmatprep.subr.mxu0 %v1643
    %1706 = vmatpush1.msra.mxu0 %v1642
    %1707 = vmatprep.subr.mxu0 %v1639
    %1708 = vmatpush1.msra.mxu0 %v1638
    %1709 = vmatprep.subr.mxu0 %v1635
    %1710 = vmatpush1.msra.mxu0 %v1634
    %1711 = vmatprep.subr.mxu0 %v1631
    %1712 = vmatpush1.msra.mxu0 %v1630
    %1713 = vmatprep.subr.mxu0 %v1627
    %1714 = vmatpush1.msra.mxu0 %v1626
    %1715 = vmatprep.subr.mxu0 %v1623
    %1716 = vmatpush1.msra.mxu0 %v1622
    %1717 = vmatprep.subr.mxu0 %v1619
    %1718 = vmatpush1.msra.mxu0 %v1618
    %1719 = vmatprep.subr.mxu0 %v1615
    %1720 = vmatpush1.msra.mxu0 %v1614
    %1721 = vmatprep.subr.mxu0 %v1611
    %1722 = vmatpush1.msra.mxu0 %v1610
    %1723 = vmatprep.subr.mxu0 %v1607
    %1724 = vmatpush1.msra.mxu0 %v1606
    %1725 = vmatprep.subr.mxu0 0.0
    %1726 = vmatpush2.msra.mxu0 0.0
    %1727 = vmatprep.subr.mxu0 0.0
    %1728 = vmatpush2.msra.mxu0 0.0
    %1729 = vmatprep.subr.mxu0 0.0
    %1730 = vmatpush2.msra.mxu0 0.0
    %1731 = vmatprep.subr.mxu0 0.0
    %1732 = vmatpush2.msra.mxu0 0.0
    %1733 = vmatprep.subr.mxu0 0.0
    %1734 = vmatpush2.msra.mxu0 0.0
    %1735 = vmatprep.subr.mxu0 0.0
    %1736 = vmatpush2.msra.mxu0 0.0
    %1737 = vmatprep.subr.mxu0 0.0
    %1738 = vmatpush2.msra.mxu0 0.0
    %1739 = vmatprep.subr.mxu0 0.0
    %1740 = vmatpush2.msra.mxu0 0.0
    %1741 = vmatprep.subr.mxu0 0.0
    %1742 = vmatpush2.msra.mxu0 0.0
    %1743 = vmatprep.subr.mxu0 0.0
    %1744 = vmatpush2.msra.mxu0 0.0
    %1745 = vmatprep.subr.mxu0 0.0
    %1746 = vmatpush2.msra.mxu0 0.0
    %1747 = vmatprep.subr.mxu0 0.0
    %1748 = vmatpush2.msra.mxu0 0.0
    %1749 = vmatprep.subr.mxu0 0.0
    %1750 = vmatpush2.msra.mxu0 0.0
    %1751 = vmatprep.subr.mxu0 0.0
    %1752 = vmatpush2.msra.mxu0 0.0
    %1753 = vmatprep.subr.mxu0 0.0
    %1754 = vmatpush2.msra.mxu0 0.0
    %1755 = vmatprep.subr.mxu0 0.0
    %1756 = vmatpush2.msra.mxu0 0.0
    %1757 = vmatprep.mubr.f32.mxu0 0.0
    %1758 = vmatmul.mubr.f32.gmra.mxu0 %v1600
    %v1759 = vpop.f32.mrf.mxu0
    %v1760 = vadd.f32 %v1676, %v1759
    %v1761 = vpop.f32.mrf.mxu0
    %v1762 = vadd.f32 %v1680, %v1761
    %1763 = vmatprep.mubr.f32.mxu0 0.0
    %1764 = vmatmul.mubr.f32.gmra.mxu0 %v1601
    %v1765 = vpop.f32.mrf.mxu0
    %v1766 = vadd.f32 %v1676, %v1765
    %v1767 = vpop.f32.mrf.mxu0
    %v1768 = vadd.f32 %v1680, %v1767
    %1769 = vmatprep.mubr.f32.mxu0 0.0
    %1770 = vmatmul.mubr.f32.gmra.mxu0 %v1602
    %v1771 = vpop.f32.mrf.mxu0
    %v1772 = vadd.f32 %v1676, %v1771
    %v1773 = vpop.f32.mrf.mxu0
    %v1774 = vadd.f32 %v1680, %v1773
    %1775 = vmatprep.mubr.f32.mxu0 0.0
    %1776 = vmatmul.mubr.f32.gmra.mxu0 %v1603
    %v1777 = vpop.f32.mrf.mxu0
    %v1778 = vadd.f32 %v1676, %v1777
    %v1779 = vpop.f32.mrf.mxu0
    %v1780 = vadd.f32 %v1680, %v1779
    %1781 = vmatprep.mubr.f32.mxu0 0.0
    %1782 = vmatmul.mubr.f32.gmra.mxu0 %v1604
    %v1783 = vpop.f32.mrf.mxu0
    %v1784 = vadd.f32 %v1676, %v1783
    %v1785 = vpop.f32.mrf.mxu0
    %v1786 = vadd.f32 %v1680, %v1785
    %1787 = vdwg.mxu0
    %1788 = vmatprep.subr.mxu0 %v1669
    %1789 = vmatpush1.msra.mxu0 %v1668
    %1790 = vmatprep.subr.mxu0 %v1665
    %1791 = vmatpush1.msra.mxu0 %v1664
    %1792 = vmatprep.subr.mxu0 %v1661
    %1793 = vmatpush1.msra.mxu0 %v1660
    %1794 = vmatprep.subr.mxu0 %v1657
    %1795 = vmatpush1.msra.mxu0 %v1656
    %1796 = vmatprep.subr.mxu0 %v1653
    %1797 = vmatpush1.msra.mxu0 %v1652
    %1798 = vmatprep.subr.mxu0 %v1649
    %1799 = vmatpush1.msra.mxu0 %v1648
    %1800 = vmatprep.subr.mxu0 %v1645
    %1801 = vmatpush1.msra.mxu0 %v1644
    %1802 = vmatprep.subr.mxu0 %v1641
    %1803 = vmatpush1.msra.mxu0 %v1640
    %1804 = vmatprep.subr.mxu0 %v1637
    %1805 = vmatpush1.msra.mxu0 %v1636
    %1806 = vmatprep.subr.mxu0 %v1633
    %1807 = vmatpush1.msra.mxu0 %v1632
    %1808 = vmatprep.subr.mxu0 %v1629
    %1809 = vmatpush1.msra.mxu0 %v1628
    %1810 = vmatprep.subr.mxu0 %v1625
    %1811 = vmatpush1.msra.mxu0 %v1624
    %1812 = vmatprep.subr.mxu0 %v1621
    %1813 = vmatpush1.msra.mxu0 %v1620
    %1814 = vmatprep.subr.mxu0 %v1617
    %1815 = vmatpush1.msra.mxu0 %v1616
    %1816 = vmatprep.subr.mxu0 %v1613
    %1817 = vmatpush1.msra.mxu0 %v1612
    %1818 = vmatprep.subr.mxu0 %v1609
    %1819 = vmatpush1.msra.mxu0 %v1608
    %1820 = vmatprep.subr.mxu0 0.0
    %1821 = vmatpush2.msra.mxu0 0.0
    %1822 = vmatprep.subr.mxu0 0.0
    %1823 = vmatpush2.msra.mxu0 0.0
    %1824 = vmatprep.subr.mxu0 0.0
    %1825 = vmatpush2.msra.mxu0 0.0
    %1826 = vmatprep.subr.mxu0 0.0
    %1827 = vmatpush2.msra.mxu0 0.0
    %1828 = vmatprep.subr.mxu0 0.0
    %1829 = vmatpush2.msra.mxu0 0.0
    %1830 = vmatprep.subr.mxu0 0.0
    %1831 = vmatpush2.msra.mxu0 0.0
    %1832 = vmatprep.subr.mxu0 0.0
    %1833 = vmatpush2.msra.mxu0 0.0
    %1834 = vmatprep.subr.mxu0 0.0
    %1835 = vmatpush2.msra.mxu0 0.0
    %1836 = vmatprep.subr.mxu0 0.0
    %1837 = vmatpush2.msra.mxu0 0.0
    %1838 = vmatprep.subr.mxu0 0.0
    %1839 = vmatpush2.msra.mxu0 0.0
    %1840 = vmatprep.subr.mxu0 0.0
    %1841 = vmatpush2.msra.mxu0 0.0
    %1842 = vmatprep.subr.mxu0 0.0
    %1843 = vmatpush2.msra.mxu0 0.0
    %1844 = vmatprep.subr.mxu0 0.0
    %1845 = vmatpush2.msra.mxu0 0.0
    %1846 = vmatprep.subr.mxu0 0.0
    %1847 = vmatpush2.msra.mxu0 0.0
    %1848 = vmatprep.subr.mxu0 0.0
    %1849 = vmatpush2.msra.mxu0 0.0
    %1850 = vmatprep.subr.mxu0 0.0
    %1851 = vmatpush2.msra.mxu0 0.0
    %1852 = vmatprep.mubr.f32.mxu0 0.0
    %1853 = vmatmul.mubr.f32.gmra.mxu0 %v1600
    %v1854 = vpop.f32.mrf.mxu0
    %v1855 = vadd.f32 %v1684, %v1854
    %v1856 = vpop.f32.mrf.mxu0
    %v1857 = vadd.f32 %v1688, %v1856
    %1858 = vmatprep.mubr.f32.mxu0 0.0
    %1859 = vmatmul.mubr.f32.gmra.mxu0 %v1601
    %v1860 = vpop.f32.mrf.mxu0
    %v1861 = vadd.f32 %v1684, %v1860
    %v1862 = vpop.f32.mrf.mxu0
    %v1863 = vadd.f32 %v1688, %v1862
    %1864 = vmatprep.mubr.f32.mxu0 0.0
    %1865 = vmatmul.mubr.f32.gmra.mxu0 %v1602
    %v1866 = vpop.f32.mrf.mxu0
    %v1867 = vadd.f32 %v1684, %v1866
    %v1868 = vpop.f32.mrf.mxu0
    %v1869 = vadd.f32 %v1688, %v1868
    %1870 = vmatprep.mubr.f32.mxu0 0.0
    %1871 = vmatmul.mubr.f32.gmra.mxu0 %v1603
    %v1872 = vpop.f32.mrf.mxu0
    %v1873 = vadd.f32 %v1684, %v1872
    %v1874 = vpop.f32.mrf.mxu0
    %v1875 = vadd.f32 %v1688, %v1874
    %1876 = vmatprep.mubr.f32.mxu0 0.0
    %1877 = vmatmul.mubr.f32.gmra.mxu0 %v1604
    %v1878 = vpop.f32.mrf.mxu0
    %v1879 = vadd.f32 %v1684, %v1878
    %v1880 = vpop.f32.mrf.mxu0
    %v1881 = vadd.f32 %v1688, %v1880
    %1882 = vdwg.mxu0
    %1883 = vst [vmem:[#allocation4] sm:$0xff] %v1760
    %1884 = vst [vmem:[#allocation4 + $0x8] sm:$0xff] %v1762
    %1885 = vst [vmem:[#allocation4 + $0x10] sm:$0xff] %v1855
    %1886 = vst [vmem:[#allocation4 + $0x18] sm:$0xff] %v1857
    %1887 = vst [vmem:[#allocation4 + $0x20] sm:$0xff] %v1766
    %1888 = vst [vmem:[#allocation4 + $0x28] sm:$0xff] %v1768
    %1889 = vst [vmem:[#allocation4 + $0x30] sm:$0xff] %v1861
    %1890 = vst [vmem:[#allocation4 + $0x38] sm:$0xff] %v1863
    %1891 = vst [vmem:[#allocation4 + $0x40] sm:$0xff] %v1772
    %1892 = vst [vmem:[#allocation4 + $0x48] sm:$0xff] %v1774
    %1893 = vst [vmem:[#allocation4 + $0x50] sm:$0xff] %v1867
    %1894 = vst [vmem:[#allocation4 + $0x58] sm:$0xff] %v1869
    %1895 = vst [vmem:[#allocation4 + $0x60] sm:$0xff] %v1778
    %1896 = vst [vmem:[#allocation4 + $0x68] sm:$0xff] %v1780
    %1897 = vst [vmem:[#allocation4 + $0x70] sm:$0xff] %v1873
    %1898 = vst [vmem:[#allocation4 + $0x78] sm:$0xff] %v1875
    %1899 = vst [vmem:[#allocation4 + $0x80] sm:$0xff] %v1784
    %1900 = vst [vmem:[#allocation4 + $0x88] sm:$0xff] %v1786
    %1901 = vst [vmem:[#allocation4 + $0x90] sm:$0xff] %v1879
    %1902 = vst [vmem:[#allocation4 + $0x98] sm:$0xff] %v1881
    %v1903 = vld [vmem:[#allocation4] sm:$0xff]
    %v1904 = vld [vmem:[#allocation4 + $0x8] sm:$0xff]
    %v1905 = vld [vmem:[#allocation4 + $0x10] sm:$0xff]
    %v1906 = vld [vmem:[#allocation4 + $0x18] sm:$0xff]
    %s1907 = scalar_lea.vmem [#allocation10], 512
    %v1908 = vld [vmem:[%s1907] sm:$0xff]
    %v1909 = vld [vmem:[%s1907 + $0x8] sm:$0xff]
    %v1910 = vld [vmem:[%s1907 + $0x10] sm:$0xff]
    %v1911 = vld [vmem:[%s1907 + $0x18] sm:$0xff]
    %v1912 = vld [vmem:[%s1907 + $0x20] sm:$0xff]
    %v1913 = vld [vmem:[%s1907 + $0x28] sm:$0xff]
    %v1914 = vld [vmem:[%s1907 + $0x30] sm:$0xff]
    %v1915 = vld [vmem:[%s1907 + $0x38] sm:$0xff]
    %v1916 = vld [vmem:[%s1907 + $0x40] sm:$0xff]
    %v1917 = vld [vmem:[%s1907 + $0x48] sm:$0xff]
    %v1918 = vld [vmem:[%s1907 + $0x50] sm:$0xff]
    %v1919 = vld [vmem:[%s1907 + $0x58] sm:$0xff]
    %v1920 = vld [vmem:[%s1907 + $0x60] sm:$0xff]
    %v1921 = vld [vmem:[%s1907 + $0x68] sm:$0xff]
    %v1922 = vld [vmem:[%s1907 + $0x70] sm:$0xff]
    %v1923 = vld [vmem:[%s1907 + $0x78] sm:$0xff]
    %v1924 = vld [vmem:[%s1907 + $0x80] sm:$0xff]
    %v1925 = vld [vmem:[%s1907 + $0x88] sm:$0xff]
    %v1926 = vld [vmem:[%s1907 + $0x90] sm:$0xff]
    %v1927 = vld [vmem:[%s1907 + $0x98] sm:$0xff]
    %v1928 = vld [vmem:[%s1907 + $0xa0] sm:$0xff]
    %v1929 = vld [vmem:[%s1907 + $0xa8] sm:$0xff]
    %v1930 = vld [vmem:[%s1907 + $0xb0] sm:$0xff]
    %v1931 = vld [vmem:[%s1907 + $0xb8] sm:$0xff]
    %v1932 = vld [vmem:[%s1907 + $0xc0] sm:$0xff]
    %v1933 = vld [vmem:[%s1907 + $0xc8] sm:$0xff]
    %v1934 = vld [vmem:[%s1907 + $0xd0] sm:$0xff]
    %v1935 = vld [vmem:[%s1907 + $0xd8] sm:$0xff]
    %v1936 = vld [vmem:[%s1907 + $0xe0] sm:$0xff]
    %v1937 = vld [vmem:[%s1907 + $0xe8] sm:$0xff]
    %v1938 = vld [vmem:[%s1907 + $0xf0] sm:$0xff]
    %v1939 = vld [vmem:[%s1907 + $0xf8] sm:$0xff]
    %v1940 = vld [vmem:[%s1907 + $0x100] sm:$0xff]
    %v1941 = vld [vmem:[%s1907 + $0x108] sm:$0xff]
    %v1942 = vld [vmem:[%s1907 + $0x110] sm:$0xff]
    %v1943 = vld [vmem:[%s1907 + $0x118] sm:$0xff]
    %v1944 = vld [vmem:[%s1907 + $0x120] sm:$0xff]
    %v1945 = vld [vmem:[%s1907 + $0x128] sm:$0xff]
    %v1946 = vld [vmem:[%s1907 + $0x130] sm:$0xff]
    %v1947 = vld [vmem:[%s1907 + $0x138] sm:$0xff]
    %v1948 = vld [vmem:[%s1907 + $0x140] sm:$0xff]
    %v1949 = vld [vmem:[%s1907 + $0x148] sm:$0xff]
    %v1950 = vld [vmem:[%s1907 + $0x150] sm:$0xff]
    %v1951 = vld [vmem:[%s1907 + $0x158] sm:$0xff]
    %v1952 = vld [vmem:[%s1907 + $0x160] sm:$0xff]
    %v1953 = vld [vmem:[%s1907 + $0x168] sm:$0xff]
    %v1954 = vld [vmem:[%s1907 + $0x170] sm:$0xff]
    %v1955 = vld [vmem:[%s1907 + $0x178] sm:$0xff]
    %v1956 = vld [vmem:[%s1907 + $0x180] sm:$0xff]
    %v1957 = vld [vmem:[%s1907 + $0x188] sm:$0xff]
    %v1958 = vld [vmem:[%s1907 + $0x190] sm:$0xff]
    %v1959 = vld [vmem:[%s1907 + $0x198] sm:$0xff]
    %v1960 = vld [vmem:[%s1907 + $0x1a0] sm:$0xff]
    %v1961 = vld [vmem:[%s1907 + $0x1a8] sm:$0xff]
    %v1962 = vld [vmem:[%s1907 + $0x1b0] sm:$0xff]
    %v1963 = vld [vmem:[%s1907 + $0x1b8] sm:$0xff]
    %v1964 = vld [vmem:[%s1907 + $0x1c0] sm:$0xff]
    %v1965 = vld [vmem:[%s1907 + $0x1c8] sm:$0xff]
    %v1966 = vld [vmem:[%s1907 + $0x1d0] sm:$0xff]
    %v1967 = vld [vmem:[%s1907 + $0x1d8] sm:$0xff]
    %v1968 = vld [vmem:[%s1907 + $0x1e0] sm:$0xff]
    %v1969 = vld [vmem:[%s1907 + $0x1e8] sm:$0xff]
    %v1970 = vld [vmem:[%s1907 + $0x1f0] sm:$0xff]
    %v1971 = vld [vmem:[%s1907 + $0x1f8] sm:$0xff]
    %1972 = vmatprep.subr.mxu0 %v1969
    %1973 = vmatpush1.msra.mxu0 %v1968
    %1974 = vmatprep.subr.mxu0 %v1965
    %1975 = vmatpush1.msra.mxu0 %v1964
    %1976 = vmatprep.subr.mxu0 %v1961
    %1977 = vmatpush1.msra.mxu0 %v1960
    %1978 = vmatprep.subr.mxu0 %v1957
    %1979 = vmatpush1.msra.mxu0 %v1956
    %1980 = vmatprep.subr.mxu0 %v1953
    %1981 = vmatpush1.msra.mxu0 %v1952
    %1982 = vmatprep.subr.mxu0 %v1949
    %1983 = vmatpush1.msra.mxu0 %v1948
    %1984 = vmatprep.subr.mxu0 %v1945
    %1985 = vmatpush1.msra.mxu0 %v1944
    %1986 = vmatprep.subr.mxu0 %v1941
    %1987 = vmatpush1.msra.mxu0 %v1940
    %1988 = vmatprep.subr.mxu0 %v1937
    %1989 = vmatpush1.msra.mxu0 %v1936
    %1990 = vmatprep.subr.mxu0 %v1933
    %1991 = vmatpush1.msra.mxu0 %v1932
    %1992 = vmatprep.subr.mxu0 %v1929
    %1993 = vmatpush1.msra.mxu0 %v1928
    %1994 = vmatprep.subr.mxu0 %v1925
    %1995 = vmatpush1.msra.mxu0 %v1924
    %1996 = vmatprep.subr.mxu0 %v1921
    %1997 = vmatpush1.msra.mxu0 %v1920
    %1998 = vmatprep.subr.mxu0 %v1917
    %1999 = vmatpush1.msra.mxu0 %v1916
    %2000 = vmatprep.subr.mxu0 %v1913
    %2001 = vmatpush1.msra.mxu0 %v1912
    %2002 = vmatprep.subr.mxu0 %v1909
    %2003 = vmatpush1.msra.mxu0 %v1908
    %2004 = vmatprep.subr.mxu0 0.0
    %2005 = vmatpush2.msra.mxu0 0.0
    %2006 = vmatprep.subr.mxu0 0.0
    %2007 = vmatpush2.msra.mxu0 0.0
    %2008 = vmatprep.subr.mxu0 0.0
    %2009 = vmatpush2.msra.mxu0 0.0
    %2010 = vmatprep.subr.mxu0 0.0
    %2011 = vmatpush2.msra.mxu0 0.0
    %2012 = vmatprep.subr.mxu0 0.0
    %2013 = vmatpush2.msra.mxu0 0.0
    %2014 = vmatprep.subr.mxu0 0.0
    %2015 = vmatpush2.msra.mxu0 0.0
    %2016 = vmatprep.subr.mxu0 0.0
    %2017 = vmatpush2.msra.mxu0 0.0
    %2018 = vmatprep.subr.mxu0 0.0
    %2019 = vmatpush2.msra.mxu0 0.0
    %2020 = vmatprep.subr.mxu0 0.0
    %2021 = vmatpush2.msra.mxu0 0.0
    %2022 = vmatprep.subr.mxu0 0.0
    %2023 = vmatpush2.msra.mxu0 0.0
    %2024 = vmatprep.subr.mxu0 0.0
    %2025 = vmatpush2.msra.mxu0 0.0
    %2026 = vmatprep.subr.mxu0 0.0
    %2027 = vmatpush2.msra.mxu0 0.0
    %2028 = vmatprep.subr.mxu0 0.0
    %2029 = vmatpush2.msra.mxu0 0.0
    %2030 = vmatprep.subr.mxu0 0.0
    %2031 = vmatpush2.msra.mxu0 0.0
    %2032 = vmatprep.subr.mxu0 0.0
    %2033 = vmatpush2.msra.mxu0 0.0
    %2034 = vmatprep.subr.mxu0 0.0
    %2035 = vmatpush2.msra.mxu0 0.0
    %2036 = vmatprep.mubr.f32.mxu0 0.0
    %2037 = vmatmul.mubr.f32.gmra.mxu0 0.0
    %v2038 = vpop.f32.mrf.mxu0
    %v2039 = vadd.f32 0.0, %v2038
    %v2040 = vpop.f32.mrf.mxu0
    %v2041 = vadd.f32 0.0, %v2040
    %2042 = vdwg.mxu0
    %2043 = vmatprep.subr.mxu0 %v1971
    %2044 = vmatpush1.msra.mxu0 %v1970
    %2045 = vmatprep.subr.mxu0 %v1967
    %2046 = vmatpush1.msra.mxu0 %v1966
    %2047 = vmatprep.subr.mxu0 %v1963
    %2048 = vmatpush1.msra.mxu0 %v1962
    %2049 = vmatprep.subr.mxu0 %v1959
    %2050 = vmatpush1.msra.mxu0 %v1958
    %2051 = vmatprep.subr.mxu0 %v1955
    %2052 = vmatpush1.msra.mxu0 %v1954
    %2053 = vmatprep.subr.mxu0 %v1951
    %2054 = vmatpush1.msra.mxu0 %v1950
    %2055 = vmatprep.subr.mxu0 %v1947
    %2056 = vmatpush1.msra.mxu0 %v1946
    %2057 = vmatprep.subr.mxu0 %v1943
    %2058 = vmatpush1.msra.mxu0 %v1942
    %2059 = vmatprep.subr.mxu0 %v1939
    %2060 = vmatpush1.msra.mxu0 %v1938
    %2061 = vmatprep.subr.mxu0 %v1935
    %2062 = vmatpush1.msra.mxu0 %v1934
    %2063 = vmatprep.subr.mxu0 %v1931
    %2064 = vmatpush1.msra.mxu0 %v1930
    %2065 = vmatprep.subr.mxu0 %v1927
    %2066 = vmatpush1.msra.mxu0 %v1926
    %2067 = vmatprep.subr.mxu0 %v1923
    %2068 = vmatpush1.msra.mxu0 %v1922
    %2069 = vmatprep.subr.mxu0 %v1919
    %2070 = vmatpush1.msra.mxu0 %v1918
    %2071 = vmatprep.subr.mxu0 %v1915
    %2072 = vmatpush1.msra.mxu0 %v1914
    %2073 = vmatprep.subr.mxu0 %v1911
    %2074 = vmatpush1.msra.mxu0 %v1910
    %2075 = vmatprep.subr.mxu0 0.0
    %2076 = vmatpush2.msra.mxu0 0.0
    %2077 = vmatprep.subr.mxu0 0.0
    %2078 = vmatpush2.msra.mxu0 0.0
    %2079 = vmatprep.subr.mxu0 0.0
    %2080 = vmatpush2.msra.mxu0 0.0
    %2081 = vmatprep.subr.mxu0 0.0
    %2082 = vmatpush2.msra.mxu0 0.0
    %2083 = vmatprep.subr.mxu0 0.0
    %2084 = vmatpush2.msra.mxu0 0.0
    %2085 = vmatprep.subr.mxu0 0.0
    %2086 = vmatpush2.msra.mxu0 0.0
    %2087 = vmatprep.subr.mxu0 0.0
    %2088 = vmatpush2.msra.mxu0 0.0
    %2089 = vmatprep.subr.mxu0 0.0
    %2090 = vmatpush2.msra.mxu0 0.0
    %2091 = vmatprep.subr.mxu0 0.0
    %2092 = vmatpush2.msra.mxu0 0.0
    %2093 = vmatprep.subr.mxu0 0.0
    %2094 = vmatpush2.msra.mxu0 0.0
    %2095 = vmatprep.subr.mxu0 0.0
    %2096 = vmatpush2.msra.mxu0 0.0
    %2097 = vmatprep.subr.mxu0 0.0
    %2098 = vmatpush2.msra.mxu0 0.0
    %2099 = vmatprep.subr.mxu0 0.0
    %2100 = vmatpush2.msra.mxu0 0.0
    %2101 = vmatprep.subr.mxu0 0.0
    %2102 = vmatpush2.msra.mxu0 0.0
    %2103 = vmatprep.subr.mxu0 0.0
    %2104 = vmatpush2.msra.mxu0 0.0
    %2105 = vmatprep.subr.mxu0 0.0
    %2106 = vmatpush2.msra.mxu0 0.0
    %2107 = vmatprep.mubr.f32.mxu0 0.0
    %2108 = vmatmul.mubr.f32.gmra.mxu0 0.0
    %v2109 = vpop.f32.mrf.mxu0
    %v2110 = vadd.f32 0.0, %v2109
    %v2111 = vpop.f32.mrf.mxu0
    %v2112 = vadd.f32 0.0, %v2111
    %2113 = vdwg.mxu0
    %v2114 = vadd.f32 %v1903, %v2039
    %v2115 = vadd.f32 %v1904, %v2041
    %v2116 = vadd.f32 %v1905, %v2110
    %v2117 = vadd.f32 %v1906, %v2112
    %v2118 = vxor.u32 %v2114, 2147483648
    %v2119 = vmul.f32 %v2118, 1.442695
    %v2120 = vpow.pop %v2119
    %v2121 = vadd.f32 %v2120, 1.0
    %v2122 = vrcp.pop %v2121
    %v2123 = vmul.f32 1.0, %v2122
    %v2124 = vxor.u32 %v2115, 2147483648
    %v2125 = vmul.f32 %v2124, 1.442695
    %v2126 = vpow.pop %v2125
    %v2127 = vadd.f32 %v2126, 1.0
    %v2128 = vrcp.pop %v2127
    %v2129 = vmul.f32 1.0, %v2128
    %v2130 = vtanh.pop %v2116
    %v2131 = vxor.u32 %v2117, 2147483648
    %v2132 = vmul.f32 %v2131, 1.442695
    %v2133 = vpow.pop %v2132
    %v2134 = vadd.f32 %v2133, 1.0
    %v2135 = vrcp.pop %v2134
    %v2136 = vmul.f32 1.0, %v2135
    %v2137 = vmul.f32 %v2129, 0.0
    %v2138 = vmul.f32 %v2123, %v2130
    %v2139 = vadd.f32 %v2137, %v2138
    %v2140 = vtanh.pop %v2139
    %v2141 = vmul.f32 %v2136, %v2140
    %2142 = vst [vmem:[#allocation3] sm:$0xff] %v2141
    %v2143 = vld [vmem:[#allocation4 + $0x20] sm:$0xff]
    %v2144 = vld [vmem:[#allocation4 + $0x28] sm:$0xff]
    %v2145 = vld [vmem:[#allocation4 + $0x30] sm:$0xff]
    %v2146 = vld [vmem:[#allocation4 + $0x38] sm:$0xff]
    %v2147 = vld [vmem:[%s1907] sm:$0xff]
    %v2148 = vld [vmem:[%s1907 + $0x8] sm:$0xff]
    %v2149 = vld [vmem:[%s1907 + $0x10] sm:$0xff]
    %v2150 = vld [vmem:[%s1907 + $0x18] sm:$0xff]
    %v2151 = vld [vmem:[%s1907 + $0x20] sm:$0xff]
    %v2152 = vld [vmem:[%s1907 + $0x28] sm:$0xff]
    %v2153 = vld [vmem:[%s1907 + $0x30] sm:$0xff]
    %v2154 = vld [vmem:[%s1907 + $0x38] sm:$0xff]
    %v2155 = vld [vmem:[%s1907 + $0x40] sm:$0xff]
    %v2156 = vld [vmem:[%s1907 + $0x48] sm:$0xff]
    %v2157 = vld [vmem:[%s1907 + $0x50] sm:$0xff]
    %v2158 = vld [vmem:[%s1907 + $0x58] sm:$0xff]
    %v2159 = vld [vmem:[%s1907 + $0x60] sm:$0xff]
    %v2160 = vld [vmem:[%s1907 + $0x68] sm:$0xff]
    %v2161 = vld [vmem:[%s1907 + $0x70] sm:$0xff]
    %v2162 = vld [vmem:[%s1907 + $0x78] sm:$0xff]
    %v2163 = vld [vmem:[%s1907 + $0x80] sm:$0xff]
    %v2164 = vld [vmem:[%s1907 + $0x88] sm:$0xff]
    %v2165 = vld [vmem:[%s1907 + $0x90] sm:$0xff]
    %v2166 = vld [vmem:[%s1907 + $0x98] sm:$0xff]
    %v2167 = vld [vmem:[%s1907 + $0xa0] sm:$0xff]
    %v2168 = vld [vmem:[%s1907 + $0xa8] sm:$0xff]
    %v2169 = vld [vmem:[%s1907 + $0xb0] sm:$0xff]
    %v2170 = vld [vmem:[%s1907 + $0xb8] sm:$0xff]
    %v2171 = vld [vmem:[%s1907 + $0xc0] sm:$0xff]
    %v2172 = vld [vmem:[%s1907 + $0xc8] sm:$0xff]
    %v2173 = vld [vmem:[%s1907 + $0xd0] sm:$0xff]
    %v2174 = vld [vmem:[%s1907 + $0xd8] sm:$0xff]
    %v2175 = vld [vmem:[%s1907 + $0xe0] sm:$0xff]
    %v2176 = vld [vmem:[%s1907 + $0xe8] sm:$0xff]
    %v2177 = vld [vmem:[%s1907 + $0xf0] sm:$0xff]
    %v2178 = vld [vmem:[%s1907 + $0xf8] sm:$0xff]
    %v2179 = vld [vmem:[%s1907 + $0x100] sm:$0xff]
    %v2180 = vld [vmem:[%s1907 + $0x108] sm:$0xff]
    %v2181 = vld [vmem:[%s1907 + $0x110] sm:$0xff]
    %v2182 = vld [vmem:[%s1907 + $0x118] sm:$0xff]
    %v2183 = vld [vmem:[%s1907 + $0x120] sm:$0xff]
    %v2184 = vld [vmem:[%s1907 + $0x128] sm:$0xff]
    %v2185 = vld [vmem:[%s1907 + $0x130] sm:$0xff]
    %v2186 = vld [vmem:[%s1907 + $0x138] sm:$0xff]
    %v2187 = vld [vmem:[%s1907 + $0x140] sm:$0xff]
    %v2188 = vld [vmem:[%s1907 + $0x148] sm:$0xff]
    %v2189 = vld [vmem:[%s1907 + $0x150] sm:$0xff]
    %v2190 = vld [vmem:[%s1907 + $0x158] sm:$0xff]
    %v2191 = vld [vmem:[%s1907 + $0x160] sm:$0xff]
    %v2192 = vld [vmem:[%s1907 + $0x168] sm:$0xff]
    %v2193 = vld [vmem:[%s1907 + $0x170] sm:$0xff]
    %v2194 = vld [vmem:[%s1907 + $0x178] sm:$0xff]
    %v2195 = vld [vmem:[%s1907 + $0x180] sm:$0xff]
    %v2196 = vld [vmem:[%s1907 + $0x188] sm:$0xff]
    %v2197 = vld [vmem:[%s1907 + $0x190] sm:$0xff]
    %v2198 = vld [vmem:[%s1907 + $0x198] sm:$0xff]
    %v2199 = vld [vmem:[%s1907 + $0x1a0] sm:$0xff]
    %v2200 = vld [vmem:[%s1907 + $0x1a8] sm:$0xff]
    %v2201 = vld [vmem:[%s1907 + $0x1b0] sm:$0xff]
    %v2202 = vld [vmem:[%s1907 + $0x1b8] sm:$0xff]
    %v2203 = vld [vmem:[%s1907 + $0x1c0] sm:$0xff]
    %v2204 = vld [vmem:[%s1907 + $0x1c8] sm:$0xff]
    %v2205 = vld [vmem:[%s1907 + $0x1d0] sm:$0xff]
    %v2206 = vld [vmem:[%s1907 + $0x1d8] sm:$0xff]
    %v2207 = vld [vmem:[%s1907 + $0x1e0] sm:$0xff]
    %v2208 = vld [vmem:[%s1907 + $0x1e8] sm:$0xff]
    %v2209 = vld [vmem:[%s1907 + $0x1f0] sm:$0xff]
    %v2210 = vld [vmem:[%s1907 + $0x1f8] sm:$0xff]
    %2211 = vmatprep.subr.mxu0 %v2208
    %2212 = vmatpush1.msra.mxu0 %v2207
    %2213 = vmatprep.subr.mxu0 %v2204
    %2214 = vmatpush1.msra.mxu0 %v2203
    %2215 = vmatprep.subr.mxu0 %v2200
    %2216 = vmatpush1.msra.mxu0 %v2199
    %2217 = vmatprep.subr.mxu0 %v2196
    %2218 = vmatpush1.msra.mxu0 %v2195
    %2219 = vmatprep.subr.mxu0 %v2192
    %2220 = vmatpush1.msra.mxu0 %v2191
    %2221 = vmatprep.subr.mxu0 %v2188
    %2222 = vmatpush1.msra.mxu0 %v2187
    %2223 = vmatprep.subr.mxu0 %v2184
    %2224 = vmatpush1.msra.mxu0 %v2183
    %2225 = vmatprep.subr.mxu0 %v2180
    %2226 = vmatpush1.msra.mxu0 %v2179
    %2227 = vmatprep.subr.mxu0 %v2176
    %2228 = vmatpush1.msra.mxu0 %v2175
    %2229 = vmatprep.subr.mxu0 %v2172
    %2230 = vmatpush1.msra.mxu0 %v2171
    %2231 = vmatprep.subr.mxu0 %v2168
    %2232 = vmatpush1.msra.mxu0 %v2167
    %2233 = vmatprep.subr.mxu0 %v2164
    %2234 = vmatpush1.msra.mxu0 %v2163
    %2235 = vmatprep.subr.mxu0 %v2160
    %2236 = vmatpush1.msra.mxu0 %v2159
    %2237 = vmatprep.subr.mxu0 %v2156
    %2238 = vmatpush1.msra.mxu0 %v2155
    %2239 = vmatprep.subr.mxu0 %v2152
    %2240 = vmatpush1.msra.mxu0 %v2151
    %2241 = vmatprep.subr.mxu0 %v2148
    %2242 = vmatpush1.msra.mxu0 %v2147
    %2243 = vmatprep.subr.mxu0 0.0
    %2244 = vmatpush2.msra.mxu0 0.0
    %2245 = vmatprep.subr.mxu0 0.0
    %2246 = vmatpush2.msra.mxu0 0.0
    %2247 = vmatprep.subr.mxu0 0.0
    %2248 = vmatpush2.msra.mxu0 0.0
    %2249 = vmatprep.subr.mxu0 0.0
    %2250 = vmatpush2.msra.mxu0 0.0
    %2251 = vmatprep.subr.mxu0 0.0
    %2252 = vmatpush2.msra.mxu0 0.0
    %2253 = vmatprep.subr.mxu0 0.0
    %2254 = vmatpush2.msra.mxu0 0.0
    %2255 = vmatprep.subr.mxu0 0.0
    %2256 = vmatpush2.msra.mxu0 0.0
    %2257 = vmatprep.subr.mxu0 0.0
    %2258 = vmatpush2.msra.mxu0 0.0
    %2259 = vmatprep.subr.mxu0 0.0
    %2260 = vmatpush2.msra.mxu0 0.0
    %2261 = vmatprep.subr.mxu0 0.0
    %2262 = vmatpush2.msra.mxu0 0.0
    %2263 = vmatprep.subr.mxu0 0.0
    %2264 = vmatpush2.msra.mxu0 0.0
    %2265 = vmatprep.subr.mxu0 0.0
    %2266 = vmatpush2.msra.mxu0 0.0
    %2267 = vmatprep.subr.mxu0 0.0
    %2268 = vmatpush2.msra.mxu0 0.0
    %2269 = vmatprep.subr.mxu0 0.0
    %2270 = vmatpush2.msra.mxu0 0.0
    %2271 = vmatprep.subr.mxu0 0.0
    %2272 = vmatpush2.msra.mxu0 0.0
    %2273 = vmatprep.subr.mxu0 0.0
    %2274 = vmatpush2.msra.mxu0 0.0
    %2275 = vmatprep.mubr.f32.mxu0 0.0
    %2276 = vmatmul.mubr.f32.gmra.mxu0 %v2141
    %v2277 = vpop.f32.mrf.mxu0
    %v2278 = vadd.f32 0.0, %v2277
    %v2279 = vpop.f32.mrf.mxu0
    %v2280 = vadd.f32 0.0, %v2279
    %2281 = vdwg.mxu0
    %2282 = vmatprep.subr.mxu0 %v2210
    %2283 = vmatpush1.msra.mxu0 %v2209
    %2284 = vmatprep.subr.mxu0 %v2206
    %2285 = vmatpush1.msra.mxu0 %v2205
    %2286 = vmatprep.subr.mxu0 %v2202
    %2287 = vmatpush1.msra.mxu0 %v2201
    %2288 = vmatprep.subr.mxu0 %v2198
    %2289 = vmatpush1.msra.mxu0 %v2197
    %2290 = vmatprep.subr.mxu0 %v2194
    %2291 = vmatpush1.msra.mxu0 %v2193
    %2292 = vmatprep.subr.mxu0 %v2190
    %2293 = vmatpush1.msra.mxu0 %v2189
    %2294 = vmatprep.subr.mxu0 %v2186
    %2295 = vmatpush1.msra.mxu0 %v2185
    %2296 = vmatprep.subr.mxu0 %v2182
    %2297 = vmatpush1.msra.mxu0 %v2181
    %2298 = vmatprep.subr.mxu0 %v2178
    %2299 = vmatpush1.msra.mxu0 %v2177
    %2300 = vmatprep.subr.mxu0 %v2174
    %2301 = vmatpush1.msra.mxu0 %v2173
    %2302 = vmatprep.subr.mxu0 %v2170
    %2303 = vmatpush1.msra.mxu0 %v2169
    %2304 = vmatprep.subr.mxu0 %v2166
    %2305 = vmatpush1.msra.mxu0 %v2165
    %2306 = vmatprep.subr.mxu0 %v2162
    %2307 = vmatpush1.msra.mxu0 %v2161
    %2308 = vmatprep.subr.mxu0 %v2158
    %2309 = vmatpush1.msra.mxu0 %v2157
    %2310 = vmatprep.subr.mxu0 %v2154
    %2311 = vmatpush1.msra.mxu0 %v2153
    %2312 = vmatprep.subr.mxu0 %v2150
    %2313 = vmatpush1.msra.mxu0 %v2149
    %2314 = vmatprep.subr.mxu0 0.0
    %2315 = vmatpush2.msra.mxu0 0.0
    %2316 = vmatprep.subr.mxu0 0.0
    %2317 = vmatpush2.msra.mxu0 0.0
    %2318 = vmatprep.subr.mxu0 0.0
    %2319 = vmatpush2.msra.mxu0 0.0
    %2320 = vmatprep.subr.mxu0 0.0
    %2321 = vmatpush2.msra.mxu0 0.0
    %2322 = vmatprep.subr.mxu0 0.0
    %2323 = vmatpush2.msra.mxu0 0.0
    %2324 = vmatprep.subr.mxu0 0.0
    %2325 = vmatpush2.msra.mxu0 0.0
    %2326 = vmatprep.subr.mxu0 0.0
    %2327 = vmatpush2.msra.mxu0 0.0
    %2328 = vmatprep.subr.mxu0 0.0
    %2329 = vmatpush2.msra.mxu0 0.0
    %2330 = vmatprep.subr.mxu0 0.0
    %2331 = vmatpush2.msra.mxu0 0.0
    %2332 = vmatprep.subr.mxu0 0.0
    %2333 = vmatpush2.msra.mxu0 0.0
    %2334 = vmatprep.subr.mxu0 0.0
    %2335 = vmatpush2.msra.mxu0 0.0
    %2336 = vmatprep.subr.mxu0 0.0
    %2337 = vmatpush2.msra.mxu0 0.0
    %2338 = vmatprep.subr.mxu0 0.0
    %2339 = vmatpush2.msra.mxu0 0.0
    %2340 = vmatprep.subr.mxu0 0.0
    %2341 = vmatpush2.msra.mxu0 0.0
    %2342 = vmatprep.subr.mxu0 0.0
    %2343 = vmatpush2.msra.mxu0 0.0
    %2344 = vmatprep.subr.mxu0 0.0
    %2345 = vmatpush2.msra.mxu0 0.0
    %2346 = vmatprep.mubr.f32.mxu0 0.0
    %2347 = vmatmul.mubr.f32.gmra.mxu0 %v2141
    %v2348 = vpop.f32.mrf.mxu0
    %v2349 = vadd.f32 0.0, %v2348
    %v2350 = vpop.f32.mrf.mxu0
    %v2351 = vadd.f32 0.0, %v2350
    %2352 = vdwg.mxu0
    %v2353 = vadd.f32 %v2143, %v2278
    %v2354 = vadd.f32 %v2144, %v2280
    %v2355 = vadd.f32 %v2145, %v2349
    %v2356 = vadd.f32 %v2146, %v2351
    %v2357 = vxor.u32 %v2353, 2147483648
    %v2358 = vmul.f32 %v2357, 1.442695
    %v2359 = vpow.pop %v2358
    %v2360 = vadd.f32 %v2359, 1.0
    %v2361 = vrcp.pop %v2360
    %v2362 = vmul.f32 1.0, %v2361
    %v2363 = vxor.u32 %v2354, 2147483648
    %v2364 = vmul.f32 %v2363, 1.442695
    %v2365 = vpow.pop %v2364
    %v2366 = vadd.f32 %v2365, 1.0
    %v2367 = vrcp.pop %v2366
    %v2368 = vmul.f32 1.0, %v2367
    %v2369 = vtanh.pop %v2355
    %v2370 = vxor.u32 %v2356, 2147483648
    %v2371 = vmul.f32 %v2370, 1.442695
    %v2372 = vpow.pop %v2371
    %v2373 = vadd.f32 %v2372, 1.0
    %v2374 = vrcp.pop %v2373
    %v2375 = vmul.f32 1.0, %v2374
    %v2376 = vmul.f32 %v2368, %v2139
    %v2377 = vmul.f32 %v2362, %v2369
    %v2378 = vadd.f32 %v2376, %v2377
    %v2379 = vtanh.pop %v2378
    %v2380 = vmul.f32 %v2375, %v2379
    %2381 = vst [vmem:[#allocation3 + $0x8] sm:$0xff] %v2380
    %v2382 = vld [vmem:[#allocation4 + $0x40] sm:$0xff]
    %v2383 = vld [vmem:[#allocation4 + $0x48] sm:$0xff]
    %v2384 = vld [vmem:[#allocation4 + $0x50] sm:$0xff]
    %v2385 = vld [vmem:[#allocation4 + $0x58] sm:$0xff]
    %v2386 = vld [vmem:[%s1907] sm:$0xff]
    %v2387 = vld [vmem:[%s1907 + $0x8] sm:$0xff]
    %v2388 = vld [vmem:[%s1907 + $0x10] sm:$0xff]
    %v2389 = vld [vmem:[%s1907 + $0x18] sm:$0xff]
    %v2390 = vld [vmem:[%s1907 + $0x20] sm:$0xff]
    %v2391 = vld [vmem:[%s1907 + $0x28] sm:$0xff]
    %v2392 = vld [vmem:[%s1907 + $0x30] sm:$0xff]
    %v2393 = vld [vmem:[%s1907 + $0x38] sm:$0xff]
    %v2394 = vld [vmem:[%s1907 + $0x40] sm:$0xff]
    %v2395 = vld [vmem:[%s1907 + $0x48] sm:$0xff]
    %v2396 = vld [vmem:[%s1907 + $0x50] sm:$0xff]
    %v2397 = vld [vmem:[%s1907 + $0x58] sm:$0xff]
    %v2398 = vld [vmem:[%s1907 + $0x60] sm:$0xff]
    %v2399 = vld [vmem:[%s1907 + $0x68] sm:$0xff]
    %v2400 = vld [vmem:[%s1907 + $0x70] sm:$0xff]
    %v2401 = vld [vmem:[%s1907 + $0x78] sm:$0xff]
    %v2402 = vld [vmem:[%s1907 + $0x80] sm:$0xff]
    %v2403 = vld [vmem:[%s1907 + $0x88] sm:$0xff]
    %v2404 = vld [vmem:[%s1907 + $0x90] sm:$0xff]
    %v2405 = vld [vmem:[%s1907 + $0x98] sm:$0xff]
    %v2406 = vld [vmem:[%s1907 + $0xa0] sm:$0xff]
    %v2407 = vld [vmem:[%s1907 + $0xa8] sm:$0xff]
    %v2408 = vld [vmem:[%s1907 + $0xb0] sm:$0xff]
    %v2409 = vld [vmem:[%s1907 + $0xb8] sm:$0xff]
    %v2410 = vld [vmem:[%s1907 + $0xc0] sm:$0xff]
    %v2411 = vld [vmem:[%s1907 + $0xc8] sm:$0xff]
    %v2412 = vld [vmem:[%s1907 + $0xd0] sm:$0xff]
    %v2413 = vld [vmem:[%s1907 + $0xd8] sm:$0xff]
    %v2414 = vld [vmem:[%s1907 + $0xe0] sm:$0xff]
    %v2415 = vld [vmem:[%s1907 + $0xe8] sm:$0xff]
    %v2416 = vld [vmem:[%s1907 + $0xf0] sm:$0xff]
    %v2417 = vld [vmem:[%s1907 + $0xf8] sm:$0xff]
    %v2418 = vld [vmem:[%s1907 + $0x100] sm:$0xff]
    %v2419 = vld [vmem:[%s1907 + $0x108] sm:$0xff]
    %v2420 = vld [vmem:[%s1907 + $0x110] sm:$0xff]
    %v2421 = vld [vmem:[%s1907 + $0x118] sm:$0xff]
    %v2422 = vld [vmem:[%s1907 + $0x120] sm:$0xff]
    %v2423 = vld [vmem:[%s1907 + $0x128] sm:$0xff]
    %v2424 = vld [vmem:[%s1907 + $0x130] sm:$0xff]
    %v2425 = vld [vmem:[%s1907 + $0x138] sm:$0xff]
    %v2426 = vld [vmem:[%s1907 + $0x140] sm:$0xff]
    %v2427 = vld [vmem:[%s1907 + $0x148] sm:$0xff]
    %v2428 = vld [vmem:[%s1907 + $0x150] sm:$0xff]
    %v2429 = vld [vmem:[%s1907 + $0x158] sm:$0xff]
    %v2430 = vld [vmem:[%s1907 + $0x160] sm:$0xff]
    %v2431 = vld [vmem:[%s1907 + $0x168] sm:$0xff]
    %v2432 = vld [vmem:[%s1907 + $0x170] sm:$0xff]
    %v2433 = vld [vmem:[%s1907 + $0x178] sm:$0xff]
    %v2434 = vld [vmem:[%s1907 + $0x180] sm:$0xff]
    %v2435 = vld [vmem:[%s1907 + $0x188] sm:$0xff]
    %v2436 = vld [vmem:[%s1907 + $0x190] sm:$0xff]
    %v2437 = vld [vmem:[%s1907 + $0x198] sm:$0xff]
    %v2438 = vld [vmem:[%s1907 + $0x1a0] sm:$0xff]
    %v2439 = vld [vmem:[%s1907 + $0x1a8] sm:$0xff]
    %v2440 = vld [vmem:[%s1907 + $0x1b0] sm:$0xff]
    %v2441 = vld [vmem:[%s1907 + $0x1b8] sm:$0xff]
    %v2442 = vld [vmem:[%s1907 + $0x1c0] sm:$0xff]
    %v2443 = vld [vmem:[%s1907 + $0x1c8] sm:$0xff]
    %v2444 = vld [vmem:[%s1907 + $0x1d0] sm:$0xff]
    %v2445 = vld [vmem:[%s1907 + $0x1d8] sm:$0xff]
    %v2446 = vld [vmem:[%s1907 + $0x1e0] sm:$0xff]
    %v2447 = vld [vmem:[%s1907 + $0x1e8] sm:$0xff]
    %v2448 = vld [vmem:[%s1907 + $0x1f0] sm:$0xff]
    %v2449 = vld [vmem:[%s1907 + $0x1f8] sm:$0xff]
    %2450 = vmatprep.subr.mxu0 %v2447
    %2451 = vmatpush1.msra.mxu0 %v2446
    %2452 = vmatprep.subr.mxu0 %v2443
    %2453 = vmatpush1.msra.mxu0 %v2442
    %2454 = vmatprep.subr.mxu0 %v2439
    %2455 = vmatpush1.msra.mxu0 %v2438
    %2456 = vmatprep.subr.mxu0 %v2435
    %2457 = vmatpush1.msra.mxu0 %v2434
    %2458 = vmatprep.subr.mxu0 %v2431
    %2459 = vmatpush1.msra.mxu0 %v2430
    %2460 = vmatprep.subr.mxu0 %v2427
    %2461 = vmatpush1.msra.mxu0 %v2426
    %2462 = vmatprep.subr.mxu0 %v2423
    %2463 = vmatpush1.msra.mxu0 %v2422
    %2464 = vmatprep.subr.mxu0 %v2419
    %2465 = vmatpush1.msra.mxu0 %v2418
    %2466 = vmatprep.subr.mxu0 %v2415
    %2467 = vmatpush1.msra.mxu0 %v2414
    %2468 = vmatprep.subr.mxu0 %v2411
    %2469 = vmatpush1.msra.mxu0 %v2410
    %2470 = vmatprep.subr.mxu0 %v2407
    %2471 = vmatpush1.msra.mxu0 %v2406
    %2472 = vmatprep.subr.mxu0 %v2403
    %2473 = vmatpush1.msra.mxu0 %v2402
    %2474 = vmatprep.subr.mxu0 %v2399
    %2475 = vmatpush1.msra.mxu0 %v2398
    %2476 = vmatprep.subr.mxu0 %v2395
    %2477 = vmatpush1.msra.mxu0 %v2394
    %2478 = vmatprep.subr.mxu0 %v2391
    %2479 = vmatpush1.msra.mxu0 %v2390
    %2480 = vmatprep.subr.mxu0 %v2387
    %2481 = vmatpush1.msra.mxu0 %v2386
    %2482 = vmatprep.subr.mxu0 0.0
    %2483 = vmatpush2.msra.mxu0 0.0
    %2484 = vmatprep.subr.mxu0 0.0
    %2485 = vmatpush2.msra.mxu0 0.0
    %2486 = vmatprep.subr.mxu0 0.0
    %2487 = vmatpush2.msra.mxu0 0.0
    %2488 = vmatprep.subr.mxu0 0.0
    %2489 = vmatpush2.msra.mxu0 0.0
    %2490 = vmatprep.subr.mxu0 0.0
    %2491 = vmatpush2.msra.mxu0 0.0
    %2492 = vmatprep.subr.mxu0 0.0
    %2493 = vmatpush2.msra.mxu0 0.0
    %2494 = vmatprep.subr.mxu0 0.0
    %2495 = vmatpush2.msra.mxu0 0.0
    %2496 = vmatprep.subr.mxu0 0.0
    %2497 = vmatpush2.msra.mxu0 0.0
    %2498 = vmatprep.subr.mxu0 0.0
    %2499 = vmatpush2.msra.mxu0 0.0
    %2500 = vmatprep.subr.mxu0 0.0
    %2501 = vmatpush2.msra.mxu0 0.0
    %2502 = vmatprep.subr.mxu0 0.0
    %2503 = vmatpush2.msra.mxu0 0.0
    %2504 = vmatprep.subr.mxu0 0.0
    %2505 = vmatpush2.msra.mxu0 0.0
    %2506 = vmatprep.subr.mxu0 0.0
    %2507 = vmatpush2.msra.mxu0 0.0
    %2508 = vmatprep.subr.mxu0 0.0
    %2509 = vmatpush2.msra.mxu0 0.0
    %2510 = vmatprep.subr.mxu0 0.0
    %2511 = vmatpush2.msra.mxu0 0.0
    %2512 = vmatprep.subr.mxu0 0.0
    %2513 = vmatpush2.msra.mxu0 0.0
    %2514 = vmatprep.mubr.f32.mxu0 0.0
    %2515 = vmatmul.mubr.f32.gmra.mxu0 %v2380
    %v2516 = vpop.f32.mrf.mxu0
    %v2517 = vadd.f32 0.0, %v2516
    %v2518 = vpop.f32.mrf.mxu0
    %v2519 = vadd.f32 0.0, %v2518
    %2520 = vdwg.mxu0
    %2521 = vmatprep.subr.mxu0 %v2449
    %2522 = vmatpush1.msra.mxu0 %v2448
    %2523 = vmatprep.subr.mxu0 %v2445
    %2524 = vmatpush1.msra.mxu0 %v2444
    %2525 = vmatprep.subr.mxu0 %v2441
    %2526 = vmatpush1.msra.mxu0 %v2440
    %2527 = vmatprep.subr.mxu0 %v2437
    %2528 = vmatpush1.msra.mxu0 %v2436
    %2529 = vmatprep.subr.mxu0 %v2433
    %2530 = vmatpush1.msra.mxu0 %v2432
    %2531 = vmatprep.subr.mxu0 %v2429
    %2532 = vmatpush1.msra.mxu0 %v2428
    %2533 = vmatprep.subr.mxu0 %v2425
    %2534 = vmatpush1.msra.mxu0 %v2424
    %2535 = vmatprep.subr.mxu0 %v2421
    %2536 = vmatpush1.msra.mxu0 %v2420
    %2537 = vmatprep.subr.mxu0 %v2417
    %2538 = vmatpush1.msra.mxu0 %v2416
    %2539 = vmatprep.subr.mxu0 %v2413
    %2540 = vmatpush1.msra.mxu0 %v2412
    %2541 = vmatprep.subr.mxu0 %v2409
    %2542 = vmatpush1.msra.mxu0 %v2408
    %2543 = vmatprep.subr.mxu0 %v2405
    %2544 = vmatpush1.msra.mxu0 %v2404
    %2545 = vmatprep.subr.mxu0 %v2401
    %2546 = vmatpush1.msra.mxu0 %v2400
    %2547 = vmatprep.subr.mxu0 %v2397
    %2548 = vmatpush1.msra.mxu0 %v2396
    %2549 = vmatprep.subr.mxu0 %v2393
    %2550 = vmatpush1.msra.mxu0 %v2392
    %2551 = vmatprep.subr.mxu0 %v2389
    %2552 = vmatpush1.msra.mxu0 %v2388
    %2553 = vmatprep.subr.mxu0 0.0
    %2554 = vmatpush2.msra.mxu0 0.0
    %2555 = vmatprep.subr.mxu0 0.0
    %2556 = vmatpush2.msra.mxu0 0.0
    %2557 = vmatprep.subr.mxu0 0.0
    %2558 = vmatpush2.msra.mxu0 0.0
    %2559 = vmatprep.subr.mxu0 0.0
    %2560 = vmatpush2.msra.mxu0 0.0
    %2561 = vmatprep.subr.mxu0 0.0
    %2562 = vmatpush2.msra.mxu0 0.0
    %2563 = vmatprep.subr.mxu0 0.0
    %2564 = vmatpush2.msra.mxu0 0.0
    %2565 = vmatprep.subr.mxu0 0.0
    %2566 = vmatpush2.msra.mxu0 0.0
    %2567 = vmatprep.subr.mxu0 0.0
    %2568 = vmatpush2.msra.mxu0 0.0
    %2569 = vmatprep.subr.mxu0 0.0
    %2570 = vmatpush2.msra.mxu0 0.0
    %2571 = vmatprep.subr.mxu0 0.0
    %2572 = vmatpush2.msra.mxu0 0.0
    %2573 = vmatprep.subr.mxu0 0.0
    %2574 = vmatpush2.msra.mxu0 0.0
    %2575 = vmatprep.subr.mxu0 0.0
    %2576 = vmatpush2.msra.mxu0 0.0
    %2577 = vmatprep.subr.mxu0 0.0
    %2578 = vmatpush2.msra.mxu0 0.0
    %2579 = vmatprep.subr.mxu0 0.0
    %2580 = vmatpush2.msra.mxu0 0.0
    %2581 = vmatprep.subr.mxu0 0.0
    %2582 = vmatpush2.msra.mxu0 0.0
    %2583 = vmatprep.subr.mxu0 0.0
    %2584 = vmatpush2.msra.mxu0 0.0
    %2585 = vmatprep.mubr.f32.mxu0 0.0
    %2586 = vmatmul.mubr.f32.gmra.mxu0 %v2380
    %v2587 = vpop.f32.mrf.mxu0
    %v2588 = vadd.f32 0.0, %v2587
    %v2589 = vpop.f32.mrf.mxu0
    %v2590 = vadd.f32 0.0, %v2589
    %2591 = vdwg.mxu0
    %v2592 = vadd.f32 %v2382, %v2517
    %v2593 = vadd.f32 %v2383, %v2519
    %v2594 = vadd.f32 %v2384, %v2588
    %v2595 = vadd.f32 %v2385, %v2590
    %v2596 = vxor.u32 %v2592, 2147483648
    %v2597 = vmul.f32 %v2596, 1.442695
    %v2598 = vpow.pop %v2597
    %v2599 = vadd.f32 %v2598, 1.0
    %v2600 = vrcp.pop %v2599
    %v2601 = vmul.f32 1.0, %v2600
    %v2602 = vxor.u32 %v2593, 2147483648
    %v2603 = vmul.f32 %v2602, 1.442695
    %v2604 = vpow.pop %v2603
    %v2605 = vadd.f32 %v2604, 1.0
    %v2606 = vrcp.pop %v2605
    %v2607 = vmul.f32 1.0, %v2606
    %v2608 = vtanh.pop %v2594
    %v2609 = vxor.u32 %v2595, 2147483648
    %v2610 = vmul.f32 %v2609, 1.442695
    %v2611 = vpow.pop %v2610
    %v2612 = vadd.f32 %v2611, 1.0
    %v2613 = vrcp.pop %v2612
    %v2614 = vmul.f32 1.0, %v2613
    %v2615 = vmul.f32 %v2607, %v2378
    %v2616 = vmul.f32 %v2601, %v2608
    %v2617 = vadd.f32 %v2615, %v2616
    %v2618 = vtanh.pop %v2617
    %v2619 = vmul.f32 %v2614, %v2618
    %2620 = vst [vmem:[#allocation3 + $0x10] sm:$0xff] %v2619
    %v2621 = vld [vmem:[#allocation4 + $0x60] sm:$0xff]
    %v2622 = vld [vmem:[#allocation4 + $0x68] sm:$0xff]
    %v2623 = vld [vmem:[#allocation4 + $0x70] sm:$0xff]
    %v2624 = vld [vmem:[#allocation4 + $0x78] sm:$0xff]
    %v2625 = vld [vmem:[%s1907] sm:$0xff]
    %v2626 = vld [vmem:[%s1907 + $0x8] sm:$0xff]
    %v2627 = vld [vmem:[%s1907 + $0x10] sm:$0xff]
    %v2628 = vld [vmem:[%s1907 + $0x18] sm:$0xff]
    %v2629 = vld [vmem:[%s1907 + $0x20] sm:$0xff]
    %v2630 = vld [vmem:[%s1907 + $0x28] sm:$0xff]
    %v2631 = vld [vmem:[%s1907 + $0x30] sm:$0xff]
    %v2632 = vld [vmem:[%s1907 + $0x38] sm:$0xff]
    %v2633 = vld [vmem:[%s1907 + $0x40] sm:$0xff]
    %v2634 = vld [vmem:[%s1907 + $0x48] sm:$0xff]
    %v2635 = vld [vmem:[%s1907 + $0x50] sm:$0xff]
    %v2636 = vld [vmem:[%s1907 + $0x58] sm:$0xff]
    %v2637 = vld [vmem:[%s1907 + $0x60] sm:$0xff]
    %v2638 = vld [vmem:[%s1907 + $0x68] sm:$0xff]
    %v2639 = vld [vmem:[%s1907 + $0x70] sm:$0xff]
    %v2640 = vld [vmem:[%s1907 + $0x78] sm:$0xff]
    %v2641 = vld [vmem:[%s1907 + $0x80] sm:$0xff]
    %v2642 = vld [vmem:[%s1907 + $0x88] sm:$0xff]
    %v2643 = vld [vmem:[%s1907 + $0x90] sm:$0xff]
    %v2644 = vld [vmem:[%s1907 + $0x98] sm:$0xff]
    %v2645 = vld [vmem:[%s1907 + $0xa0] sm:$0xff]
    %v2646 = vld [vmem:[%s1907 + $0xa8] sm:$0xff]
    %v2647 = vld [vmem:[%s1907 + $0xb0] sm:$0xff]
    %v2648 = vld [vmem:[%s1907 + $0xb8] sm:$0xff]
    %v2649 = vld [vmem:[%s1907 + $0xc0] sm:$0xff]
    %v2650 = vld [vmem:[%s1907 + $0xc8] sm:$0xff]
    %v2651 = vld [vmem:[%s1907 + $0xd0] sm:$0xff]
    %v2652 = vld [vmem:[%s1907 + $0xd8] sm:$0xff]
    %v2653 = vld [vmem:[%s1907 + $0xe0] sm:$0xff]
    %v2654 = vld [vmem:[%s1907 + $0xe8] sm:$0xff]
    %v2655 = vld [vmem:[%s1907 + $0xf0] sm:$0xff]
    %v2656 = vld [vmem:[%s1907 + $0xf8] sm:$0xff]
    %v2657 = vld [vmem:[%s1907 + $0x100] sm:$0xff]
    %v2658 = vld [vmem:[%s1907 + $0x108] sm:$0xff]
    %v2659 = vld [vmem:[%s1907 + $0x110] sm:$0xff]
    %v2660 = vld [vmem:[%s1907 + $0x118] sm:$0xff]
    %v2661 = vld [vmem:[%s1907 + $0x120] sm:$0xff]
    %v2662 = vld [vmem:[%s1907 + $0x128] sm:$0xff]
    %v2663 = vld [vmem:[%s1907 + $0x130] sm:$0xff]
    %v2664 = vld [vmem:[%s1907 + $0x138] sm:$0xff]
    %v2665 = vld [vmem:[%s1907 + $0x140] sm:$0xff]
    %v2666 = vld [vmem:[%s1907 + $0x148] sm:$0xff]
    %v2667 = vld [vmem:[%s1907 + $0x150] sm:$0xff]
    %v2668 = vld [vmem:[%s1907 + $0x158] sm:$0xff]
    %v2669 = vld [vmem:[%s1907 + $0x160] sm:$0xff]
    %v2670 = vld [vmem:[%s1907 + $0x168] sm:$0xff]
    %v2671 = vld [vmem:[%s1907 + $0x170] sm:$0xff]
    %v2672 = vld [vmem:[%s1907 + $0x178] sm:$0xff]
    %v2673 = vld [vmem:[%s1907 + $0x180] sm:$0xff]
    %v2674 = vld [vmem:[%s1907 + $0x188] sm:$0xff]
    %v2675 = vld [vmem:[%s1907 + $0x190] sm:$0xff]
    %v2676 = vld [vmem:[%s1907 + $0x198] sm:$0xff]
    %v2677 = vld [vmem:[%s1907 + $0x1a0] sm:$0xff]
    %v2678 = vld [vmem:[%s1907 + $0x1a8] sm:$0xff]
    %v2679 = vld [vmem:[%s1907 + $0x1b0] sm:$0xff]
    %v2680 = vld [vmem:[%s1907 + $0x1b8] sm:$0xff]
    %v2681 = vld [vmem:[%s1907 + $0x1c0] sm:$0xff]
    %v2682 = vld [vmem:[%s1907 + $0x1c8] sm:$0xff]
    %v2683 = vld [vmem:[%s1907 + $0x1d0] sm:$0xff]
    %v2684 = vld [vmem:[%s1907 + $0x1d8] sm:$0xff]
    %v2685 = vld [vmem:[%s1907 + $0x1e0] sm:$0xff]
    %v2686 = vld [vmem:[%s1907 + $0x1e8] sm:$0xff]
    %v2687 = vld [vmem:[%s1907 + $0x1f0] sm:$0xff]
    %v2688 = vld [vmem:[%s1907 + $0x1f8] sm:$0xff]
    %2689 = vmatprep.subr.mxu0 %v2686
    %2690 = vmatpush1.msra.mxu0 %v2685
    %2691 = vmatprep.subr.mxu0 %v2682
    %2692 = vmatpush1.msra.mxu0 %v2681
    %2693 = vmatprep.subr.mxu0 %v2678
    %2694 = vmatpush1.msra.mxu0 %v2677
    %2695 = vmatprep.subr.mxu0 %v2674
    %2696 = vmatpush1.msra.mxu0 %v2673
    %2697 = vmatprep.subr.mxu0 %v2670
    %2698 = vmatpush1.msra.mxu0 %v2669
    %2699 = vmatprep.subr.mxu0 %v2666
    %2700 = vmatpush1.msra.mxu0 %v2665
    %2701 = vmatprep.subr.mxu0 %v2662
    %2702 = vmatpush1.msra.mxu0 %v2661
    %2703 = vmatprep.subr.mxu0 %v2658
    %2704 = vmatpush1.msra.mxu0 %v2657
    %2705 = vmatprep.subr.mxu0 %v2654
    %2706 = vmatpush1.msra.mxu0 %v2653
    %2707 = vmatprep.subr.mxu0 %v2650
    %2708 = vmatpush1.msra.mxu0 %v2649
    %2709 = vmatprep.subr.mxu0 %v2646
    %2710 = vmatpush1.msra.mxu0 %v2645
    %2711 = vmatprep.subr.mxu0 %v2642
    %2712 = vmatpush1.msra.mxu0 %v2641
    %2713 = vmatprep.subr.mxu0 %v2638
    %2714 = vmatpush1.msra.mxu0 %v2637
    %2715 = vmatprep.subr.mxu0 %v2634
    %2716 = vmatpush1.msra.mxu0 %v2633
    %2717 = vmatprep.subr.mxu0 %v2630
    %2718 = vmatpush1.msra.mxu0 %v2629
    %2719 = vmatprep.subr.mxu0 %v2626
    %2720 = vmatpush1.msra.mxu0 %v2625
    %2721 = vmatprep.subr.mxu0 0.0
    %2722 = vmatpush2.msra.mxu0 0.0
    %2723 = vmatprep.subr.mxu0 0.0
    %2724 = vmatpush2.msra.mxu0 0.0
    %2725 = vmatprep.subr.mxu0 0.0
    %2726 = vmatpush2.msra.mxu0 0.0
    %2727 = vmatprep.subr.mxu0 0.0
    %2728 = vmatpush2.msra.mxu0 0.0
    %2729 = vmatprep.subr.mxu0 0.0
    %2730 = vmatpush2.msra.mxu0 0.0
    %2731 = vmatprep.subr.mxu0 0.0
    %2732 = vmatpush2.msra.mxu0 0.0
    %2733 = vmatprep.subr.mxu0 0.0
    %2734 = vmatpush2.msra.mxu0 0.0
    %2735 = vmatprep.subr.mxu0 0.0
    %2736 = vmatpush2.msra.mxu0 0.0
    %2737 = vmatprep.subr.mxu0 0.0
    %2738 = vmatpush2.msra.mxu0 0.0
    %2739 = vmatprep.subr.mxu0 0.0
    %2740 = vmatpush2.msra.mxu0 0.0
    %2741 = vmatprep.subr.mxu0 0.0
    %2742 = vmatpush2.msra.mxu0 0.0
    %2743 = vmatprep.subr.mxu0 0.0
    %2744 = vmatpush2.msra.mxu0 0.0
    %2745 = vmatprep.subr.mxu0 0.0
    %2746 = vmatpush2.msra.mxu0 0.0
    %2747 = vmatprep.subr.mxu0 0.0
    %2748 = vmatpush2.msra.mxu0 0.0
    %2749 = vmatprep.subr.mxu0 0.0
    %2750 = vmatpush2.msra.mxu0 0.0
    %2751 = vmatprep.subr.mxu0 0.0
    %2752 = vmatpush2.msra.mxu0 0.0
    %2753 = vmatprep.mubr.f32.mxu0 0.0
    %2754 = vmatmul.mubr.f32.gmra.mxu0 %v2619
    %v2755 = vpop.f32.mrf.mxu0
    %v2756 = vadd.f32 0.0, %v2755
    %v2757 = vpop.f32.mrf.mxu0
    %v2758 = vadd.f32 0.0, %v2757
    %2759 = vdwg.mxu0
    %2760 = vmatprep.subr.mxu0 %v2688
    %2761 = vmatpush1.msra.mxu0 %v2687
    %2762 = vmatprep.subr.mxu0 %v2684
    %2763 = vmatpush1.msra.mxu0 %v2683
    %2764 = vmatprep.subr.mxu0 %v2680
    %2765 = vmatpush1.msra.mxu0 %v2679
    %2766 = vmatprep.subr.mxu0 %v2676
    %2767 = vmatpush1.msra.mxu0 %v2675
    %2768 = vmatprep.subr.mxu0 %v2672
    %2769 = vmatpush1.msra.mxu0 %v2671
    %2770 = vmatprep.subr.mxu0 %v2668
    %2771 = vmatpush1.msra.mxu0 %v2667
    %2772 = vmatprep.subr.mxu0 %v2664
    %2773 = vmatpush1.msra.mxu0 %v2663
    %2774 = vmatprep.subr.mxu0 %v2660
    %2775 = vmatpush1.msra.mxu0 %v2659
    %2776 = vmatprep.subr.mxu0 %v2656
    %2777 = vmatpush1.msra.mxu0 %v2655
    %2778 = vmatprep.subr.mxu0 %v2652
    %2779 = vmatpush1.msra.mxu0 %v2651
    %2780 = vmatprep.subr.mxu0 %v2648
    %2781 = vmatpush1.msra.mxu0 %v2647
    %2782 = vmatprep.subr.mxu0 %v2644
    %2783 = vmatpush1.msra.mxu0 %v2643
    %2784 = vmatprep.subr.mxu0 %v2640
    %2785 = vmatpush1.msra.mxu0 %v2639
    %2786 = vmatprep.subr.mxu0 %v2636
    %2787 = vmatpush1.msra.mxu0 %v2635
    %2788 = vmatprep.subr.mxu0 %v2632
    %2789 = vmatpush1.msra.mxu0 %v2631
    %2790 = vmatprep.subr.mxu0 %v2628
    %2791 = vmatpush1.msra.mxu0 %v2627
    %2792 = vmatprep.subr.mxu0 0.0
    %2793 = vmatpush2.msra.mxu0 0.0
    %2794 = vmatprep.subr.mxu0 0.0
    %2795 = vmatpush2.msra.mxu0 0.0
    %2796 = vmatprep.subr.mxu0 0.0
    %2797 = vmatpush2.msra.mxu0 0.0
    %2798 = vmatprep.subr.mxu0 0.0
    %2799 = vmatpush2.msra.mxu0 0.0
    %2800 = vmatprep.subr.mxu0 0.0
    %2801 = vmatpush2.msra.mxu0 0.0
    %2802 = vmatprep.subr.mxu0 0.0
    %2803 = vmatpush2.msra.mxu0 0.0
    %2804 = vmatprep.subr.mxu0 0.0
    %2805 = vmatpush2.msra.mxu0 0.0
    %2806 = vmatprep.subr.mxu0 0.0
    %2807 = vmatpush2.msra.mxu0 0.0
    %2808 = vmatprep.subr.mxu0 0.0
    %2809 = vmatpush2.msra.mxu0 0.0
    %2810 = vmatprep.subr.mxu0 0.0
    %2811 = vmatpush2.msra.mxu0 0.0
    %2812 = vmatprep.subr.mxu0 0.0
    %2813 = vmatpush2.msra.mxu0 0.0
    %2814 = vmatprep.subr.mxu0 0.0
    %2815 = vmatpush2.msra.mxu0 0.0
    %2816 = vmatprep.subr.mxu0 0.0
    %2817 = vmatpush2.msra.mxu0 0.0
    %2818 = vmatprep.subr.mxu0 0.0
    %2819 = vmatpush2.msra.mxu0 0.0
    %2820 = vmatprep.subr.mxu0 0.0
    %2821 = vmatpush2.msra.mxu0 0.0
    %2822 = vmatprep.subr.mxu0 0.0
    %2823 = vmatpush2.msra.mxu0 0.0
    %2824 = vmatprep.mubr.f32.mxu0 0.0
    %2825 = vmatmul.mubr.f32.gmra.mxu0 %v2619
    %v2826 = vpop.f32.mrf.mxu0
    %v2827 = vadd.f32 0.0, %v2826
    %v2828 = vpop.f32.mrf.mxu0
    %v2829 = vadd.f32 0.0, %v2828
    %2830 = vdwg.mxu0
    %v2831 = vadd.f32 %v2621, %v2756
    %v2832 = vadd.f32 %v2622, %v2758
    %v2833 = vadd.f32 %v2623, %v2827
    %v2834 = vadd.f32 %v2624, %v2829
    %v2835 = vxor.u32 %v2831, 2147483648
    %v2836 = vmul.f32 %v2835, 1.442695
    %v2837 = vpow.pop %v2836
    %v2838 = vadd.f32 %v2837, 1.0
    %v2839 = vrcp.pop %v2838
    %v2840 = vmul.f32 1.0, %v2839
    %v2841 = vxor.u32 %v2832, 2147483648
    %v2842 = vmul.f32 %v2841, 1.442695
    %v2843 = vpow.pop %v2842
    %v2844 = vadd.f32 %v2843, 1.0
    %v2845 = vrcp.pop %v2844
    %v2846 = vmul.f32 1.0, %v2845
    %v2847 = vtanh.pop %v2833
    %v2848 = vxor.u32 %v2834, 2147483648
    %v2849 = vmul.f32 %v2848, 1.442695
    %v2850 = vpow.pop %v2849
    %v2851 = vadd.f32 %v2850, 1.0
    %v2852 = vrcp.pop %v2851
    %v2853 = vmul.f32 1.0, %v2852
    %v2854 = vmul.f32 %v2846, %v2617
    %v2855 = vmul.f32 %v2840, %v2847
    %v2856 = vadd.f32 %v2854, %v2855
    %v2857 = vtanh.pop %v2856
    %v2858 = vmul.f32 %v2853, %v2857
    %2859 = vst [vmem:[#allocation3 + $0x18] sm:$0xff] %v2858
    %v2860 = vld [vmem:[#allocation4 + $0x80] sm:$0xff]
    %v2861 = vld [vmem:[#allocation4 + $0x88] sm:$0xff]
    %v2862 = vld [vmem:[#allocation4 + $0x90] sm:$0xff]
    %v2863 = vld [vmem:[#allocation4 + $0x98] sm:$0xff]
    %v2864 = vld [vmem:[%s1907] sm:$0xff]
    %v2865 = vld [vmem:[%s1907 + $0x8] sm:$0xff]
    %v2866 = vld [vmem:[%s1907 + $0x10] sm:$0xff]
    %v2867 = vld [vmem:[%s1907 + $0x18] sm:$0xff]
    %v2868 = vld [vmem:[%s1907 + $0x20] sm:$0xff]
    %v2869 = vld [vmem:[%s1907 + $0x28] sm:$0xff]
    %v2870 = vld [vmem:[%s1907 + $0x30] sm:$0xff]
    %v2871 = vld [vmem:[%s1907 + $0x38] sm:$0xff]
    %v2872 = vld [vmem:[%s1907 + $0x40] sm:$0xff]
    %v2873 = vld [vmem:[%s1907 + $0x48] sm:$0xff]
    %v2874 = vld [vmem:[%s1907 + $0x50] sm:$0xff]
    %v2875 = vld [vmem:[%s1907 + $0x58] sm:$0xff]
    %v2876 = vld [vmem:[%s1907 + $0x60] sm:$0xff]
    %v2877 = vld [vmem:[%s1907 + $0x68] sm:$0xff]
    %v2878 = vld [vmem:[%s1907 + $0x70] sm:$0xff]
    %v2879 = vld [vmem:[%s1907 + $0x78] sm:$0xff]
    %v2880 = vld [vmem:[%s1907 + $0x80] sm:$0xff]
    %v2881 = vld [vmem:[%s1907 + $0x88] sm:$0xff]
    %v2882 = vld [vmem:[%s1907 + $0x90] sm:$0xff]
    %v2883 = vld [vmem:[%s1907 + $0x98] sm:$0xff]
    %v2884 = vld [vmem:[%s1907 + $0xa0] sm:$0xff]
    %v2885 = vld [vmem:[%s1907 + $0xa8] sm:$0xff]
    %v2886 = vld [vmem:[%s1907 + $0xb0] sm:$0xff]
    %v2887 = vld [vmem:[%s1907 + $0xb8] sm:$0xff]
    %v2888 = vld [vmem:[%s1907 + $0xc0] sm:$0xff]
    %v2889 = vld [vmem:[%s1907 + $0xc8] sm:$0xff]
    %v2890 = vld [vmem:[%s1907 + $0xd0] sm:$0xff]
    %v2891 = vld [vmem:[%s1907 + $0xd8] sm:$0xff]
    %v2892 = vld [vmem:[%s1907 + $0xe0] sm:$0xff]
    %v2893 = vld [vmem:[%s1907 + $0xe8] sm:$0xff]
    %v2894 = vld [vmem:[%s1907 + $0xf0] sm:$0xff]
    %v2895 = vld [vmem:[%s1907 + $0xf8] sm:$0xff]
    %v2896 = vld [vmem:[%s1907 + $0x100] sm:$0xff]
    %v2897 = vld [vmem:[%s1907 + $0x108] sm:$0xff]
    %v2898 = vld [vmem:[%s1907 + $0x110] sm:$0xff]
    %v2899 = vld [vmem:[%s1907 + $0x118] sm:$0xff]
    %v2900 = vld [vmem:[%s1907 + $0x120] sm:$0xff]
    %v2901 = vld [vmem:[%s1907 + $0x128] sm:$0xff]
    %v2902 = vld [vmem:[%s1907 + $0x130] sm:$0xff]
    %v2903 = vld [vmem:[%s1907 + $0x138] sm:$0xff]
    %v2904 = vld [vmem:[%s1907 + $0x140] sm:$0xff]
    %v2905 = vld [vmem:[%s1907 + $0x148] sm:$0xff]
    %v2906 = vld [vmem:[%s1907 + $0x150] sm:$0xff]
    %v2907 = vld [vmem:[%s1907 + $0x158] sm:$0xff]
    %v2908 = vld [vmem:[%s1907 + $0x160] sm:$0xff]
    %v2909 = vld [vmem:[%s1907 + $0x168] sm:$0xff]
    %v2910 = vld [vmem:[%s1907 + $0x170] sm:$0xff]
    %v2911 = vld [vmem:[%s1907 + $0x178] sm:$0xff]
    %v2912 = vld [vmem:[%s1907 + $0x180] sm:$0xff]
    %v2913 = vld [vmem:[%s1907 + $0x188] sm:$0xff]
    %v2914 = vld [vmem:[%s1907 + $0x190] sm:$0xff]
    %v2915 = vld [vmem:[%s1907 + $0x198] sm:$0xff]
    %v2916 = vld [vmem:[%s1907 + $0x1a0] sm:$0xff]
    %v2917 = vld [vmem:[%s1907 + $0x1a8] sm:$0xff]
    %v2918 = vld [vmem:[%s1907 + $0x1b0] sm:$0xff]
    %v2919 = vld [vmem:[%s1907 + $0x1b8] sm:$0xff]
    %v2920 = vld [vmem:[%s1907 + $0x1c0] sm:$0xff]
    %v2921 = vld [vmem:[%s1907 + $0x1c8] sm:$0xff]
    %v2922 = vld [vmem:[%s1907 + $0x1d0] sm:$0xff]
    %v2923 = vld [vmem:[%s1907 + $0x1d8] sm:$0xff]
    %v2924 = vld [vmem:[%s1907 + $0x1e0] sm:$0xff]
    %v2925 = vld [vmem:[%s1907 + $0x1e8] sm:$0xff]
    %v2926 = vld [vmem:[%s1907 + $0x1f0] sm:$0xff]
    %v2927 = vld [vmem:[%s1907 + $0x1f8] sm:$0xff]
    %2928 = vmatprep.subr.mxu0 %v2925
    %2929 = vmatpush1.msra.mxu0 %v2924
    %2930 = vmatprep.subr.mxu0 %v2921
    %2931 = vmatpush1.msra.mxu0 %v2920
    %2932 = vmatprep.subr.mxu0 %v2917
    %2933 = vmatpush1.msra.mxu0 %v2916
    %2934 = vmatprep.subr.mxu0 %v2913
    %2935 = vmatpush1.msra.mxu0 %v2912
    %2936 = vmatprep.subr.mxu0 %v2909
    %2937 = vmatpush1.msra.mxu0 %v2908
    %2938 = vmatprep.subr.mxu0 %v2905
    %2939 = vmatpush1.msra.mxu0 %v2904
    %2940 = vmatprep.subr.mxu0 %v2901
    %2941 = vmatpush1.msra.mxu0 %v2900
    %2942 = vmatprep.subr.mxu0 %v2897
    %2943 = vmatpush1.msra.mxu0 %v2896
    %2944 = vmatprep.subr.mxu0 %v2893
    %2945 = vmatpush1.msra.mxu0 %v2892
    %2946 = vmatprep.subr.mxu0 %v2889
    %2947 = vmatpush1.msra.mxu0 %v2888
    %2948 = vmatprep.subr.mxu0 %v2885
    %2949 = vmatpush1.msra.mxu0 %v2884
    %2950 = vmatprep.subr.mxu0 %v2881
    %2951 = vmatpush1.msra.mxu0 %v2880
    %2952 = vmatprep.subr.mxu0 %v2877
    %2953 = vmatpush1.msra.mxu0 %v2876
    %2954 = vmatprep.subr.mxu0 %v2873
    %2955 = vmatpush1.msra.mxu0 %v2872
    %2956 = vmatprep.subr.mxu0 %v2869
    %2957 = vmatpush1.msra.mxu0 %v2868
    %2958 = vmatprep.subr.mxu0 %v2865
    %2959 = vmatpush1.msra.mxu0 %v2864
    %2960 = vmatprep.subr.mxu0 0.0
    %2961 = vmatpush2.msra.mxu0 0.0
    %2962 = vmatprep.subr.mxu0 0.0
    %2963 = vmatpush2.msra.mxu0 0.0
    %2964 = vmatprep.subr.mxu0 0.0
    %2965 = vmatpush2.msra.mxu0 0.0
    %2966 = vmatprep.subr.mxu0 0.0
    %2967 = vmatpush2.msra.mxu0 0.0
    %2968 = vmatprep.subr.mxu0 0.0
    %2969 = vmatpush2.msra.mxu0 0.0
    %2970 = vmatprep.subr.mxu0 0.0
    %2971 = vmatpush2.msra.mxu0 0.0
    %2972 = vmatprep.subr.mxu0 0.0
    %2973 = vmatpush2.msra.mxu0 0.0
    %2974 = vmatprep.subr.mxu0 0.0
    %2975 = vmatpush2.msra.mxu0 0.0
    %2976 = vmatprep.subr.mxu0 0.0
    %2977 = vmatpush2.msra.mxu0 0.0
    %2978 = vmatprep.subr.mxu0 0.0
    %2979 = vmatpush2.msra.mxu0 0.0
    %2980 = vmatprep.subr.mxu0 0.0
    %2981 = vmatpush2.msra.mxu0 0.0
    %2982 = vmatprep.subr.mxu0 0.0
    %2983 = vmatpush2.msra.mxu0 0.0
    %2984 = vmatprep.subr.mxu0 0.0
    %2985 = vmatpush2.msra.mxu0 0.0
    %2986 = vmatprep.subr.mxu0 0.0
    %2987 = vmatpush2.msra.mxu0 0.0
    %2988 = vmatprep.subr.mxu0 0.0
    %2989 = vmatpush2.msra.mxu0 0.0
    %2990 = vmatprep.subr.mxu0 0.0
    %2991 = vmatpush2.msra.mxu0 0.0
    %2992 = vmatprep.mubr.f32.mxu0 0.0
    %2993 = vmatmul.mubr.f32.gmra.mxu0 %v2858
    %v2994 = vpop.f32.mrf.mxu0
    %v2995 = vadd.f32 0.0, %v2994
    %v2996 = vpop.f32.mrf.mxu0
    %v2997 = vadd.f32 0.0, %v2996
    %2998 = vdwg.mxu0
    %2999 = vmatprep.subr.mxu0 %v2927
    %3000 = vmatpush1.msra.mxu0 %v2926
    %3001 = vmatprep.subr.mxu0 %v2923
    %3002 = vmatpush1.msra.mxu0 %v2922
    %3003 = vmatprep.subr.mxu0 %v2919
    %3004 = vmatpush1.msra.mxu0 %v2918
    %3005 = vmatprep.subr.mxu0 %v2915
    %3006 = vmatpush1.msra.mxu0 %v2914
    %3007 = vmatprep.subr.mxu0 %v2911
    %3008 = vmatpush1.msra.mxu0 %v2910
    %3009 = vmatprep.subr.mxu0 %v2907
    %3010 = vmatpush1.msra.mxu0 %v2906
    %3011 = vmatprep.subr.mxu0 %v2903
    %3012 = vmatpush1.msra.mxu0 %v2902
    %3013 = vmatprep.subr.mxu0 %v2899
    %3014 = vmatpush1.msra.mxu0 %v2898
    %3015 = vmatprep.subr.mxu0 %v2895
    %3016 = vmatpush1.msra.mxu0 %v2894
    %3017 = vmatprep.subr.mxu0 %v2891
    %3018 = vmatpush1.msra.mxu0 %v2890
    %3019 = vmatprep.subr.mxu0 %v2887
    %3020 = vmatpush1.msra.mxu0 %v2886
    %3021 = vmatprep.subr.mxu0 %v2883
    %3022 = vmatpush1.msra.mxu0 %v2882
    %3023 = vmatprep.subr.mxu0 %v2879
    %3024 = vmatpush1.msra.mxu0 %v2878
    %3025 = vmatprep.subr.mxu0 %v2875
    %3026 = vmatpush1.msra.mxu0 %v2874
    %3027 = vmatprep.subr.mxu0 %v2871
    %3028 = vmatpush1.msra.mxu0 %v2870
    %3029 = vmatprep.subr.mxu0 %v2867
    %3030 = vmatpush1.msra.mxu0 %v2866
    %3031 = vmatprep.subr.mxu0 0.0
    %3032 = vmatpush2.msra.mxu0 0.0
    %3033 = vmatprep.subr.mxu0 0.0
    %3034 = vmatpush2.msra.mxu0 0.0
    %3035 = vmatprep.subr.mxu0 0.0
    %3036 = vmatpush2.msra.mxu0 0.0
    %3037 = vmatprep.subr.mxu0 0.0
    %3038 = vmatpush2.msra.mxu0 0.0
    %3039 = vmatprep.subr.mxu0 0.0
    %3040 = vmatpush2.msra.mxu0 0.0
    %3041 = vmatprep.subr.mxu0 0.0
    %3042 = vmatpush2.msra.mxu0 0.0
    %3043 = vmatprep.subr.mxu0 0.0
    %3044 = vmatpush2.msra.mxu0 0.0
    %3045 = vmatprep.subr.mxu0 0.0
    %3046 = vmatpush2.msra.mxu0 0.0
    %3047 = vmatprep.subr.mxu0 0.0
    %3048 = vmatpush2.msra.mxu0 0.0
    %3049 = vmatprep.subr.mxu0 0.0
    %3050 = vmatpush2.msra.mxu0 0.0
    %3051 = vmatprep.subr.mxu0 0.0
    %3052 = vmatpush2.msra.mxu0 0.0
    %3053 = vmatprep.subr.mxu0 0.0
    %3054 = vmatpush2.msra.mxu0 0.0
    %3055 = vmatprep.subr.mxu0 0.0
    %3056 = vmatpush2.msra.mxu0 0.0
    %3057 = vmatprep.subr.mxu0 0.0
    %3058 = vmatpush2.msra.mxu0 0.0
    %3059 = vmatprep.subr.mxu0 0.0
    %3060 = vmatpush2.msra.mxu0 0.0
    %3061 = vmatprep.subr.mxu0 0.0
    %3062 = vmatpush2.msra.mxu0 0.0
    %3063 = vmatprep.mubr.f32.mxu0 0.0
    %3064 = vmatmul.mubr.f32.gmra.mxu0 %v2858
    %v3065 = vpop.f32.mrf.mxu0
    %v3066 = vadd.f32 0.0, %v3065
    %v3067 = vpop.f32.mrf.mxu0
    %v3068 = vadd.f32 0.0, %v3067
    %3069 = vdwg.mxu0
    %v3070 = vadd.f32 %v2860, %v2995
    %v3071 = vadd.f32 %v2861, %v2997
    %v3072 = vadd.f32 %v2862, %v3066
    %v3073 = vadd.f32 %v2863, %v3068
    %v3074 = vxor.u32 %v3070, 2147483648
    %v3075 = vmul.f32 %v3074, 1.442695
    %v3076 = vpow.pop %v3075
    %v3077 = vadd.f32 %v3076, 1.0
    %v3078 = vrcp.pop %v3077
    %v3079 = vmul.f32 1.0, %v3078
    %v3080 = vxor.u32 %v3071, 2147483648
    %v3081 = vmul.f32 %v3080, 1.442695
    %v3082 = vpow.pop %v3081
    %v3083 = vadd.f32 %v3082, 1.0
    %v3084 = vrcp.pop %v3083
    %v3085 = vmul.f32 1.0, %v3084
    %v3086 = vtanh.pop %v3072
    %v3087 = vxor.u32 %v3073, 2147483648
    %v3088 = vmul.f32 %v3087, 1.442695
    %v3089 = vpow.pop %v3088
    %v3090 = vadd.f32 %v3089, 1.0
    %v3091 = vrcp.pop %v3090
    %v3092 = vmul.f32 1.0, %v3091
    %v3093 = vmul.f32 %v3085, %v2856
    %v3094 = vmul.f32 %v3079, %v3086
    %v3095 = vadd.f32 %v3093, %v3094
    %v3096 = vtanh.pop %v3095
    %v3097 = vmul.f32 %v3092, %v3096
    %3098 = vst [vmem:[#allocation3 + $0x20] sm:$0xff] %v3097
    %v3099 = vld [vmem:[#allocation3] sm:$0xff]
    %v3100 = vld [vmem:[#allocation3 + $0x8] sm:$0xff]
    %v3101 = vld [vmem:[#allocation3 + $0x10] sm:$0xff]
    %v3102 = vld [vmem:[#allocation3 + $0x18] sm:$0xff]
    %v3103 = vld [vmem:[#allocation3 + $0x20] sm:$0xff]
    %s3104 = scalar_lea.vmem [#allocation8], 1024
    %v3105 = vld [vmem:[%s3104] sm:$0xff]
    %v3106 = vld [vmem:[%s3104 + $0x8] sm:$0xff]
    %v3107 = vld [vmem:[%s3104 + $0x10] sm:$0xff]
    %v3108 = vld [vmem:[%s3104 + $0x18] sm:$0xff]
    %v3109 = vld [vmem:[%s3104 + $0x20] sm:$0xff]
    %v3110 = vld [vmem:[%s3104 + $0x28] sm:$0xff]
    %v3111 = vld [vmem:[%s3104 + $0x30] sm:$0xff]
    %v3112 = vld [vmem:[%s3104 + $0x38] sm:$0xff]
    %v3113 = vld [vmem:[%s3104 + $0x40] sm:$0xff]
    %v3114 = vld [vmem:[%s3104 + $0x48] sm:$0xff]
    %v3115 = vld [vmem:[%s3104 + $0x50] sm:$0xff]
    %v3116 = vld [vmem:[%s3104 + $0x58] sm:$0xff]
    %v3117 = vld [vmem:[%s3104 + $0x60] sm:$0xff]
    %v3118 = vld [vmem:[%s3104 + $0x68] sm:$0xff]
    %v3119 = vld [vmem:[%s3104 + $0x70] sm:$0xff]
    %v3120 = vld [vmem:[%s3104 + $0x78] sm:$0xff]
    %v3121 = vld [vmem:[%s3104 + $0x80] sm:$0xff]
    %v3122 = vld [vmem:[%s3104 + $0x88] sm:$0xff]
    %v3123 = vld [vmem:[%s3104 + $0x90] sm:$0xff]
    %v3124 = vld [vmem:[%s3104 + $0x98] sm:$0xff]
    %v3125 = vld [vmem:[%s3104 + $0xa0] sm:$0xff]
    %v3126 = vld [vmem:[%s3104 + $0xa8] sm:$0xff]
    %v3127 = vld [vmem:[%s3104 + $0xb0] sm:$0xff]
    %v3128 = vld [vmem:[%s3104 + $0xb8] sm:$0xff]
    %v3129 = vld [vmem:[%s3104 + $0xc0] sm:$0xff]
    %v3130 = vld [vmem:[%s3104 + $0xc8] sm:$0xff]
    %v3131 = vld [vmem:[%s3104 + $0xd0] sm:$0xff]
    %v3132 = vld [vmem:[%s3104 + $0xd8] sm:$0xff]
    %v3133 = vld [vmem:[%s3104 + $0xe0] sm:$0xff]
    %v3134 = vld [vmem:[%s3104 + $0xe8] sm:$0xff]
    %v3135 = vld [vmem:[%s3104 + $0xf0] sm:$0xff]
    %v3136 = vld [vmem:[%s3104 + $0xf8] sm:$0xff]
    %v3137 = vld [vmem:[%s3104 + $0x100] sm:$0xff]
    %v3138 = vld [vmem:[%s3104 + $0x108] sm:$0xff]
    %v3139 = vld [vmem:[%s3104 + $0x110] sm:$0xff]
    %v3140 = vld [vmem:[%s3104 + $0x118] sm:$0xff]
    %v3141 = vld [vmem:[%s3104 + $0x120] sm:$0xff]
    %v3142 = vld [vmem:[%s3104 + $0x128] sm:$0xff]
    %v3143 = vld [vmem:[%s3104 + $0x130] sm:$0xff]
    %v3144 = vld [vmem:[%s3104 + $0x138] sm:$0xff]
    %v3145 = vld [vmem:[%s3104 + $0x140] sm:$0xff]
    %v3146 = vld [vmem:[%s3104 + $0x148] sm:$0xff]
    %v3147 = vld [vmem:[%s3104 + $0x150] sm:$0xff]
    %v3148 = vld [vmem:[%s3104 + $0x158] sm:$0xff]
    %v3149 = vld [vmem:[%s3104 + $0x160] sm:$0xff]
    %v3150 = vld [vmem:[%s3104 + $0x168] sm:$0xff]
    %v3151 = vld [vmem:[%s3104 + $0x170] sm:$0xff]
    %v3152 = vld [vmem:[%s3104 + $0x178] sm:$0xff]
    %v3153 = vld [vmem:[%s3104 + $0x180] sm:$0xff]
    %v3154 = vld [vmem:[%s3104 + $0x188] sm:$0xff]
    %v3155 = vld [vmem:[%s3104 + $0x190] sm:$0xff]
    %v3156 = vld [vmem:[%s3104 + $0x198] sm:$0xff]
    %v3157 = vld [vmem:[%s3104 + $0x1a0] sm:$0xff]
    %v3158 = vld [vmem:[%s3104 + $0x1a8] sm:$0xff]
    %v3159 = vld [vmem:[%s3104 + $0x1b0] sm:$0xff]
    %v3160 = vld [vmem:[%s3104 + $0x1b8] sm:$0xff]
    %v3161 = vld [vmem:[%s3104 + $0x1c0] sm:$0xff]
    %v3162 = vld [vmem:[%s3104 + $0x1c8] sm:$0xff]
    %v3163 = vld [vmem:[%s3104 + $0x1d0] sm:$0xff]
    %v3164 = vld [vmem:[%s3104 + $0x1d8] sm:$0xff]
    %v3165 = vld [vmem:[%s3104 + $0x1e0] sm:$0xff]
    %v3166 = vld [vmem:[%s3104 + $0x1e8] sm:$0xff]
    %v3167 = vld [vmem:[%s3104 + $0x1f0] sm:$0xff]
    %v3168 = vld [vmem:[%s3104 + $0x1f8] sm:$0xff]
    %s3169 = scalar_lea.vmem [#allocation11], 8
    %v3170 = vld [vmem:[%s3169] sm:$0xf]
    %v3172 = vlaneseq
    %v3173 = vshrl.u32 %v3172, 7
    %v3174 = vsub.s32 0, %v3173
    %v3175 = vrot.slane %v3170, %v3174
    %v3176 = vlaneseq
    %v3177 = vshrl.u32 %v3176, 7
    %v3178 = vsub.s32 1, %v3177
    %v3179 = vrot.slane %v3170, %v3178
    %v3180 = vlaneseq
    %v3181 = vshrl.u32 %v3180, 7
    %v3182 = vsub.s32 2, %v3181
    %v3183 = vrot.slane %v3170, %v3182
    %v3184 = vlaneseq
    %v3185 = vshrl.u32 %v3184, 7
    %v3186 = vsub.s32 3, %v3185
    %v3187 = vrot.slane %v3170, %v3186
    %3192 = vmatprep.subr.mxu0 %v3166
    %3193 = vmatpush1.msra.mxu0 %v3165
    %3194 = vmatprep.subr.mxu0 %v3162
    %3195 = vmatpush1.msra.mxu0 %v3161
    %3196 = vmatprep.subr.mxu0 %v3158
    %3197 = vmatpush1.msra.mxu0 %v3157
    %3198 = vmatprep.subr.mxu0 %v3154
    %3199 = vmatpush1.msra.mxu0 %v3153
    %3200 = vmatprep.subr.mxu0 %v3150
    %3201 = vmatpush1.msra.mxu0 %v3149
    %3202 = vmatprep.subr.mxu0 %v3146
    %3203 = vmatpush1.msra.mxu0 %v3145
    %3204 = vmatprep.subr.mxu0 %v3142
    %3205 = vmatpush1.msra.mxu0 %v3141
    %3206 = vmatprep.subr.mxu0 %v3138
    %3207 = vmatpush1.msra.mxu0 %v3137
    %3208 = vmatprep.subr.mxu0 %v3134
    %3209 = vmatpush1.msra.mxu0 %v3133
    %3210 = vmatprep.subr.mxu0 %v3130
    %3211 = vmatpush1.msra.mxu0 %v3129
    %3212 = vmatprep.subr.mxu0 %v3126
    %3213 = vmatpush1.msra.mxu0 %v3125
    %3214 = vmatprep.subr.mxu0 %v3122
    %3215 = vmatpush1.msra.mxu0 %v3121
    %3216 = vmatprep.subr.mxu0 %v3118
    %3217 = vmatpush1.msra.mxu0 %v3117
    %3218 = vmatprep.subr.mxu0 %v3114
    %3219 = vmatpush1.msra.mxu0 %v3113
    %3220 = vmatprep.subr.mxu0 %v3110
    %3221 = vmatpush1.msra.mxu0 %v3109
    %3222 = vmatprep.subr.mxu0 %v3106
    %3223 = vmatpush1.msra.mxu0 %v3105
    %3224 = vmatprep.subr.mxu0 0.0
    %3225 = vmatpush2.msra.mxu0 0.0
    %3226 = vmatprep.subr.mxu0 0.0
    %3227 = vmatpush2.msra.mxu0 0.0
    %3228 = vmatprep.subr.mxu0 0.0
    %3229 = vmatpush2.msra.mxu0 0.0
    %3230 = vmatprep.subr.mxu0 0.0
    %3231 = vmatpush2.msra.mxu0 0.0
    %3232 = vmatprep.subr.mxu0 0.0
    %3233 = vmatpush2.msra.mxu0 0.0
    %3234 = vmatprep.subr.mxu0 0.0
    %3235 = vmatpush2.msra.mxu0 0.0
    %3236 = vmatprep.subr.mxu0 0.0
    %3237 = vmatpush2.msra.mxu0 0.0
    %3238 = vmatprep.subr.mxu0 0.0
    %3239 = vmatpush2.msra.mxu0 0.0
    %3240 = vmatprep.subr.mxu0 0.0
    %3241 = vmatpush2.msra.mxu0 0.0
    %3242 = vmatprep.subr.mxu0 0.0
    %3243 = vmatpush2.msra.mxu0 0.0
    %3244 = vmatprep.subr.mxu0 0.0
    %3245 = vmatpush2.msra.mxu0 0.0
    %3246 = vmatprep.subr.mxu0 0.0
    %3247 = vmatpush2.msra.mxu0 0.0
    %3248 = vmatprep.subr.mxu0 0.0
    %3249 = vmatpush2.msra.mxu0 0.0
    %3250 = vmatprep.subr.mxu0 0.0
    %3251 = vmatpush2.msra.mxu0 0.0
    %3252 = vmatprep.subr.mxu0 0.0
    %3253 = vmatpush2.msra.mxu0 0.0
    %3254 = vmatprep.subr.mxu0 0.0
    %3255 = vmatpush2.msra.mxu0 0.0
    %3256 = vmatprep.mubr.f32.mxu0 0.0
    %3257 = vmatmul.mubr.f32.gmra.mxu0 %v3099
    %v3258 = vpop.f32.mrf.mxu0
    %v3259 = vadd.f32 %v3175, %v3258
    %v3260 = vpop.f32.mrf.mxu0
    %v3261 = vadd.f32 %v3179, %v3260
    %3262 = vmatprep.mubr.f32.mxu0 0.0
    %3263 = vmatmul.mubr.f32.gmra.mxu0 %v3100
    %v3264 = vpop.f32.mrf.mxu0
    %v3265 = vadd.f32 %v3175, %v3264
    %v3266 = vpop.f32.mrf.mxu0
    %v3267 = vadd.f32 %v3179, %v3266
    %3268 = vmatprep.mubr.f32.mxu0 0.0
    %3269 = vmatmul.mubr.f32.gmra.mxu0 %v3101
    %v3270 = vpop.f32.mrf.mxu0
    %v3271 = vadd.f32 %v3175, %v3270
    %v3272 = vpop.f32.mrf.mxu0
    %v3273 = vadd.f32 %v3179, %v3272
    %3274 = vmatprep.mubr.f32.mxu0 0.0
    %3275 = vmatmul.mubr.f32.gmra.mxu0 %v3102
    %v3276 = vpop.f32.mrf.mxu0
    %v3277 = vadd.f32 %v3175, %v3276
    %v3278 = vpop.f32.mrf.mxu0
    %v3279 = vadd.f32 %v3179, %v3278
    %3280 = vmatprep.mubr.f32.mxu0 0.0
    %3281 = vmatmul.mubr.f32.gmra.mxu0 %v3103
    %v3282 = vpop.f32.mrf.mxu0
    %v3283 = vadd.f32 %v3175, %v3282
    %v3284 = vpop.f32.mrf.mxu0
    %v3285 = vadd.f32 %v3179, %v3284
    %3286 = vdwg.mxu0
    %3287 = vmatprep.subr.mxu0 %v3168
    %3288 = vmatpush1.msra.mxu0 %v3167
    %3289 = vmatprep.subr.mxu0 %v3164
    %3290 = vmatpush1.msra.mxu0 %v3163
    %3291 = vmatprep.subr.mxu0 %v3160
    %3292 = vmatpush1.msra.mxu0 %v3159
    %3293 = vmatprep.subr.mxu0 %v3156
    %3294 = vmatpush1.msra.mxu0 %v3155
    %3295 = vmatprep.subr.mxu0 %v3152
    %3296 = vmatpush1.msra.mxu0 %v3151
    %3297 = vmatprep.subr.mxu0 %v3148
    %3298 = vmatpush1.msra.mxu0 %v3147
    %3299 = vmatprep.subr.mxu0 %v3144
    %3300 = vmatpush1.msra.mxu0 %v3143
    %3301 = vmatprep.subr.mxu0 %v3140
    %3302 = vmatpush1.msra.mxu0 %v3139
    %3303 = vmatprep.subr.mxu0 %v3136
    %3304 = vmatpush1.msra.mxu0 %v3135
    %3305 = vmatprep.subr.mxu0 %v3132
    %3306 = vmatpush1.msra.mxu0 %v3131
    %3307 = vmatprep.subr.mxu0 %v3128
    %3308 = vmatpush1.msra.mxu0 %v3127
    %3309 = vmatprep.subr.mxu0 %v3124
    %3310 = vmatpush1.msra.mxu0 %v3123
    %3311 = vmatprep.subr.mxu0 %v3120
    %3312 = vmatpush1.msra.mxu0 %v3119
    %3313 = vmatprep.subr.mxu0 %v3116
    %3314 = vmatpush1.msra.mxu0 %v3115
    %3315 = vmatprep.subr.mxu0 %v3112
    %3316 = vmatpush1.msra.mxu0 %v3111
    %3317 = vmatprep.subr.mxu0 %v3108
    %3318 = vmatpush1.msra.mxu0 %v3107
    %3319 = vmatprep.subr.mxu0 0.0
    %3320 = vmatpush2.msra.mxu0 0.0
    %3321 = vmatprep.subr.mxu0 0.0
    %3322 = vmatpush2.msra.mxu0 0.0
    %3323 = vmatprep.subr.mxu0 0.0
    %3324 = vmatpush2.msra.mxu0 0.0
    %3325 = vmatprep.subr.mxu0 0.0
    %3326 = vmatpush2.msra.mxu0 0.0
    %3327 = vmatprep.subr.mxu0 0.0
    %3328 = vmatpush2.msra.mxu0 0.0
    %3329 = vmatprep.subr.mxu0 0.0
    %3330 = vmatpush2.msra.mxu0 0.0
    %3331 = vmatprep.subr.mxu0 0.0
    %3332 = vmatpush2.msra.mxu0 0.0
    %3333 = vmatprep.subr.mxu0 0.0
    %3334 = vmatpush2.msra.mxu0 0.0
    %3335 = vmatprep.subr.mxu0 0.0
    %3336 = vmatpush2.msra.mxu0 0.0
    %3337 = vmatprep.subr.mxu0 0.0
    %3338 = vmatpush2.msra.mxu0 0.0
    %3339 = vmatprep.subr.mxu0 0.0
    %3340 = vmatpush2.msra.mxu0 0.0
    %3341 = vmatprep.subr.mxu0 0.0
    %3342 = vmatpush2.msra.mxu0 0.0
    %3343 = vmatprep.subr.mxu0 0.0
    %3344 = vmatpush2.msra.mxu0 0.0
    %3345 = vmatprep.subr.mxu0 0.0
    %3346 = vmatpush2.msra.mxu0 0.0
    %3347 = vmatprep.subr.mxu0 0.0
    %3348 = vmatpush2.msra.mxu0 0.0
    %3349 = vmatprep.subr.mxu0 0.0
    %3350 = vmatpush2.msra.mxu0 0.0
    %3351 = vmatprep.mubr.f32.mxu0 0.0
    %3352 = vmatmul.mubr.f32.gmra.mxu0 %v3099
    %v3353 = vpop.f32.mrf.mxu0
    %v3354 = vadd.f32 %v3183, %v3353
    %v3355 = vpop.f32.mrf.mxu0
    %v3356 = vadd.f32 %v3187, %v3355
    %3357 = vmatprep.mubr.f32.mxu0 0.0
    %3358 = vmatmul.mubr.f32.gmra.mxu0 %v3100
    %v3359 = vpop.f32.mrf.mxu0
    %v3360 = vadd.f32 %v3183, %v3359
    %v3361 = vpop.f32.mrf.mxu0
    %v3362 = vadd.f32 %v3187, %v3361
    %3363 = vmatprep.mubr.f32.mxu0 0.0
    %3364 = vmatmul.mubr.f32.gmra.mxu0 %v3101
    %v3365 = vpop.f32.mrf.mxu0
    %v3366 = vadd.f32 %v3183, %v3365
    %v3367 = vpop.f32.mrf.mxu0
    %v3368 = vadd.f32 %v3187, %v3367
    %3369 = vmatprep.mubr.f32.mxu0 0.0
    %3370 = vmatmul.mubr.f32.gmra.mxu0 %v3102
    %v3371 = vpop.f32.mrf.mxu0
    %v3372 = vadd.f32 %v3183, %v3371
    %v3373 = vpop.f32.mrf.mxu0
    %v3374 = vadd.f32 %v3187, %v3373
    %3375 = vmatprep.mubr.f32.mxu0 0.0
    %3376 = vmatmul.mubr.f32.gmra.mxu0 %v3103
    %v3377 = vpop.f32.mrf.mxu0
    %v3378 = vadd.f32 %v3183, %v3377
    %v3379 = vpop.f32.mrf.mxu0
    %v3380 = vadd.f32 %v3187, %v3379
    %3381 = vdwg.mxu0
    %3382 = vst [vmem:[#allocation4] sm:$0xff] %v3259
    %3383 = vst [vmem:[#allocation4 + $0x8] sm:$0xff] %v3261
    %3384 = vst [vmem:[#allocation4 + $0x10] sm:$0xff] %v3354
    %3385 = vst [vmem:[#allocation4 + $0x18] sm:$0xff] %v3356
    %3386 = vst [vmem:[#allocation4 + $0x20] sm:$0xff] %v3265
    %3387 = vst [vmem:[#allocation4 + $0x28] sm:$0xff] %v3267
    %3388 = vst [vmem:[#allocation4 + $0x30] sm:$0xff] %v3360
    %3389 = vst [vmem:[#allocation4 + $0x38] sm:$0xff] %v3362
    %3390 = vst [vmem:[#allocation4 + $0x40] sm:$0xff] %v3271
    %3391 = vst [vmem:[#allocation4 + $0x48] sm:$0xff] %v3273
    %3392 = vst [vmem:[#allocation4 + $0x50] sm:$0xff] %v3366
    %3393 = vst [vmem:[#allocation4 + $0x58] sm:$0xff] %v3368
    %3394 = vst [vmem:[#allocation4 + $0x60] sm:$0xff] %v3277
    %3395 = vst [vmem:[#allocation4 + $0x68] sm:$0xff] %v3279
    %3396 = vst [vmem:[#allocation4 + $0x70] sm:$0xff] %v3372
    %3397 = vst [vmem:[#allocation4 + $0x78] sm:$0xff] %v3374
    %3398 = vst [vmem:[#allocation4 + $0x80] sm:$0xff] %v3283
    %3399 = vst [vmem:[#allocation4 + $0x88] sm:$0xff] %v3285
    %3400 = vst [vmem:[#allocation4 + $0x90] sm:$0xff] %v3378
    %3401 = vst [vmem:[#allocation4 + $0x98] sm:$0xff] %v3380
    %v3402 = vld [vmem:[#allocation4] sm:$0xff]
    %v3403 = vld [vmem:[#allocation4 + $0x8] sm:$0xff]
    %v3404 = vld [vmem:[#allocation4 + $0x10] sm:$0xff]
    %v3405 = vld [vmem:[#allocation4 + $0x18] sm:$0xff]
    %s3406 = scalar_lea.vmem [#allocation10], 1024
    %v3407 = vld [vmem:[%s3406] sm:$0xff]
    %v3408 = vld [vmem:[%s3406 + $0x8] sm:$0xff]
    %v3409 = vld [vmem:[%s3406 + $0x10] sm:$0xff]
    %v3410 = vld [vmem:[%s3406 + $0x18] sm:$0xff]
    %v3411 = vld [vmem:[%s3406 + $0x20] sm:$0xff]
    %v3412 = vld [vmem:[%s3406 + $0x28] sm:$0xff]
    %v3413 = vld [vmem:[%s3406 + $0x30] sm:$0xff]
    %v3414 = vld [vmem:[%s3406 + $0x38] sm:$0xff]
    %v3415 = vld [vmem:[%s3406 + $0x40] sm:$0xff]
    %v3416 = vld [vmem:[%s3406 + $0x48] sm:$0xff]
    %v3417 = vld [vmem:[%s3406 + $0x50] sm:$0xff]
    %v3418 = vld [vmem:[%s3406 + $0x58] sm:$0xff]
    %v3419 = vld [vmem:[%s3406 + $0x60] sm:$0xff]
    %v3420 = vld [vmem:[%s3406 + $0x68] sm:$0xff]
    %v3421 = vld [vmem:[%s3406 + $0x70] sm:$0xff]
    %v3422 = vld [vmem:[%s3406 + $0x78] sm:$0xff]
    %v3423 = vld [vmem:[%s3406 + $0x80] sm:$0xff]
    %v3424 = vld [vmem:[%s3406 + $0x88] sm:$0xff]
    %v3425 = vld [vmem:[%s3406 + $0x90] sm:$0xff]
    %v3426 = vld [vmem:[%s3406 + $0x98] sm:$0xff]
    %v3427 = vld [vmem:[%s3406 + $0xa0] sm:$0xff]
    %v3428 = vld [vmem:[%s3406 + $0xa8] sm:$0xff]
    %v3429 = vld [vmem:[%s3406 + $0xb0] sm:$0xff]
    %v3430 = vld [vmem:[%s3406 + $0xb8] sm:$0xff]
    %v3431 = vld [vmem:[%s3406 + $0xc0] sm:$0xff]
    %v3432 = vld [vmem:[%s3406 + $0xc8] sm:$0xff]
    %v3433 = vld [vmem:[%s3406 + $0xd0] sm:$0xff]
    %v3434 = vld [vmem:[%s3406 + $0xd8] sm:$0xff]
    %v3435 = vld [vmem:[%s3406 + $0xe0] sm:$0xff]
    %v3436 = vld [vmem:[%s3406 + $0xe8] sm:$0xff]
    %v3437 = vld [vmem:[%s3406 + $0xf0] sm:$0xff]
    %v3438 = vld [vmem:[%s3406 + $0xf8] sm:$0xff]
    %v3439 = vld [vmem:[%s3406 + $0x100] sm:$0xff]
    %v3440 = vld [vmem:[%s3406 + $0x108] sm:$0xff]
    %v3441 = vld [vmem:[%s3406 + $0x110] sm:$0xff]
    %v3442 = vld [vmem:[%s3406 + $0x118] sm:$0xff]
    %v3443 = vld [vmem:[%s3406 + $0x120] sm:$0xff]
    %v3444 = vld [vmem:[%s3406 + $0x128] sm:$0xff]
    %v3445 = vld [vmem:[%s3406 + $0x130] sm:$0xff]
    %v3446 = vld [vmem:[%s3406 + $0x138] sm:$0xff]
    %v3447 = vld [vmem:[%s3406 + $0x140] sm:$0xff]
    %v3448 = vld [vmem:[%s3406 + $0x148] sm:$0xff]
    %v3449 = vld [vmem:[%s3406 + $0x150] sm:$0xff]
    %v3450 = vld [vmem:[%s3406 + $0x158] sm:$0xff]
    %v3451 = vld [vmem:[%s3406 + $0x160] sm:$0xff]
    %v3452 = vld [vmem:[%s3406 + $0x168] sm:$0xff]
    %v3453 = vld [vmem:[%s3406 + $0x170] sm:$0xff]
    %v3454 = vld [vmem:[%s3406 + $0x178] sm:$0xff]
    %v3455 = vld [vmem:[%s3406 + $0x180] sm:$0xff]
    %v3456 = vld [vmem:[%s3406 + $0x188] sm:$0xff]
    %v3457 = vld [vmem:[%s3406 + $0x190] sm:$0xff]
    %v3458 = vld [vmem:[%s3406 + $0x198] sm:$0xff]
    %v3459 = vld [vmem:[%s3406 + $0x1a0] sm:$0xff]
    %v3460 = vld [vmem:[%s3406 + $0x1a8] sm:$0xff]
    %v3461 = vld [vmem:[%s3406 + $0x1b0] sm:$0xff]
    %v3462 = vld [vmem:[%s3406 + $0x1b8] sm:$0xff]
    %v3463 = vld [vmem:[%s3406 + $0x1c0] sm:$0xff]
    %v3464 = vld [vmem:[%s3406 + $0x1c8] sm:$0xff]
    %v3465 = vld [vmem:[%s3406 + $0x1d0] sm:$0xff]
    %v3466 = vld [vmem:[%s3406 + $0x1d8] sm:$0xff]
    %v3467 = vld [vmem:[%s3406 + $0x1e0] sm:$0xff]
    %v3468 = vld [vmem:[%s3406 + $0x1e8] sm:$0xff]
    %v3469 = vld [vmem:[%s3406 + $0x1f0] sm:$0xff]
    %v3470 = vld [vmem:[%s3406 + $0x1f8] sm:$0xff]
    %3471 = vmatprep.subr.mxu0 %v3468
    %3472 = vmatpush1.msra.mxu0 %v3467
    %3473 = vmatprep.subr.mxu0 %v3464
    %3474 = vmatpush1.msra.mxu0 %v3463
    %3475 = vmatprep.subr.mxu0 %v3460
    %3476 = vmatpush1.msra.mxu0 %v3459
    %3477 = vmatprep.subr.mxu0 %v3456
    %3478 = vmatpush1.msra.mxu0 %v3455
    %3479 = vmatprep.subr.mxu0 %v3452
    %3480 = vmatpush1.msra.mxu0 %v3451
    %3481 = vmatprep.subr.mxu0 %v3448
    %3482 = vmatpush1.msra.mxu0 %v3447
    %3483 = vmatprep.subr.mxu0 %v3444
    %3484 = vmatpush1.msra.mxu0 %v3443
    %3485 = vmatprep.subr.mxu0 %v3440
    %3486 = vmatpush1.msra.mxu0 %v3439
    %3487 = vmatprep.subr.mxu0 %v3436
    %3488 = vmatpush1.msra.mxu0 %v3435
    %3489 = vmatprep.subr.mxu0 %v3432
    %3490 = vmatpush1.msra.mxu0 %v3431
    %3491 = vmatprep.subr.mxu0 %v3428
    %3492 = vmatpush1.msra.mxu0 %v3427
    %3493 = vmatprep.subr.mxu0 %v3424
    %3494 = vmatpush1.msra.mxu0 %v3423
    %3495 = vmatprep.subr.mxu0 %v3420
    %3496 = vmatpush1.msra.mxu0 %v3419
    %3497 = vmatprep.subr.mxu0 %v3416
    %3498 = vmatpush1.msra.mxu0 %v3415
    %3499 = vmatprep.subr.mxu0 %v3412
    %3500 = vmatpush1.msra.mxu0 %v3411
    %3501 = vmatprep.subr.mxu0 %v3408
    %3502 = vmatpush1.msra.mxu0 %v3407
    %3503 = vmatprep.subr.mxu0 0.0
    %3504 = vmatpush2.msra.mxu0 0.0
    %3505 = vmatprep.subr.mxu0 0.0
    %3506 = vmatpush2.msra.mxu0 0.0
    %3507 = vmatprep.subr.mxu0 0.0
    %3508 = vmatpush2.msra.mxu0 0.0
    %3509 = vmatprep.subr.mxu0 0.0
    %3510 = vmatpush2.msra.mxu0 0.0
    %3511 = vmatprep.subr.mxu0 0.0
    %3512 = vmatpush2.msra.mxu0 0.0
    %3513 = vmatprep.subr.mxu0 0.0
    %3514 = vmatpush2.msra.mxu0 0.0
    %3515 = vmatprep.subr.mxu0 0.0
    %3516 = vmatpush2.msra.mxu0 0.0
    %3517 = vmatprep.subr.mxu0 0.0
    %3518 = vmatpush2.msra.mxu0 0.0
    %3519 = vmatprep.subr.mxu0 0.0
    %3520 = vmatpush2.msra.mxu0 0.0
    %3521 = vmatprep.subr.mxu0 0.0
    %3522 = vmatpush2.msra.mxu0 0.0
    %3523 = vmatprep.subr.mxu0 0.0
    %3524 = vmatpush2.msra.mxu0 0.0
    %3525 = vmatprep.subr.mxu0 0.0
    %3526 = vmatpush2.msra.mxu0 0.0
    %3527 = vmatprep.subr.mxu0 0.0
    %3528 = vmatpush2.msra.mxu0 0.0
    %3529 = vmatprep.subr.mxu0 0.0
    %3530 = vmatpush2.msra.mxu0 0.0
    %3531 = vmatprep.subr.mxu0 0.0
    %3532 = vmatpush2.msra.mxu0 0.0
    %3533 = vmatprep.subr.mxu0 0.0
    %3534 = vmatpush2.msra.mxu0 0.0
    %3535 = vmatprep.mubr.f32.mxu0 0.0
    %3536 = vmatmul.mubr.f32.gmra.mxu0 0.0
    %v3537 = vpop.f32.mrf.mxu0
    %v3538 = vadd.f32 0.0, %v3537
    %v3539 = vpop.f32.mrf.mxu0
    %v3540 = vadd.f32 0.0, %v3539
    %3541 = vdwg.mxu0
    %3542 = vmatprep.subr.mxu0 %v3470
    %3543 = vmatpush1.msra.mxu0 %v3469
    %3544 = vmatprep.subr.mxu0 %v3466
    %3545 = vmatpush1.msra.mxu0 %v3465
    %3546 = vmatprep.subr.mxu0 %v3462
    %3547 = vmatpush1.msra.mxu0 %v3461
    %3548 = vmatprep.subr.mxu0 %v3458
    %3549 = vmatpush1.msra.mxu0 %v3457
    %3550 = vmatprep.subr.mxu0 %v3454
    %3551 = vmatpush1.msra.mxu0 %v3453
    %3552 = vmatprep.subr.mxu0 %v3450
    %3553 = vmatpush1.msra.mxu0 %v3449
    %3554 = vmatprep.subr.mxu0 %v3446
    %3555 = vmatpush1.msra.mxu0 %v3445
    %3556 = vmatprep.subr.mxu0 %v3442
    %3557 = vmatpush1.msra.mxu0 %v3441
    %3558 = vmatprep.subr.mxu0 %v3438
    %3559 = vmatpush1.msra.mxu0 %v3437
    %3560 = vmatprep.subr.mxu0 %v3434
    %3561 = vmatpush1.msra.mxu0 %v3433
    %3562 = vmatprep.subr.mxu0 %v3430
    %3563 = vmatpush1.msra.mxu0 %v3429
    %3564 = vmatprep.subr.mxu0 %v3426
    %3565 = vmatpush1.msra.mxu0 %v3425
    %3566 = vmatprep.subr.mxu0 %v3422
    %3567 = vmatpush1.msra.mxu0 %v3421
    %3568 = vmatprep.subr.mxu0 %v3418
    %3569 = vmatpush1.msra.mxu0 %v3417
    %3570 = vmatprep.subr.mxu0 %v3414
    %3571 = vmatpush1.msra.mxu0 %v3413
    %3572 = vmatprep.subr.mxu0 %v3410
    %3573 = vmatpush1.msra.mxu0 %v3409
    %3574 = vmatprep.subr.mxu0 0.0
    %3575 = vmatpush2.msra.mxu0 0.0
    %3576 = vmatprep.subr.mxu0 0.0
    %3577 = vmatpush2.msra.mxu0 0.0
    %3578 = vmatprep.subr.mxu0 0.0
    %3579 = vmatpush2.msra.mxu0 0.0
    %3580 = vmatprep.subr.mxu0 0.0
    %3581 = vmatpush2.msra.mxu0 0.0
    %3582 = vmatprep.subr.mxu0 0.0
    %3583 = vmatpush2.msra.mxu0 0.0
    %3584 = vmatprep.subr.mxu0 0.0
    %3585 = vmatpush2.msra.mxu0 0.0
    %3586 = vmatprep.subr.mxu0 0.0
    %3587 = vmatpush2.msra.mxu0 0.0
    %3588 = vmatprep.subr.mxu0 0.0
    %3589 = vmatpush2.msra.mxu0 0.0
    %3590 = vmatprep.subr.mxu0 0.0
    %3591 = vmatpush2.msra.mxu0 0.0
    %3592 = vmatprep.subr.mxu0 0.0
    %3593 = vmatpush2.msra.mxu0 0.0
    %3594 = vmatprep.subr.mxu0 0.0
    %3595 = vmatpush2.msra.mxu0 0.0
    %3596 = vmatprep.subr.mxu0 0.0
    %3597 = vmatpush2.msra.mxu0 0.0
    %3598 = vmatprep.subr.mxu0 0.0
    %3599 = vmatpush2.msra.mxu0 0.0
    %3600 = vmatprep.subr.mxu0 0.0
    %3601 = vmatpush2.msra.mxu0 0.0
    %3602 = vmatprep.subr.mxu0 0.0
    %3603 = vmatpush2.msra.mxu0 0.0
    %3604 = vmatprep.subr.mxu0 0.0
    %3605 = vmatpush2.msra.mxu0 0.0
    %3606 = vmatprep.mubr.f32.mxu0 0.0
    %3607 = vmatmul.mubr.f32.gmra.mxu0 0.0
    %v3608 = vpop.f32.mrf.mxu0
    %v3609 = vadd.f32 0.0, %v3608
    %v3610 = vpop.f32.mrf.mxu0
    %v3611 = vadd.f32 0.0, %v3610
    %3612 = vdwg.mxu0
    %v3613 = vadd.f32 %v3402, %v3538
    %v3614 = vadd.f32 %v3403, %v3540
    %v3615 = vadd.f32 %v3404, %v3609
    %v3616 = vadd.f32 %v3405, %v3611
    %v3617 = vxor.u32 %v3613, 2147483648
    %v3618 = vmul.f32 %v3617, 1.442695
    %v3619 = vpow.pop %v3618
    %v3620 = vadd.f32 %v3619, 1.0
    %v3621 = vrcp.pop %v3620
    %v3622 = vmul.f32 1.0, %v3621
    %v3623 = vxor.u32 %v3614, 2147483648
    %v3624 = vmul.f32 %v3623, 1.442695
    %v3625 = vpow.pop %v3624
    %v3626 = vadd.f32 %v3625, 1.0
    %v3627 = vrcp.pop %v3626
    %v3628 = vmul.f32 1.0, %v3627
    %v3629 = vtanh.pop %v3615
    %v3630 = vxor.u32 %v3616, 2147483648
    %v3631 = vmul.f32 %v3630, 1.442695
    %v3632 = vpow.pop %v3631
    %v3633 = vadd.f32 %v3632, 1.0
    %v3634 = vrcp.pop %v3633
    %v3635 = vmul.f32 1.0, %v3634
    %v3636 = vmul.f32 %v3628, 0.0
    %v3637 = vmul.f32 %v3622, %v3629
    %v3638 = vadd.f32 %v3636, %v3637
    %v3639 = vtanh.pop %v3638
    %v3640 = vmul.f32 %v3635, %v3639
    %3641 = vst [vmem:[#allocation2] sm:$0xff] %v3640
    %v3642 = vld [vmem:[#allocation4 + $0x20] sm:$0xff]
    %v3643 = vld [vmem:[#allocation4 + $0x28] sm:$0xff]
    %v3644 = vld [vmem:[#allocation4 + $0x30] sm:$0xff]
    %v3645 = vld [vmem:[#allocation4 + $0x38] sm:$0xff]
    %v3646 = vld [vmem:[%s3406] sm:$0xff]
    %v3647 = vld [vmem:[%s3406 + $0x8] sm:$0xff]
    %v3648 = vld [vmem:[%s3406 + $0x10] sm:$0xff]
    %v3649 = vld [vmem:[%s3406 + $0x18] sm:$0xff]
    %v3650 = vld [vmem:[%s3406 + $0x20] sm:$0xff]
    %v3651 = vld [vmem:[%s3406 + $0x28] sm:$0xff]
    %v3652 = vld [vmem:[%s3406 + $0x30] sm:$0xff]
    %v3653 = vld [vmem:[%s3406 + $0x38] sm:$0xff]
    %v3654 = vld [vmem:[%s3406 + $0x40] sm:$0xff]
    %v3655 = vld [vmem:[%s3406 + $0x48] sm:$0xff]
    %v3656 = vld [vmem:[%s3406 + $0x50] sm:$0xff]
    %v3657 = vld [vmem:[%s3406 + $0x58] sm:$0xff]
    %v3658 = vld [vmem:[%s3406 + $0x60] sm:$0xff]
    %v3659 = vld [vmem:[%s3406 + $0x68] sm:$0xff]
    %v3660 = vld [vmem:[%s3406 + $0x70] sm:$0xff]
    %v3661 = vld [vmem:[%s3406 + $0x78] sm:$0xff]
    %v3662 = vld [vmem:[%s3406 + $0x80] sm:$0xff]
    %v3663 = vld [vmem:[%s3406 + $0x88] sm:$0xff]
    %v3664 = vld [vmem:[%s3406 + $0x90] sm:$0xff]
    %v3665 = vld [vmem:[%s3406 + $0x98] sm:$0xff]
    %v3666 = vld [vmem:[%s3406 + $0xa0] sm:$0xff]
    %v3667 = vld [vmem:[%s3406 + $0xa8] sm:$0xff]
    %v3668 = vld [vmem:[%s3406 + $0xb0] sm:$0xff]
    %v3669 = vld [vmem:[%s3406 + $0xb8] sm:$0xff]
    %v3670 = vld [vmem:[%s3406 + $0xc0] sm:$0xff]
    %v3671 = vld [vmem:[%s3406 + $0xc8] sm:$0xff]
    %v3672 = vld [vmem:[%s3406 + $0xd0] sm:$0xff]
    %v3673 = vld [vmem:[%s3406 + $0xd8] sm:$0xff]
    %v3674 = vld [vmem:[%s3406 + $0xe0] sm:$0xff]
    %v3675 = vld [vmem:[%s3406 + $0xe8] sm:$0xff]
    %v3676 = vld [vmem:[%s3406 + $0xf0] sm:$0xff]
    %v3677 = vld [vmem:[%s3406 + $0xf8] sm:$0xff]
    %v3678 = vld [vmem:[%s3406 + $0x100] sm:$0xff]
    %v3679 = vld [vmem:[%s3406 + $0x108] sm:$0xff]
    %v3680 = vld [vmem:[%s3406 + $0x110] sm:$0xff]
    %v3681 = vld [vmem:[%s3406 + $0x118] sm:$0xff]
    %v3682 = vld [vmem:[%s3406 + $0x120] sm:$0xff]
    %v3683 = vld [vmem:[%s3406 + $0x128] sm:$0xff]
    %v3684 = vld [vmem:[%s3406 + $0x130] sm:$0xff]
    %v3685 = vld [vmem:[%s3406 + $0x138] sm:$0xff]
    %v3686 = vld [vmem:[%s3406 + $0x140] sm:$0xff]
    %v3687 = vld [vmem:[%s3406 + $0x148] sm:$0xff]
    %v3688 = vld [vmem:[%s3406 + $0x150] sm:$0xff]
    %v3689 = vld [vmem:[%s3406 + $0x158] sm:$0xff]
    %v3690 = vld [vmem:[%s3406 + $0x160] sm:$0xff]
    %v3691 = vld [vmem:[%s3406 + $0x168] sm:$0xff]
    %v3692 = vld [vmem:[%s3406 + $0x170] sm:$0xff]
    %v3693 = vld [vmem:[%s3406 + $0x178] sm:$0xff]
    %v3694 = vld [vmem:[%s3406 + $0x180] sm:$0xff]
    %v3695 = vld [vmem:[%s3406 + $0x188] sm:$0xff]
    %v3696 = vld [vmem:[%s3406 + $0x190] sm:$0xff]
    %v3697 = vld [vmem:[%s3406 + $0x198] sm:$0xff]
    %v3698 = vld [vmem:[%s3406 + $0x1a0] sm:$0xff]
    %v3699 = vld [vmem:[%s3406 + $0x1a8] sm:$0xff]
    %v3700 = vld [vmem:[%s3406 + $0x1b0] sm:$0xff]
    %v3701 = vld [vmem:[%s3406 + $0x1b8] sm:$0xff]
    %v3702 = vld [vmem:[%s3406 + $0x1c0] sm:$0xff]
    %v3703 = vld [vmem:[%s3406 + $0x1c8] sm:$0xff]
    %v3704 = vld [vmem:[%s3406 + $0x1d0] sm:$0xff]
    %v3705 = vld [vmem:[%s3406 + $0x1d8] sm:$0xff]
    %v3706 = vld [vmem:[%s3406 + $0x1e0] sm:$0xff]
    %v3707 = vld [vmem:[%s3406 + $0x1e8] sm:$0xff]
    %v3708 = vld [vmem:[%s3406 + $0x1f0] sm:$0xff]
    %v3709 = vld [vmem:[%s3406 + $0x1f8] sm:$0xff]
    %3710 = vmatprep.subr.mxu0 %v3707
    %3711 = vmatpush1.msra.mxu0 %v3706
    %3712 = vmatprep.subr.mxu0 %v3703
    %3713 = vmatpush1.msra.mxu0 %v3702
    %3714 = vmatprep.subr.mxu0 %v3699
    %3715 = vmatpush1.msra.mxu0 %v3698
    %3716 = vmatprep.subr.mxu0 %v3695
    %3717 = vmatpush1.msra.mxu0 %v3694
    %3718 = vmatprep.subr.mxu0 %v3691
    %3719 = vmatpush1.msra.mxu0 %v3690
    %3720 = vmatprep.subr.mxu0 %v3687
    %3721 = vmatpush1.msra.mxu0 %v3686
    %3722 = vmatprep.subr.mxu0 %v3683
    %3723 = vmatpush1.msra.mxu0 %v3682
    %3724 = vmatprep.subr.mxu0 %v3679
    %3725 = vmatpush1.msra.mxu0 %v3678
    %3726 = vmatprep.subr.mxu0 %v3675
    %3727 = vmatpush1.msra.mxu0 %v3674
    %3728 = vmatprep.subr.mxu0 %v3671
    %3729 = vmatpush1.msra.mxu0 %v3670
    %3730 = vmatprep.subr.mxu0 %v3667
    %3731 = vmatpush1.msra.mxu0 %v3666
    %3732 = vmatprep.subr.mxu0 %v3663
    %3733 = vmatpush1.msra.mxu0 %v3662
    %3734 = vmatprep.subr.mxu0 %v3659
    %3735 = vmatpush1.msra.mxu0 %v3658
    %3736 = vmatprep.subr.mxu0 %v3655
    %3737 = vmatpush1.msra.mxu0 %v3654
    %3738 = vmatprep.subr.mxu0 %v3651
    %3739 = vmatpush1.msra.mxu0 %v3650
    %3740 = vmatprep.subr.mxu0 %v3647
    %3741 = vmatpush1.msra.mxu0 %v3646
    %3742 = vmatprep.subr.mxu0 0.0
    %3743 = vmatpush2.msra.mxu0 0.0
    %3744 = vmatprep.subr.mxu0 0.0
    %3745 = vmatpush2.msra.mxu0 0.0
    %3746 = vmatprep.subr.mxu0 0.0
    %3747 = vmatpush2.msra.mxu0 0.0
    %3748 = vmatprep.subr.mxu0 0.0
    %3749 = vmatpush2.msra.mxu0 0.0
    %3750 = vmatprep.subr.mxu0 0.0
    %3751 = vmatpush2.msra.mxu0 0.0
    %3752 = vmatprep.subr.mxu0 0.0
    %3753 = vmatpush2.msra.mxu0 0.0
    %3754 = vmatprep.subr.mxu0 0.0
    %3755 = vmatpush2.msra.mxu0 0.0
    %3756 = vmatprep.subr.mxu0 0.0
    %3757 = vmatpush2.msra.mxu0 0.0
    %3758 = vmatprep.subr.mxu0 0.0
    %3759 = vmatpush2.msra.mxu0 0.0
    %3760 = vmatprep.subr.mxu0 0.0
    %3761 = vmatpush2.msra.mxu0 0.0
    %3762 = vmatprep.subr.mxu0 0.0
    %3763 = vmatpush2.msra.mxu0 0.0
    %3764 = vmatprep.subr.mxu0 0.0
    %3765 = vmatpush2.msra.mxu0 0.0
    %3766 = vmatprep.subr.mxu0 0.0
    %3767 = vmatpush2.msra.mxu0 0.0
    %3768 = vmatprep.subr.mxu0 0.0
    %3769 = vmatpush2.msra.mxu0 0.0
    %3770 = vmatprep.subr.mxu0 0.0
    %3771 = vmatpush2.msra.mxu0 0.0
    %3772 = vmatprep.subr.mxu0 0.0
    %3773 = vmatpush2.msra.mxu0 0.0
    %3774 = vmatprep.mubr.f32.mxu0 0.0
    %3775 = vmatmul.mubr.f32.gmra.mxu0 %v3640
    %v3776 = vpop.f32.mrf.mxu0
    %v3777 = vadd.f32 0.0, %v3776
    %v3778 = vpop.f32.mrf.mxu0
    %v3779 = vadd.f32 0.0, %v3778
    %3780 = vdwg.mxu0
    %3781 = vmatprep.subr.mxu0 %v3709
    %3782 = vmatpush1.msra.mxu0 %v3708
    %3783 = vmatprep.subr.mxu0 %v3705
    %3784 = vmatpush1.msra.mxu0 %v3704
    %3785 = vmatprep.subr.mxu0 %v3701
    %3786 = vmatpush1.msra.mxu0 %v3700
    %3787 = vmatprep.subr.mxu0 %v3697
    %3788 = vmatpush1.msra.mxu0 %v3696
    %3789 = vmatprep.subr.mxu0 %v3693
    %3790 = vmatpush1.msra.mxu0 %v3692
    %3791 = vmatprep.subr.mxu0 %v3689
    %3792 = vmatpush1.msra.mxu0 %v3688
    %3793 = vmatprep.subr.mxu0 %v3685
    %3794 = vmatpush1.msra.mxu0 %v3684
    %3795 = vmatprep.subr.mxu0 %v3681
    %3796 = vmatpush1.msra.mxu0 %v3680
    %3797 = vmatprep.subr.mxu0 %v3677
    %3798 = vmatpush1.msra.mxu0 %v3676
    %3799 = vmatprep.subr.mxu0 %v3673
    %3800 = vmatpush1.msra.mxu0 %v3672
    %3801 = vmatprep.subr.mxu0 %v3669
    %3802 = vmatpush1.msra.mxu0 %v3668
    %3803 = vmatprep.subr.mxu0 %v3665
    %3804 = vmatpush1.msra.mxu0 %v3664
    %3805 = vmatprep.subr.mxu0 %v3661
    %3806 = vmatpush1.msra.mxu0 %v3660
    %3807 = vmatprep.subr.mxu0 %v3657
    %3808 = vmatpush1.msra.mxu0 %v3656
    %3809 = vmatprep.subr.mxu0 %v3653
    %3810 = vmatpush1.msra.mxu0 %v3652
    %3811 = vmatprep.subr.mxu0 %v3649
    %3812 = vmatpush1.msra.mxu0 %v3648
    %3813 = vmatprep.subr.mxu0 0.0
    %3814 = vmatpush2.msra.mxu0 0.0
    %3815 = vmatprep.subr.mxu0 0.0
    %3816 = vmatpush2.msra.mxu0 0.0
    %3817 = vmatprep.subr.mxu0 0.0
    %3818 = vmatpush2.msra.mxu0 0.0
    %3819 = vmatprep.subr.mxu0 0.0
    %3820 = vmatpush2.msra.mxu0 0.0
    %3821 = vmatprep.subr.mxu0 0.0
    %3822 = vmatpush2.msra.mxu0 0.0
    %3823 = vmatprep.subr.mxu0 0.0
    %3824 = vmatpush2.msra.mxu0 0.0
    %3825 = vmatprep.subr.mxu0 0.0
    %3826 = vmatpush2.msra.mxu0 0.0
    %3827 = vmatprep.subr.mxu0 0.0
    %3828 = vmatpush2.msra.mxu0 0.0
    %3829 = vmatprep.subr.mxu0 0.0
    %3830 = vmatpush2.msra.mxu0 0.0
    %3831 = vmatprep.subr.mxu0 0.0
    %3832 = vmatpush2.msra.mxu0 0.0
    %3833 = vmatprep.subr.mxu0 0.0
    %3834 = vmatpush2.msra.mxu0 0.0
    %3835 = vmatprep.subr.mxu0 0.0
    %3836 = vmatpush2.msra.mxu0 0.0
    %3837 = vmatprep.subr.mxu0 0.0
    %3838 = vmatpush2.msra.mxu0 0.0
    %3839 = vmatprep.subr.mxu0 0.0
    %3840 = vmatpush2.msra.mxu0 0.0
    %3841 = vmatprep.subr.mxu0 0.0
    %3842 = vmatpush2.msra.mxu0 0.0
    %3843 = vmatprep.subr.mxu0 0.0
    %3844 = vmatpush2.msra.mxu0 0.0
    %3845 = vmatprep.mubr.f32.mxu0 0.0
    %3846 = vmatmul.mubr.f32.gmra.mxu0 %v3640
    %v3847 = vpop.f32.mrf.mxu0
    %v3848 = vadd.f32 0.0, %v3847
    %v3849 = vpop.f32.mrf.mxu0
    %v3850 = vadd.f32 0.0, %v3849
    %3851 = vdwg.mxu0
    %v3852 = vadd.f32 %v3642, %v3777
    %v3853 = vadd.f32 %v3643, %v3779
    %v3854 = vadd.f32 %v3644, %v3848
    %v3855 = vadd.f32 %v3645, %v3850
    %v3856 = vxor.u32 %v3852, 2147483648
    %v3857 = vmul.f32 %v3856, 1.442695
    %v3858 = vpow.pop %v3857
    %v3859 = vadd.f32 %v3858, 1.0
    %v3860 = vrcp.pop %v3859
    %v3861 = vmul.f32 1.0, %v3860
    %v3862 = vxor.u32 %v3853, 2147483648
    %v3863 = vmul.f32 %v3862, 1.442695
    %v3864 = vpow.pop %v3863
    %v3865 = vadd.f32 %v3864, 1.0
    %v3866 = vrcp.pop %v3865
    %v3867 = vmul.f32 1.0, %v3866
    %v3868 = vtanh.pop %v3854
    %v3869 = vxor.u32 %v3855, 2147483648
    %v3870 = vmul.f32 %v3869, 1.442695
    %v3871 = vpow.pop %v3870
    %v3872 = vadd.f32 %v3871, 1.0
    %v3873 = vrcp.pop %v3872
    %v3874 = vmul.f32 1.0, %v3873
    %v3875 = vmul.f32 %v3867, %v3638
    %v3876 = vmul.f32 %v3861, %v3868
    %v3877 = vadd.f32 %v3875, %v3876
    %v3878 = vtanh.pop %v3877
    %v3879 = vmul.f32 %v3874, %v3878
    %3880 = vst [vmem:[#allocation2 + $0x8] sm:$0xff] %v3879
    %v3881 = vld [vmem:[#allocation4 + $0x40] sm:$0xff]
    %v3882 = vld [vmem:[#allocation4 + $0x48] sm:$0xff]
    %v3883 = vld [vmem:[#allocation4 + $0x50] sm:$0xff]
    %v3884 = vld [vmem:[#allocation4 + $0x58] sm:$0xff]
    %v3885 = vld [vmem:[%s3406] sm:$0xff]
    %v3886 = vld [vmem:[%s3406 + $0x8] sm:$0xff]
    %v3887 = vld [vmem:[%s3406 + $0x10] sm:$0xff]
    %v3888 = vld [vmem:[%s3406 + $0x18] sm:$0xff]
    %v3889 = vld [vmem:[%s3406 + $0x20] sm:$0xff]
    %v3890 = vld [vmem:[%s3406 + $0x28] sm:$0xff]
    %v3891 = vld [vmem:[%s3406 + $0x30] sm:$0xff]
    %v3892 = vld [vmem:[%s3406 + $0x38] sm:$0xff]
    %v3893 = vld [vmem:[%s3406 + $0x40] sm:$0xff]
    %v3894 = vld [vmem:[%s3406 + $0x48] sm:$0xff]
    %v3895 = vld [vmem:[%s3406 + $0x50] sm:$0xff]
    %v3896 = vld [vmem:[%s3406 + $0x58] sm:$0xff]
    %v3897 = vld [vmem:[%s3406 + $0x60] sm:$0xff]
    %v3898 = vld [vmem:[%s3406 + $0x68] sm:$0xff]
    %v3899 = vld [vmem:[%s3406 + $0x70] sm:$0xff]
    %v3900 = vld [vmem:[%s3406 + $0x78] sm:$0xff]
    %v3901 = vld [vmem:[%s3406 + $0x80] sm:$0xff]
    %v3902 = vld [vmem:[%s3406 + $0x88] sm:$0xff]
    %v3903 = vld [vmem:[%s3406 + $0x90] sm:$0xff]
    %v3904 = vld [vmem:[%s3406 + $0x98] sm:$0xff]
    %v3905 = vld [vmem:[%s3406 + $0xa0] sm:$0xff]
    %v3906 = vld [vmem:[%s3406 + $0xa8] sm:$0xff]
    %v3907 = vld [vmem:[%s3406 + $0xb0] sm:$0xff]
    %v3908 = vld [vmem:[%s3406 + $0xb8] sm:$0xff]
    %v3909 = vld [vmem:[%s3406 + $0xc0] sm:$0xff]
    %v3910 = vld [vmem:[%s3406 + $0xc8] sm:$0xff]
    %v3911 = vld [vmem:[%s3406 + $0xd0] sm:$0xff]
    %v3912 = vld [vmem:[%s3406 + $0xd8] sm:$0xff]
    %v3913 = vld [vmem:[%s3406 + $0xe0] sm:$0xff]
    %v3914 = vld [vmem:[%s3406 + $0xe8] sm:$0xff]
    %v3915 = vld [vmem:[%s3406 + $0xf0] sm:$0xff]
    %v3916 = vld [vmem:[%s3406 + $0xf8] sm:$0xff]
    %v3917 = vld [vmem:[%s3406 + $0x100] sm:$0xff]
    %v3918 = vld [vmem:[%s3406 + $0x108] sm:$0xff]
    %v3919 = vld [vmem:[%s3406 + $0x110] sm:$0xff]
    %v3920 = vld [vmem:[%s3406 + $0x118] sm:$0xff]
    %v3921 = vld [vmem:[%s3406 + $0x120] sm:$0xff]
    %v3922 = vld [vmem:[%s3406 + $0x128] sm:$0xff]
    %v3923 = vld [vmem:[%s3406 + $0x130] sm:$0xff]
    %v3924 = vld [vmem:[%s3406 + $0x138] sm:$0xff]
    %v3925 = vld [vmem:[%s3406 + $0x140] sm:$0xff]
    %v3926 = vld [vmem:[%s3406 + $0x148] sm:$0xff]
    %v3927 = vld [vmem:[%s3406 + $0x150] sm:$0xff]
    %v3928 = vld [vmem:[%s3406 + $0x158] sm:$0xff]
    %v3929 = vld [vmem:[%s3406 + $0x160] sm:$0xff]
    %v3930 = vld [vmem:[%s3406 + $0x168] sm:$0xff]
    %v3931 = vld [vmem:[%s3406 + $0x170] sm:$0xff]
    %v3932 = vld [vmem:[%s3406 + $0x178] sm:$0xff]
    %v3933 = vld [vmem:[%s3406 + $0x180] sm:$0xff]
    %v3934 = vld [vmem:[%s3406 + $0x188] sm:$0xff]
    %v3935 = vld [vmem:[%s3406 + $0x190] sm:$0xff]
    %v3936 = vld [vmem:[%s3406 + $0x198] sm:$0xff]
    %v3937 = vld [vmem:[%s3406 + $0x1a0] sm:$0xff]
    %v3938 = vld [vmem:[%s3406 + $0x1a8] sm:$0xff]
    %v3939 = vld [vmem:[%s3406 + $0x1b0] sm:$0xff]
    %v3940 = vld [vmem:[%s3406 + $0x1b8] sm:$0xff]
    %v3941 = vld [vmem:[%s3406 + $0x1c0] sm:$0xff]
    %v3942 = vld [vmem:[%s3406 + $0x1c8] sm:$0xff]
    %v3943 = vld [vmem:[%s3406 + $0x1d0] sm:$0xff]
    %v3944 = vld [vmem:[%s3406 + $0x1d8] sm:$0xff]
    %v3945 = vld [vmem:[%s3406 + $0x1e0] sm:$0xff]
    %v3946 = vld [vmem:[%s3406 + $0x1e8] sm:$0xff]
    %v3947 = vld [vmem:[%s3406 + $0x1f0] sm:$0xff]
    %v3948 = vld [vmem:[%s3406 + $0x1f8] sm:$0xff]
    %3949 = vmatprep.subr.mxu0 %v3946
    %3950 = vmatpush1.msra.mxu0 %v3945
    %3951 = vmatprep.subr.mxu0 %v3942
    %3952 = vmatpush1.msra.mxu0 %v3941
    %3953 = vmatprep.subr.mxu0 %v3938
    %3954 = vmatpush1.msra.mxu0 %v3937
    %3955 = vmatprep.subr.mxu0 %v3934
    %3956 = vmatpush1.msra.mxu0 %v3933
    %3957 = vmatprep.subr.mxu0 %v3930
    %3958 = vmatpush1.msra.mxu0 %v3929
    %3959 = vmatprep.subr.mxu0 %v3926
    %3960 = vmatpush1.msra.mxu0 %v3925
    %3961 = vmatprep.subr.mxu0 %v3922
    %3962 = vmatpush1.msra.mxu0 %v3921
    %3963 = vmatprep.subr.mxu0 %v3918
    %3964 = vmatpush1.msra.mxu0 %v3917
    %3965 = vmatprep.subr.mxu0 %v3914
    %3966 = vmatpush1.msra.mxu0 %v3913
    %3967 = vmatprep.subr.mxu0 %v3910
    %3968 = vmatpush1.msra.mxu0 %v3909
    %3969 = vmatprep.subr.mxu0 %v3906
    %3970 = vmatpush1.msra.mxu0 %v3905
    %3971 = vmatprep.subr.mxu0 %v3902
    %3972 = vmatpush1.msra.mxu0 %v3901
    %3973 = vmatprep.subr.mxu0 %v3898
    %3974 = vmatpush1.msra.mxu0 %v3897
    %3975 = vmatprep.subr.mxu0 %v3894
    %3976 = vmatpush1.msra.mxu0 %v3893
    %3977 = vmatprep.subr.mxu0 %v3890
    %3978 = vmatpush1.msra.mxu0 %v3889
    %3979 = vmatprep.subr.mxu0 %v3886
    %3980 = vmatpush1.msra.mxu0 %v3885
    %3981 = vmatprep.subr.mxu0 0.0
    %3982 = vmatpush2.msra.mxu0 0.0
    %3983 = vmatprep.subr.mxu0 0.0
    %3984 = vmatpush2.msra.mxu0 0.0
    %3985 = vmatprep.subr.mxu0 0.0
    %3986 = vmatpush2.msra.mxu0 0.0
    %3987 = vmatprep.subr.mxu0 0.0
    %3988 = vmatpush2.msra.mxu0 0.0
    %3989 = vmatprep.subr.mxu0 0.0
    %3990 = vmatpush2.msra.mxu0 0.0
    %3991 = vmatprep.subr.mxu0 0.0
    %3992 = vmatpush2.msra.mxu0 0.0
    %3993 = vmatprep.subr.mxu0 0.0
    %3994 = vmatpush2.msra.mxu0 0.0
    %3995 = vmatprep.subr.mxu0 0.0
    %3996 = vmatpush2.msra.mxu0 0.0
    %3997 = vmatprep.subr.mxu0 0.0
    %3998 = vmatpush2.msra.mxu0 0.0
    %3999 = vmatprep.subr.mxu0 0.0
    %4000 = vmatpush2.msra.mxu0 0.0
    %4001 = vmatprep.subr.mxu0 0.0
    %4002 = vmatpush2.msra.mxu0 0.0
    %4003 = vmatprep.subr.mxu0 0.0
    %4004 = vmatpush2.msra.mxu0 0.0
    %4005 = vmatprep.subr.mxu0 0.0
    %4006 = vmatpush2.msra.mxu0 0.0
    %4007 = vmatprep.subr.mxu0 0.0
    %4008 = vmatpush2.msra.mxu0 0.0
    %4009 = vmatprep.subr.mxu0 0.0
    %4010 = vmatpush2.msra.mxu0 0.0
    %4011 = vmatprep.subr.mxu0 0.0
    %4012 = vmatpush2.msra.mxu0 0.0
    %4013 = vmatprep.mubr.f32.mxu0 0.0
    %4014 = vmatmul.mubr.f32.gmra.mxu0 %v3879
    %v4015 = vpop.f32.mrf.mxu0
    %v4016 = vadd.f32 0.0, %v4015
    %v4017 = vpop.f32.mrf.mxu0
    %v4018 = vadd.f32 0.0, %v4017
    %4019 = vdwg.mxu0
    %4020 = vmatprep.subr.mxu0 %v3948
    %4021 = vmatpush1.msra.mxu0 %v3947
    %4022 = vmatprep.subr.mxu0 %v3944
    %4023 = vmatpush1.msra.mxu0 %v3943
    %4024 = vmatprep.subr.mxu0 %v3940
    %4025 = vmatpush1.msra.mxu0 %v3939
    %4026 = vmatprep.subr.mxu0 %v3936
    %4027 = vmatpush1.msra.mxu0 %v3935
    %4028 = vmatprep.subr.mxu0 %v3932
    %4029 = vmatpush1.msra.mxu0 %v3931
    %4030 = vmatprep.subr.mxu0 %v3928
    %4031 = vmatpush1.msra.mxu0 %v3927
    %4032 = vmatprep.subr.mxu0 %v3924
    %4033 = vmatpush1.msra.mxu0 %v3923
    %4034 = vmatprep.subr.mxu0 %v3920
    %4035 = vmatpush1.msra.mxu0 %v3919
    %4036 = vmatprep.subr.mxu0 %v3916
    %4037 = vmatpush1.msra.mxu0 %v3915
    %4038 = vmatprep.subr.mxu0 %v3912
    %4039 = vmatpush1.msra.mxu0 %v3911
    %4040 = vmatprep.subr.mxu0 %v3908
    %4041 = vmatpush1.msra.mxu0 %v3907
    %4042 = vmatprep.subr.mxu0 %v3904
    %4043 = vmatpush1.msra.mxu0 %v3903
    %4044 = vmatprep.subr.mxu0 %v3900
    %4045 = vmatpush1.msra.mxu0 %v3899
    %4046 = vmatprep.subr.mxu0 %v3896
    %4047 = vmatpush1.msra.mxu0 %v3895
    %4048 = vmatprep.subr.mxu0 %v3892
    %4049 = vmatpush1.msra.mxu0 %v3891
    %4050 = vmatprep.subr.mxu0 %v3888
    %4051 = vmatpush1.msra.mxu0 %v3887
    %4052 = vmatprep.subr.mxu0 0.0
    %4053 = vmatpush2.msra.mxu0 0.0
    %4054 = vmatprep.subr.mxu0 0.0
    %4055 = vmatpush2.msra.mxu0 0.0
    %4056 = vmatprep.subr.mxu0 0.0
    %4057 = vmatpush2.msra.mxu0 0.0
    %4058 = vmatprep.subr.mxu0 0.0
    %4059 = vmatpush2.msra.mxu0 0.0
    %4060 = vmatprep.subr.mxu0 0.0
    %4061 = vmatpush2.msra.mxu0 0.0
    %4062 = vmatprep.subr.mxu0 0.0
    %4063 = vmatpush2.msra.mxu0 0.0
    %4064 = vmatprep.subr.mxu0 0.0
    %4065 = vmatpush2.msra.mxu0 0.0
    %4066 = vmatprep.subr.mxu0 0.0
    %4067 = vmatpush2.msra.mxu0 0.0
    %4068 = vmatprep.subr.mxu0 0.0
    %4069 = vmatpush2.msra.mxu0 0.0
    %4070 = vmatprep.subr.mxu0 0.0
    %4071 = vmatpush2.msra.mxu0 0.0
    %4072 = vmatprep.subr.mxu0 0.0
    %4073 = vmatpush2.msra.mxu0 0.0
    %4074 = vmatprep.subr.mxu0 0.0
    %4075 = vmatpush2.msra.mxu0 0.0
    %4076 = vmatprep.subr.mxu0 0.0
    %4077 = vmatpush2.msra.mxu0 0.0
    %4078 = vmatprep.subr.mxu0 0.0
    %4079 = vmatpush2.msra.mxu0 0.0
    %4080 = vmatprep.subr.mxu0 0.0
    %4081 = vmatpush2.msra.mxu0 0.0
    %4082 = vmatprep.subr.mxu0 0.0
    %4083 = vmatpush2.msra.mxu0 0.0
    %4084 = vmatprep.mubr.f32.mxu0 0.0
    %4085 = vmatmul.mubr.f32.gmra.mxu0 %v3879
    %v4086 = vpop.f32.mrf.mxu0
    %v4087 = vadd.f32 0.0, %v4086
    %v4088 = vpop.f32.mrf.mxu0
    %v4089 = vadd.f32 0.0, %v4088
    %4090 = vdwg.mxu0
    %v4091 = vadd.f32 %v3881, %v4016
    %v4092 = vadd.f32 %v3882, %v4018
    %v4093 = vadd.f32 %v3883, %v4087
    %v4094 = vadd.f32 %v3884, %v4089
    %v4095 = vxor.u32 %v4091, 2147483648
    %v4096 = vmul.f32 %v4095, 1.442695
    %v4097 = vpow.pop %v4096
    %v4098 = vadd.f32 %v4097, 1.0
    %v4099 = vrcp.pop %v4098
    %v4100 = vmul.f32 1.0, %v4099
    %v4101 = vxor.u32 %v4092, 2147483648
    %v4102 = vmul.f32 %v4101, 1.442695
    %v4103 = vpow.pop %v4102
    %v4104 = vadd.f32 %v4103, 1.0
    %v4105 = vrcp.pop %v4104
    %v4106 = vmul.f32 1.0, %v4105
    %v4107 = vtanh.pop %v4093
    %v4108 = vxor.u32 %v4094, 2147483648
    %v4109 = vmul.f32 %v4108, 1.442695
    %v4110 = vpow.pop %v4109
    %v4111 = vadd.f32 %v4110, 1.0
    %v4112 = vrcp.pop %v4111
    %v4113 = vmul.f32 1.0, %v4112
    %v4114 = vmul.f32 %v4106, %v3877
    %v4115 = vmul.f32 %v4100, %v4107
    %v4116 = vadd.f32 %v4114, %v4115
    %v4117 = vtanh.pop %v4116
    %v4118 = vmul.f32 %v4113, %v4117
    %4119 = vst [vmem:[#allocation2 + $0x10] sm:$0xff] %v4118
    %v4120 = vld [vmem:[#allocation4 + $0x60] sm:$0xff]
    %v4121 = vld [vmem:[#allocation4 + $0x68] sm:$0xff]
    %v4122 = vld [vmem:[#allocation4 + $0x70] sm:$0xff]
    %v4123 = vld [vmem:[#allocation4 + $0x78] sm:$0xff]
    %v4124 = vld [vmem:[%s3406] sm:$0xff]
    %v4125 = vld [vmem:[%s3406 + $0x8] sm:$0xff]
    %v4126 = vld [vmem:[%s3406 + $0x10] sm:$0xff]
    %v4127 = vld [vmem:[%s3406 + $0x18] sm:$0xff]
    %v4128 = vld [vmem:[%s3406 + $0x20] sm:$0xff]
    %v4129 = vld [vmem:[%s3406 + $0x28] sm:$0xff]
    %v4130 = vld [vmem:[%s3406 + $0x30] sm:$0xff]
    %v4131 = vld [vmem:[%s3406 + $0x38] sm:$0xff]
    %v4132 = vld [vmem:[%s3406 + $0x40] sm:$0xff]
    %v4133 = vld [vmem:[%s3406 + $0x48] sm:$0xff]
    %v4134 = vld [vmem:[%s3406 + $0x50] sm:$0xff]
    %v4135 = vld [vmem:[%s3406 + $0x58] sm:$0xff]
    %v4136 = vld [vmem:[%s3406 + $0x60] sm:$0xff]
    %v4137 = vld [vmem:[%s3406 + $0x68] sm:$0xff]
    %v4138 = vld [vmem:[%s3406 + $0x70] sm:$0xff]
    %v4139 = vld [vmem:[%s3406 + $0x78] sm:$0xff]
    %v4140 = vld [vmem:[%s3406 + $0x80] sm:$0xff]
    %v4141 = vld [vmem:[%s3406 + $0x88] sm:$0xff]
    %v4142 = vld [vmem:[%s3406 + $0x90] sm:$0xff]
    %v4143 = vld [vmem:[%s3406 + $0x98] sm:$0xff]
    %v4144 = vld [vmem:[%s3406 + $0xa0] sm:$0xff]
    %v4145 = vld [vmem:[%s3406 + $0xa8] sm:$0xff]
    %v4146 = vld [vmem:[%s3406 + $0xb0] sm:$0xff]
    %v4147 = vld [vmem:[%s3406 + $0xb8] sm:$0xff]
    %v4148 = vld [vmem:[%s3406 + $0xc0] sm:$0xff]
    %v4149 = vld [vmem:[%s3406 + $0xc8] sm:$0xff]
    %v4150 = vld [vmem:[%s3406 + $0xd0] sm:$0xff]
    %v4151 = vld [vmem:[%s3406 + $0xd8] sm:$0xff]
    %v4152 = vld [vmem:[%s3406 + $0xe0] sm:$0xff]
    %v4153 = vld [vmem:[%s3406 + $0xe8] sm:$0xff]
    %v4154 = vld [vmem:[%s3406 + $0xf0] sm:$0xff]
    %v4155 = vld [vmem:[%s3406 + $0xf8] sm:$0xff]
    %v4156 = vld [vmem:[%s3406 + $0x100] sm:$0xff]
    %v4157 = vld [vmem:[%s3406 + $0x108] sm:$0xff]
    %v4158 = vld [vmem:[%s3406 + $0x110] sm:$0xff]
    %v4159 = vld [vmem:[%s3406 + $0x118] sm:$0xff]
    %v4160 = vld [vmem:[%s3406 + $0x120] sm:$0xff]
    %v4161 = vld [vmem:[%s3406 + $0x128] sm:$0xff]
    %v4162 = vld [vmem:[%s3406 + $0x130] sm:$0xff]
    %v4163 = vld [vmem:[%s3406 + $0x138] sm:$0xff]
    %v4164 = vld [vmem:[%s3406 + $0x140] sm:$0xff]
    %v4165 = vld [vmem:[%s3406 + $0x148] sm:$0xff]
    %v4166 = vld [vmem:[%s3406 + $0x150] sm:$0xff]
    %v4167 = vld [vmem:[%s3406 + $0x158] sm:$0xff]
    %v4168 = vld [vmem:[%s3406 + $0x160] sm:$0xff]
    %v4169 = vld [vmem:[%s3406 + $0x168] sm:$0xff]
    %v4170 = vld [vmem:[%s3406 + $0x170] sm:$0xff]
    %v4171 = vld [vmem:[%s3406 + $0x178] sm:$0xff]
    %v4172 = vld [vmem:[%s3406 + $0x180] sm:$0xff]
    %v4173 = vld [vmem:[%s3406 + $0x188] sm:$0xff]
    %v4174 = vld [vmem:[%s3406 + $0x190] sm:$0xff]
    %v4175 = vld [vmem:[%s3406 + $0x198] sm:$0xff]
    %v4176 = vld [vmem:[%s3406 + $0x1a0] sm:$0xff]
    %v4177 = vld [vmem:[%s3406 + $0x1a8] sm:$0xff]
    %v4178 = vld [vmem:[%s3406 + $0x1b0] sm:$0xff]
    %v4179 = vld [vmem:[%s3406 + $0x1b8] sm:$0xff]
    %v4180 = vld [vmem:[%s3406 + $0x1c0] sm:$0xff]
    %v4181 = vld [vmem:[%s3406 + $0x1c8] sm:$0xff]
    %v4182 = vld [vmem:[%s3406 + $0x1d0] sm:$0xff]
    %v4183 = vld [vmem:[%s3406 + $0x1d8] sm:$0xff]
    %v4184 = vld [vmem:[%s3406 + $0x1e0] sm:$0xff]
    %v4185 = vld [vmem:[%s3406 + $0x1e8] sm:$0xff]
    %v4186 = vld [vmem:[%s3406 + $0x1f0] sm:$0xff]
    %v4187 = vld [vmem:[%s3406 + $0x1f8] sm:$0xff]
    %4188 = vmatprep.subr.mxu0 %v4185
    %4189 = vmatpush1.msra.mxu0 %v4184
    %4190 = vmatprep.subr.mxu0 %v4181
    %4191 = vmatpush1.msra.mxu0 %v4180
    %4192 = vmatprep.subr.mxu0 %v4177
    %4193 = vmatpush1.msra.mxu0 %v4176
    %4194 = vmatprep.subr.mxu0 %v4173
    %4195 = vmatpush1.msra.mxu0 %v4172
    %4196 = vmatprep.subr.mxu0 %v4169
    %4197 = vmatpush1.msra.mxu0 %v4168
    %4198 = vmatprep.subr.mxu0 %v4165
    %4199 = vmatpush1.msra.mxu0 %v4164
    %4200 = vmatprep.subr.mxu0 %v4161
    %4201 = vmatpush1.msra.mxu0 %v4160
    %4202 = vmatprep.subr.mxu0 %v4157
    %4203 = vmatpush1.msra.mxu0 %v4156
    %4204 = vmatprep.subr.mxu0 %v4153
    %4205 = vmatpush1.msra.mxu0 %v4152
    %4206 = vmatprep.subr.mxu0 %v4149
    %4207 = vmatpush1.msra.mxu0 %v4148
    %4208 = vmatprep.subr.mxu0 %v4145
    %4209 = vmatpush1.msra.mxu0 %v4144
    %4210 = vmatprep.subr.mxu0 %v4141
    %4211 = vmatpush1.msra.mxu0 %v4140
    %4212 = vmatprep.subr.mxu0 %v4137
    %4213 = vmatpush1.msra.mxu0 %v4136
    %4214 = vmatprep.subr.mxu0 %v4133
    %4215 = vmatpush1.msra.mxu0 %v4132
    %4216 = vmatprep.subr.mxu0 %v4129
    %4217 = vmatpush1.msra.mxu0 %v4128
    %4218 = vmatprep.subr.mxu0 %v4125
    %4219 = vmatpush1.msra.mxu0 %v4124
    %4220 = vmatprep.subr.mxu0 0.0
    %4221 = vmatpush2.msra.mxu0 0.0
    %4222 = vmatprep.subr.mxu0 0.0
    %4223 = vmatpush2.msra.mxu0 0.0
    %4224 = vmatprep.subr.mxu0 0.0
    %4225 = vmatpush2.msra.mxu0 0.0
    %4226 = vmatprep.subr.mxu0 0.0
    %4227 = vmatpush2.msra.mxu0 0.0
    %4228 = vmatprep.subr.mxu0 0.0
    %4229 = vmatpush2.msra.mxu0 0.0
    %4230 = vmatprep.subr.mxu0 0.0
    %4231 = vmatpush2.msra.mxu0 0.0
    %4232 = vmatprep.subr.mxu0 0.0
    %4233 = vmatpush2.msra.mxu0 0.0
    %4234 = vmatprep.subr.mxu0 0.0
    %4235 = vmatpush2.msra.mxu0 0.0
    %4236 = vmatprep.subr.mxu0 0.0
    %4237 = vmatpush2.msra.mxu0 0.0
    %4238 = vmatprep.subr.mxu0 0.0
    %4239 = vmatpush2.msra.mxu0 0.0
    %4240 = vmatprep.subr.mxu0 0.0
    %4241 = vmatpush2.msra.mxu0 0.0
    %4242 = vmatprep.subr.mxu0 0.0
    %4243 = vmatpush2.msra.mxu0 0.0
    %4244 = vmatprep.subr.mxu0 0.0
    %4245 = vmatpush2.msra.mxu0 0.0
    %4246 = vmatprep.subr.mxu0 0.0
    %4247 = vmatpush2.msra.mxu0 0.0
    %4248 = vmatprep.subr.mxu0 0.0
    %4249 = vmatpush2.msra.mxu0 0.0
    %4250 = vmatprep.subr.mxu0 0.0
    %4251 = vmatpush2.msra.mxu0 0.0
    %4252 = vmatprep.mubr.f32.mxu0 0.0
    %4253 = vmatmul.mubr.f32.gmra.mxu0 %v4118
    %v4254 = vpop.f32.mrf.mxu0
    %v4255 = vadd.f32 0.0, %v4254
    %v4256 = vpop.f32.mrf.mxu0
    %v4257 = vadd.f32 0.0, %v4256
    %4258 = vdwg.mxu0
    %4259 = vmatprep.subr.mxu0 %v4187
    %4260 = vmatpush1.msra.mxu0 %v4186
    %4261 = vmatprep.subr.mxu0 %v4183
    %4262 = vmatpush1.msra.mxu0 %v4182
    %4263 = vmatprep.subr.mxu0 %v4179
    %4264 = vmatpush1.msra.mxu0 %v4178
    %4265 = vmatprep.subr.mxu0 %v4175
    %4266 = vmatpush1.msra.mxu0 %v4174
    %4267 = vmatprep.subr.mxu0 %v4171
    %4268 = vmatpush1.msra.mxu0 %v4170
    %4269 = vmatprep.subr.mxu0 %v4167
    %4270 = vmatpush1.msra.mxu0 %v4166
    %4271 = vmatprep.subr.mxu0 %v4163
    %4272 = vmatpush1.msra.mxu0 %v4162
    %4273 = vmatprep.subr.mxu0 %v4159
    %4274 = vmatpush1.msra.mxu0 %v4158
    %4275 = vmatprep.subr.mxu0 %v4155
    %4276 = vmatpush1.msra.mxu0 %v4154
    %4277 = vmatprep.subr.mxu0 %v4151
    %4278 = vmatpush1.msra.mxu0 %v4150
    %4279 = vmatprep.subr.mxu0 %v4147
    %4280 = vmatpush1.msra.mxu0 %v4146
    %4281 = vmatprep.subr.mxu0 %v4143
    %4282 = vmatpush1.msra.mxu0 %v4142
    %4283 = vmatprep.subr.mxu0 %v4139
    %4284 = vmatpush1.msra.mxu0 %v4138
    %4285 = vmatprep.subr.mxu0 %v4135
    %4286 = vmatpush1.msra.mxu0 %v4134
    %4287 = vmatprep.subr.mxu0 %v4131
    %4288 = vmatpush1.msra.mxu0 %v4130
    %4289 = vmatprep.subr.mxu0 %v4127
    %4290 = vmatpush1.msra.mxu0 %v4126
    %4291 = vmatprep.subr.mxu0 0.0
    %4292 = vmatpush2.msra.mxu0 0.0
    %4293 = vmatprep.subr.mxu0 0.0
    %4294 = vmatpush2.msra.mxu0 0.0
    %4295 = vmatprep.subr.mxu0 0.0
    %4296 = vmatpush2.msra.mxu0 0.0
    %4297 = vmatprep.subr.mxu0 0.0
    %4298 = vmatpush2.msra.mxu0 0.0
    %4299 = vmatprep.subr.mxu0 0.0
    %4300 = vmatpush2.msra.mxu0 0.0
    %4301 = vmatprep.subr.mxu0 0.0
    %4302 = vmatpush2.msra.mxu0 0.0
    %4303 = vmatprep.subr.mxu0 0.0
    %4304 = vmatpush2.msra.mxu0 0.0
    %4305 = vmatprep.subr.mxu0 0.0
    %4306 = vmatpush2.msra.mxu0 0.0
    %4307 = vmatprep.subr.mxu0 0.0
    %4308 = vmatpush2.msra.mxu0 0.0
    %4309 = vmatprep.subr.mxu0 0.0
    %4310 = vmatpush2.msra.mxu0 0.0
    %4311 = vmatprep.subr.mxu0 0.0
    %4312 = vmatpush2.msra.mxu0 0.0
    %4313 = vmatprep.subr.mxu0 0.0
    %4314 = vmatpush2.msra.mxu0 0.0
    %4315 = vmatprep.subr.mxu0 0.0
    %4316 = vmatpush2.msra.mxu0 0.0
    %4317 = vmatprep.subr.mxu0 0.0
    %4318 = vmatpush2.msra.mxu0 0.0
    %4319 = vmatprep.subr.mxu0 0.0
    %4320 = vmatpush2.msra.mxu0 0.0
    %4321 = vmatprep.subr.mxu0 0.0
    %4322 = vmatpush2.msra.mxu0 0.0
    %4323 = vmatprep.mubr.f32.mxu0 0.0
    %4324 = vmatmul.mubr.f32.gmra.mxu0 %v4118
    %v4325 = vpop.f32.mrf.mxu0
    %v4326 = vadd.f32 0.0, %v4325
    %v4327 = vpop.f32.mrf.mxu0
    %v4328 = vadd.f32 0.0, %v4327
    %4329 = vdwg.mxu0
    %v4330 = vadd.f32 %v4120, %v4255
    %v4331 = vadd.f32 %v4121, %v4257
    %v4332 = vadd.f32 %v4122, %v4326
    %v4333 = vadd.f32 %v4123, %v4328
    %v4334 = vxor.u32 %v4330, 2147483648
    %v4335 = vmul.f32 %v4334, 1.442695
    %v4336 = vpow.pop %v4335
    %v4337 = vadd.f32 %v4336, 1.0
    %v4338 = vrcp.pop %v4337
    %v4339 = vmul.f32 1.0, %v4338
    %v4340 = vxor.u32 %v4331, 2147483648
    %v4341 = vmul.f32 %v4340, 1.442695
    %v4342 = vpow.pop %v4341
    %v4343 = vadd.f32 %v4342, 1.0
    %v4344 = vrcp.pop %v4343
    %v4345 = vmul.f32 1.0, %v4344
    %v4346 = vtanh.pop %v4332
    %v4347 = vxor.u32 %v4333, 2147483648
    %v4348 = vmul.f32 %v4347, 1.442695
    %v4349 = vpow.pop %v4348
    %v4350 = vadd.f32 %v4349, 1.0
    %v4351 = vrcp.pop %v4350
    %v4352 = vmul.f32 1.0, %v4351
    %v4353 = vmul.f32 %v4345, %v4116
    %v4354 = vmul.f32 %v4339, %v4346
    %v4355 = vadd.f32 %v4353, %v4354
    %v4356 = vtanh.pop %v4355
    %v4357 = vmul.f32 %v4352, %v4356
    %4358 = vst [vmem:[#allocation2 + $0x18] sm:$0xff] %v4357
    %v4359 = vld [vmem:[#allocation4 + $0x80] sm:$0xff]
    %v4360 = vld [vmem:[#allocation4 + $0x88] sm:$0xff]
    %v4361 = vld [vmem:[#allocation4 + $0x90] sm:$0xff]
    %v4362 = vld [vmem:[#allocation4 + $0x98] sm:$0xff]
    %v4363 = vld [vmem:[%s3406] sm:$0xff]
    %v4364 = vld [vmem:[%s3406 + $0x8] sm:$0xff]
    %v4365 = vld [vmem:[%s3406 + $0x10] sm:$0xff]
    %v4366 = vld [vmem:[%s3406 + $0x18] sm:$0xff]
    %v4367 = vld [vmem:[%s3406 + $0x20] sm:$0xff]
    %v4368 = vld [vmem:[%s3406 + $0x28] sm:$0xff]
    %v4369 = vld [vmem:[%s3406 + $0x30] sm:$0xff]
    %v4370 = vld [vmem:[%s3406 + $0x38] sm:$0xff]
    %v4371 = vld [vmem:[%s3406 + $0x40] sm:$0xff]
    %v4372 = vld [vmem:[%s3406 + $0x48] sm:$0xff]
    %v4373 = vld [vmem:[%s3406 + $0x50] sm:$0xff]
    %v4374 = vld [vmem:[%s3406 + $0x58] sm:$0xff]
    %v4375 = vld [vmem:[%s3406 + $0x60] sm:$0xff]
    %v4376 = vld [vmem:[%s3406 + $0x68] sm:$0xff]
    %v4377 = vld [vmem:[%s3406 + $0x70] sm:$0xff]
    %v4378 = vld [vmem:[%s3406 + $0x78] sm:$0xff]
    %v4379 = vld [vmem:[%s3406 + $0x80] sm:$0xff]
    %v4380 = vld [vmem:[%s3406 + $0x88] sm:$0xff]
    %v4381 = vld [vmem:[%s3406 + $0x90] sm:$0xff]
    %v4382 = vld [vmem:[%s3406 + $0x98] sm:$0xff]
    %v4383 = vld [vmem:[%s3406 + $0xa0] sm:$0xff]
    %v4384 = vld [vmem:[%s3406 + $0xa8] sm:$0xff]
    %v4385 = vld [vmem:[%s3406 + $0xb0] sm:$0xff]
    %v4386 = vld [vmem:[%s3406 + $0xb8] sm:$0xff]
    %v4387 = vld [vmem:[%s3406 + $0xc0] sm:$0xff]
    %v4388 = vld [vmem:[%s3406 + $0xc8] sm:$0xff]
    %v4389 = vld [vmem:[%s3406 + $0xd0] sm:$0xff]
    %v4390 = vld [vmem:[%s3406 + $0xd8] sm:$0xff]
    %v4391 = vld [vmem:[%s3406 + $0xe0] sm:$0xff]
    %v4392 = vld [vmem:[%s3406 + $0xe8] sm:$0xff]
    %v4393 = vld [vmem:[%s3406 + $0xf0] sm:$0xff]
    %v4394 = vld [vmem:[%s3406 + $0xf8] sm:$0xff]
    %v4395 = vld [vmem:[%s3406 + $0x100] sm:$0xff]
    %v4396 = vld [vmem:[%s3406 + $0x108] sm:$0xff]
    %v4397 = vld [vmem:[%s3406 + $0x110] sm:$0xff]
    %v4398 = vld [vmem:[%s3406 + $0x118] sm:$0xff]
    %v4399 = vld [vmem:[%s3406 + $0x120] sm:$0xff]
    %v4400 = vld [vmem:[%s3406 + $0x128] sm:$0xff]
    %v4401 = vld [vmem:[%s3406 + $0x130] sm:$0xff]
    %v4402 = vld [vmem:[%s3406 + $0x138] sm:$0xff]
    %v4403 = vld [vmem:[%s3406 + $0x140] sm:$0xff]
    %v4404 = vld [vmem:[%s3406 + $0x148] sm:$0xff]
    %v4405 = vld [vmem:[%s3406 + $0x150] sm:$0xff]
    %v4406 = vld [vmem:[%s3406 + $0x158] sm:$0xff]
    %v4407 = vld [vmem:[%s3406 + $0x160] sm:$0xff]
    %v4408 = vld [vmem:[%s3406 + $0x168] sm:$0xff]
    %v4409 = vld [vmem:[%s3406 + $0x170] sm:$0xff]
    %v4410 = vld [vmem:[%s3406 + $0x178] sm:$0xff]
    %v4411 = vld [vmem:[%s3406 + $0x180] sm:$0xff]
    %v4412 = vld [vmem:[%s3406 + $0x188] sm:$0xff]
    %v4413 = vld [vmem:[%s3406 + $0x190] sm:$0xff]
    %v4414 = vld [vmem:[%s3406 + $0x198] sm:$0xff]
    %v4415 = vld [vmem:[%s3406 + $0x1a0] sm:$0xff]
    %v4416 = vld [vmem:[%s3406 + $0x1a8] sm:$0xff]
    %v4417 = vld [vmem:[%s3406 + $0x1b0] sm:$0xff]
    %v4418 = vld [vmem:[%s3406 + $0x1b8] sm:$0xff]
    %v4419 = vld [vmem:[%s3406 + $0x1c0] sm:$0xff]
    %v4420 = vld [vmem:[%s3406 + $0x1c8] sm:$0xff]
    %v4421 = vld [vmem:[%s3406 + $0x1d0] sm:$0xff]
    %v4422 = vld [vmem:[%s3406 + $0x1d8] sm:$0xff]
    %v4423 = vld [vmem:[%s3406 + $0x1e0] sm:$0xff]
    %v4424 = vld [vmem:[%s3406 + $0x1e8] sm:$0xff]
    %v4425 = vld [vmem:[%s3406 + $0x1f0] sm:$0xff]
    %v4426 = vld [vmem:[%s3406 + $0x1f8] sm:$0xff]
    %4427 = vmatprep.subr.mxu0 %v4424
    %4428 = vmatpush1.msra.mxu0 %v4423
    %4429 = vmatprep.subr.mxu0 %v4420
    %4430 = vmatpush1.msra.mxu0 %v4419
    %4431 = vmatprep.subr.mxu0 %v4416
    %4432 = vmatpush1.msra.mxu0 %v4415
    %4433 = vmatprep.subr.mxu0 %v4412
    %4434 = vmatpush1.msra.mxu0 %v4411
    %4435 = vmatprep.subr.mxu0 %v4408
    %4436 = vmatpush1.msra.mxu0 %v4407
    %4437 = vmatprep.subr.mxu0 %v4404
    %4438 = vmatpush1.msra.mxu0 %v4403
    %4439 = vmatprep.subr.mxu0 %v4400
    %4440 = vmatpush1.msra.mxu0 %v4399
    %4441 = vmatprep.subr.mxu0 %v4396
    %4442 = vmatpush1.msra.mxu0 %v4395
    %4443 = vmatprep.subr.mxu0 %v4392
    %4444 = vmatpush1.msra.mxu0 %v4391
    %4445 = vmatprep.subr.mxu0 %v4388
    %4446 = vmatpush1.msra.mxu0 %v4387
    %4447 = vmatprep.subr.mxu0 %v4384
    %4448 = vmatpush1.msra.mxu0 %v4383
    %4449 = vmatprep.subr.mxu0 %v4380
    %4450 = vmatpush1.msra.mxu0 %v4379
    %4451 = vmatprep.subr.mxu0 %v4376
    %4452 = vmatpush1.msra.mxu0 %v4375
    %4453 = vmatprep.subr.mxu0 %v4372
    %4454 = vmatpush1.msra.mxu0 %v4371
    %4455 = vmatprep.subr.mxu0 %v4368
    %4456 = vmatpush1.msra.mxu0 %v4367
    %4457 = vmatprep.subr.mxu0 %v4364
    %4458 = vmatpush1.msra.mxu0 %v4363
    %4459 = vmatprep.subr.mxu0 0.0
    %4460 = vmatpush2.msra.mxu0 0.0
    %4461 = vmatprep.subr.mxu0 0.0
    %4462 = vmatpush2.msra.mxu0 0.0
    %4463 = vmatprep.subr.mxu0 0.0
    %4464 = vmatpush2.msra.mxu0 0.0
    %4465 = vmatprep.subr.mxu0 0.0
    %4466 = vmatpush2.msra.mxu0 0.0
    %4467 = vmatprep.subr.mxu0 0.0
    %4468 = vmatpush2.msra.mxu0 0.0
    %4469 = vmatprep.subr.mxu0 0.0
    %4470 = vmatpush2.msra.mxu0 0.0
    %4471 = vmatprep.subr.mxu0 0.0
    %4472 = vmatpush2.msra.mxu0 0.0
    %4473 = vmatprep.subr.mxu0 0.0
    %4474 = vmatpush2.msra.mxu0 0.0
    %4475 = vmatprep.subr.mxu0 0.0
    %4476 = vmatpush2.msra.mxu0 0.0
    %4477 = vmatprep.subr.mxu0 0.0
    %4478 = vmatpush2.msra.mxu0 0.0
    %4479 = vmatprep.subr.mxu0 0.0
    %4480 = vmatpush2.msra.mxu0 0.0
    %4481 = vmatprep.subr.mxu0 0.0
    %4482 = vmatpush2.msra.mxu0 0.0
    %4483 = vmatprep.subr.mxu0 0.0
    %4484 = vmatpush2.msra.mxu0 0.0
    %4485 = vmatprep.subr.mxu0 0.0
    %4486 = vmatpush2.msra.mxu0 0.0
    %4487 = vmatprep.subr.mxu0 0.0
    %4488 = vmatpush2.msra.mxu0 0.0
    %4489 = vmatprep.subr.mxu0 0.0
    %4490 = vmatpush2.msra.mxu0 0.0
    %4491 = vmatprep.mubr.f32.mxu0 0.0
    %4492 = vmatmul.mubr.f32.gmra.mxu0 %v4357
    %v4493 = vpop.f32.mrf.mxu0
    %v4494 = vadd.f32 0.0, %v4493
    %v4495 = vpop.f32.mrf.mxu0
    %v4496 = vadd.f32 0.0, %v4495
    %4497 = vdwg.mxu0
    %4498 = vmatprep.subr.mxu0 %v4426
    %4499 = vmatpush1.msra.mxu0 %v4425
    %4500 = vmatprep.subr.mxu0 %v4422
    %4501 = vmatpush1.msra.mxu0 %v4421
    %4502 = vmatprep.subr.mxu0 %v4418
    %4503 = vmatpush1.msra.mxu0 %v4417
    %4504 = vmatprep.subr.mxu0 %v4414
    %4505 = vmatpush1.msra.mxu0 %v4413
    %4506 = vmatprep.subr.mxu0 %v4410
    %4507 = vmatpush1.msra.mxu0 %v4409
    %4508 = vmatprep.subr.mxu0 %v4406
    %4509 = vmatpush1.msra.mxu0 %v4405
    %4510 = vmatprep.subr.mxu0 %v4402
    %4511 = vmatpush1.msra.mxu0 %v4401
    %4512 = vmatprep.subr.mxu0 %v4398
    %4513 = vmatpush1.msra.mxu0 %v4397
    %4514 = vmatprep.subr.mxu0 %v4394
    %4515 = vmatpush1.msra.mxu0 %v4393
    %4516 = vmatprep.subr.mxu0 %v4390
    %4517 = vmatpush1.msra.mxu0 %v4389
    %4518 = vmatprep.subr.mxu0 %v4386
    %4519 = vmatpush1.msra.mxu0 %v4385
    %4520 = vmatprep.subr.mxu0 %v4382
    %4521 = vmatpush1.msra.mxu0 %v4381
    %4522 = vmatprep.subr.mxu0 %v4378
    %4523 = vmatpush1.msra.mxu0 %v4377
    %4524 = vmatprep.subr.mxu0 %v4374
    %4525 = vmatpush1.msra.mxu0 %v4373
    %4526 = vmatprep.subr.mxu0 %v4370
    %4527 = vmatpush1.msra.mxu0 %v4369
    %4528 = vmatprep.subr.mxu0 %v4366
    %4529 = vmatpush1.msra.mxu0 %v4365
    %4530 = vmatprep.subr.mxu0 0.0
    %4531 = vmatpush2.msra.mxu0 0.0
    %4532 = vmatprep.subr.mxu0 0.0
    %4533 = vmatpush2.msra.mxu0 0.0
    %4534 = vmatprep.subr.mxu0 0.0
    %4535 = vmatpush2.msra.mxu0 0.0
    %4536 = vmatprep.subr.mxu0 0.0
    %4537 = vmatpush2.msra.mxu0 0.0
    %4538 = vmatprep.subr.mxu0 0.0
    %4539 = vmatpush2.msra.mxu0 0.0
    %4540 = vmatprep.subr.mxu0 0.0
    %4541 = vmatpush2.msra.mxu0 0.0
    %4542 = vmatprep.subr.mxu0 0.0
    %4543 = vmatpush2.msra.mxu0 0.0
    %4544 = vmatprep.subr.mxu0 0.0
    %4545 = vmatpush2.msra.mxu0 0.0
    %4546 = vmatprep.subr.mxu0 0.0
    %4547 = vmatpush2.msra.mxu0 0.0
    %4548 = vmatprep.subr.mxu0 0.0
    %4549 = vmatpush2.msra.mxu0 0.0
    %4550 = vmatprep.subr.mxu0 0.0
    %4551 = vmatpush2.msra.mxu0 0.0
    %4552 = vmatprep.subr.mxu0 0.0
    %4553 = vmatpush2.msra.mxu0 0.0
    %4554 = vmatprep.subr.mxu0 0.0
    %4555 = vmatpush2.msra.mxu0 0.0
    %4556 = vmatprep.subr.mxu0 0.0
    %4557 = vmatpush2.msra.mxu0 0.0
    %4558 = vmatprep.subr.mxu0 0.0
    %4559 = vmatpush2.msra.mxu0 0.0
    %4560 = vmatprep.subr.mxu0 0.0
    %4561 = vmatpush2.msra.mxu0 0.0
    %4562 = vmatprep.mubr.f32.mxu0 0.0
    %4563 = vmatmul.mubr.f32.gmra.mxu0 %v4357
    %v4564 = vpop.f32.mrf.mxu0
    %v4565 = vadd.f32 0.0, %v4564
    %v4566 = vpop.f32.mrf.mxu0
    %v4567 = vadd.f32 0.0, %v4566
    %4568 = vdwg.mxu0
    %v4569 = vadd.f32 %v4359, %v4494
    %v4570 = vadd.f32 %v4360, %v4496
    %v4571 = vadd.f32 %v4361, %v4565
    %v4572 = vadd.f32 %v4362, %v4567
    %v4573 = vxor.u32 %v4569, 2147483648
    %v4574 = vmul.f32 %v4573, 1.442695
    %v4575 = vpow.pop %v4574
    %v4576 = vadd.f32 %v4575, 1.0
    %v4577 = vrcp.pop %v4576
    %v4578 = vmul.f32 1.0, %v4577
    %v4579 = vxor.u32 %v4570, 2147483648
    %v4580 = vmul.f32 %v4579, 1.442695
    %v4581 = vpow.pop %v4580
    %v4582 = vadd.f32 %v4581, 1.0
    %v4583 = vrcp.pop %v4582
    %v4584 = vmul.f32 1.0, %v4583
    %v4585 = vtanh.pop %v4571
    %v4586 = vxor.u32 %v4572, 2147483648
    %v4587 = vmul.f32 %v4586, 1.442695
    %v4588 = vpow.pop %v4587
    %v4589 = vadd.f32 %v4588, 1.0
    %v4590 = vrcp.pop %v4589
    %v4591 = vmul.f32 1.0, %v4590
    %v4592 = vmul.f32 %v4584, %v4355
    %v4593 = vmul.f32 %v4578, %v4585
    %v4594 = vadd.f32 %v4592, %v4593
    %v4595 = vtanh.pop %v4594
    %v4596 = vmul.f32 %v4591, %v4595
    %4597 = vst [vmem:[#allocation2 + $0x20] sm:$0xff] %v4596
    %v4598 = vld [vmem:[#allocation2] sm:$0xff]
    %v4599 = vld [vmem:[#allocation2 + $0x8] sm:$0xff]
    %v4600 = vld [vmem:[#allocation2 + $0x10] sm:$0xff]
    %v4601 = vld [vmem:[#allocation2 + $0x18] sm:$0xff]
    %v4602 = vld [vmem:[#allocation2 + $0x20] sm:$0xff]
    %s4603 = scalar_lea.vmem [#allocation8], 1536
    %v4604 = vld [vmem:[%s4603] sm:$0xff]
    %v4605 = vld [vmem:[%s4603 + $0x8] sm:$0xff]
    %v4606 = vld [vmem:[%s4603 + $0x10] sm:$0xff]
    %v4607 = vld [vmem:[%s4603 + $0x18] sm:$0xff]
    %v4608 = vld [vmem:[%s4603 + $0x20] sm:$0xff]
    %v4609 = vld [vmem:[%s4603 + $0x28] sm:$0xff]
    %v4610 = vld [vmem:[%s4603 + $0x30] sm:$0xff]
    %v4611 = vld [vmem:[%s4603 + $0x38] sm:$0xff]
    %v4612 = vld [vmem:[%s4603 + $0x40] sm:$0xff]
    %v4613 = vld [vmem:[%s4603 + $0x48] sm:$0xff]
    %v4614 = vld [vmem:[%s4603 + $0x50] sm:$0xff]
    %v4615 = vld [vmem:[%s4603 + $0x58] sm:$0xff]
    %v4616 = vld [vmem:[%s4603 + $0x60] sm:$0xff]
    %v4617 = vld [vmem:[%s4603 + $0x68] sm:$0xff]
    %v4618 = vld [vmem:[%s4603 + $0x70] sm:$0xff]
    %v4619 = vld [vmem:[%s4603 + $0x78] sm:$0xff]
    %v4620 = vld [vmem:[%s4603 + $0x80] sm:$0xff]
    %v4621 = vld [vmem:[%s4603 + $0x88] sm:$0xff]
    %v4622 = vld [vmem:[%s4603 + $0x90] sm:$0xff]
    %v4623 = vld [vmem:[%s4603 + $0x98] sm:$0xff]
    %v4624 = vld [vmem:[%s4603 + $0xa0] sm:$0xff]
    %v4625 = vld [vmem:[%s4603 + $0xa8] sm:$0xff]
    %v4626 = vld [vmem:[%s4603 + $0xb0] sm:$0xff]
    %v4627 = vld [vmem:[%s4603 + $0xb8] sm:$0xff]
    %v4628 = vld [vmem:[%s4603 + $0xc0] sm:$0xff]
    %v4629 = vld [vmem:[%s4603 + $0xc8] sm:$0xff]
    %v4630 = vld [vmem:[%s4603 + $0xd0] sm:$0xff]
    %v4631 = vld [vmem:[%s4603 + $0xd8] sm:$0xff]
    %v4632 = vld [vmem:[%s4603 + $0xe0] sm:$0xff]
    %v4633 = vld [vmem:[%s4603 + $0xe8] sm:$0xff]
    %v4634 = vld [vmem:[%s4603 + $0xf0] sm:$0xff]
    %v4635 = vld [vmem:[%s4603 + $0xf8] sm:$0xff]
    %v4636 = vld [vmem:[%s4603 + $0x100] sm:$0xff]
    %v4637 = vld [vmem:[%s4603 + $0x108] sm:$0xff]
    %v4638 = vld [vmem:[%s4603 + $0x110] sm:$0xff]
    %v4639 = vld [vmem:[%s4603 + $0x118] sm:$0xff]
    %v4640 = vld [vmem:[%s4603 + $0x120] sm:$0xff]
    %v4641 = vld [vmem:[%s4603 + $0x128] sm:$0xff]
    %v4642 = vld [vmem:[%s4603 + $0x130] sm:$0xff]
    %v4643 = vld [vmem:[%s4603 + $0x138] sm:$0xff]
    %v4644 = vld [vmem:[%s4603 + $0x140] sm:$0xff]
    %v4645 = vld [vmem:[%s4603 + $0x148] sm:$0xff]
    %v4646 = vld [vmem:[%s4603 + $0x150] sm:$0xff]
    %v4647 = vld [vmem:[%s4603 + $0x158] sm:$0xff]
    %v4648 = vld [vmem:[%s4603 + $0x160] sm:$0xff]
    %v4649 = vld [vmem:[%s4603 + $0x168] sm:$0xff]
    %v4650 = vld [vmem:[%s4603 + $0x170] sm:$0xff]
    %v4651 = vld [vmem:[%s4603 + $0x178] sm:$0xff]
    %v4652 = vld [vmem:[%s4603 + $0x180] sm:$0xff]
    %v4653 = vld [vmem:[%s4603 + $0x188] sm:$0xff]
    %v4654 = vld [vmem:[%s4603 + $0x190] sm:$0xff]
    %v4655 = vld [vmem:[%s4603 + $0x198] sm:$0xff]
    %v4656 = vld [vmem:[%s4603 + $0x1a0] sm:$0xff]
    %v4657 = vld [vmem:[%s4603 + $0x1a8] sm:$0xff]
    %v4658 = vld [vmem:[%s4603 + $0x1b0] sm:$0xff]
    %v4659 = vld [vmem:[%s4603 + $0x1b8] sm:$0xff]
    %v4660 = vld [vmem:[%s4603 + $0x1c0] sm:$0xff]
    %v4661 = vld [vmem:[%s4603 + $0x1c8] sm:$0xff]
    %v4662 = vld [vmem:[%s4603 + $0x1d0] sm:$0xff]
    %v4663 = vld [vmem:[%s4603 + $0x1d8] sm:$0xff]
    %v4664 = vld [vmem:[%s4603 + $0x1e0] sm:$0xff]
    %v4665 = vld [vmem:[%s4603 + $0x1e8] sm:$0xff]
    %v4666 = vld [vmem:[%s4603 + $0x1f0] sm:$0xff]
    %v4667 = vld [vmem:[%s4603 + $0x1f8] sm:$0xff]
    %s4668 = scalar_lea.vmem [#allocation11], 12
    %v4669 = vld [vmem:[%s4668] sm:$0xf]
    %v4671 = vlaneseq
    %v4672 = vshrl.u32 %v4671, 7
    %v4673 = vsub.s32 0, %v4672
    %v4674 = vrot.slane %v4669, %v4673
    %v4675 = vlaneseq
    %v4676 = vshrl.u32 %v4675, 7
    %v4677 = vsub.s32 1, %v4676
    %v4678 = vrot.slane %v4669, %v4677
    %v4679 = vlaneseq
    %v4680 = vshrl.u32 %v4679, 7
    %v4681 = vsub.s32 2, %v4680
    %v4682 = vrot.slane %v4669, %v4681
    %v4683 = vlaneseq
    %v4684 = vshrl.u32 %v4683, 7
    %v4685 = vsub.s32 3, %v4684
    %v4686 = vrot.slane %v4669, %v4685
    %4691 = vmatprep.subr.mxu0 %v4665
    %4692 = vmatpush1.msra.mxu0 %v4664
    %4693 = vmatprep.subr.mxu0 %v4661
    %4694 = vmatpush1.msra.mxu0 %v4660
    %4695 = vmatprep.subr.mxu0 %v4657
    %4696 = vmatpush1.msra.mxu0 %v4656
    %4697 = vmatprep.subr.mxu0 %v4653
    %4698 = vmatpush1.msra.mxu0 %v4652
    %4699 = vmatprep.subr.mxu0 %v4649
    %4700 = vmatpush1.msra.mxu0 %v4648
    %4701 = vmatprep.subr.mxu0 %v4645
    %4702 = vmatpush1.msra.mxu0 %v4644
    %4703 = vmatprep.subr.mxu0 %v4641
    %4704 = vmatpush1.msra.mxu0 %v4640
    %4705 = vmatprep.subr.mxu0 %v4637
    %4706 = vmatpush1.msra.mxu0 %v4636
    %4707 = vmatprep.subr.mxu0 %v4633
    %4708 = vmatpush1.msra.mxu0 %v4632
    %4709 = vmatprep.subr.mxu0 %v4629
    %4710 = vmatpush1.msra.mxu0 %v4628
    %4711 = vmatprep.subr.mxu0 %v4625
    %4712 = vmatpush1.msra.mxu0 %v4624
    %4713 = vmatprep.subr.mxu0 %v4621
    %4714 = vmatpush1.msra.mxu0 %v4620
    %4715 = vmatprep.subr.mxu0 %v4617
    %4716 = vmatpush1.msra.mxu0 %v4616
    %4717 = vmatprep.subr.mxu0 %v4613
    %4718 = vmatpush1.msra.mxu0 %v4612
    %4719 = vmatprep.subr.mxu0 %v4609
    %4720 = vmatpush1.msra.mxu0 %v4608
    %4721 = vmatprep.subr.mxu0 %v4605
    %4722 = vmatpush1.msra.mxu0 %v4604
    %4723 = vmatprep.subr.mxu0 0.0
    %4724 = vmatpush2.msra.mxu0 0.0
    %4725 = vmatprep.subr.mxu0 0.0
    %4726 = vmatpush2.msra.mxu0 0.0
    %4727 = vmatprep.subr.mxu0 0.0
    %4728 = vmatpush2.msra.mxu0 0.0
    %4729 = vmatprep.subr.mxu0 0.0
    %4730 = vmatpush2.msra.mxu0 0.0
    %4731 = vmatprep.subr.mxu0 0.0
    %4732 = vmatpush2.msra.mxu0 0.0
    %4733 = vmatprep.subr.mxu0 0.0
    %4734 = vmatpush2.msra.mxu0 0.0
    %4735 = vmatprep.subr.mxu0 0.0
    %4736 = vmatpush2.msra.mxu0 0.0
    %4737 = vmatprep.subr.mxu0 0.0
    %4738 = vmatpush2.msra.mxu0 0.0
    %4739 = vmatprep.subr.mxu0 0.0
    %4740 = vmatpush2.msra.mxu0 0.0
    %4741 = vmatprep.subr.mxu0 0.0
    %4742 = vmatpush2.msra.mxu0 0.0
    %4743 = vmatprep.subr.mxu0 0.0
    %4744 = vmatpush2.msra.mxu0 0.0
    %4745 = vmatprep.subr.mxu0 0.0
    %4746 = vmatpush2.msra.mxu0 0.0
    %4747 = vmatprep.subr.mxu0 0.0
    %4748 = vmatpush2.msra.mxu0 0.0
    %4749 = vmatprep.subr.mxu0 0.0
    %4750 = vmatpush2.msra.mxu0 0.0
    %4751 = vmatprep.subr.mxu0 0.0
    %4752 = vmatpush2.msra.mxu0 0.0
    %4753 = vmatprep.subr.mxu0 0.0
    %4754 = vmatpush2.msra.mxu0 0.0
    %4755 = vmatprep.mubr.f32.mxu0 0.0
    %4756 = vmatmul.mubr.f32.gmra.mxu0 %v4598
    %v4757 = vpop.f32.mrf.mxu0
    %v4758 = vadd.f32 %v4674, %v4757
    %v4759 = vpop.f32.mrf.mxu0
    %v4760 = vadd.f32 %v4678, %v4759
    %4761 = vmatprep.mubr.f32.mxu0 0.0
    %4762 = vmatmul.mubr.f32.gmra.mxu0 %v4599
    %v4763 = vpop.f32.mrf.mxu0
    %v4764 = vadd.f32 %v4674, %v4763
    %v4765 = vpop.f32.mrf.mxu0
    %v4766 = vadd.f32 %v4678, %v4765
    %4767 = vmatprep.mubr.f32.mxu0 0.0
    %4768 = vmatmul.mubr.f32.gmra.mxu0 %v4600
    %v4769 = vpop.f32.mrf.mxu0
    %v4770 = vadd.f32 %v4674, %v4769
    %v4771 = vpop.f32.mrf.mxu0
    %v4772 = vadd.f32 %v4678, %v4771
    %4773 = vmatprep.mubr.f32.mxu0 0.0
    %4774 = vmatmul.mubr.f32.gmra.mxu0 %v4601
    %v4775 = vpop.f32.mrf.mxu0
    %v4776 = vadd.f32 %v4674, %v4775
    %v4777 = vpop.f32.mrf.mxu0
    %v4778 = vadd.f32 %v4678, %v4777
    %4779 = vmatprep.mubr.f32.mxu0 0.0
    %4780 = vmatmul.mubr.f32.gmra.mxu0 %v4602
    %v4781 = vpop.f32.mrf.mxu0
    %v4782 = vadd.f32 %v4674, %v4781
    %v4783 = vpop.f32.mrf.mxu0
    %v4784 = vadd.f32 %v4678, %v4783
    %4785 = vdwg.mxu0
    %4786 = vmatprep.subr.mxu0 %v4667
    %4787 = vmatpush1.msra.mxu0 %v4666
    %4788 = vmatprep.subr.mxu0 %v4663
    %4789 = vmatpush1.msra.mxu0 %v4662
    %4790 = vmatprep.subr.mxu0 %v4659
    %4791 = vmatpush1.msra.mxu0 %v4658
    %4792 = vmatprep.subr.mxu0 %v4655
    %4793 = vmatpush1.msra.mxu0 %v4654
    %4794 = vmatprep.subr.mxu0 %v4651
    %4795 = vmatpush1.msra.mxu0 %v4650
    %4796 = vmatprep.subr.mxu0 %v4647
    %4797 = vmatpush1.msra.mxu0 %v4646
    %4798 = vmatprep.subr.mxu0 %v4643
    %4799 = vmatpush1.msra.mxu0 %v4642
    %4800 = vmatprep.subr.mxu0 %v4639
    %4801 = vmatpush1.msra.mxu0 %v4638
    %4802 = vmatprep.subr.mxu0 %v4635
    %4803 = vmatpush1.msra.mxu0 %v4634
    %4804 = vmatprep.subr.mxu0 %v4631
    %4805 = vmatpush1.msra.mxu0 %v4630
    %4806 = vmatprep.subr.mxu0 %v4627
    %4807 = vmatpush1.msra.mxu0 %v4626
    %4808 = vmatprep.subr.mxu0 %v4623
    %4809 = vmatpush1.msra.mxu0 %v4622
    %4810 = vmatprep.subr.mxu0 %v4619
    %4811 = vmatpush1.msra.mxu0 %v4618
    %4812 = vmatprep.subr.mxu0 %v4615
    %4813 = vmatpush1.msra.mxu0 %v4614
    %4814 = vmatprep.subr.mxu0 %v4611
    %4815 = vmatpush1.msra.mxu0 %v4610
    %4816 = vmatprep.subr.mxu0 %v4607
    %4817 = vmatpush1.msra.mxu0 %v4606
    %4818 = vmatprep.subr.mxu0 0.0
    %4819 = vmatpush2.msra.mxu0 0.0
    %4820 = vmatprep.subr.mxu0 0.0
    %4821 = vmatpush2.msra.mxu0 0.0
    %4822 = vmatprep.subr.mxu0 0.0
    %4823 = vmatpush2.msra.mxu0 0.0
    %4824 = vmatprep.subr.mxu0 0.0
    %4825 = vmatpush2.msra.mxu0 0.0
    %4826 = vmatprep.subr.mxu0 0.0
    %4827 = vmatpush2.msra.mxu0 0.0
    %4828 = vmatprep.subr.mxu0 0.0
    %4829 = vmatpush2.msra.mxu0 0.0
    %4830 = vmatprep.subr.mxu0 0.0
    %4831 = vmatpush2.msra.mxu0 0.0
    %4832 = vmatprep.subr.mxu0 0.0
    %4833 = vmatpush2.msra.mxu0 0.0
    %4834 = vmatprep.subr.mxu0 0.0
    %4835 = vmatpush2.msra.mxu0 0.0
    %4836 = vmatprep.subr.mxu0 0.0
    %4837 = vmatpush2.msra.mxu0 0.0
    %4838 = vmatprep.subr.mxu0 0.0
    %4839 = vmatpush2.msra.mxu0 0.0
    %4840 = vmatprep.subr.mxu0 0.0
    %4841 = vmatpush2.msra.mxu0 0.0
    %4842 = vmatprep.subr.mxu0 0.0
    %4843 = vmatpush2.msra.mxu0 0.0
    %4844 = vmatprep.subr.mxu0 0.0
    %4845 = vmatpush2.msra.mxu0 0.0
    %4846 = vmatprep.subr.mxu0 0.0
    %4847 = vmatpush2.msra.mxu0 0.0
    %4848 = vmatprep.subr.mxu0 0.0
    %4849 = vmatpush2.msra.mxu0 0.0
    %4850 = vmatprep.mubr.f32.mxu0 0.0
    %4851 = vmatmul.mubr.f32.gmra.mxu0 %v4598
    %v4852 = vpop.f32.mrf.mxu0
    %v4853 = vadd.f32 %v4682, %v4852
    %v4854 = vpop.f32.mrf.mxu0
    %v4855 = vadd.f32 %v4686, %v4854
    %4856 = vmatprep.mubr.f32.mxu0 0.0
    %4857 = vmatmul.mubr.f32.gmra.mxu0 %v4599
    %v4858 = vpop.f32.mrf.mxu0
    %v4859 = vadd.f32 %v4682, %v4858
    %v4860 = vpop.f32.mrf.mxu0
    %v4861 = vadd.f32 %v4686, %v4860
    %4862 = vmatprep.mubr.f32.mxu0 0.0
    %4863 = vmatmul.mubr.f32.gmra.mxu0 %v4600
    %v4864 = vpop.f32.mrf.mxu0
    %v4865 = vadd.f32 %v4682, %v4864
    %v4866 = vpop.f32.mrf.mxu0
    %v4867 = vadd.f32 %v4686, %v4866
    %4868 = vmatprep.mubr.f32.mxu0 0.0
    %4869 = vmatmul.mubr.f32.gmra.mxu0 %v4601
    %v4870 = vpop.f32.mrf.mxu0
    %v4871 = vadd.f32 %v4682, %v4870
    %v4872 = vpop.f32.mrf.mxu0
    %v4873 = vadd.f32 %v4686, %v4872
    %4874 = vmatprep.mubr.f32.mxu0 0.0
    %4875 = vmatmul.mubr.f32.gmra.mxu0 %v4602
    %v4876 = vpop.f32.mrf.mxu0
    %v4877 = vadd.f32 %v4682, %v4876
    %v4878 = vpop.f32.mrf.mxu0
    %v4879 = vadd.f32 %v4686, %v4878
    %4880 = vdwg.mxu0
    %4881 = vst [vmem:[#allocation4] sm:$0xff] %v4758
    %4882 = vst [vmem:[#allocation4 + $0x8] sm:$0xff] %v4760
    %4883 = vst [vmem:[#allocation4 + $0x10] sm:$0xff] %v4853
    %4884 = vst [vmem:[#allocation4 + $0x18] sm:$0xff] %v4855
    %4885 = vst [vmem:[#allocation4 + $0x20] sm:$0xff] %v4764
    %4886 = vst [vmem:[#allocation4 + $0x28] sm:$0xff] %v4766
    %4887 = vst [vmem:[#allocation4 + $0x30] sm:$0xff] %v4859
    %4888 = vst [vmem:[#allocation4 + $0x38] sm:$0xff] %v4861
    %4889 = vst [vmem:[#allocation4 + $0x40] sm:$0xff] %v4770
    %4890 = vst [vmem:[#allocation4 + $0x48] sm:$0xff] %v4772
    %4891 = vst [vmem:[#allocation4 + $0x50] sm:$0xff] %v4865
    %4892 = vst [vmem:[#allocation4 + $0x58] sm:$0xff] %v4867
    %4893 = vst [vmem:[#allocation4 + $0x60] sm:$0xff] %v4776
    %4894 = vst [vmem:[#allocation4 + $0x68] sm:$0xff] %v4778
    %4895 = vst [vmem:[#allocation4 + $0x70] sm:$0xff] %v4871
    %4896 = vst [vmem:[#allocation4 + $0x78] sm:$0xff] %v4873
    %4897 = vst [vmem:[#allocation4 + $0x80] sm:$0xff] %v4782
    %4898 = vst [vmem:[#allocation4 + $0x88] sm:$0xff] %v4784
    %4899 = vst [vmem:[#allocation4 + $0x90] sm:$0xff] %v4877
    %4900 = vst [vmem:[#allocation4 + $0x98] sm:$0xff] %v4879
    %v4901 = vld [vmem:[#allocation4] sm:$0xff]
    %v4902 = vld [vmem:[#allocation4 + $0x8] sm:$0xff]
    %v4903 = vld [vmem:[#allocation4 + $0x10] sm:$0xff]
    %v4904 = vld [vmem:[#allocation4 + $0x18] sm:$0xff]
    %s4905 = scalar_lea.vmem [#allocation10], 1536
    %v4906 = vld [vmem:[%s4905] sm:$0xff]
    %v4907 = vld [vmem:[%s4905 + $0x8] sm:$0xff]
    %v4908 = vld [vmem:[%s4905 + $0x10] sm:$0xff]
    %v4909 = vld [vmem:[%s4905 + $0x18] sm:$0xff]
    %v4910 = vld [vmem:[%s4905 + $0x20] sm:$0xff]
    %v4911 = vld [vmem:[%s4905 + $0x28] sm:$0xff]
    %v4912 = vld [vmem:[%s4905 + $0x30] sm:$0xff]
    %v4913 = vld [vmem:[%s4905 + $0x38] sm:$0xff]
    %v4914 = vld [vmem:[%s4905 + $0x40] sm:$0xff]
    %v4915 = vld [vmem:[%s4905 + $0x48] sm:$0xff]
    %v4916 = vld [vmem:[%s4905 + $0x50] sm:$0xff]
    %v4917 = vld [vmem:[%s4905 + $0x58] sm:$0xff]
    %v4918 = vld [vmem:[%s4905 + $0x60] sm:$0xff]
    %v4919 = vld [vmem:[%s4905 + $0x68] sm:$0xff]
    %v4920 = vld [vmem:[%s4905 + $0x70] sm:$0xff]
    %v4921 = vld [vmem:[%s4905 + $0x78] sm:$0xff]
    %v4922 = vld [vmem:[%s4905 + $0x80] sm:$0xff]
    %v4923 = vld [vmem:[%s4905 + $0x88] sm:$0xff]
    %v4924 = vld [vmem:[%s4905 + $0x90] sm:$0xff]
    %v4925 = vld [vmem:[%s4905 + $0x98] sm:$0xff]
    %v4926 = vld [vmem:[%s4905 + $0xa0] sm:$0xff]
    %v4927 = vld [vmem:[%s4905 + $0xa8] sm:$0xff]
    %v4928 = vld [vmem:[%s4905 + $0xb0] sm:$0xff]
    %v4929 = vld [vmem:[%s4905 + $0xb8] sm:$0xff]
    %v4930 = vld [vmem:[%s4905 + $0xc0] sm:$0xff]
    %v4931 = vld [vmem:[%s4905 + $0xc8] sm:$0xff]
    %v4932 = vld [vmem:[%s4905 + $0xd0] sm:$0xff]
    %v4933 = vld [vmem:[%s4905 + $0xd8] sm:$0xff]
    %v4934 = vld [vmem:[%s4905 + $0xe0] sm:$0xff]
    %v4935 = vld [vmem:[%s4905 + $0xe8] sm:$0xff]
    %v4936 = vld [vmem:[%s4905 + $0xf0] sm:$0xff]
    %v4937 = vld [vmem:[%s4905 + $0xf8] sm:$0xff]
    %v4938 = vld [vmem:[%s4905 + $0x100] sm:$0xff]
    %v4939 = vld [vmem:[%s4905 + $0x108] sm:$0xff]
    %v4940 = vld [vmem:[%s4905 + $0x110] sm:$0xff]
    %v4941 = vld [vmem:[%s4905 + $0x118] sm:$0xff]
    %v4942 = vld [vmem:[%s4905 + $0x120] sm:$0xff]
    %v4943 = vld [vmem:[%s4905 + $0x128] sm:$0xff]
    %v4944 = vld [vmem:[%s4905 + $0x130] sm:$0xff]
    %v4945 = vld [vmem:[%s4905 + $0x138] sm:$0xff]
    %v4946 = vld [vmem:[%s4905 + $0x140] sm:$0xff]
    %v4947 = vld [vmem:[%s4905 + $0x148] sm:$0xff]
    %v4948 = vld [vmem:[%s4905 + $0x150] sm:$0xff]
    %v4949 = vld [vmem:[%s4905 + $0x158] sm:$0xff]
    %v4950 = vld [vmem:[%s4905 + $0x160] sm:$0xff]
    %v4951 = vld [vmem:[%s4905 + $0x168] sm:$0xff]
    %v4952 = vld [vmem:[%s4905 + $0x170] sm:$0xff]
    %v4953 = vld [vmem:[%s4905 + $0x178] sm:$0xff]
    %v4954 = vld [vmem:[%s4905 + $0x180] sm:$0xff]
    %v4955 = vld [vmem:[%s4905 + $0x188] sm:$0xff]
    %v4956 = vld [vmem:[%s4905 + $0x190] sm:$0xff]
    %v4957 = vld [vmem:[%s4905 + $0x198] sm:$0xff]
    %v4958 = vld [vmem:[%s4905 + $0x1a0] sm:$0xff]
    %v4959 = vld [vmem:[%s4905 + $0x1a8] sm:$0xff]
    %v4960 = vld [vmem:[%s4905 + $0x1b0] sm:$0xff]
    %v4961 = vld [vmem:[%s4905 + $0x1b8] sm:$0xff]
    %v4962 = vld [vmem:[%s4905 + $0x1c0] sm:$0xff]
    %v4963 = vld [vmem:[%s4905 + $0x1c8] sm:$0xff]
    %v4964 = vld [vmem:[%s4905 + $0x1d0] sm:$0xff]
    %v4965 = vld [vmem:[%s4905 + $0x1d8] sm:$0xff]
    %v4966 = vld [vmem:[%s4905 + $0x1e0] sm:$0xff]
    %v4967 = vld [vmem:[%s4905 + $0x1e8] sm:$0xff]
    %v4968 = vld [vmem:[%s4905 + $0x1f0] sm:$0xff]
    %v4969 = vld [vmem:[%s4905 + $0x1f8] sm:$0xff]
    %4970 = vmatprep.subr.mxu0 %v4967
    %4971 = vmatpush1.msra.mxu0 %v4966
    %4972 = vmatprep.subr.mxu0 %v4963
    %4973 = vmatpush1.msra.mxu0 %v4962
    %4974 = vmatprep.subr.mxu0 %v4959
    %4975 = vmatpush1.msra.mxu0 %v4958
    %4976 = vmatprep.subr.mxu0 %v4955
    %4977 = vmatpush1.msra.mxu0 %v4954
    %4978 = vmatprep.subr.mxu0 %v4951
    %4979 = vmatpush1.msra.mxu0 %v4950
    %4980 = vmatprep.subr.mxu0 %v4947
    %4981 = vmatpush1.msra.mxu0 %v4946
    %4982 = vmatprep.subr.mxu0 %v4943
    %4983 = vmatpush1.msra.mxu0 %v4942
    %4984 = vmatprep.subr.mxu0 %v4939
    %4985 = vmatpush1.msra.mxu0 %v4938
    %4986 = vmatprep.subr.mxu0 %v4935
    %4987 = vmatpush1.msra.mxu0 %v4934
    %4988 = vmatprep.subr.mxu0 %v4931
    %4989 = vmatpush1.msra.mxu0 %v4930
    %4990 = vmatprep.subr.mxu0 %v4927
    %4991 = vmatpush1.msra.mxu0 %v4926
    %4992 = vmatprep.subr.mxu0 %v4923
    %4993 = vmatpush1.msra.mxu0 %v4922
    %4994 = vmatprep.subr.mxu0 %v4919
    %4995 = vmatpush1.msra.mxu0 %v4918
    %4996 = vmatprep.subr.mxu0 %v4915
    %4997 = vmatpush1.msra.mxu0 %v4914
    %4998 = vmatprep.subr.mxu0 %v4911
    %4999 = vmatpush1.msra.mxu0 %v4910
    %5000 = vmatprep.subr.mxu0 %v4907
    %5001 = vmatpush1.msra.mxu0 %v4906
    %5002 = vmatprep.subr.mxu0 0.0
    %5003 = vmatpush2.msra.mxu0 0.0
    %5004 = vmatprep.subr.mxu0 0.0
    %5005 = vmatpush2.msra.mxu0 0.0
    %5006 = vmatprep.subr.mxu0 0.0
    %5007 = vmatpush2.msra.mxu0 0.0
    %5008 = vmatprep.subr.mxu0 0.0
    %5009 = vmatpush2.msra.mxu0 0.0
    %5010 = vmatprep.subr.mxu0 0.0
    %5011 = vmatpush2.msra.mxu0 0.0
    %5012 = vmatprep.subr.mxu0 0.0
    %5013 = vmatpush2.msra.mxu0 0.0
    %5014 = vmatprep.subr.mxu0 0.0
    %5015 = vmatpush2.msra.mxu0 0.0
    %5016 = vmatprep.subr.mxu0 0.0
    %5017 = vmatpush2.msra.mxu0 0.0
    %5018 = vmatprep.subr.mxu0 0.0
    %5019 = vmatpush2.msra.mxu0 0.0
    %5020 = vmatprep.subr.mxu0 0.0
    %5021 = vmatpush2.msra.mxu0 0.0
    %5022 = vmatprep.subr.mxu0 0.0
    %5023 = vmatpush2.msra.mxu0 0.0
    %5024 = vmatprep.subr.mxu0 0.0
    %5025 = vmatpush2.msra.mxu0 0.0
    %5026 = vmatprep.subr.mxu0 0.0
    %5027 = vmatpush2.msra.mxu0 0.0
    %5028 = vmatprep.subr.mxu0 0.0
    %5029 = vmatpush2.msra.mxu0 0.0
    %5030 = vmatprep.subr.mxu0 0.0
    %5031 = vmatpush2.msra.mxu0 0.0
    %5032 = vmatprep.subr.mxu0 0.0
    %5033 = vmatpush2.msra.mxu0 0.0
    %5034 = vmatprep.mubr.f32.mxu0 0.0
    %5035 = vmatmul.mubr.f32.gmra.mxu0 0.0
    %v5036 = vpop.f32.mrf.mxu0
    %v5037 = vadd.f32 0.0, %v5036
    %v5038 = vpop.f32.mrf.mxu0
    %v5039 = vadd.f32 0.0, %v5038
    %5040 = vdwg.mxu0
    %5041 = vmatprep.subr.mxu0 %v4969
    %5042 = vmatpush1.msra.mxu0 %v4968
    %5043 = vmatprep.subr.mxu0 %v4965
    %5044 = vmatpush1.msra.mxu0 %v4964
    %5045 = vmatprep.subr.mxu0 %v4961
    %5046 = vmatpush1.msra.mxu0 %v4960
    %5047 = vmatprep.subr.mxu0 %v4957
    %5048 = vmatpush1.msra.mxu0 %v4956
    %5049 = vmatprep.subr.mxu0 %v4953
    %5050 = vmatpush1.msra.mxu0 %v4952
    %5051 = vmatprep.subr.mxu0 %v4949
    %5052 = vmatpush1.msra.mxu0 %v4948
    %5053 = vmatprep.subr.mxu0 %v4945
    %5054 = vmatpush1.msra.mxu0 %v4944
    %5055 = vmatprep.subr.mxu0 %v4941
    %5056 = vmatpush1.msra.mxu0 %v4940
    %5057 = vmatprep.subr.mxu0 %v4937
    %5058 = vmatpush1.msra.mxu0 %v4936
    %5059 = vmatprep.subr.mxu0 %v4933
    %5060 = vmatpush1.msra.mxu0 %v4932
    %5061 = vmatprep.subr.mxu0 %v4929
    %5062 = vmatpush1.msra.mxu0 %v4928
    %5063 = vmatprep.subr.mxu0 %v4925
    %5064 = vmatpush1.msra.mxu0 %v4924
    %5065 = vmatprep.subr.mxu0 %v4921
    %5066 = vmatpush1.msra.mxu0 %v4920
    %5067 = vmatprep.subr.mxu0 %v4917
    %5068 = vmatpush1.msra.mxu0 %v4916
    %5069 = vmatprep.subr.mxu0 %v4913
    %5070 = vmatpush1.msra.mxu0 %v4912
    %5071 = vmatprep.subr.mxu0 %v4909
    %5072 = vmatpush1.msra.mxu0 %v4908
    %5073 = vmatprep.subr.mxu0 0.0
    %5074 = vmatpush2.msra.mxu0 0.0
    %5075 = vmatprep.subr.mxu0 0.0
    %5076 = vmatpush2.msra.mxu0 0.0
    %5077 = vmatprep.subr.mxu0 0.0
    %5078 = vmatpush2.msra.mxu0 0.0
    %5079 = vmatprep.subr.mxu0 0.0
    %5080 = vmatpush2.msra.mxu0 0.0
    %5081 = vmatprep.subr.mxu0 0.0
    %5082 = vmatpush2.msra.mxu0 0.0
    %5083 = vmatprep.subr.mxu0 0.0
    %5084 = vmatpush2.msra.mxu0 0.0
    %5085 = vmatprep.subr.mxu0 0.0
    %5086 = vmatpush2.msra.mxu0 0.0
    %5087 = vmatprep.subr.mxu0 0.0
    %5088 = vmatpush2.msra.mxu0 0.0
    %5089 = vmatprep.subr.mxu0 0.0
    %5090 = vmatpush2.msra.mxu0 0.0
    %5091 = vmatprep.subr.mxu0 0.0
    %5092 = vmatpush2.msra.mxu0 0.0
    %5093 = vmatprep.subr.mxu0 0.0
    %5094 = vmatpush2.msra.mxu0 0.0
    %5095 = vmatprep.subr.mxu0 0.0
    %5096 = vmatpush2.msra.mxu0 0.0
    %5097 = vmatprep.subr.mxu0 0.0
    %5098 = vmatpush2.msra.mxu0 0.0
    %5099 = vmatprep.subr.mxu0 0.0
    %5100 = vmatpush2.msra.mxu0 0.0
    %5101 = vmatprep.subr.mxu0 0.0
    %5102 = vmatpush2.msra.mxu0 0.0
    %5103 = vmatprep.subr.mxu0 0.0
    %5104 = vmatpush2.msra.mxu0 0.0
    %5105 = vmatprep.mubr.f32.mxu0 0.0
    %5106 = vmatmul.mubr.f32.gmra.mxu0 0.0
    %v5107 = vpop.f32.mrf.mxu0
    %v5108 = vadd.f32 0.0, %v5107
    %v5109 = vpop.f32.mrf.mxu0
    %v5110 = vadd.f32 0.0, %v5109
    %5111 = vdwg.mxu0
    %v5112 = vadd.f32 %v4901, %v5037
    %v5113 = vadd.f32 %v4902, %v5039
    %v5114 = vadd.f32 %v4903, %v5108
    %v5115 = vadd.f32 %v4904, %v5110
    %v5116 = vxor.u32 %v5112, 2147483648
    %v5117 = vmul.f32 %v5116, 1.442695
    %v5118 = vpow.pop %v5117
    %v5119 = vadd.f32 %v5118, 1.0
    %v5120 = vrcp.pop %v5119
    %v5121 = vmul.f32 1.0, %v5120
    %v5122 = vxor.u32 %v5113, 2147483648
    %v5123 = vmul.f32 %v5122, 1.442695
    %v5124 = vpow.pop %v5123
    %v5125 = vadd.f32 %v5124, 1.0
    %v5126 = vrcp.pop %v5125
    %v5127 = vmul.f32 1.0, %v5126
    %v5128 = vtanh.pop %v5114
    %v5129 = vxor.u32 %v5115, 2147483648
    %v5130 = vmul.f32 %v5129, 1.442695
    %v5131 = vpow.pop %v5130
    %v5132 = vadd.f32 %v5131, 1.0
    %v5133 = vrcp.pop %v5132
    %v5134 = vmul.f32 1.0, %v5133
    %v5135 = vmul.f32 %v5127, 0.0
    %v5136 = vmul.f32 %v5121, %v5128
    %v5137 = vadd.f32 %v5135, %v5136
    %v5138 = vtanh.pop %v5137
    %v5139 = vmul.f32 %v5134, %v5138
    %5140 = vst [vmem:[#allocation3] sm:$0xff] %v5139
    %v5141 = vld [vmem:[#allocation4 + $0x20] sm:$0xff]
    %v5142 = vld [vmem:[#allocation4 + $0x28] sm:$0xff]
    %v5143 = vld [vmem:[#allocation4 + $0x30] sm:$0xff]
    %v5144 = vld [vmem:[#allocation4 + $0x38] sm:$0xff]
    %v5145 = vld [vmem:[%s4905] sm:$0xff]
    %v5146 = vld [vmem:[%s4905 + $0x8] sm:$0xff]
    %v5147 = vld [vmem:[%s4905 + $0x10] sm:$0xff]
    %v5148 = vld [vmem:[%s4905 + $0x18] sm:$0xff]
    %v5149 = vld [vmem:[%s4905 + $0x20] sm:$0xff]
    %v5150 = vld [vmem:[%s4905 + $0x28] sm:$0xff]
    %v5151 = vld [vmem:[%s4905 + $0x30] sm:$0xff]
    %v5152 = vld [vmem:[%s4905 + $0x38] sm:$0xff]
    %v5153 = vld [vmem:[%s4905 + $0x40] sm:$0xff]
    %v5154 = vld [vmem:[%s4905 + $0x48] sm:$0xff]
    %v5155 = vld [vmem:[%s4905 + $0x50] sm:$0xff]
    %v5156 = vld [vmem:[%s4905 + $0x58] sm:$0xff]
    %v5157 = vld [vmem:[%s4905 + $0x60] sm:$0xff]
    %v5158 = vld [vmem:[%s4905 + $0x68] sm:$0xff]
    %v5159 = vld [vmem:[%s4905 + $0x70] sm:$0xff]
    %v5160 = vld [vmem:[%s4905 + $0x78] sm:$0xff]
    %v5161 = vld [vmem:[%s4905 + $0x80] sm:$0xff]
    %v5162 = vld [vmem:[%s4905 + $0x88] sm:$0xff]
    %v5163 = vld [vmem:[%s4905 + $0x90] sm:$0xff]
    %v5164 = vld [vmem:[%s4905 + $0x98] sm:$0xff]
    %v5165 = vld [vmem:[%s4905 + $0xa0] sm:$0xff]
    %v5166 = vld [vmem:[%s4905 + $0xa8] sm:$0xff]
    %v5167 = vld [vmem:[%s4905 + $0xb0] sm:$0xff]
    %v5168 = vld [vmem:[%s4905 + $0xb8] sm:$0xff]
    %v5169 = vld [vmem:[%s4905 + $0xc0] sm:$0xff]
    %v5170 = vld [vmem:[%s4905 + $0xc8] sm:$0xff]
    %v5171 = vld [vmem:[%s4905 + $0xd0] sm:$0xff]
    %v5172 = vld [vmem:[%s4905 + $0xd8] sm:$0xff]
    %v5173 = vld [vmem:[%s4905 + $0xe0] sm:$0xff]
    %v5174 = vld [vmem:[%s4905 + $0xe8] sm:$0xff]
    %v5175 = vld [vmem:[%s4905 + $0xf0] sm:$0xff]
    %v5176 = vld [vmem:[%s4905 + $0xf8] sm:$0xff]
    %v5177 = vld [vmem:[%s4905 + $0x100] sm:$0xff]
    %v5178 = vld [vmem:[%s4905 + $0x108] sm:$0xff]
    %v5179 = vld [vmem:[%s4905 + $0x110] sm:$0xff]
    %v5180 = vld [vmem:[%s4905 + $0x118] sm:$0xff]
    %v5181 = vld [vmem:[%s4905 + $0x120] sm:$0xff]
    %v5182 = vld [vmem:[%s4905 + $0x128] sm:$0xff]
    %v5183 = vld [vmem:[%s4905 + $0x130] sm:$0xff]
    %v5184 = vld [vmem:[%s4905 + $0x138] sm:$0xff]
    %v5185 = vld [vmem:[%s4905 + $0x140] sm:$0xff]
    %v5186 = vld [vmem:[%s4905 + $0x148] sm:$0xff]
    %v5187 = vld [vmem:[%s4905 + $0x150] sm:$0xff]
    %v5188 = vld [vmem:[%s4905 + $0x158] sm:$0xff]
    %v5189 = vld [vmem:[%s4905 + $0x160] sm:$0xff]
    %v5190 = vld [vmem:[%s4905 + $0x168] sm:$0xff]
    %v5191 = vld [vmem:[%s4905 + $0x170] sm:$0xff]
    %v5192 = vld [vmem:[%s4905 + $0x178] sm:$0xff]
    %v5193 = vld [vmem:[%s4905 + $0x180] sm:$0xff]
    %v5194 = vld [vmem:[%s4905 + $0x188] sm:$0xff]
    %v5195 = vld [vmem:[%s4905 + $0x190] sm:$0xff]
    %v5196 = vld [vmem:[%s4905 + $0x198] sm:$0xff]
    %v5197 = vld [vmem:[%s4905 + $0x1a0] sm:$0xff]
    %v5198 = vld [vmem:[%s4905 + $0x1a8] sm:$0xff]
    %v5199 = vld [vmem:[%s4905 + $0x1b0] sm:$0xff]
    %v5200 = vld [vmem:[%s4905 + $0x1b8] sm:$0xff]
    %v5201 = vld [vmem:[%s4905 + $0x1c0] sm:$0xff]
    %v5202 = vld [vmem:[%s4905 + $0x1c8] sm:$0xff]
    %v5203 = vld [vmem:[%s4905 + $0x1d0] sm:$0xff]
    %v5204 = vld [vmem:[%s4905 + $0x1d8] sm:$0xff]
    %v5205 = vld [vmem:[%s4905 + $0x1e0] sm:$0xff]
    %v5206 = vld [vmem:[%s4905 + $0x1e8] sm:$0xff]
    %v5207 = vld [vmem:[%s4905 + $0x1f0] sm:$0xff]
    %v5208 = vld [vmem:[%s4905 + $0x1f8] sm:$0xff]
    %5209 = vmatprep.subr.mxu0 %v5206
    %5210 = vmatpush1.msra.mxu0 %v5205
    %5211 = vmatprep.subr.mxu0 %v5202
    %5212 = vmatpush1.msra.mxu0 %v5201
    %5213 = vmatprep.subr.mxu0 %v5198
    %5214 = vmatpush1.msra.mxu0 %v5197
    %5215 = vmatprep.subr.mxu0 %v5194
    %5216 = vmatpush1.msra.mxu0 %v5193
    %5217 = vmatprep.subr.mxu0 %v5190
    %5218 = vmatpush1.msra.mxu0 %v5189
    %5219 = vmatprep.subr.mxu0 %v5186
    %5220 = vmatpush1.msra.mxu0 %v5185
    %5221 = vmatprep.subr.mxu0 %v5182
    %5222 = vmatpush1.msra.mxu0 %v5181
    %5223 = vmatprep.subr.mxu0 %v5178
    %5224 = vmatpush1.msra.mxu0 %v5177
    %5225 = vmatprep.subr.mxu0 %v5174
    %5226 = vmatpush1.msra.mxu0 %v5173
    %5227 = vmatprep.subr.mxu0 %v5170
    %5228 = vmatpush1.msra.mxu0 %v5169
    %5229 = vmatprep.subr.mxu0 %v5166
    %5230 = vmatpush1.msra.mxu0 %v5165
    %5231 = vmatprep.subr.mxu0 %v5162
    %5232 = vmatpush1.msra.mxu0 %v5161
    %5233 = vmatprep.subr.mxu0 %v5158
    %5234 = vmatpush1.msra.mxu0 %v5157
    %5235 = vmatprep.subr.mxu0 %v5154
    %5236 = vmatpush1.msra.mxu0 %v5153
    %5237 = vmatprep.subr.mxu0 %v5150
    %5238 = vmatpush1.msra.mxu0 %v5149
    %5239 = vmatprep.subr.mxu0 %v5146
    %5240 = vmatpush1.msra.mxu0 %v5145
    %5241 = vmatprep.subr.mxu0 0.0
    %5242 = vmatpush2.msra.mxu0 0.0
    %5243 = vmatprep.subr.mxu0 0.0
    %5244 = vmatpush2.msra.mxu0 0.0
    %5245 = vmatprep.subr.mxu0 0.0
    %5246 = vmatpush2.msra.mxu0 0.0
    %5247 = vmatprep.subr.mxu0 0.0
    %5248 = vmatpush2.msra.mxu0 0.0
    %5249 = vmatprep.subr.mxu0 0.0
    %5250 = vmatpush2.msra.mxu0 0.0
    %5251 = vmatprep.subr.mxu0 0.0
    %5252 = vmatpush2.msra.mxu0 0.0
    %5253 = vmatprep.subr.mxu0 0.0
    %5254 = vmatpush2.msra.mxu0 0.0
    %5255 = vmatprep.subr.mxu0 0.0
    %5256 = vmatpush2.msra.mxu0 0.0
    %5257 = vmatprep.subr.mxu0 0.0
    %5258 = vmatpush2.msra.mxu0 0.0
    %5259 = vmatprep.subr.mxu0 0.0
    %5260 = vmatpush2.msra.mxu0 0.0
    %5261 = vmatprep.subr.mxu0 0.0
    %5262 = vmatpush2.msra.mxu0 0.0
    %5263 = vmatprep.subr.mxu0 0.0
    %5264 = vmatpush2.msra.mxu0 0.0
    %5265 = vmatprep.subr.mxu0 0.0
    %5266 = vmatpush2.msra.mxu0 0.0
    %5267 = vmatprep.subr.mxu0 0.0
    %5268 = vmatpush2.msra.mxu0 0.0
    %5269 = vmatprep.subr.mxu0 0.0
    %5270 = vmatpush2.msra.mxu0 0.0
    %5271 = vmatprep.subr.mxu0 0.0
    %5272 = vmatpush2.msra.mxu0 0.0
    %5273 = vmatprep.mubr.f32.mxu0 0.0
    %5274 = vmatmul.mubr.f32.gmra.mxu0 %v5139
    %v5275 = vpop.f32.mrf.mxu0
    %v5276 = vadd.f32 0.0, %v5275
    %v5277 = vpop.f32.mrf.mxu0
    %v5278 = vadd.f32 0.0, %v5277
    %5279 = vdwg.mxu0
    %5280 = vmatprep.subr.mxu0 %v5208
    %5281 = vmatpush1.msra.mxu0 %v5207
    %5282 = vmatprep.subr.mxu0 %v5204
    %5283 = vmatpush1.msra.mxu0 %v5203
    %5284 = vmatprep.subr.mxu0 %v5200
    %5285 = vmatpush1.msra.mxu0 %v5199
    %5286 = vmatprep.subr.mxu0 %v5196
    %5287 = vmatpush1.msra.mxu0 %v5195
    %5288 = vmatprep.subr.mxu0 %v5192
    %5289 = vmatpush1.msra.mxu0 %v5191
    %5290 = vmatprep.subr.mxu0 %v5188
    %5291 = vmatpush1.msra.mxu0 %v5187
    %5292 = vmatprep.subr.mxu0 %v5184
    %5293 = vmatpush1.msra.mxu0 %v5183
    %5294 = vmatprep.subr.mxu0 %v5180
    %5295 = vmatpush1.msra.mxu0 %v5179
    %5296 = vmatprep.subr.mxu0 %v5176
    %5297 = vmatpush1.msra.mxu0 %v5175
    %5298 = vmatprep.subr.mxu0 %v5172
    %5299 = vmatpush1.msra.mxu0 %v5171
    %5300 = vmatprep.subr.mxu0 %v5168
    %5301 = vmatpush1.msra.mxu0 %v5167
    %5302 = vmatprep.subr.mxu0 %v5164
    %5303 = vmatpush1.msra.mxu0 %v5163
    %5304 = vmatprep.subr.mxu0 %v5160
    %5305 = vmatpush1.msra.mxu0 %v5159
    %5306 = vmatprep.subr.mxu0 %v5156
    %5307 = vmatpush1.msra.mxu0 %v5155
    %5308 = vmatprep.subr.mxu0 %v5152
    %5309 = vmatpush1.msra.mxu0 %v5151
    %5310 = vmatprep.subr.mxu0 %v5148
    %5311 = vmatpush1.msra.mxu0 %v5147
    %5312 = vmatprep.subr.mxu0 0.0
    %5313 = vmatpush2.msra.mxu0 0.0
    %5314 = vmatprep.subr.mxu0 0.0
    %5315 = vmatpush2.msra.mxu0 0.0
    %5316 = vmatprep.subr.mxu0 0.0
    %5317 = vmatpush2.msra.mxu0 0.0
    %5318 = vmatprep.subr.mxu0 0.0
    %5319 = vmatpush2.msra.mxu0 0.0
    %5320 = vmatprep.subr.mxu0 0.0
    %5321 = vmatpush2.msra.mxu0 0.0
    %5322 = vmatprep.subr.mxu0 0.0
    %5323 = vmatpush2.msra.mxu0 0.0
    %5324 = vmatprep.subr.mxu0 0.0
    %5325 = vmatpush2.msra.mxu0 0.0
    %5326 = vmatprep.subr.mxu0 0.0
    %5327 = vmatpush2.msra.mxu0 0.0
    %5328 = vmatprep.subr.mxu0 0.0
    %5329 = vmatpush2.msra.mxu0 0.0
    %5330 = vmatprep.subr.mxu0 0.0
    %5331 = vmatpush2.msra.mxu0 0.0
    %5332 = vmatprep.subr.mxu0 0.0
    %5333 = vmatpush2.msra.mxu0 0.0
    %5334 = vmatprep.subr.mxu0 0.0
    %5335 = vmatpush2.msra.mxu0 0.0
    %5336 = vmatprep.subr.mxu0 0.0
    %5337 = vmatpush2.msra.mxu0 0.0
    %5338 = vmatprep.subr.mxu0 0.0
    %5339 = vmatpush2.msra.mxu0 0.0
    %5340 = vmatprep.subr.mxu0 0.0
    %5341 = vmatpush2.msra.mxu0 0.0
    %5342 = vmatprep.subr.mxu0 0.0
    %5343 = vmatpush2.msra.mxu0 0.0
    %5344 = vmatprep.mubr.f32.mxu0 0.0
    %5345 = vmatmul.mubr.f32.gmra.mxu0 %v5139
    %v5346 = vpop.f32.mrf.mxu0
    %v5347 = vadd.f32 0.0, %v5346
    %v5348 = vpop.f32.mrf.mxu0
    %v5349 = vadd.f32 0.0, %v5348
    %5350 = vdwg.mxu0
    %v5351 = vadd.f32 %v5141, %v5276
    %v5352 = vadd.f32 %v5142, %v5278
    %v5353 = vadd.f32 %v5143, %v5347
    %v5354 = vadd.f32 %v5144, %v5349
    %v5355 = vxor.u32 %v5351, 2147483648
    %v5356 = vmul.f32 %v5355, 1.442695
    %v5357 = vpow.pop %v5356
    %v5358 = vadd.f32 %v5357, 1.0
    %v5359 = vrcp.pop %v5358
    %v5360 = vmul.f32 1.0, %v5359
    %v5361 = vxor.u32 %v5352, 2147483648
    %v5362 = vmul.f32 %v5361, 1.442695
    %v5363 = vpow.pop %v5362
    %v5364 = vadd.f32 %v5363, 1.0
    %v5365 = vrcp.pop %v5364
    %v5366 = vmul.f32 1.0, %v5365
    %v5367 = vtanh.pop %v5353
    %v5368 = vxor.u32 %v5354, 2147483648
    %v5369 = vmul.f32 %v5368, 1.442695
    %v5370 = vpow.pop %v5369
    %v5371 = vadd.f32 %v5370, 1.0
    %v5372 = vrcp.pop %v5371
    %v5373 = vmul.f32 1.0, %v5372
    %v5374 = vmul.f32 %v5366, %v5137
    %v5375 = vmul.f32 %v5360, %v5367
    %v5376 = vadd.f32 %v5374, %v5375
    %v5377 = vtanh.pop %v5376
    %v5378 = vmul.f32 %v5373, %v5377
    %5379 = vst [vmem:[#allocation3 + $0x8] sm:$0xff] %v5378
    %v5380 = vld [vmem:[#allocation4 + $0x40] sm:$0xff]
    %v5381 = vld [vmem:[#allocation4 + $0x48] sm:$0xff]
    %v5382 = vld [vmem:[#allocation4 + $0x50] sm:$0xff]
    %v5383 = vld [vmem:[#allocation4 + $0x58] sm:$0xff]
    %v5384 = vld [vmem:[%s4905] sm:$0xff]
    %v5385 = vld [vmem:[%s4905 + $0x8] sm:$0xff]
    %v5386 = vld [vmem:[%s4905 + $0x10] sm:$0xff]
    %v5387 = vld [vmem:[%s4905 + $0x18] sm:$0xff]
    %v5388 = vld [vmem:[%s4905 + $0x20] sm:$0xff]
    %v5389 = vld [vmem:[%s4905 + $0x28] sm:$0xff]
    %v5390 = vld [vmem:[%s4905 + $0x30] sm:$0xff]
    %v5391 = vld [vmem:[%s4905 + $0x38] sm:$0xff]
    %v5392 = vld [vmem:[%s4905 + $0x40] sm:$0xff]
    %v5393 = vld [vmem:[%s4905 + $0x48] sm:$0xff]
    %v5394 = vld [vmem:[%s4905 + $0x50] sm:$0xff]
    %v5395 = vld [vmem:[%s4905 + $0x58] sm:$0xff]
    %v5396 = vld [vmem:[%s4905 + $0x60] sm:$0xff]
    %v5397 = vld [vmem:[%s4905 + $0x68] sm:$0xff]
    %v5398 = vld [vmem:[%s4905 + $0x70] sm:$0xff]
    %v5399 = vld [vmem:[%s4905 + $0x78] sm:$0xff]
    %v5400 = vld [vmem:[%s4905 + $0x80] sm:$0xff]
    %v5401 = vld [vmem:[%s4905 + $0x88] sm:$0xff]
    %v5402 = vld [vmem:[%s4905 + $0x90] sm:$0xff]
    %v5403 = vld [vmem:[%s4905 + $0x98] sm:$0xff]
    %v5404 = vld [vmem:[%s4905 + $0xa0] sm:$0xff]
    %v5405 = vld [vmem:[%s4905 + $0xa8] sm:$0xff]
    %v5406 = vld [vmem:[%s4905 + $0xb0] sm:$0xff]
    %v5407 = vld [vmem:[%s4905 + $0xb8] sm:$0xff]
    %v5408 = vld [vmem:[%s4905 + $0xc0] sm:$0xff]
    %v5409 = vld [vmem:[%s4905 + $0xc8] sm:$0xff]
    %v5410 = vld [vmem:[%s4905 + $0xd0] sm:$0xff]
    %v5411 = vld [vmem:[%s4905 + $0xd8] sm:$0xff]
    %v5412 = vld [vmem:[%s4905 + $0xe0] sm:$0xff]
    %v5413 = vld [vmem:[%s4905 + $0xe8] sm:$0xff]
    %v5414 = vld [vmem:[%s4905 + $0xf0] sm:$0xff]
    %v5415 = vld [vmem:[%s4905 + $0xf8] sm:$0xff]
    %v5416 = vld [vmem:[%s4905 + $0x100] sm:$0xff]
    %v5417 = vld [vmem:[%s4905 + $0x108] sm:$0xff]
    %v5418 = vld [vmem:[%s4905 + $0x110] sm:$0xff]
    %v5419 = vld [vmem:[%s4905 + $0x118] sm:$0xff]
    %v5420 = vld [vmem:[%s4905 + $0x120] sm:$0xff]
    %v5421 = vld [vmem:[%s4905 + $0x128] sm:$0xff]
    %v5422 = vld [vmem:[%s4905 + $0x130] sm:$0xff]
    %v5423 = vld [vmem:[%s4905 + $0x138] sm:$0xff]
    %v5424 = vld [vmem:[%s4905 + $0x140] sm:$0xff]
    %v5425 = vld [vmem:[%s4905 + $0x148] sm:$0xff]
    %v5426 = vld [vmem:[%s4905 + $0x150] sm:$0xff]
    %v5427 = vld [vmem:[%s4905 + $0x158] sm:$0xff]
    %v5428 = vld [vmem:[%s4905 + $0x160] sm:$0xff]
    %v5429 = vld [vmem:[%s4905 + $0x168] sm:$0xff]
    %v5430 = vld [vmem:[%s4905 + $0x170] sm:$0xff]
    %v5431 = vld [vmem:[%s4905 + $0x178] sm:$0xff]
    %v5432 = vld [vmem:[%s4905 + $0x180] sm:$0xff]
    %v5433 = vld [vmem:[%s4905 + $0x188] sm:$0xff]
    %v5434 = vld [vmem:[%s4905 + $0x190] sm:$0xff]
    %v5435 = vld [vmem:[%s4905 + $0x198] sm:$0xff]
    %v5436 = vld [vmem:[%s4905 + $0x1a0] sm:$0xff]
    %v5437 = vld [vmem:[%s4905 + $0x1a8] sm:$0xff]
    %v5438 = vld [vmem:[%s4905 + $0x1b0] sm:$0xff]
    %v5439 = vld [vmem:[%s4905 + $0x1b8] sm:$0xff]
    %v5440 = vld [vmem:[%s4905 + $0x1c0] sm:$0xff]
    %v5441 = vld [vmem:[%s4905 + $0x1c8] sm:$0xff]
    %v5442 = vld [vmem:[%s4905 + $0x1d0] sm:$0xff]
    %v5443 = vld [vmem:[%s4905 + $0x1d8] sm:$0xff]
    %v5444 = vld [vmem:[%s4905 + $0x1e0] sm:$0xff]
    %v5445 = vld [vmem:[%s4905 + $0x1e8] sm:$0xff]
    %v5446 = vld [vmem:[%s4905 + $0x1f0] sm:$0xff]
    %v5447 = vld [vmem:[%s4905 + $0x1f8] sm:$0xff]
    %5448 = vmatprep.subr.mxu0 %v5445
    %5449 = vmatpush1.msra.mxu0 %v5444
    %5450 = vmatprep.subr.mxu0 %v5441
    %5451 = vmatpush1.msra.mxu0 %v5440
    %5452 = vmatprep.subr.mxu0 %v5437
    %5453 = vmatpush1.msra.mxu0 %v5436
    %5454 = vmatprep.subr.mxu0 %v5433
    %5455 = vmatpush1.msra.mxu0 %v5432
    %5456 = vmatprep.subr.mxu0 %v5429
    %5457 = vmatpush1.msra.mxu0 %v5428
    %5458 = vmatprep.subr.mxu0 %v5425
    %5459 = vmatpush1.msra.mxu0 %v5424
    %5460 = vmatprep.subr.mxu0 %v5421
    %5461 = vmatpush1.msra.mxu0 %v5420
    %5462 = vmatprep.subr.mxu0 %v5417
    %5463 = vmatpush1.msra.mxu0 %v5416
    %5464 = vmatprep.subr.mxu0 %v5413
    %5465 = vmatpush1.msra.mxu0 %v5412
    %5466 = vmatprep.subr.mxu0 %v5409
    %5467 = vmatpush1.msra.mxu0 %v5408
    %5468 = vmatprep.subr.mxu0 %v5405
    %5469 = vmatpush1.msra.mxu0 %v5404
    %5470 = vmatprep.subr.mxu0 %v5401
    %5471 = vmatpush1.msra.mxu0 %v5400
    %5472 = vmatprep.subr.mxu0 %v5397
    %5473 = vmatpush1.msra.mxu0 %v5396
    %5474 = vmatprep.subr.mxu0 %v5393
    %5475 = vmatpush1.msra.mxu0 %v5392
    %5476 = vmatprep.subr.mxu0 %v5389
    %5477 = vmatpush1.msra.mxu0 %v5388
    %5478 = vmatprep.subr.mxu0 %v5385
    %5479 = vmatpush1.msra.mxu0 %v5384
    %5480 = vmatprep.subr.mxu0 0.0
    %5481 = vmatpush2.msra.mxu0 0.0
    %5482 = vmatprep.subr.mxu0 0.0
    %5483 = vmatpush2.msra.mxu0 0.0
    %5484 = vmatprep.subr.mxu0 0.0
    %5485 = vmatpush2.msra.mxu0 0.0
    %5486 = vmatprep.subr.mxu0 0.0
    %5487 = vmatpush2.msra.mxu0 0.0
    %5488 = vmatprep.subr.mxu0 0.0
    %5489 = vmatpush2.msra.mxu0 0.0
    %5490 = vmatprep.subr.mxu0 0.0
    %5491 = vmatpush2.msra.mxu0 0.0
    %5492 = vmatprep.subr.mxu0 0.0
    %5493 = vmatpush2.msra.mxu0 0.0
    %5494 = vmatprep.subr.mxu0 0.0
    %5495 = vmatpush2.msra.mxu0 0.0
    %5496 = vmatprep.subr.mxu0 0.0
    %5497 = vmatpush2.msra.mxu0 0.0
    %5498 = vmatprep.subr.mxu0 0.0
    %5499 = vmatpush2.msra.mxu0 0.0
    %5500 = vmatprep.subr.mxu0 0.0
    %5501 = vmatpush2.msra.mxu0 0.0
    %5502 = vmatprep.subr.mxu0 0.0
    %5503 = vmatpush2.msra.mxu0 0.0
    %5504 = vmatprep.subr.mxu0 0.0
    %5505 = vmatpush2.msra.mxu0 0.0
    %5506 = vmatprep.subr.mxu0 0.0
    %5507 = vmatpush2.msra.mxu0 0.0
    %5508 = vmatprep.subr.mxu0 0.0
    %5509 = vmatpush2.msra.mxu0 0.0
    %5510 = vmatprep.subr.mxu0 0.0
    %5511 = vmatpush2.msra.mxu0 0.0
    %5512 = vmatprep.mubr.f32.mxu0 0.0
    %5513 = vmatmul.mubr.f32.gmra.mxu0 %v5378
    %v5514 = vpop.f32.mrf.mxu0
    %v5515 = vadd.f32 0.0, %v5514
    %v5516 = vpop.f32.mrf.mxu0
    %v5517 = vadd.f32 0.0, %v5516
    %5518 = vdwg.mxu0
    %5519 = vmatprep.subr.mxu0 %v5447
    %5520 = vmatpush1.msra.mxu0 %v5446
    %5521 = vmatprep.subr.mxu0 %v5443
    %5522 = vmatpush1.msra.mxu0 %v5442
    %5523 = vmatprep.subr.mxu0 %v5439
    %5524 = vmatpush1.msra.mxu0 %v5438
    %5525 = vmatprep.subr.mxu0 %v5435
    %5526 = vmatpush1.msra.mxu0 %v5434
    %5527 = vmatprep.subr.mxu0 %v5431
    %5528 = vmatpush1.msra.mxu0 %v5430
    %5529 = vmatprep.subr.mxu0 %v5427
    %5530 = vmatpush1.msra.mxu0 %v5426
    %5531 = vmatprep.subr.mxu0 %v5423
    %5532 = vmatpush1.msra.mxu0 %v5422
    %5533 = vmatprep.subr.mxu0 %v5419
    %5534 = vmatpush1.msra.mxu0 %v5418
    %5535 = vmatprep.subr.mxu0 %v5415
    %5536 = vmatpush1.msra.mxu0 %v5414
    %5537 = vmatprep.subr.mxu0 %v5411
    %5538 = vmatpush1.msra.mxu0 %v5410
    %5539 = vmatprep.subr.mxu0 %v5407
    %5540 = vmatpush1.msra.mxu0 %v5406
    %5541 = vmatprep.subr.mxu0 %v5403
    %5542 = vmatpush1.msra.mxu0 %v5402
    %5543 = vmatprep.subr.mxu0 %v5399
    %5544 = vmatpush1.msra.mxu0 %v5398
    %5545 = vmatprep.subr.mxu0 %v5395
    %5546 = vmatpush1.msra.mxu0 %v5394
    %5547 = vmatprep.subr.mxu0 %v5391
    %5548 = vmatpush1.msra.mxu0 %v5390
    %5549 = vmatprep.subr.mxu0 %v5387
    %5550 = vmatpush1.msra.mxu0 %v5386
    %5551 = vmatprep.subr.mxu0 0.0
    %5552 = vmatpush2.msra.mxu0 0.0
    %5553 = vmatprep.subr.mxu0 0.0
    %5554 = vmatpush2.msra.mxu0 0.0
    %5555 = vmatprep.subr.mxu0 0.0
    %5556 = vmatpush2.msra.mxu0 0.0
    %5557 = vmatprep.subr.mxu0 0.0
    %5558 = vmatpush2.msra.mxu0 0.0
    %5559 = vmatprep.subr.mxu0 0.0
    %5560 = vmatpush2.msra.mxu0 0.0
    %5561 = vmatprep.subr.mxu0 0.0
    %5562 = vmatpush2.msra.mxu0 0.0
    %5563 = vmatprep.subr.mxu0 0.0
    %5564 = vmatpush2.msra.mxu0 0.0
    %5565 = vmatprep.subr.mxu0 0.0
    %5566 = vmatpush2.msra.mxu0 0.0
    %5567 = vmatprep.subr.mxu0 0.0
    %5568 = vmatpush2.msra.mxu0 0.0
    %5569 = vmatprep.subr.mxu0 0.0
    %5570 = vmatpush2.msra.mxu0 0.0
    %5571 = vmatprep.subr.mxu0 0.0
    %5572 = vmatpush2.msra.mxu0 0.0
    %5573 = vmatprep.subr.mxu0 0.0
    %5574 = vmatpush2.msra.mxu0 0.0
    %5575 = vmatprep.subr.mxu0 0.0
    %5576 = vmatpush2.msra.mxu0 0.0
    %5577 = vmatprep.subr.mxu0 0.0
    %5578 = vmatpush2.msra.mxu0 0.0
    %5579 = vmatprep.subr.mxu0 0.0
    %5580 = vmatpush2.msra.mxu0 0.0
    %5581 = vmatprep.subr.mxu0 0.0
    %5582 = vmatpush2.msra.mxu0 0.0
    %5583 = vmatprep.mubr.f32.mxu0 0.0
    %5584 = vmatmul.mubr.f32.gmra.mxu0 %v5378
    %v5585 = vpop.f32.mrf.mxu0
    %v5586 = vadd.f32 0.0, %v5585
    %v5587 = vpop.f32.mrf.mxu0
    %v5588 = vadd.f32 0.0, %v5587
    %5589 = vdwg.mxu0
    %v5590 = vadd.f32 %v5380, %v5515
    %v5591 = vadd.f32 %v5381, %v5517
    %v5592 = vadd.f32 %v5382, %v5586
    %v5593 = vadd.f32 %v5383, %v5588
    %v5594 = vxor.u32 %v5590, 2147483648
    %v5595 = vmul.f32 %v5594, 1.442695
    %v5596 = vpow.pop %v5595
    %v5597 = vadd.f32 %v5596, 1.0
    %v5598 = vrcp.pop %v5597
    %v5599 = vmul.f32 1.0, %v5598
    %v5600 = vxor.u32 %v5591, 2147483648
    %v5601 = vmul.f32 %v5600, 1.442695
    %v5602 = vpow.pop %v5601
    %v5603 = vadd.f32 %v5602, 1.0
    %v5604 = vrcp.pop %v5603
    %v5605 = vmul.f32 1.0, %v5604
    %v5606 = vtanh.pop %v5592
    %v5607 = vxor.u32 %v5593, 2147483648
    %v5608 = vmul.f32 %v5607, 1.442695
    %v5609 = vpow.pop %v5608
    %v5610 = vadd.f32 %v5609, 1.0
    %v5611 = vrcp.pop %v5610
    %v5612 = vmul.f32 1.0, %v5611
    %v5613 = vmul.f32 %v5605, %v5376
    %v5614 = vmul.f32 %v5599, %v5606
    %v5615 = vadd.f32 %v5613, %v5614
    %v5616 = vtanh.pop %v5615
    %v5617 = vmul.f32 %v5612, %v5616
    %5618 = vst [vmem:[#allocation3 + $0x10] sm:$0xff] %v5617
    %v5619 = vld [vmem:[#allocation4 + $0x60] sm:$0xff]
    %v5620 = vld [vmem:[#allocation4 + $0x68] sm:$0xff]
    %v5621 = vld [vmem:[#allocation4 + $0x70] sm:$0xff]
    %v5622 = vld [vmem:[#allocation4 + $0x78] sm:$0xff]
    %v5623 = vld [vmem:[%s4905] sm:$0xff]
    %v5624 = vld [vmem:[%s4905 + $0x8] sm:$0xff]
    %v5625 = vld [vmem:[%s4905 + $0x10] sm:$0xff]
    %v5626 = vld [vmem:[%s4905 + $0x18] sm:$0xff]
    %v5627 = vld [vmem:[%s4905 + $0x20] sm:$0xff]
    %v5628 = vld [vmem:[%s4905 + $0x28] sm:$0xff]
    %v5629 = vld [vmem:[%s4905 + $0x30] sm:$0xff]
    %v5630 = vld [vmem:[%s4905 + $0x38] sm:$0xff]
    %v5631 = vld [vmem:[%s4905 + $0x40] sm:$0xff]
    %v5632 = vld [vmem:[%s4905 + $0x48] sm:$0xff]
    %v5633 = vld [vmem:[%s4905 + $0x50] sm:$0xff]
    %v5634 = vld [vmem:[%s4905 + $0x58] sm:$0xff]
    %v5635 = vld [vmem:[%s4905 + $0x60] sm:$0xff]
    %v5636 = vld [vmem:[%s4905 + $0x68] sm:$0xff]
    %v5637 = vld [vmem:[%s4905 + $0x70] sm:$0xff]
    %v5638 = vld [vmem:[%s4905 + $0x78] sm:$0xff]
    %v5639 = vld [vmem:[%s4905 + $0x80] sm:$0xff]
    %v5640 = vld [vmem:[%s4905 + $0x88] sm:$0xff]
    %v5641 = vld [vmem:[%s4905 + $0x90] sm:$0xff]
    %v5642 = vld [vmem:[%s4905 + $0x98] sm:$0xff]
    %v5643 = vld [vmem:[%s4905 + $0xa0] sm:$0xff]
    %v5644 = vld [vmem:[%s4905 + $0xa8] sm:$0xff]
    %v5645 = vld [vmem:[%s4905 + $0xb0] sm:$0xff]
    %v5646 = vld [vmem:[%s4905 + $0xb8] sm:$0xff]
    %v5647 = vld [vmem:[%s4905 + $0xc0] sm:$0xff]
    %v5648 = vld [vmem:[%s4905 + $0xc8] sm:$0xff]
    %v5649 = vld [vmem:[%s4905 + $0xd0] sm:$0xff]
    %v5650 = vld [vmem:[%s4905 + $0xd8] sm:$0xff]
    %v5651 = vld [vmem:[%s4905 + $0xe0] sm:$0xff]
    %v5652 = vld [vmem:[%s4905 + $0xe8] sm:$0xff]
    %v5653 = vld [vmem:[%s4905 + $0xf0] sm:$0xff]
    %v5654 = vld [vmem:[%s4905 + $0xf8] sm:$0xff]
    %v5655 = vld [vmem:[%s4905 + $0x100] sm:$0xff]
    %v5656 = vld [vmem:[%s4905 + $0x108] sm:$0xff]
    %v5657 = vld [vmem:[%s4905 + $0x110] sm:$0xff]
    %v5658 = vld [vmem:[%s4905 + $0x118] sm:$0xff]
    %v5659 = vld [vmem:[%s4905 + $0x120] sm:$0xff]
    %v5660 = vld [vmem:[%s4905 + $0x128] sm:$0xff]
    %v5661 = vld [vmem:[%s4905 + $0x130] sm:$0xff]
    %v5662 = vld [vmem:[%s4905 + $0x138] sm:$0xff]
    %v5663 = vld [vmem:[%s4905 + $0x140] sm:$0xff]
    %v5664 = vld [vmem:[%s4905 + $0x148] sm:$0xff]
    %v5665 = vld [vmem:[%s4905 + $0x150] sm:$0xff]
    %v5666 = vld [vmem:[%s4905 + $0x158] sm:$0xff]
    %v5667 = vld [vmem:[%s4905 + $0x160] sm:$0xff]
    %v5668 = vld [vmem:[%s4905 + $0x168] sm:$0xff]
    %v5669 = vld [vmem:[%s4905 + $0x170] sm:$0xff]
    %v5670 = vld [vmem:[%s4905 + $0x178] sm:$0xff]
    %v5671 = vld [vmem:[%s4905 + $0x180] sm:$0xff]
    %v5672 = vld [vmem:[%s4905 + $0x188] sm:$0xff]
    %v5673 = vld [vmem:[%s4905 + $0x190] sm:$0xff]
    %v5674 = vld [vmem:[%s4905 + $0x198] sm:$0xff]
    %v5675 = vld [vmem:[%s4905 + $0x1a0] sm:$0xff]
    %v5676 = vld [vmem:[%s4905 + $0x1a8] sm:$0xff]
    %v5677 = vld [vmem:[%s4905 + $0x1b0] sm:$0xff]
    %v5678 = vld [vmem:[%s4905 + $0x1b8] sm:$0xff]
    %v5679 = vld [vmem:[%s4905 + $0x1c0] sm:$0xff]
    %v5680 = vld [vmem:[%s4905 + $0x1c8] sm:$0xff]
    %v5681 = vld [vmem:[%s4905 + $0x1d0] sm:$0xff]
    %v5682 = vld [vmem:[%s4905 + $0x1d8] sm:$0xff]
    %v5683 = vld [vmem:[%s4905 + $0x1e0] sm:$0xff]
    %v5684 = vld [vmem:[%s4905 + $0x1e8] sm:$0xff]
    %v5685 = vld [vmem:[%s4905 + $0x1f0] sm:$0xff]
    %v5686 = vld [vmem:[%s4905 + $0x1f8] sm:$0xff]
    %5687 = vmatprep.subr.mxu0 %v5684
    %5688 = vmatpush1.msra.mxu0 %v5683
    %5689 = vmatprep.subr.mxu0 %v5680
    %5690 = vmatpush1.msra.mxu0 %v5679
    %5691 = vmatprep.subr.mxu0 %v5676
    %5692 = vmatpush1.msra.mxu0 %v5675
    %5693 = vmatprep.subr.mxu0 %v5672
    %5694 = vmatpush1.msra.mxu0 %v5671
    %5695 = vmatprep.subr.mxu0 %v5668
    %5696 = vmatpush1.msra.mxu0 %v5667
    %5697 = vmatprep.subr.mxu0 %v5664
    %5698 = vmatpush1.msra.mxu0 %v5663
    %5699 = vmatprep.subr.mxu0 %v5660
    %5700 = vmatpush1.msra.mxu0 %v5659
    %5701 = vmatprep.subr.mxu0 %v5656
    %5702 = vmatpush1.msra.mxu0 %v5655
    %5703 = vmatprep.subr.mxu0 %v5652
    %5704 = vmatpush1.msra.mxu0 %v5651
    %5705 = vmatprep.subr.mxu0 %v5648
    %5706 = vmatpush1.msra.mxu0 %v5647
    %5707 = vmatprep.subr.mxu0 %v5644
    %5708 = vmatpush1.msra.mxu0 %v5643
    %5709 = vmatprep.subr.mxu0 %v5640
    %5710 = vmatpush1.msra.mxu0 %v5639
    %5711 = vmatprep.subr.mxu0 %v5636
    %5712 = vmatpush1.msra.mxu0 %v5635
    %5713 = vmatprep.subr.mxu0 %v5632
    %5714 = vmatpush1.msra.mxu0 %v5631
    %5715 = vmatprep.subr.mxu0 %v5628
    %5716 = vmatpush1.msra.mxu0 %v5627
    %5717 = vmatprep.subr.mxu0 %v5624
    %5718 = vmatpush1.msra.mxu0 %v5623
    %5719 = vmatprep.subr.mxu0 0.0
    %5720 = vmatpush2.msra.mxu0 0.0
    %5721 = vmatprep.subr.mxu0 0.0
    %5722 = vmatpush2.msra.mxu0 0.0
    %5723 = vmatprep.subr.mxu0 0.0
    %5724 = vmatpush2.msra.mxu0 0.0
    %5725 = vmatprep.subr.mxu0 0.0
    %5726 = vmatpush2.msra.mxu0 0.0
    %5727 = vmatprep.subr.mxu0 0.0
    %5728 = vmatpush2.msra.mxu0 0.0
    %5729 = vmatprep.subr.mxu0 0.0
    %5730 = vmatpush2.msra.mxu0 0.0
    %5731 = vmatprep.subr.mxu0 0.0
    %5732 = vmatpush2.msra.mxu0 0.0
    %5733 = vmatprep.subr.mxu0 0.0
    %5734 = vmatpush2.msra.mxu0 0.0
    %5735 = vmatprep.subr.mxu0 0.0
    %5736 = vmatpush2.msra.mxu0 0.0
    %5737 = vmatprep.subr.mxu0 0.0
    %5738 = vmatpush2.msra.mxu0 0.0
    %5739 = vmatprep.subr.mxu0 0.0
    %5740 = vmatpush2.msra.mxu0 0.0
    %5741 = vmatprep.subr.mxu0 0.0
    %5742 = vmatpush2.msra.mxu0 0.0
    %5743 = vmatprep.subr.mxu0 0.0
    %5744 = vmatpush2.msra.mxu0 0.0
    %5745 = vmatprep.subr.mxu0 0.0
    %5746 = vmatpush2.msra.mxu0 0.0
    %5747 = vmatprep.subr.mxu0 0.0
    %5748 = vmatpush2.msra.mxu0 0.0
    %5749 = vmatprep.subr.mxu0 0.0
    %5750 = vmatpush2.msra.mxu0 0.0
    %5751 = vmatprep.mubr.f32.mxu0 0.0
    %5752 = vmatmul.mubr.f32.gmra.mxu0 %v5617
    %v5753 = vpop.f32.mrf.mxu0
    %v5754 = vadd.f32 0.0, %v5753
    %v5755 = vpop.f32.mrf.mxu0
    %v5756 = vadd.f32 0.0, %v5755
    %5757 = vdwg.mxu0
    %5758 = vmatprep.subr.mxu0 %v5686
    %5759 = vmatpush1.msra.mxu0 %v5685
    %5760 = vmatprep.subr.mxu0 %v5682
    %5761 = vmatpush1.msra.mxu0 %v5681
    %5762 = vmatprep.subr.mxu0 %v5678
    %5763 = vmatpush1.msra.mxu0 %v5677
    %5764 = vmatprep.subr.mxu0 %v5674
    %5765 = vmatpush1.msra.mxu0 %v5673
    %5766 = vmatprep.subr.mxu0 %v5670
    %5767 = vmatpush1.msra.mxu0 %v5669
    %5768 = vmatprep.subr.mxu0 %v5666
    %5769 = vmatpush1.msra.mxu0 %v5665
    %5770 = vmatprep.subr.mxu0 %v5662
    %5771 = vmatpush1.msra.mxu0 %v5661
    %5772 = vmatprep.subr.mxu0 %v5658
    %5773 = vmatpush1.msra.mxu0 %v5657
    %5774 = vmatprep.subr.mxu0 %v5654
    %5775 = vmatpush1.msra.mxu0 %v5653
    %5776 = vmatprep.subr.mxu0 %v5650
    %5777 = vmatpush1.msra.mxu0 %v5649
    %5778 = vmatprep.subr.mxu0 %v5646
    %5779 = vmatpush1.msra.mxu0 %v5645
    %5780 = vmatprep.subr.mxu0 %v5642
    %5781 = vmatpush1.msra.mxu0 %v5641
    %5782 = vmatprep.subr.mxu0 %v5638
    %5783 = vmatpush1.msra.mxu0 %v5637
    %5784 = vmatprep.subr.mxu0 %v5634
    %5785 = vmatpush1.msra.mxu0 %v5633
    %5786 = vmatprep.subr.mxu0 %v5630
    %5787 = vmatpush1.msra.mxu0 %v5629
    %5788 = vmatprep.subr.mxu0 %v5626
    %5789 = vmatpush1.msra.mxu0 %v5625
    %5790 = vmatprep.subr.mxu0 0.0
    %5791 = vmatpush2.msra.mxu0 0.0
    %5792 = vmatprep.subr.mxu0 0.0
    %5793 = vmatpush2.msra.mxu0 0.0
    %5794 = vmatprep.subr.mxu0 0.0
    %5795 = vmatpush2.msra.mxu0 0.0
    %5796 = vmatprep.subr.mxu0 0.0
    %5797 = vmatpush2.msra.mxu0 0.0
    %5798 = vmatprep.subr.mxu0 0.0
    %5799 = vmatpush2.msra.mxu0 0.0
    %5800 = vmatprep.subr.mxu0 0.0
    %5801 = vmatpush2.msra.mxu0 0.0
    %5802 = vmatprep.subr.mxu0 0.0
    %5803 = vmatpush2.msra.mxu0 0.0
    %5804 = vmatprep.subr.mxu0 0.0
    %5805 = vmatpush2.msra.mxu0 0.0
    %5806 = vmatprep.subr.mxu0 0.0
    %5807 = vmatpush2.msra.mxu0 0.0
    %5808 = vmatprep.subr.mxu0 0.0
    %5809 = vmatpush2.msra.mxu0 0.0
    %5810 = vmatprep.subr.mxu0 0.0
    %5811 = vmatpush2.msra.mxu0 0.0
    %5812 = vmatprep.subr.mxu0 0.0
    %5813 = vmatpush2.msra.mxu0 0.0
    %5814 = vmatprep.subr.mxu0 0.0
    %5815 = vmatpush2.msra.mxu0 0.0
    %5816 = vmatprep.subr.mxu0 0.0
    %5817 = vmatpush2.msra.mxu0 0.0
    %5818 = vmatprep.subr.mxu0 0.0
    %5819 = vmatpush2.msra.mxu0 0.0
    %5820 = vmatprep.subr.mxu0 0.0
    %5821 = vmatpush2.msra.mxu0 0.0
    %5822 = vmatprep.mubr.f32.mxu0 0.0
    %5823 = vmatmul.mubr.f32.gmra.mxu0 %v5617
    %v5824 = vpop.f32.mrf.mxu0
    %v5825 = vadd.f32 0.0, %v5824
    %v5826 = vpop.f32.mrf.mxu0
    %v5827 = vadd.f32 0.0, %v5826
    %5828 = vdwg.mxu0
    %v5829 = vadd.f32 %v5619, %v5754
    %v5830 = vadd.f32 %v5620, %v5756
    %v5831 = vadd.f32 %v5621, %v5825
    %v5832 = vadd.f32 %v5622, %v5827
    %v5833 = vxor.u32 %v5829, 2147483648
    %v5834 = vmul.f32 %v5833, 1.442695
    %v5835 = vpow.pop %v5834
    %v5836 = vadd.f32 %v5835, 1.0
    %v5837 = vrcp.pop %v5836
    %v5838 = vmul.f32 1.0, %v5837
    %v5839 = vxor.u32 %v5830, 2147483648
    %v5840 = vmul.f32 %v5839, 1.442695
    %v5841 = vpow.pop %v5840
    %v5842 = vadd.f32 %v5841, 1.0
    %v5843 = vrcp.pop %v5842
    %v5844 = vmul.f32 1.0, %v5843
    %v5845 = vtanh.pop %v5831
    %v5846 = vxor.u32 %v5832, 2147483648
    %v5847 = vmul.f32 %v5846, 1.442695
    %v5848 = vpow.pop %v5847
    %v5849 = vadd.f32 %v5848, 1.0
    %v5850 = vrcp.pop %v5849
    %v5851 = vmul.f32 1.0, %v5850
    %v5852 = vmul.f32 %v5844, %v5615
    %v5853 = vmul.f32 %v5838, %v5845
    %v5854 = vadd.f32 %v5852, %v5853
    %v5855 = vtanh.pop %v5854
    %v5856 = vmul.f32 %v5851, %v5855
    %5857 = vst [vmem:[#allocation3 + $0x18] sm:$0xff] %v5856
    %v5858 = vld [vmem:[#allocation4 + $0x80] sm:$0xff]
    %v5859 = vld [vmem:[#allocation4 + $0x88] sm:$0xff]
    %v5860 = vld [vmem:[#allocation4 + $0x90] sm:$0xff]
    %v5861 = vld [vmem:[#allocation4 + $0x98] sm:$0xff]
    %v5862 = vld [vmem:[%s4905] sm:$0xff]
    %v5863 = vld [vmem:[%s4905 + $0x8] sm:$0xff]
    %v5864 = vld [vmem:[%s4905 + $0x10] sm:$0xff]
    %v5865 = vld [vmem:[%s4905 + $0x18] sm:$0xff]
    %v5866 = vld [vmem:[%s4905 + $0x20] sm:$0xff]
    %v5867 = vld [vmem:[%s4905 + $0x28] sm:$0xff]
    %v5868 = vld [vmem:[%s4905 + $0x30] sm:$0xff]
    %v5869 = vld [vmem:[%s4905 + $0x38] sm:$0xff]
    %v5870 = vld [vmem:[%s4905 + $0x40] sm:$0xff]
    %v5871 = vld [vmem:[%s4905 + $0x48] sm:$0xff]
    %v5872 = vld [vmem:[%s4905 + $0x50] sm:$0xff]
    %v5873 = vld [vmem:[%s4905 + $0x58] sm:$0xff]
    %v5874 = vld [vmem:[%s4905 + $0x60] sm:$0xff]
    %v5875 = vld [vmem:[%s4905 + $0x68] sm:$0xff]
    %v5876 = vld [vmem:[%s4905 + $0x70] sm:$0xff]
    %v5877 = vld [vmem:[%s4905 + $0x78] sm:$0xff]
    %v5878 = vld [vmem:[%s4905 + $0x80] sm:$0xff]
    %v5879 = vld [vmem:[%s4905 + $0x88] sm:$0xff]
    %v5880 = vld [vmem:[%s4905 + $0x90] sm:$0xff]
    %v5881 = vld [vmem:[%s4905 + $0x98] sm:$0xff]
    %v5882 = vld [vmem:[%s4905 + $0xa0] sm:$0xff]
    %v5883 = vld [vmem:[%s4905 + $0xa8] sm:$0xff]
    %v5884 = vld [vmem:[%s4905 + $0xb0] sm:$0xff]
    %v5885 = vld [vmem:[%s4905 + $0xb8] sm:$0xff]
    %v5886 = vld [vmem:[%s4905 + $0xc0] sm:$0xff]
    %v5887 = vld [vmem:[%s4905 + $0xc8] sm:$0xff]
    %v5888 = vld [vmem:[%s4905 + $0xd0] sm:$0xff]
    %v5889 = vld [vmem:[%s4905 + $0xd8] sm:$0xff]
    %v5890 = vld [vmem:[%s4905 + $0xe0] sm:$0xff]
    %v5891 = vld [vmem:[%s4905 + $0xe8] sm:$0xff]
    %v5892 = vld [vmem:[%s4905 + $0xf0] sm:$0xff]
    %v5893 = vld [vmem:[%s4905 + $0xf8] sm:$0xff]
    %v5894 = vld [vmem:[%s4905 + $0x100] sm:$0xff]
    %v5895 = vld [vmem:[%s4905 + $0x108] sm:$0xff]
    %v5896 = vld [vmem:[%s4905 + $0x110] sm:$0xff]
    %v5897 = vld [vmem:[%s4905 + $0x118] sm:$0xff]
    %v5898 = vld [vmem:[%s4905 + $0x120] sm:$0xff]
    %v5899 = vld [vmem:[%s4905 + $0x128] sm:$0xff]
    %v5900 = vld [vmem:[%s4905 + $0x130] sm:$0xff]
    %v5901 = vld [vmem:[%s4905 + $0x138] sm:$0xff]
    %v5902 = vld [vmem:[%s4905 + $0x140] sm:$0xff]
    %v5903 = vld [vmem:[%s4905 + $0x148] sm:$0xff]
    %v5904 = vld [vmem:[%s4905 + $0x150] sm:$0xff]
    %v5905 = vld [vmem:[%s4905 + $0x158] sm:$0xff]
    %v5906 = vld [vmem:[%s4905 + $0x160] sm:$0xff]
    %v5907 = vld [vmem:[%s4905 + $0x168] sm:$0xff]
    %v5908 = vld [vmem:[%s4905 + $0x170] sm:$0xff]
    %v5909 = vld [vmem:[%s4905 + $0x178] sm:$0xff]
    %v5910 = vld [vmem:[%s4905 + $0x180] sm:$0xff]
    %v5911 = vld [vmem:[%s4905 + $0x188] sm:$0xff]
    %v5912 = vld [vmem:[%s4905 + $0x190] sm:$0xff]
    %v5913 = vld [vmem:[%s4905 + $0x198] sm:$0xff]
    %v5914 = vld [vmem:[%s4905 + $0x1a0] sm:$0xff]
    %v5915 = vld [vmem:[%s4905 + $0x1a8] sm:$0xff]
    %v5916 = vld [vmem:[%s4905 + $0x1b0] sm:$0xff]
    %v5917 = vld [vmem:[%s4905 + $0x1b8] sm:$0xff]
    %v5918 = vld [vmem:[%s4905 + $0x1c0] sm:$0xff]
    %v5919 = vld [vmem:[%s4905 + $0x1c8] sm:$0xff]
    %v5920 = vld [vmem:[%s4905 + $0x1d0] sm:$0xff]
    %v5921 = vld [vmem:[%s4905 + $0x1d8] sm:$0xff]
    %v5922 = vld [vmem:[%s4905 + $0x1e0] sm:$0xff]
    %v5923 = vld [vmem:[%s4905 + $0x1e8] sm:$0xff]
    %v5924 = vld [vmem:[%s4905 + $0x1f0] sm:$0xff]
    %v5925 = vld [vmem:[%s4905 + $0x1f8] sm:$0xff]
    %5926 = vmatprep.subr.mxu0 %v5923
    %5927 = vmatpush1.msra.mxu0 %v5922
    %5928 = vmatprep.subr.mxu0 %v5919
    %5929 = vmatpush1.msra.mxu0 %v5918
    %5930 = vmatprep.subr.mxu0 %v5915
    %5931 = vmatpush1.msra.mxu0 %v5914
    %5932 = vmatprep.subr.mxu0 %v5911
    %5933 = vmatpush1.msra.mxu0 %v5910
    %5934 = vmatprep.subr.mxu0 %v5907
    %5935 = vmatpush1.msra.mxu0 %v5906
    %5936 = vmatprep.subr.mxu0 %v5903
    %5937 = vmatpush1.msra.mxu0 %v5902
    %5938 = vmatprep.subr.mxu0 %v5899
    %5939 = vmatpush1.msra.mxu0 %v5898
    %5940 = vmatprep.subr.mxu0 %v5895
    %5941 = vmatpush1.msra.mxu0 %v5894
    %5942 = vmatprep.subr.mxu0 %v5891
    %5943 = vmatpush1.msra.mxu0 %v5890
    %5944 = vmatprep.subr.mxu0 %v5887
    %5945 = vmatpush1.msra.mxu0 %v5886
    %5946 = vmatprep.subr.mxu0 %v5883
    %5947 = vmatpush1.msra.mxu0 %v5882
    %5948 = vmatprep.subr.mxu0 %v5879
    %5949 = vmatpush1.msra.mxu0 %v5878
    %5950 = vmatprep.subr.mxu0 %v5875
    %5951 = vmatpush1.msra.mxu0 %v5874
    %5952 = vmatprep.subr.mxu0 %v5871
    %5953 = vmatpush1.msra.mxu0 %v5870
    %5954 = vmatprep.subr.mxu0 %v5867
    %5955 = vmatpush1.msra.mxu0 %v5866
    %5956 = vmatprep.subr.mxu0 %v5863
    %5957 = vmatpush1.msra.mxu0 %v5862
    %5958 = vmatprep.subr.mxu0 0.0
    %5959 = vmatpush2.msra.mxu0 0.0
    %5960 = vmatprep.subr.mxu0 0.0
    %5961 = vmatpush2.msra.mxu0 0.0
    %5962 = vmatprep.subr.mxu0 0.0
    %5963 = vmatpush2.msra.mxu0 0.0
    %5964 = vmatprep.subr.mxu0 0.0
    %5965 = vmatpush2.msra.mxu0 0.0
    %5966 = vmatprep.subr.mxu0 0.0
    %5967 = vmatpush2.msra.mxu0 0.0
    %5968 = vmatprep.subr.mxu0 0.0
    %5969 = vmatpush2.msra.mxu0 0.0
    %5970 = vmatprep.subr.mxu0 0.0
    %5971 = vmatpush2.msra.mxu0 0.0
    %5972 = vmatprep.subr.mxu0 0.0
    %5973 = vmatpush2.msra.mxu0 0.0
    %5974 = vmatprep.subr.mxu0 0.0
    %5975 = vmatpush2.msra.mxu0 0.0
    %5976 = vmatprep.subr.mxu0 0.0
    %5977 = vmatpush2.msra.mxu0 0.0
    %5978 = vmatprep.subr.mxu0 0.0
    %5979 = vmatpush2.msra.mxu0 0.0
    %5980 = vmatprep.subr.mxu0 0.0
    %5981 = vmatpush2.msra.mxu0 0.0
    %5982 = vmatprep.subr.mxu0 0.0
    %5983 = vmatpush2.msra.mxu0 0.0
    %5984 = vmatprep.subr.mxu0 0.0
    %5985 = vmatpush2.msra.mxu0 0.0
    %5986 = vmatprep.subr.mxu0 0.0
    %5987 = vmatpush2.msra.mxu0 0.0
    %5988 = vmatprep.subr.mxu0 0.0
    %5989 = vmatpush2.msra.mxu0 0.0
    %5990 = vmatprep.mubr.f32.mxu0 0.0
    %5991 = vmatmul.mubr.f32.gmra.mxu0 %v5856
    %v5992 = vpop.f32.mrf.mxu0
    %v5993 = vadd.f32 0.0, %v5992
    %v5994 = vpop.f32.mrf.mxu0
    %v5995 = vadd.f32 0.0, %v5994
    %5996 = vdwg.mxu0
    %5997 = vmatprep.subr.mxu0 %v5925
    %5998 = vmatpush1.msra.mxu0 %v5924
    %5999 = vmatprep.subr.mxu0 %v5921
    %6000 = vmatpush1.msra.mxu0 %v5920
    %6001 = vmatprep.subr.mxu0 %v5917
    %6002 = vmatpush1.msra.mxu0 %v5916
    %6003 = vmatprep.subr.mxu0 %v5913
    %6004 = vmatpush1.msra.mxu0 %v5912
    %6005 = vmatprep.subr.mxu0 %v5909
    %6006 = vmatpush1.msra.mxu0 %v5908
    %6007 = vmatprep.subr.mxu0 %v5905
    %6008 = vmatpush1.msra.mxu0 %v5904
    %6009 = vmatprep.subr.mxu0 %v5901
    %6010 = vmatpush1.msra.mxu0 %v5900
    %6011 = vmatprep.subr.mxu0 %v5897
    %6012 = vmatpush1.msra.mxu0 %v5896
    %6013 = vmatprep.subr.mxu0 %v5893
    %6014 = vmatpush1.msra.mxu0 %v5892
    %6015 = vmatprep.subr.mxu0 %v5889
    %6016 = vmatpush1.msra.mxu0 %v5888
    %6017 = vmatprep.subr.mxu0 %v5885
    %6018 = vmatpush1.msra.mxu0 %v5884
    %6019 = vmatprep.subr.mxu0 %v5881
    %6020 = vmatpush1.msra.mxu0 %v5880
    %6021 = vmatprep.subr.mxu0 %v5877
    %6022 = vmatpush1.msra.mxu0 %v5876
    %6023 = vmatprep.subr.mxu0 %v5873
    %6024 = vmatpush1.msra.mxu0 %v5872
    %6025 = vmatprep.subr.mxu0 %v5869
    %6026 = vmatpush1.msra.mxu0 %v5868
    %6027 = vmatprep.subr.mxu0 %v5865
    %6028 = vmatpush1.msra.mxu0 %v5864
    %6029 = vmatprep.subr.mxu0 0.0
    %6030 = vmatpush2.msra.mxu0 0.0
    %6031 = vmatprep.subr.mxu0 0.0
    %6032 = vmatpush2.msra.mxu0 0.0
    %6033 = vmatprep.subr.mxu0 0.0
    %6034 = vmatpush2.msra.mxu0 0.0
    %6035 = vmatprep.subr.mxu0 0.0
    %6036 = vmatpush2.msra.mxu0 0.0
    %6037 = vmatprep.subr.mxu0 0.0
    %6038 = vmatpush2.msra.mxu0 0.0
    %6039 = vmatprep.subr.mxu0 0.0
    %6040 = vmatpush2.msra.mxu0 0.0
    %6041 = vmatprep.subr.mxu0 0.0
    %6042 = vmatpush2.msra.mxu0 0.0
    %6043 = vmatprep.subr.mxu0 0.0
    %6044 = vmatpush2.msra.mxu0 0.0
    %6045 = vmatprep.subr.mxu0 0.0
    %6046 = vmatpush2.msra.mxu0 0.0
    %6047 = vmatprep.subr.mxu0 0.0
    %6048 = vmatpush2.msra.mxu0 0.0
    %6049 = vmatprep.subr.mxu0 0.0
    %6050 = vmatpush2.msra.mxu0 0.0
    %6051 = vmatprep.subr.mxu0 0.0
    %6052 = vmatpush2.msra.mxu0 0.0
    %6053 = vmatprep.subr.mxu0 0.0
    %6054 = vmatpush2.msra.mxu0 0.0
    %6055 = vmatprep.subr.mxu0 0.0
    %6056 = vmatpush2.msra.mxu0 0.0
    %6057 = vmatprep.subr.mxu0 0.0
    %6058 = vmatpush2.msra.mxu0 0.0
    %6059 = vmatprep.subr.mxu0 0.0
    %6060 = vmatpush2.msra.mxu0 0.0
    %6061 = vmatprep.mubr.f32.mxu0 0.0
    %6062 = vmatmul.mubr.f32.gmra.mxu0 %v5856
    %v6063 = vpop.f32.mrf.mxu0
    %v6064 = vadd.f32 0.0, %v6063
    %v6065 = vpop.f32.mrf.mxu0
    %v6066 = vadd.f32 0.0, %v6065
    %6067 = vdwg.mxu0
    %v6068 = vadd.f32 %v5858, %v5993
    %v6069 = vadd.f32 %v5859, %v5995
    %v6070 = vadd.f32 %v5860, %v6064
    %v6071 = vadd.f32 %v5861, %v6066
    %v6072 = vxor.u32 %v6068, 2147483648
    %v6073 = vmul.f32 %v6072, 1.442695
    %v6074 = vpow.pop %v6073
    %v6075 = vadd.f32 %v6074, 1.0
    %v6076 = vrcp.pop %v6075
    %v6077 = vmul.f32 1.0, %v6076
    %v6078 = vxor.u32 %v6069, 2147483648
    %v6079 = vmul.f32 %v6078, 1.442695
    %v6080 = vpow.pop %v6079
    %v6081 = vadd.f32 %v6080, 1.0
    %v6082 = vrcp.pop %v6081
    %v6083 = vmul.f32 1.0, %v6082
    %v6084 = vtanh.pop %v6070
    %v6085 = vxor.u32 %v6071, 2147483648
    %v6086 = vmul.f32 %v6085, 1.442695
    %v6087 = vpow.pop %v6086
    %v6088 = vadd.f32 %v6087, 1.0
    %v6089 = vrcp.pop %v6088
    %v6090 = vmul.f32 1.0, %v6089
    %v6091 = vmul.f32 %v6083, %v5854
    %v6092 = vmul.f32 %v6077, %v6084
    %v6093 = vadd.f32 %v6091, %v6092
    %v6094 = vtanh.pop %v6093
    %v6095 = vmul.f32 %v6090, %v6094
    %6096 = vst [vmem:[#allocation3 + $0x20] sm:$0xff] %v6095
    %v6097 = vld [vmem:[#allocation3] sm:$0xff]
    %v6098 = vld [vmem:[#allocation3 + $0x8] sm:$0xff]
    %v6099 = vld [vmem:[#allocation3 + $0x10] sm:$0xff]
    %v6100 = vld [vmem:[#allocation3 + $0x18] sm:$0xff]
    %v6101 = vld [vmem:[#allocation3 + $0x20] sm:$0xff]
    %s6102 = scalar_lea.vmem [#allocation8], 2048
    %v6103 = vld [vmem:[%s6102] sm:$0xff]
    %v6104 = vld [vmem:[%s6102 + $0x8] sm:$0xff]
    %v6105 = vld [vmem:[%s6102 + $0x10] sm:$0xff]
    %v6106 = vld [vmem:[%s6102 + $0x18] sm:$0xff]
    %v6107 = vld [vmem:[%s6102 + $0x20] sm:$0xff]
    %v6108 = vld [vmem:[%s6102 + $0x28] sm:$0xff]
    %v6109 = vld [vmem:[%s6102 + $0x30] sm:$0xff]
    %v6110 = vld [vmem:[%s6102 + $0x38] sm:$0xff]
    %v6111 = vld [vmem:[%s6102 + $0x40] sm:$0xff]
    %v6112 = vld [vmem:[%s6102 + $0x48] sm:$0xff]
    %v6113 = vld [vmem:[%s6102 + $0x50] sm:$0xff]
    %v6114 = vld [vmem:[%s6102 + $0x58] sm:$0xff]
    %v6115 = vld [vmem:[%s6102 + $0x60] sm:$0xff]
    %v6116 = vld [vmem:[%s6102 + $0x68] sm:$0xff]
    %v6117 = vld [vmem:[%s6102 + $0x70] sm:$0xff]
    %v6118 = vld [vmem:[%s6102 + $0x78] sm:$0xff]
    %v6119 = vld [vmem:[%s6102 + $0x80] sm:$0xff]
    %v6120 = vld [vmem:[%s6102 + $0x88] sm:$0xff]
    %v6121 = vld [vmem:[%s6102 + $0x90] sm:$0xff]
    %v6122 = vld [vmem:[%s6102 + $0x98] sm:$0xff]
    %v6123 = vld [vmem:[%s6102 + $0xa0] sm:$0xff]
    %v6124 = vld [vmem:[%s6102 + $0xa8] sm:$0xff]
    %v6125 = vld [vmem:[%s6102 + $0xb0] sm:$0xff]
    %v6126 = vld [vmem:[%s6102 + $0xb8] sm:$0xff]
    %v6127 = vld [vmem:[%s6102 + $0xc0] sm:$0xff]
    %v6128 = vld [vmem:[%s6102 + $0xc8] sm:$0xff]
    %v6129 = vld [vmem:[%s6102 + $0xd0] sm:$0xff]
    %v6130 = vld [vmem:[%s6102 + $0xd8] sm:$0xff]
    %v6131 = vld [vmem:[%s6102 + $0xe0] sm:$0xff]
    %v6132 = vld [vmem:[%s6102 + $0xe8] sm:$0xff]
    %v6133 = vld [vmem:[%s6102 + $0xf0] sm:$0xff]
    %v6134 = vld [vmem:[%s6102 + $0xf8] sm:$0xff]
    %v6135 = vld [vmem:[%s6102 + $0x100] sm:$0xff]
    %v6136 = vld [vmem:[%s6102 + $0x108] sm:$0xff]
    %v6137 = vld [vmem:[%s6102 + $0x110] sm:$0xff]
    %v6138 = vld [vmem:[%s6102 + $0x118] sm:$0xff]
    %v6139 = vld [vmem:[%s6102 + $0x120] sm:$0xff]
    %v6140 = vld [vmem:[%s6102 + $0x128] sm:$0xff]
    %v6141 = vld [vmem:[%s6102 + $0x130] sm:$0xff]
    %v6142 = vld [vmem:[%s6102 + $0x138] sm:$0xff]
    %v6143 = vld [vmem:[%s6102 + $0x140] sm:$0xff]
    %v6144 = vld [vmem:[%s6102 + $0x148] sm:$0xff]
    %v6145 = vld [vmem:[%s6102 + $0x150] sm:$0xff]
    %v6146 = vld [vmem:[%s6102 + $0x158] sm:$0xff]
    %v6147 = vld [vmem:[%s6102 + $0x160] sm:$0xff]
    %v6148 = vld [vmem:[%s6102 + $0x168] sm:$0xff]
    %v6149 = vld [vmem:[%s6102 + $0x170] sm:$0xff]
    %v6150 = vld [vmem:[%s6102 + $0x178] sm:$0xff]
    %v6151 = vld [vmem:[%s6102 + $0x180] sm:$0xff]
    %v6152 = vld [vmem:[%s6102 + $0x188] sm:$0xff]
    %v6153 = vld [vmem:[%s6102 + $0x190] sm:$0xff]
    %v6154 = vld [vmem:[%s6102 + $0x198] sm:$0xff]
    %v6155 = vld [vmem:[%s6102 + $0x1a0] sm:$0xff]
    %v6156 = vld [vmem:[%s6102 + $0x1a8] sm:$0xff]
    %v6157 = vld [vmem:[%s6102 + $0x1b0] sm:$0xff]
    %v6158 = vld [vmem:[%s6102 + $0x1b8] sm:$0xff]
    %v6159 = vld [vmem:[%s6102 + $0x1c0] sm:$0xff]
    %v6160 = vld [vmem:[%s6102 + $0x1c8] sm:$0xff]
    %v6161 = vld [vmem:[%s6102 + $0x1d0] sm:$0xff]
    %v6162 = vld [vmem:[%s6102 + $0x1d8] sm:$0xff]
    %v6163 = vld [vmem:[%s6102 + $0x1e0] sm:$0xff]
    %v6164 = vld [vmem:[%s6102 + $0x1e8] sm:$0xff]
    %v6165 = vld [vmem:[%s6102 + $0x1f0] sm:$0xff]
    %v6166 = vld [vmem:[%s6102 + $0x1f8] sm:$0xff]
    %s6167 = scalar_lea.vmem [#allocation11], 16
    %v6168 = vld [vmem:[%s6167] sm:$0xf]
    %v6170 = vlaneseq
    %v6171 = vshrl.u32 %v6170, 7
    %v6172 = vsub.s32 0, %v6171
    %v6173 = vrot.slane %v6168, %v6172
    %v6174 = vlaneseq
    %v6175 = vshrl.u32 %v6174, 7
    %v6176 = vsub.s32 1, %v6175
    %v6177 = vrot.slane %v6168, %v6176
    %v6178 = vlaneseq
    %v6179 = vshrl.u32 %v6178, 7
    %v6180 = vsub.s32 2, %v6179
    %v6181 = vrot.slane %v6168, %v6180
    %v6182 = vlaneseq
    %v6183 = vshrl.u32 %v6182, 7
    %v6184 = vsub.s32 3, %v6183
    %v6185 = vrot.slane %v6168, %v6184
    %6190 = vmatprep.subr.mxu0 %v6164
    %6191 = vmatpush1.msra.mxu0 %v6163
    %6192 = vmatprep.subr.mxu0 %v6160
    %6193 = vmatpush1.msra.mxu0 %v6159
    %6194 = vmatprep.subr.mxu0 %v6156
    %6195 = vmatpush1.msra.mxu0 %v6155
    %6196 = vmatprep.subr.mxu0 %v6152
    %6197 = vmatpush1.msra.mxu0 %v6151
    %6198 = vmatprep.subr.mxu0 %v6148
    %6199 = vmatpush1.msra.mxu0 %v6147
    %6200 = vmatprep.subr.mxu0 %v6144
    %6201 = vmatpush1.msra.mxu0 %v6143
    %6202 = vmatprep.subr.mxu0 %v6140
    %6203 = vmatpush1.msra.mxu0 %v6139
    %6204 = vmatprep.subr.mxu0 %v6136
    %6205 = vmatpush1.msra.mxu0 %v6135
    %6206 = vmatprep.subr.mxu0 %v6132
    %6207 = vmatpush1.msra.mxu0 %v6131
    %6208 = vmatprep.subr.mxu0 %v6128
    %6209 = vmatpush1.msra.mxu0 %v6127
    %6210 = vmatprep.subr.mxu0 %v6124
    %6211 = vmatpush1.msra.mxu0 %v6123
    %6212 = vmatprep.subr.mxu0 %v6120
    %6213 = vmatpush1.msra.mxu0 %v6119
    %6214 = vmatprep.subr.mxu0 %v6116
    %6215 = vmatpush1.msra.mxu0 %v6115
    %6216 = vmatprep.subr.mxu0 %v6112
    %6217 = vmatpush1.msra.mxu0 %v6111
    %6218 = vmatprep.subr.mxu0 %v6108
    %6219 = vmatpush1.msra.mxu0 %v6107
    %6220 = vmatprep.subr.mxu0 %v6104
    %6221 = vmatpush1.msra.mxu0 %v6103
    %6222 = vmatprep.subr.mxu0 0.0
    %6223 = vmatpush2.msra.mxu0 0.0
    %6224 = vmatprep.subr.mxu0 0.0
    %6225 = vmatpush2.msra.mxu0 0.0
    %6226 = vmatprep.subr.mxu0 0.0
    %6227 = vmatpush2.msra.mxu0 0.0
    %6228 = vmatprep.subr.mxu0 0.0
    %6229 = vmatpush2.msra.mxu0 0.0
    %6230 = vmatprep.subr.mxu0 0.0
    %6231 = vmatpush2.msra.mxu0 0.0
    %6232 = vmatprep.subr.mxu0 0.0
    %6233 = vmatpush2.msra.mxu0 0.0
    %6234 = vmatprep.subr.mxu0 0.0
    %6235 = vmatpush2.msra.mxu0 0.0
    %6236 = vmatprep.subr.mxu0 0.0
    %6237 = vmatpush2.msra.mxu0 0.0
    %6238 = vmatprep.subr.mxu0 0.0
    %6239 = vmatpush2.msra.mxu0 0.0
    %6240 = vmatprep.subr.mxu0 0.0
    %6241 = vmatpush2.msra.mxu0 0.0
    %6242 = vmatprep.subr.mxu0 0.0
    %6243 = vmatpush2.msra.mxu0 0.0
    %6244 = vmatprep.subr.mxu0 0.0
    %6245 = vmatpush2.msra.mxu0 0.0
    %6246 = vmatprep.subr.mxu0 0.0
    %6247 = vmatpush2.msra.mxu0 0.0
    %6248 = vmatprep.subr.mxu0 0.0
    %6249 = vmatpush2.msra.mxu0 0.0
    %6250 = vmatprep.subr.mxu0 0.0
    %6251 = vmatpush2.msra.mxu0 0.0
    %6252 = vmatprep.subr.mxu0 0.0
    %6253 = vmatpush2.msra.mxu0 0.0
    %6254 = vmatprep.mubr.f32.mxu0 0.0
    %6255 = vmatmul.mubr.f32.gmra.mxu0 %v6097
    %v6256 = vpop.f32.mrf.mxu0
    %v6257 = vadd.f32 %v6173, %v6256
    %v6258 = vpop.f32.mrf.mxu0
    %v6259 = vadd.f32 %v6177, %v6258
    %6260 = vmatprep.mubr.f32.mxu0 0.0
    %6261 = vmatmul.mubr.f32.gmra.mxu0 %v6098
    %v6262 = vpop.f32.mrf.mxu0
    %v6263 = vadd.f32 %v6173, %v6262
    %v6264 = vpop.f32.mrf.mxu0
    %v6265 = vadd.f32 %v6177, %v6264
    %6266 = vmatprep.mubr.f32.mxu0 0.0
    %6267 = vmatmul.mubr.f32.gmra.mxu0 %v6099
    %v6268 = vpop.f32.mrf.mxu0
    %v6269 = vadd.f32 %v6173, %v6268
    %v6270 = vpop.f32.mrf.mxu0
    %v6271 = vadd.f32 %v6177, %v6270
    %6272 = vmatprep.mubr.f32.mxu0 0.0
    %6273 = vmatmul.mubr.f32.gmra.mxu0 %v6100
    %v6274 = vpop.f32.mrf.mxu0
    %v6275 = vadd.f32 %v6173, %v6274
    %v6276 = vpop.f32.mrf.mxu0
    %v6277 = vadd.f32 %v6177, %v6276
    %6278 = vmatprep.mubr.f32.mxu0 0.0
    %6279 = vmatmul.mubr.f32.gmra.mxu0 %v6101
    %v6280 = vpop.f32.mrf.mxu0
    %v6281 = vadd.f32 %v6173, %v6280
    %v6282 = vpop.f32.mrf.mxu0
    %v6283 = vadd.f32 %v6177, %v6282
    %6284 = vdwg.mxu0
    %6285 = vmatprep.subr.mxu0 %v6166
    %6286 = vmatpush1.msra.mxu0 %v6165
    %6287 = vmatprep.subr.mxu0 %v6162
    %6288 = vmatpush1.msra.mxu0 %v6161
    %6289 = vmatprep.subr.mxu0 %v6158
    %6290 = vmatpush1.msra.mxu0 %v6157
    %6291 = vmatprep.subr.mxu0 %v6154
    %6292 = vmatpush1.msra.mxu0 %v6153
    %6293 = vmatprep.subr.mxu0 %v6150
    %6294 = vmatpush1.msra.mxu0 %v6149
    %6295 = vmatprep.subr.mxu0 %v6146
    %6296 = vmatpush1.msra.mxu0 %v6145
    %6297 = vmatprep.subr.mxu0 %v6142
    %6298 = vmatpush1.msra.mxu0 %v6141
    %6299 = vmatprep.subr.mxu0 %v6138
    %6300 = vmatpush1.msra.mxu0 %v6137
    %6301 = vmatprep.subr.mxu0 %v6134
    %6302 = vmatpush1.msra.mxu0 %v6133
    %6303 = vmatprep.subr.mxu0 %v6130
    %6304 = vmatpush1.msra.mxu0 %v6129
    %6305 = vmatprep.subr.mxu0 %v6126
    %6306 = vmatpush1.msra.mxu0 %v6125
    %6307 = vmatprep.subr.mxu0 %v6122
    %6308 = vmatpush1.msra.mxu0 %v6121
    %6309 = vmatprep.subr.mxu0 %v6118
    %6310 = vmatpush1.msra.mxu0 %v6117
    %6311 = vmatprep.subr.mxu0 %v6114
    %6312 = vmatpush1.msra.mxu0 %v6113
    %6313 = vmatprep.subr.mxu0 %v6110
    %6314 = vmatpush1.msra.mxu0 %v6109
    %6315 = vmatprep.subr.mxu0 %v6106
    %6316 = vmatpush1.msra.mxu0 %v6105
    %6317 = vmatprep.subr.mxu0 0.0
    %6318 = vmatpush2.msra.mxu0 0.0
    %6319 = vmatprep.subr.mxu0 0.0
    %6320 = vmatpush2.msra.mxu0 0.0
    %6321 = vmatprep.subr.mxu0 0.0
    %6322 = vmatpush2.msra.mxu0 0.0
    %6323 = vmatprep.subr.mxu0 0.0
    %6324 = vmatpush2.msra.mxu0 0.0
    %6325 = vmatprep.subr.mxu0 0.0
    %6326 = vmatpush2.msra.mxu0 0.0
    %6327 = vmatprep.subr.mxu0 0.0
    %6328 = vmatpush2.msra.mxu0 0.0
    %6329 = vmatprep.subr.mxu0 0.0
    %6330 = vmatpush2.msra.mxu0 0.0
    %6331 = vmatprep.subr.mxu0 0.0
    %6332 = vmatpush2.msra.mxu0 0.0
    %6333 = vmatprep.subr.mxu0 0.0
    %6334 = vmatpush2.msra.mxu0 0.0
    %6335 = vmatprep.subr.mxu0 0.0
    %6336 = vmatpush2.msra.mxu0 0.0
    %6337 = vmatprep.subr.mxu0 0.0
    %6338 = vmatpush2.msra.mxu0 0.0
    %6339 = vmatprep.subr.mxu0 0.0
    %6340 = vmatpush2.msra.mxu0 0.0
    %6341 = vmatprep.subr.mxu0 0.0
    %6342 = vmatpush2.msra.mxu0 0.0
    %6343 = vmatprep.subr.mxu0 0.0
    %6344 = vmatpush2.msra.mxu0 0.0
    %6345 = vmatprep.subr.mxu0 0.0
    %6346 = vmatpush2.msra.mxu0 0.0
    %6347 = vmatprep.subr.mxu0 0.0
    %6348 = vmatpush2.msra.mxu0 0.0
    %6349 = vmatprep.mubr.f32.mxu0 0.0
    %6350 = vmatmul.mubr.f32.gmra.mxu0 %v6097
    %v6351 = vpop.f32.mrf.mxu0
    %v6352 = vadd.f32 %v6181, %v6351
    %v6353 = vpop.f32.mrf.mxu0
    %v6354 = vadd.f32 %v6185, %v6353
    %6355 = vmatprep.mubr.f32.mxu0 0.0
    %6356 = vmatmul.mubr.f32.gmra.mxu0 %v6098
    %v6357 = vpop.f32.mrf.mxu0
    %v6358 = vadd.f32 %v6181, %v6357
    %v6359 = vpop.f32.mrf.mxu0
    %v6360 = vadd.f32 %v6185, %v6359
    %6361 = vmatprep.mubr.f32.mxu0 0.0
    %6362 = vmatmul.mubr.f32.gmra.mxu0 %v6099
    %v6363 = vpop.f32.mrf.mxu0
    %v6364 = vadd.f32 %v6181, %v6363
    %v6365 = vpop.f32.mrf.mxu0
    %v6366 = vadd.f32 %v6185, %v6365
    %6367 = vmatprep.mubr.f32.mxu0 0.0
    %6368 = vmatmul.mubr.f32.gmra.mxu0 %v6100
    %v6369 = vpop.f32.mrf.mxu0
    %v6370 = vadd.f32 %v6181, %v6369
    %v6371 = vpop.f32.mrf.mxu0
    %v6372 = vadd.f32 %v6185, %v6371
    %6373 = vmatprep.mubr.f32.mxu0 0.0
    %6374 = vmatmul.mubr.f32.gmra.mxu0 %v6101
    %v6375 = vpop.f32.mrf.mxu0
    %v6376 = vadd.f32 %v6181, %v6375
    %v6377 = vpop.f32.mrf.mxu0
    %v6378 = vadd.f32 %v6185, %v6377
    %6379 = vdwg.mxu0
    %6380 = vst [vmem:[#allocation4] sm:$0xff] %v6257
    %6381 = vst [vmem:[#allocation4 + $0x8] sm:$0xff] %v6259
    %6382 = vst [vmem:[#allocation4 + $0x10] sm:$0xff] %v6352
    %6383 = vst [vmem:[#allocation4 + $0x18] sm:$0xff] %v6354
    %6384 = vst [vmem:[#allocation4 + $0x20] sm:$0xff] %v6263
    %6385 = vst [vmem:[#allocation4 + $0x28] sm:$0xff] %v6265
    %6386 = vst [vmem:[#allocation4 + $0x30] sm:$0xff] %v6358
    %6387 = vst [vmem:[#allocation4 + $0x38] sm:$0xff] %v6360
    %6388 = vst [vmem:[#allocation4 + $0x40] sm:$0xff] %v6269
    %6389 = vst [vmem:[#allocation4 + $0x48] sm:$0xff] %v6271
    %6390 = vst [vmem:[#allocation4 + $0x50] sm:$0xff] %v6364
    %6391 = vst [vmem:[#allocation4 + $0x58] sm:$0xff] %v6366
    %6392 = vst [vmem:[#allocation4 + $0x60] sm:$0xff] %v6275
    %6393 = vst [vmem:[#allocation4 + $0x68] sm:$0xff] %v6277
    %6394 = vst [vmem:[#allocation4 + $0x70] sm:$0xff] %v6370
    %6395 = vst [vmem:[#allocation4 + $0x78] sm:$0xff] %v6372
    %6396 = vst [vmem:[#allocation4 + $0x80] sm:$0xff] %v6281
    %6397 = vst [vmem:[#allocation4 + $0x88] sm:$0xff] %v6283
    %6398 = vst [vmem:[#allocation4 + $0x90] sm:$0xff] %v6376
    %6399 = vst [vmem:[#allocation4 + $0x98] sm:$0xff] %v6378
    %v6400 = vld [vmem:[#allocation4] sm:$0xff]
    %v6401 = vld [vmem:[#allocation4 + $0x8] sm:$0xff]
    %v6402 = vld [vmem:[#allocation4 + $0x10] sm:$0xff]
    %v6403 = vld [vmem:[#allocation4 + $0x18] sm:$0xff]
    %s6404 = scalar_lea.vmem [#allocation10], 2048
    %v6405 = vld [vmem:[%s6404] sm:$0xff]
    %v6406 = vld [vmem:[%s6404 + $0x8] sm:$0xff]
    %v6407 = vld [vmem:[%s6404 + $0x10] sm:$0xff]
    %v6408 = vld [vmem:[%s6404 + $0x18] sm:$0xff]
    %v6409 = vld [vmem:[%s6404 + $0x20] sm:$0xff]
    %v6410 = vld [vmem:[%s6404 + $0x28] sm:$0xff]
    %v6411 = vld [vmem:[%s6404 + $0x30] sm:$0xff]
    %v6412 = vld [vmem:[%s6404 + $0x38] sm:$0xff]
    %v6413 = vld [vmem:[%s6404 + $0x40] sm:$0xff]
    %v6414 = vld [vmem:[%s6404 + $0x48] sm:$0xff]
    %v6415 = vld [vmem:[%s6404 + $0x50] sm:$0xff]
    %v6416 = vld [vmem:[%s6404 + $0x58] sm:$0xff]
    %v6417 = vld [vmem:[%s6404 + $0x60] sm:$0xff]
    %v6418 = vld [vmem:[%s6404 + $0x68] sm:$0xff]
    %v6419 = vld [vmem:[%s6404 + $0x70] sm:$0xff]
    %v6420 = vld [vmem:[%s6404 + $0x78] sm:$0xff]
    %v6421 = vld [vmem:[%s6404 + $0x80] sm:$0xff]
    %v6422 = vld [vmem:[%s6404 + $0x88] sm:$0xff]
    %v6423 = vld [vmem:[%s6404 + $0x90] sm:$0xff]
    %v6424 = vld [vmem:[%s6404 + $0x98] sm:$0xff]
    %v6425 = vld [vmem:[%s6404 + $0xa0] sm:$0xff]
    %v6426 = vld [vmem:[%s6404 + $0xa8] sm:$0xff]
    %v6427 = vld [vmem:[%s6404 + $0xb0] sm:$0xff]
    %v6428 = vld [vmem:[%s6404 + $0xb8] sm:$0xff]
    %v6429 = vld [vmem:[%s6404 + $0xc0] sm:$0xff]
    %v6430 = vld [vmem:[%s6404 + $0xc8] sm:$0xff]
    %v6431 = vld [vmem:[%s6404 + $0xd0] sm:$0xff]
    %v6432 = vld [vmem:[%s6404 + $0xd8] sm:$0xff]
    %v6433 = vld [vmem:[%s6404 + $0xe0] sm:$0xff]
    %v6434 = vld [vmem:[%s6404 + $0xe8] sm:$0xff]
    %v6435 = vld [vmem:[%s6404 + $0xf0] sm:$0xff]
    %v6436 = vld [vmem:[%s6404 + $0xf8] sm:$0xff]
    %v6437 = vld [vmem:[%s6404 + $0x100] sm:$0xff]
    %v6438 = vld [vmem:[%s6404 + $0x108] sm:$0xff]
    %v6439 = vld [vmem:[%s6404 + $0x110] sm:$0xff]
    %v6440 = vld [vmem:[%s6404 + $0x118] sm:$0xff]
    %v6441 = vld [vmem:[%s6404 + $0x120] sm:$0xff]
    %v6442 = vld [vmem:[%s6404 + $0x128] sm:$0xff]
    %v6443 = vld [vmem:[%s6404 + $0x130] sm:$0xff]
    %v6444 = vld [vmem:[%s6404 + $0x138] sm:$0xff]
    %v6445 = vld [vmem:[%s6404 + $0x140] sm:$0xff]
    %v6446 = vld [vmem:[%s6404 + $0x148] sm:$0xff]
    %v6447 = vld [vmem:[%s6404 + $0x150] sm:$0xff]
    %v6448 = vld [vmem:[%s6404 + $0x158] sm:$0xff]
    %v6449 = vld [vmem:[%s6404 + $0x160] sm:$0xff]
    %v6450 = vld [vmem:[%s6404 + $0x168] sm:$0xff]
    %v6451 = vld [vmem:[%s6404 + $0x170] sm:$0xff]
    %v6452 = vld [vmem:[%s6404 + $0x178] sm:$0xff]
    %v6453 = vld [vmem:[%s6404 + $0x180] sm:$0xff]
    %v6454 = vld [vmem:[%s6404 + $0x188] sm:$0xff]
    %v6455 = vld [vmem:[%s6404 + $0x190] sm:$0xff]
    %v6456 = vld [vmem:[%s6404 + $0x198] sm:$0xff]
    %v6457 = vld [vmem:[%s6404 + $0x1a0] sm:$0xff]
    %v6458 = vld [vmem:[%s6404 + $0x1a8] sm:$0xff]
    %v6459 = vld [vmem:[%s6404 + $0x1b0] sm:$0xff]
    %v6460 = vld [vmem:[%s6404 + $0x1b8] sm:$0xff]
    %v6461 = vld [vmem:[%s6404 + $0x1c0] sm:$0xff]
    %v6462 = vld [vmem:[%s6404 + $0x1c8] sm:$0xff]
    %v6463 = vld [vmem:[%s6404 + $0x1d0] sm:$0xff]
    %v6464 = vld [vmem:[%s6404 + $0x1d8] sm:$0xff]
    %v6465 = vld [vmem:[%s6404 + $0x1e0] sm:$0xff]
    %v6466 = vld [vmem:[%s6404 + $0x1e8] sm:$0xff]
    %v6467 = vld [vmem:[%s6404 + $0x1f0] sm:$0xff]
    %v6468 = vld [vmem:[%s6404 + $0x1f8] sm:$0xff]
    %6469 = vmatprep.subr.mxu0 %v6466
    %6470 = vmatpush1.msra.mxu0 %v6465
    %6471 = vmatprep.subr.mxu0 %v6462
    %6472 = vmatpush1.msra.mxu0 %v6461
    %6473 = vmatprep.subr.mxu0 %v6458
    %6474 = vmatpush1.msra.mxu0 %v6457
    %6475 = vmatprep.subr.mxu0 %v6454
    %6476 = vmatpush1.msra.mxu0 %v6453
    %6477 = vmatprep.subr.mxu0 %v6450
    %6478 = vmatpush1.msra.mxu0 %v6449
    %6479 = vmatprep.subr.mxu0 %v6446
    %6480 = vmatpush1.msra.mxu0 %v6445
    %6481 = vmatprep.subr.mxu0 %v6442
    %6482 = vmatpush1.msra.mxu0 %v6441
    %6483 = vmatprep.subr.mxu0 %v6438
    %6484 = vmatpush1.msra.mxu0 %v6437
    %6485 = vmatprep.subr.mxu0 %v6434
    %6486 = vmatpush1.msra.mxu0 %v6433
    %6487 = vmatprep.subr.mxu0 %v6430
    %6488 = vmatpush1.msra.mxu0 %v6429
    %6489 = vmatprep.subr.mxu0 %v6426
    %6490 = vmatpush1.msra.mxu0 %v6425
    %6491 = vmatprep.subr.mxu0 %v6422
    %6492 = vmatpush1.msra.mxu0 %v6421
    %6493 = vmatprep.subr.mxu0 %v6418
    %6494 = vmatpush1.msra.mxu0 %v6417
    %6495 = vmatprep.subr.mxu0 %v6414
    %6496 = vmatpush1.msra.mxu0 %v6413
    %6497 = vmatprep.subr.mxu0 %v6410
    %6498 = vmatpush1.msra.mxu0 %v6409
    %6499 = vmatprep.subr.mxu0 %v6406
    %6500 = vmatpush1.msra.mxu0 %v6405
    %6501 = vmatprep.subr.mxu0 0.0
    %6502 = vmatpush2.msra.mxu0 0.0
    %6503 = vmatprep.subr.mxu0 0.0
    %6504 = vmatpush2.msra.mxu0 0.0
    %6505 = vmatprep.subr.mxu0 0.0
    %6506 = vmatpush2.msra.mxu0 0.0
    %6507 = vmatprep.subr.mxu0 0.0
    %6508 = vmatpush2.msra.mxu0 0.0
    %6509 = vmatprep.subr.mxu0 0.0
    %6510 = vmatpush2.msra.mxu0 0.0
    %6511 = vmatprep.subr.mxu0 0.0
    %6512 = vmatpush2.msra.mxu0 0.0
    %6513 = vmatprep.subr.mxu0 0.0
    %6514 = vmatpush2.msra.mxu0 0.0
    %6515 = vmatprep.subr.mxu0 0.0
    %6516 = vmatpush2.msra.mxu0 0.0
    %6517 = vmatprep.subr.mxu0 0.0
    %6518 = vmatpush2.msra.mxu0 0.0
    %6519 = vmatprep.subr.mxu0 0.0
    %6520 = vmatpush2.msra.mxu0 0.0
    %6521 = vmatprep.subr.mxu0 0.0
    %6522 = vmatpush2.msra.mxu0 0.0
    %6523 = vmatprep.subr.mxu0 0.0
    %6524 = vmatpush2.msra.mxu0 0.0
    %6525 = vmatprep.subr.mxu0 0.0
    %6526 = vmatpush2.msra.mxu0 0.0
    %6527 = vmatprep.subr.mxu0 0.0
    %6528 = vmatpush2.msra.mxu0 0.0
    %6529 = vmatprep.subr.mxu0 0.0
    %6530 = vmatpush2.msra.mxu0 0.0
    %6531 = vmatprep.subr.mxu0 0.0
    %6532 = vmatpush2.msra.mxu0 0.0
    %6533 = vmatprep.mubr.f32.mxu0 0.0
    %6534 = vmatmul.mubr.f32.gmra.mxu0 0.0
    %v6535 = vpop.f32.mrf.mxu0
    %v6536 = vadd.f32 0.0, %v6535
    %v6537 = vpop.f32.mrf.mxu0
    %v6538 = vadd.f32 0.0, %v6537
    %6539 = vdwg.mxu0
    %6540 = vmatprep.subr.mxu0 %v6468
    %6541 = vmatpush1.msra.mxu0 %v6467
    %6542 = vmatprep.subr.mxu0 %v6464
    %6543 = vmatpush1.msra.mxu0 %v6463
    %6544 = vmatprep.subr.mxu0 %v6460
    %6545 = vmatpush1.msra.mxu0 %v6459
    %6546 = vmatprep.subr.mxu0 %v6456
    %6547 = vmatpush1.msra.mxu0 %v6455
    %6548 = vmatprep.subr.mxu0 %v6452
    %6549 = vmatpush1.msra.mxu0 %v6451
    %6550 = vmatprep.subr.mxu0 %v6448
    %6551 = vmatpush1.msra.mxu0 %v6447
    %6552 = vmatprep.subr.mxu0 %v6444
    %6553 = vmatpush1.msra.mxu0 %v6443
    %6554 = vmatprep.subr.mxu0 %v6440
    %6555 = vmatpush1.msra.mxu0 %v6439
    %6556 = vmatprep.subr.mxu0 %v6436
    %6557 = vmatpush1.msra.mxu0 %v6435
    %6558 = vmatprep.subr.mxu0 %v6432
    %6559 = vmatpush1.msra.mxu0 %v6431
    %6560 = vmatprep.subr.mxu0 %v6428
    %6561 = vmatpush1.msra.mxu0 %v6427
    %6562 = vmatprep.subr.mxu0 %v6424
    %6563 = vmatpush1.msra.mxu0 %v6423
    %6564 = vmatprep.subr.mxu0 %v6420
    %6565 = vmatpush1.msra.mxu0 %v6419
    %6566 = vmatprep.subr.mxu0 %v6416
    %6567 = vmatpush1.msra.mxu0 %v6415
    %6568 = vmatprep.subr.mxu0 %v6412
    %6569 = vmatpush1.msra.mxu0 %v6411
    %6570 = vmatprep.subr.mxu0 %v6408
    %6571 = vmatpush1.msra.mxu0 %v6407
    %6572 = vmatprep.subr.mxu0 0.0
    %6573 = vmatpush2.msra.mxu0 0.0
    %6574 = vmatprep.subr.mxu0 0.0
    %6575 = vmatpush2.msra.mxu0 0.0
    %6576 = vmatprep.subr.mxu0 0.0
    %6577 = vmatpush2.msra.mxu0 0.0
    %6578 = vmatprep.subr.mxu0 0.0
    %6579 = vmatpush2.msra.mxu0 0.0
    %6580 = vmatprep.subr.mxu0 0.0
    %6581 = vmatpush2.msra.mxu0 0.0
    %6582 = vmatprep.subr.mxu0 0.0
    %6583 = vmatpush2.msra.mxu0 0.0
    %6584 = vmatprep.subr.mxu0 0.0
    %6585 = vmatpush2.msra.mxu0 0.0
    %6586 = vmatprep.subr.mxu0 0.0
    %6587 = vmatpush2.msra.mxu0 0.0
    %6588 = vmatprep.subr.mxu0 0.0
    %6589 = vmatpush2.msra.mxu0 0.0
    %6590 = vmatprep.subr.mxu0 0.0
    %6591 = vmatpush2.msra.mxu0 0.0
    %6592 = vmatprep.subr.mxu0 0.0
    %6593 = vmatpush2.msra.mxu0 0.0
    %6594 = vmatprep.subr.mxu0 0.0
    %6595 = vmatpush2.msra.mxu0 0.0
    %6596 = vmatprep.subr.mxu0 0.0
    %6597 = vmatpush2.msra.mxu0 0.0
    %6598 = vmatprep.subr.mxu0 0.0
    %6599 = vmatpush2.msra.mxu0 0.0
    %6600 = vmatprep.subr.mxu0 0.0
    %6601 = vmatpush2.msra.mxu0 0.0
    %6602 = vmatprep.subr.mxu0 0.0
    %6603 = vmatpush2.msra.mxu0 0.0
    %6604 = vmatprep.mubr.f32.mxu0 0.0
    %6605 = vmatmul.mubr.f32.gmra.mxu0 0.0
    %v6606 = vpop.f32.mrf.mxu0
    %v6607 = vadd.f32 0.0, %v6606
    %v6608 = vpop.f32.mrf.mxu0
    %v6609 = vadd.f32 0.0, %v6608
    %6610 = vdwg.mxu0
    %v6611 = vadd.f32 %v6400, %v6536
    %v6612 = vadd.f32 %v6401, %v6538
    %v6613 = vadd.f32 %v6402, %v6607
    %v6614 = vadd.f32 %v6403, %v6609
    %v6615 = vxor.u32 %v6611, 2147483648
    %v6616 = vmul.f32 %v6615, 1.442695
    %v6617 = vpow.pop %v6616
    %v6618 = vadd.f32 %v6617, 1.0
    %v6619 = vrcp.pop %v6618
    %v6620 = vmul.f32 1.0, %v6619
    %v6621 = vxor.u32 %v6612, 2147483648
    %v6622 = vmul.f32 %v6621, 1.442695
    %v6623 = vpow.pop %v6622
    %v6624 = vadd.f32 %v6623, 1.0
    %v6625 = vrcp.pop %v6624
    %v6626 = vmul.f32 1.0, %v6625
    %v6627 = vtanh.pop %v6613
    %v6628 = vxor.u32 %v6614, 2147483648
    %v6629 = vmul.f32 %v6628, 1.442695
    %v6630 = vpow.pop %v6629
    %v6631 = vadd.f32 %v6630, 1.0
    %v6632 = vrcp.pop %v6631
    %v6633 = vmul.f32 1.0, %v6632
    %v6634 = vmul.f32 %v6626, 0.0
    %v6635 = vmul.f32 %v6620, %v6627
    %v6636 = vadd.f32 %v6634, %v6635
    %v6637 = vtanh.pop %v6636
    %v6638 = vmul.f32 %v6633, %v6637
    %v6639 = vld [vmem:[#allocation4 + $0x20] sm:$0xff]
    %v6640 = vld [vmem:[#allocation4 + $0x28] sm:$0xff]
    %v6641 = vld [vmem:[#allocation4 + $0x30] sm:$0xff]
    %v6642 = vld [vmem:[#allocation4 + $0x38] sm:$0xff]
    %6643 = vmatprep.subr.mxu0 %v6466
    %6644 = vmatpush1.msra.mxu0 %v6465
    %6645 = vmatprep.subr.mxu0 %v6462
    %6646 = vmatpush1.msra.mxu0 %v6461
    %6647 = vmatprep.subr.mxu0 %v6458
    %6648 = vmatpush1.msra.mxu0 %v6457
    %6649 = vmatprep.subr.mxu0 %v6454
    %6650 = vmatpush1.msra.mxu0 %v6453
    %6651 = vmatprep.subr.mxu0 %v6450
    %6652 = vmatpush1.msra.mxu0 %v6449
    %6653 = vmatprep.subr.mxu0 %v6446
    %6654 = vmatpush1.msra.mxu0 %v6445
    %6655 = vmatprep.subr.mxu0 %v6442
    %6656 = vmatpush1.msra.mxu0 %v6441
    %6657 = vmatprep.subr.mxu0 %v6438
    %6658 = vmatpush1.msra.mxu0 %v6437
    %6659 = vmatprep.subr.mxu0 %v6434
    %6660 = vmatpush1.msra.mxu0 %v6433
    %6661 = vmatprep.subr.mxu0 %v6430
    %6662 = vmatpush1.msra.mxu0 %v6429
    %6663 = vmatprep.subr.mxu0 %v6426
    %6664 = vmatpush1.msra.mxu0 %v6425
    %6665 = vmatprep.subr.mxu0 %v6422
    %6666 = vmatpush1.msra.mxu0 %v6421
    %6667 = vmatprep.subr.mxu0 %v6418
    %6668 = vmatpush1.msra.mxu0 %v6417
    %6669 = vmatprep.subr.mxu0 %v6414
    %6670 = vmatpush1.msra.mxu0 %v6413
    %6671 = vmatprep.subr.mxu0 %v6410
    %6672 = vmatpush1.msra.mxu0 %v6409
    %6673 = vmatprep.subr.mxu0 %v6406
    %6674 = vmatpush1.msra.mxu0 %v6405
    %6675 = vmatprep.subr.mxu0 0.0
    %6676 = vmatpush2.msra.mxu0 0.0
    %6677 = vmatprep.subr.mxu0 0.0
    %6678 = vmatpush2.msra.mxu0 0.0
    %6679 = vmatprep.subr.mxu0 0.0
    %6680 = vmatpush2.msra.mxu0 0.0
    %6681 = vmatprep.subr.mxu0 0.0
    %6682 = vmatpush2.msra.mxu0 0.0
    %6683 = vmatprep.subr.mxu0 0.0
    %6684 = vmatpush2.msra.mxu0 0.0
    %6685 = vmatprep.subr.mxu0 0.0
    %6686 = vmatpush2.msra.mxu0 0.0
    %6687 = vmatprep.subr.mxu0 0.0
    %6688 = vmatpush2.msra.mxu0 0.0
    %6689 = vmatprep.subr.mxu0 0.0
    %6690 = vmatpush2.msra.mxu0 0.0
    %6691 = vmatprep.subr.mxu0 0.0
    %6692 = vmatpush2.msra.mxu0 0.0
    %6693 = vmatprep.subr.mxu0 0.0
    %6694 = vmatpush2.msra.mxu0 0.0
    %6695 = vmatprep.subr.mxu0 0.0
    %6696 = vmatpush2.msra.mxu0 0.0
    %6697 = vmatprep.subr.mxu0 0.0
    %6698 = vmatpush2.msra.mxu0 0.0
    %6699 = vmatprep.subr.mxu0 0.0
    %6700 = vmatpush2.msra.mxu0 0.0
    %6701 = vmatprep.subr.mxu0 0.0
    %6702 = vmatpush2.msra.mxu0 0.0
    %6703 = vmatprep.subr.mxu0 0.0
    %6704 = vmatpush2.msra.mxu0 0.0
    %6705 = vmatprep.subr.mxu0 0.0
    %6706 = vmatpush2.msra.mxu0 0.0
    %6707 = vmatprep.mubr.f32.mxu0 0.0
    %6708 = vmatmul.mubr.f32.gmra.mxu0 %v6638
    %v6709 = vpop.f32.mrf.mxu0
    %v6710 = vadd.f32 0.0, %v6709
    %v6711 = vpop.f32.mrf.mxu0
    %v6712 = vadd.f32 0.0, %v6711
    %6713 = vdwg.mxu0
    %6714 = vmatprep.subr.mxu0 %v6468
    %6715 = vmatpush1.msra.mxu0 %v6467
    %6716 = vmatprep.subr.mxu0 %v6464
    %6717 = vmatpush1.msra.mxu0 %v6463
    %6718 = vmatprep.subr.mxu0 %v6460
    %6719 = vmatpush1.msra.mxu0 %v6459
    %6720 = vmatprep.subr.mxu0 %v6456
    %6721 = vmatpush1.msra.mxu0 %v6455
    %6722 = vmatprep.subr.mxu0 %v6452
    %6723 = vmatpush1.msra.mxu0 %v6451
    %6724 = vmatprep.subr.mxu0 %v6448
    %6725 = vmatpush1.msra.mxu0 %v6447
    %6726 = vmatprep.subr.mxu0 %v6444
    %6727 = vmatpush1.msra.mxu0 %v6443
    %6728 = vmatprep.subr.mxu0 %v6440
    %6729 = vmatpush1.msra.mxu0 %v6439
    %6730 = vmatprep.subr.mxu0 %v6436
    %6731 = vmatpush1.msra.mxu0 %v6435
    %6732 = vmatprep.subr.mxu0 %v6432
    %6733 = vmatpush1.msra.mxu0 %v6431
    %6734 = vmatprep.subr.mxu0 %v6428
    %6735 = vmatpush1.msra.mxu0 %v6427
    %6736 = vmatprep.subr.mxu0 %v6424
    %6737 = vmatpush1.msra.mxu0 %v6423
    %6738 = vmatprep.subr.mxu0 %v6420
    %6739 = vmatpush1.msra.mxu0 %v6419
    %6740 = vmatprep.subr.mxu0 %v6416
    %6741 = vmatpush1.msra.mxu0 %v6415
    %6742 = vmatprep.subr.mxu0 %v6412
    %6743 = vmatpush1.msra.mxu0 %v6411
    %6744 = vmatprep.subr.mxu0 %v6408
    %6745 = vmatpush1.msra.mxu0 %v6407
    %6746 = vmatprep.subr.mxu0 0.0
    %6747 = vmatpush2.msra.mxu0 0.0
    %6748 = vmatprep.subr.mxu0 0.0
    %6749 = vmatpush2.msra.mxu0 0.0
    %6750 = vmatprep.subr.mxu0 0.0
    %6751 = vmatpush2.msra.mxu0 0.0
    %6752 = vmatprep.subr.mxu0 0.0
    %6753 = vmatpush2.msra.mxu0 0.0
    %6754 = vmatprep.subr.mxu0 0.0
    %6755 = vmatpush2.msra.mxu0 0.0
    %6756 = vmatprep.subr.mxu0 0.0
    %6757 = vmatpush2.msra.mxu0 0.0
    %6758 = vmatprep.subr.mxu0 0.0
    %6759 = vmatpush2.msra.mxu0 0.0
    %6760 = vmatprep.subr.mxu0 0.0
    %6761 = vmatpush2.msra.mxu0 0.0
    %6762 = vmatprep.subr.mxu0 0.0
    %6763 = vmatpush2.msra.mxu0 0.0
    %6764 = vmatprep.subr.mxu0 0.0
    %6765 = vmatpush2.msra.mxu0 0.0
    %6766 = vmatprep.subr.mxu0 0.0
    %6767 = vmatpush2.msra.mxu0 0.0
    %6768 = vmatprep.subr.mxu0 0.0
    %6769 = vmatpush2.msra.mxu0 0.0
    %6770 = vmatprep.subr.mxu0 0.0
    %6771 = vmatpush2.msra.mxu0 0.0
    %6772 = vmatprep.subr.mxu0 0.0
    %6773 = vmatpush2.msra.mxu0 0.0
    %6774 = vmatprep.subr.mxu0 0.0
    %6775 = vmatpush2.msra.mxu0 0.0
    %6776 = vmatprep.subr.mxu0 0.0
    %6777 = vmatpush2.msra.mxu0 0.0
    %6778 = vmatprep.mubr.f32.mxu0 0.0
    %6779 = vmatmul.mubr.f32.gmra.mxu0 %v6638
    %v6780 = vpop.f32.mrf.mxu0
    %v6781 = vadd.f32 0.0, %v6780
    %v6782 = vpop.f32.mrf.mxu0
    %v6783 = vadd.f32 0.0, %v6782
    %6784 = vdwg.mxu0
    %v6785 = vadd.f32 %v6639, %v6710
    %v6786 = vadd.f32 %v6640, %v6712
    %v6787 = vadd.f32 %v6641, %v6781
    %v6788 = vadd.f32 %v6642, %v6783
    %v6789 = vxor.u32 %v6785, 2147483648
    %v6790 = vmul.f32 %v6789, 1.442695
    %v6791 = vpow.pop %v6790
    %v6792 = vadd.f32 %v6791, 1.0
    %v6793 = vrcp.pop %v6792
    %v6794 = vmul.f32 1.0, %v6793
    %v6795 = vxor.u32 %v6786, 2147483648
    %v6796 = vmul.f32 %v6795, 1.442695
    %v6797 = vpow.pop %v6796
    %v6798 = vadd.f32 %v6797, 1.0
    %v6799 = vrcp.pop %v6798
    %v6800 = vmul.f32 1.0, %v6799
    %v6801 = vtanh.pop %v6787
    %v6802 = vxor.u32 %v6788, 2147483648
    %v6803 = vmul.f32 %v6802, 1.442695
    %v6804 = vpow.pop %v6803
    %v6805 = vadd.f32 %v6804, 1.0
    %v6806 = vrcp.pop %v6805
    %v6807 = vmul.f32 1.0, %v6806
    %v6808 = vmul.f32 %v6800, %v6636
    %v6809 = vmul.f32 %v6794, %v6801
    %v6810 = vadd.f32 %v6808, %v6809
    %v6811 = vtanh.pop %v6810
    %v6812 = vmul.f32 %v6807, %v6811
    %v6813 = vld [vmem:[#allocation4 + $0x40] sm:$0xff]
    %v6814 = vld [vmem:[#allocation4 + $0x48] sm:$0xff]
    %v6815 = vld [vmem:[#allocation4 + $0x50] sm:$0xff]
    %v6816 = vld [vmem:[#allocation4 + $0x58] sm:$0xff]
    %6817 = vmatprep.subr.mxu0 %v6466
    %6818 = vmatpush1.msra.mxu0 %v6465
    %6819 = vmatprep.subr.mxu0 %v6462
    %6820 = vmatpush1.msra.mxu0 %v6461
    %6821 = vmatprep.subr.mxu0 %v6458
    %6822 = vmatpush1.msra.mxu0 %v6457
    %6823 = vmatprep.subr.mxu0 %v6454
    %6824 = vmatpush1.msra.mxu0 %v6453
    %6825 = vmatprep.subr.mxu0 %v6450
    %6826 = vmatpush1.msra.mxu0 %v6449
    %6827 = vmatprep.subr.mxu0 %v6446
    %6828 = vmatpush1.msra.mxu0 %v6445
    %6829 = vmatprep.subr.mxu0 %v6442
    %6830 = vmatpush1.msra.mxu0 %v6441
    %6831 = vmatprep.subr.mxu0 %v6438
    %6832 = vmatpush1.msra.mxu0 %v6437
    %6833 = vmatprep.subr.mxu0 %v6434
    %6834 = vmatpush1.msra.mxu0 %v6433
    %6835 = vmatprep.subr.mxu0 %v6430
    %6836 = vmatpush1.msra.mxu0 %v6429
    %6837 = vmatprep.subr.mxu0 %v6426
    %6838 = vmatpush1.msra.mxu0 %v6425
    %6839 = vmatprep.subr.mxu0 %v6422
    %6840 = vmatpush1.msra.mxu0 %v6421
    %6841 = vmatprep.subr.mxu0 %v6418
    %6842 = vmatpush1.msra.mxu0 %v6417
    %6843 = vmatprep.subr.mxu0 %v6414
    %6844 = vmatpush1.msra.mxu0 %v6413
    %6845 = vmatprep.subr.mxu0 %v6410
    %6846 = vmatpush1.msra.mxu0 %v6409
    %6847 = vmatprep.subr.mxu0 %v6406
    %6848 = vmatpush1.msra.mxu0 %v6405
    %6849 = vmatprep.subr.mxu0 0.0
    %6850 = vmatpush2.msra.mxu0 0.0
    %6851 = vmatprep.subr.mxu0 0.0
    %6852 = vmatpush2.msra.mxu0 0.0
    %6853 = vmatprep.subr.mxu0 0.0
    %6854 = vmatpush2.msra.mxu0 0.0
    %6855 = vmatprep.subr.mxu0 0.0
    %6856 = vmatpush2.msra.mxu0 0.0
    %6857 = vmatprep.subr.mxu0 0.0
    %6858 = vmatpush2.msra.mxu0 0.0
    %6859 = vmatprep.subr.mxu0 0.0
    %6860 = vmatpush2.msra.mxu0 0.0
    %6861 = vmatprep.subr.mxu0 0.0
    %6862 = vmatpush2.msra.mxu0 0.0
    %6863 = vmatprep.subr.mxu0 0.0
    %6864 = vmatpush2.msra.mxu0 0.0
    %6865 = vmatprep.subr.mxu0 0.0
    %6866 = vmatpush2.msra.mxu0 0.0
    %6867 = vmatprep.subr.mxu0 0.0
    %6868 = vmatpush2.msra.mxu0 0.0
    %6869 = vmatprep.subr.mxu0 0.0
    %6870 = vmatpush2.msra.mxu0 0.0
    %6871 = vmatprep.subr.mxu0 0.0
    %6872 = vmatpush2.msra.mxu0 0.0
    %6873 = vmatprep.subr.mxu0 0.0
    %6874 = vmatpush2.msra.mxu0 0.0
    %6875 = vmatprep.subr.mxu0 0.0
    %6876 = vmatpush2.msra.mxu0 0.0
    %6877 = vmatprep.subr.mxu0 0.0
    %6878 = vmatpush2.msra.mxu0 0.0
    %6879 = vmatprep.subr.mxu0 0.0
    %6880 = vmatpush2.msra.mxu0 0.0
    %6881 = vmatprep.mubr.f32.mxu0 0.0
    %6882 = vmatmul.mubr.f32.gmra.mxu0 %v6812
    %v6883 = vpop.f32.mrf.mxu0
    %v6884 = vadd.f32 0.0, %v6883
    %v6885 = vpop.f32.mrf.mxu0
    %v6886 = vadd.f32 0.0, %v6885
    %6887 = vdwg.mxu0
    %6888 = vmatprep.subr.mxu0 %v6468
    %6889 = vmatpush1.msra.mxu0 %v6467
    %6890 = vmatprep.subr.mxu0 %v6464
    %6891 = vmatpush1.msra.mxu0 %v6463
    %6892 = vmatprep.subr.mxu0 %v6460
    %6893 = vmatpush1.msra.mxu0 %v6459
    %6894 = vmatprep.subr.mxu0 %v6456
    %6895 = vmatpush1.msra.mxu0 %v6455
    %6896 = vmatprep.subr.mxu0 %v6452
    %6897 = vmatpush1.msra.mxu0 %v6451
    %6898 = vmatprep.subr.mxu0 %v6448
    %6899 = vmatpush1.msra.mxu0 %v6447
    %6900 = vmatprep.subr.mxu0 %v6444
    %6901 = vmatpush1.msra.mxu0 %v6443
    %6902 = vmatprep.subr.mxu0 %v6440
    %6903 = vmatpush1.msra.mxu0 %v6439
    %6904 = vmatprep.subr.mxu0 %v6436
    %6905 = vmatpush1.msra.mxu0 %v6435
    %6906 = vmatprep.subr.mxu0 %v6432
    %6907 = vmatpush1.msra.mxu0 %v6431
    %6908 = vmatprep.subr.mxu0 %v6428
    %6909 = vmatpush1.msra.mxu0 %v6427
    %6910 = vmatprep.subr.mxu0 %v6424
    %6911 = vmatpush1.msra.mxu0 %v6423
    %6912 = vmatprep.subr.mxu0 %v6420
    %6913 = vmatpush1.msra.mxu0 %v6419
    %6914 = vmatprep.subr.mxu0 %v6416
    %6915 = vmatpush1.msra.mxu0 %v6415
    %6916 = vmatprep.subr.mxu0 %v6412
    %6917 = vmatpush1.msra.mxu0 %v6411
    %6918 = vmatprep.subr.mxu0 %v6408
    %6919 = vmatpush1.msra.mxu0 %v6407
    %6920 = vmatprep.subr.mxu0 0.0
    %6921 = vmatpush2.msra.mxu0 0.0
    %6922 = vmatprep.subr.mxu0 0.0
    %6923 = vmatpush2.msra.mxu0 0.0
    %6924 = vmatprep.subr.mxu0 0.0
    %6925 = vmatpush2.msra.mxu0 0.0
    %6926 = vmatprep.subr.mxu0 0.0
    %6927 = vmatpush2.msra.mxu0 0.0
    %6928 = vmatprep.subr.mxu0 0.0
    %6929 = vmatpush2.msra.mxu0 0.0
    %6930 = vmatprep.subr.mxu0 0.0
    %6931 = vmatpush2.msra.mxu0 0.0
    %6932 = vmatprep.subr.mxu0 0.0
    %6933 = vmatpush2.msra.mxu0 0.0
    %6934 = vmatprep.subr.mxu0 0.0
    %6935 = vmatpush2.msra.mxu0 0.0
    %6936 = vmatprep.subr.mxu0 0.0
    %6937 = vmatpush2.msra.mxu0 0.0
    %6938 = vmatprep.subr.mxu0 0.0
    %6939 = vmatpush2.msra.mxu0 0.0
    %6940 = vmatprep.subr.mxu0 0.0
    %6941 = vmatpush2.msra.mxu0 0.0
    %6942 = vmatprep.subr.mxu0 0.0
    %6943 = vmatpush2.msra.mxu0 0.0
    %6944 = vmatprep.subr.mxu0 0.0
    %6945 = vmatpush2.msra.mxu0 0.0
    %6946 = vmatprep.subr.mxu0 0.0
    %6947 = vmatpush2.msra.mxu0 0.0
    %6948 = vmatprep.subr.mxu0 0.0
    %6949 = vmatpush2.msra.mxu0 0.0
    %6950 = vmatprep.subr.mxu0 0.0
    %6951 = vmatpush2.msra.mxu0 0.0
    %6952 = vmatprep.mubr.f32.mxu0 0.0
    %6953 = vmatmul.mubr.f32.gmra.mxu0 %v6812
    %v6954 = vpop.f32.mrf.mxu0
    %v6955 = vadd.f32 0.0, %v6954
    %v6956 = vpop.f32.mrf.mxu0
    %v6957 = vadd.f32 0.0, %v6956
    %6958 = vdwg.mxu0
    %v6959 = vadd.f32 %v6813, %v6884
    %v6960 = vadd.f32 %v6814, %v6886
    %v6961 = vadd.f32 %v6815, %v6955
    %v6962 = vadd.f32 %v6816, %v6957
    %v6963 = vxor.u32 %v6959, 2147483648
    %v6964 = vmul.f32 %v6963, 1.442695
    %v6965 = vpow.pop %v6964
    %v6966 = vadd.f32 %v6965, 1.0
    %v6967 = vrcp.pop %v6966
    %v6968 = vmul.f32 1.0, %v6967
    %v6969 = vxor.u32 %v6960, 2147483648
    %v6970 = vmul.f32 %v6969, 1.442695
    %v6971 = vpow.pop %v6970
    %v6972 = vadd.f32 %v6971, 1.0
    %v6973 = vrcp.pop %v6972
    %v6974 = vmul.f32 1.0, %v6973
    %v6975 = vtanh.pop %v6961
    %v6976 = vxor.u32 %v6962, 2147483648
    %v6977 = vmul.f32 %v6976, 1.442695
    %v6978 = vpow.pop %v6977
    %v6979 = vadd.f32 %v6978, 1.0
    %v6980 = vrcp.pop %v6979
    %v6981 = vmul.f32 1.0, %v6980
    %v6982 = vmul.f32 %v6974, %v6810
    %v6983 = vmul.f32 %v6968, %v6975
    %v6984 = vadd.f32 %v6982, %v6983
    %v6985 = vtanh.pop %v6984
    %v6986 = vmul.f32 %v6981, %v6985
    %v6987 = vld [vmem:[#allocation4 + $0x60] sm:$0xff]
    %v6988 = vld [vmem:[#allocation4 + $0x68] sm:$0xff]
    %v6989 = vld [vmem:[#allocation4 + $0x70] sm:$0xff]
    %v6990 = vld [vmem:[#allocation4 + $0x78] sm:$0xff]
    %6991 = vmatprep.subr.mxu0 %v6466
    %6992 = vmatpush1.msra.mxu0 %v6465
    %6993 = vmatprep.subr.mxu0 %v6462
    %6994 = vmatpush1.msra.mxu0 %v6461
    %6995 = vmatprep.subr.mxu0 %v6458
    %6996 = vmatpush1.msra.mxu0 %v6457
    %6997 = vmatprep.subr.mxu0 %v6454
    %6998 = vmatpush1.msra.mxu0 %v6453
    %6999 = vmatprep.subr.mxu0 %v6450
    %7000 = vmatpush1.msra.mxu0 %v6449
    %7001 = vmatprep.subr.mxu0 %v6446
    %7002 = vmatpush1.msra.mxu0 %v6445
    %7003 = vmatprep.subr.mxu0 %v6442
    %7004 = vmatpush1.msra.mxu0 %v6441
    %7005 = vmatprep.subr.mxu0 %v6438
    %7006 = vmatpush1.msra.mxu0 %v6437
    %7007 = vmatprep.subr.mxu0 %v6434
    %7008 = vmatpush1.msra.mxu0 %v6433
    %7009 = vmatprep.subr.mxu0 %v6430
    %7010 = vmatpush1.msra.mxu0 %v6429
    %7011 = vmatprep.subr.mxu0 %v6426
    %7012 = vmatpush1.msra.mxu0 %v6425
    %7013 = vmatprep.subr.mxu0 %v6422
    %7014 = vmatpush1.msra.mxu0 %v6421
    %7015 = vmatprep.subr.mxu0 %v6418
    %7016 = vmatpush1.msra.mxu0 %v6417
    %7017 = vmatprep.subr.mxu0 %v6414
    %7018 = vmatpush1.msra.mxu0 %v6413
    %7019 = vmatprep.subr.mxu0 %v6410
    %7020 = vmatpush1.msra.mxu0 %v6409
    %7021 = vmatprep.subr.mxu0 %v6406
    %7022 = vmatpush1.msra.mxu0 %v6405
    %7023 = vmatprep.subr.mxu0 0.0
    %7024 = vmatpush2.msra.mxu0 0.0
    %7025 = vmatprep.subr.mxu0 0.0
    %7026 = vmatpush2.msra.mxu0 0.0
    %7027 = vmatprep.subr.mxu0 0.0
    %7028 = vmatpush2.msra.mxu0 0.0
    %7029 = vmatprep.subr.mxu0 0.0
    %7030 = vmatpush2.msra.mxu0 0.0
    %7031 = vmatprep.subr.mxu0 0.0
    %7032 = vmatpush2.msra.mxu0 0.0
    %7033 = vmatprep.subr.mxu0 0.0
    %7034 = vmatpush2.msra.mxu0 0.0
    %7035 = vmatprep.subr.mxu0 0.0
    %7036 = vmatpush2.msra.mxu0 0.0
    %7037 = vmatprep.subr.mxu0 0.0
    %7038 = vmatpush2.msra.mxu0 0.0
    %7039 = vmatprep.subr.mxu0 0.0
    %7040 = vmatpush2.msra.mxu0 0.0
    %7041 = vmatprep.subr.mxu0 0.0
    %7042 = vmatpush2.msra.mxu0 0.0
    %7043 = vmatprep.subr.mxu0 0.0
    %7044 = vmatpush2.msra.mxu0 0.0
    %7045 = vmatprep.subr.mxu0 0.0
    %7046 = vmatpush2.msra.mxu0 0.0
    %7047 = vmatprep.subr.mxu0 0.0
    %7048 = vmatpush2.msra.mxu0 0.0
    %7049 = vmatprep.subr.mxu0 0.0
    %7050 = vmatpush2.msra.mxu0 0.0
    %7051 = vmatprep.subr.mxu0 0.0
    %7052 = vmatpush2.msra.mxu0 0.0
    %7053 = vmatprep.subr.mxu0 0.0
    %7054 = vmatpush2.msra.mxu0 0.0
    %7055 = vmatprep.mubr.f32.mxu0 0.0
    %7056 = vmatmul.mubr.f32.gmra.mxu0 %v6986
    %v7057 = vpop.f32.mrf.mxu0
    %v7058 = vadd.f32 0.0, %v7057
    %v7059 = vpop.f32.mrf.mxu0
    %v7060 = vadd.f32 0.0, %v7059
    %7061 = vdwg.mxu0
    %7062 = vmatprep.subr.mxu0 %v6468
    %7063 = vmatpush1.msra.mxu0 %v6467
    %7064 = vmatprep.subr.mxu0 %v6464
    %7065 = vmatpush1.msra.mxu0 %v6463
    %7066 = vmatprep.subr.mxu0 %v6460
    %7067 = vmatpush1.msra.mxu0 %v6459
    %7068 = vmatprep.subr.mxu0 %v6456
    %7069 = vmatpush1.msra.mxu0 %v6455
    %7070 = vmatprep.subr.mxu0 %v6452
    %7071 = vmatpush1.msra.mxu0 %v6451
    %7072 = vmatprep.subr.mxu0 %v6448
    %7073 = vmatpush1.msra.mxu0 %v6447
    %7074 = vmatprep.subr.mxu0 %v6444
    %7075 = vmatpush1.msra.mxu0 %v6443
    %7076 = vmatprep.subr.mxu0 %v6440
    %7077 = vmatpush1.msra.mxu0 %v6439
    %7078 = vmatprep.subr.mxu0 %v6436
    %7079 = vmatpush1.msra.mxu0 %v6435
    %7080 = vmatprep.subr.mxu0 %v6432
    %7081 = vmatpush1.msra.mxu0 %v6431
    %7082 = vmatprep.subr.mxu0 %v6428
    %7083 = vmatpush1.msra.mxu0 %v6427
    %7084 = vmatprep.subr.mxu0 %v6424
    %7085 = vmatpush1.msra.mxu0 %v6423
    %7086 = vmatprep.subr.mxu0 %v6420
    %7087 = vmatpush1.msra.mxu0 %v6419
    %7088 = vmatprep.subr.mxu0 %v6416
    %7089 = vmatpush1.msra.mxu0 %v6415
    %7090 = vmatprep.subr.mxu0 %v6412
    %7091 = vmatpush1.msra.mxu0 %v6411
    %7092 = vmatprep.subr.mxu0 %v6408
    %7093 = vmatpush1.msra.mxu0 %v6407
    %7094 = vmatprep.subr.mxu0 0.0
    %7095 = vmatpush2.msra.mxu0 0.0
    %7096 = vmatprep.subr.mxu0 0.0
    %7097 = vmatpush2.msra.mxu0 0.0
    %7098 = vmatprep.subr.mxu0 0.0
    %7099 = vmatpush2.msra.mxu0 0.0
    %7100 = vmatprep.subr.mxu0 0.0
    %7101 = vmatpush2.msra.mxu0 0.0
    %7102 = vmatprep.subr.mxu0 0.0
    %7103 = vmatpush2.msra.mxu0 0.0
    %7104 = vmatprep.subr.mxu0 0.0
    %7105 = vmatpush2.msra.mxu0 0.0
    %7106 = vmatprep.subr.mxu0 0.0
    %7107 = vmatpush2.msra.mxu0 0.0
    %7108 = vmatprep.subr.mxu0 0.0
    %7109 = vmatpush2.msra.mxu0 0.0
    %7110 = vmatprep.subr.mxu0 0.0
    %7111 = vmatpush2.msra.mxu0 0.0
    %7112 = vmatprep.subr.mxu0 0.0
    %7113 = vmatpush2.msra.mxu0 0.0
    %7114 = vmatprep.subr.mxu0 0.0
    %7115 = vmatpush2.msra.mxu0 0.0
    %7116 = vmatprep.subr.mxu0 0.0
    %7117 = vmatpush2.msra.mxu0 0.0
    %7118 = vmatprep.subr.mxu0 0.0
    %7119 = vmatpush2.msra.mxu0 0.0
    %7120 = vmatprep.subr.mxu0 0.0
    %7121 = vmatpush2.msra.mxu0 0.0
    %7122 = vmatprep.subr.mxu0 0.0
    %7123 = vmatpush2.msra.mxu0 0.0
    %7124 = vmatprep.subr.mxu0 0.0
    %7125 = vmatpush2.msra.mxu0 0.0
    %7126 = vmatprep.mubr.f32.mxu0 0.0
    %7127 = vmatmul.mubr.f32.gmra.mxu0 %v6986
    %v7128 = vpop.f32.mrf.mxu0
    %v7129 = vadd.f32 0.0, %v7128
    %v7130 = vpop.f32.mrf.mxu0
    %v7131 = vadd.f32 0.0, %v7130
    %7132 = vdwg.mxu0
    %v7133 = vadd.f32 %v6987, %v7058
    %v7134 = vadd.f32 %v6988, %v7060
    %v7135 = vadd.f32 %v6989, %v7129
    %v7136 = vadd.f32 %v6990, %v7131
    %v7137 = vxor.u32 %v7133, 2147483648
    %v7138 = vmul.f32 %v7137, 1.442695
    %v7139 = vpow.pop %v7138
    %v7140 = vadd.f32 %v7139, 1.0
    %v7141 = vrcp.pop %v7140
    %v7142 = vmul.f32 1.0, %v7141
    %v7143 = vxor.u32 %v7134, 2147483648
    %v7144 = vmul.f32 %v7143, 1.442695
    %v7145 = vpow.pop %v7144
    %v7146 = vadd.f32 %v7145, 1.0
    %v7147 = vrcp.pop %v7146
    %v7148 = vmul.f32 1.0, %v7147
    %v7149 = vtanh.pop %v7135
    %v7150 = vxor.u32 %v7136, 2147483648
    %v7151 = vmul.f32 %v7150, 1.442695
    %v7152 = vpow.pop %v7151
    %v7153 = vadd.f32 %v7152, 1.0
    %v7154 = vrcp.pop %v7153
    %v7155 = vmul.f32 1.0, %v7154
    %v7156 = vmul.f32 %v7148, %v6984
    %v7157 = vmul.f32 %v7142, %v7149
    %v7158 = vadd.f32 %v7156, %v7157
    %v7159 = vtanh.pop %v7158
    %v7160 = vmul.f32 %v7155, %v7159
    %v7161 = vld [vmem:[#allocation4 + $0x80] sm:$0xff]
    %v7162 = vld [vmem:[#allocation4 + $0x88] sm:$0xff]
    %v7163 = vld [vmem:[#allocation4 + $0x90] sm:$0xff]
    %v7164 = vld [vmem:[#allocation4 + $0x98] sm:$0xff]
    %7165 = vmatprep.subr.mxu0 %v6466
    %7166 = vmatpush1.msra.mxu0 %v6465
    %7167 = vmatprep.subr.mxu0 %v6462
    %7168 = vmatpush1.msra.mxu0 %v6461
    %7169 = vmatprep.subr.mxu0 %v6458
    %7170 = vmatpush1.msra.mxu0 %v6457
    %7171 = vmatprep.subr.mxu0 %v6454
    %7172 = vmatpush1.msra.mxu0 %v6453
    %7173 = vmatprep.subr.mxu0 %v6450
    %7174 = vmatpush1.msra.mxu0 %v6449
    %7175 = vmatprep.subr.mxu0 %v6446
    %7176 = vmatpush1.msra.mxu0 %v6445
    %7177 = vmatprep.subr.mxu0 %v6442
    %7178 = vmatpush1.msra.mxu0 %v6441
    %7179 = vmatprep.subr.mxu0 %v6438
    %7180 = vmatpush1.msra.mxu0 %v6437
    %7181 = vmatprep.subr.mxu0 %v6434
    %7182 = vmatpush1.msra.mxu0 %v6433
    %7183 = vmatprep.subr.mxu0 %v6430
    %7184 = vmatpush1.msra.mxu0 %v6429
    %7185 = vmatprep.subr.mxu0 %v6426
    %7186 = vmatpush1.msra.mxu0 %v6425
    %7187 = vmatprep.subr.mxu0 %v6422
    %7188 = vmatpush1.msra.mxu0 %v6421
    %7189 = vmatprep.subr.mxu0 %v6418
    %7190 = vmatpush1.msra.mxu0 %v6417
    %7191 = vmatprep.subr.mxu0 %v6414
    %7192 = vmatpush1.msra.mxu0 %v6413
    %7193 = vmatprep.subr.mxu0 %v6410
    %7194 = vmatpush1.msra.mxu0 %v6409
    %7195 = vmatprep.subr.mxu0 %v6406
    %7196 = vmatpush1.msra.mxu0 %v6405
    %7197 = vmatprep.subr.mxu0 0.0
    %7198 = vmatpush2.msra.mxu0 0.0
    %7199 = vmatprep.subr.mxu0 0.0
    %7200 = vmatpush2.msra.mxu0 0.0
    %7201 = vmatprep.subr.mxu0 0.0
    %7202 = vmatpush2.msra.mxu0 0.0
    %7203 = vmatprep.subr.mxu0 0.0
    %7204 = vmatpush2.msra.mxu0 0.0
    %7205 = vmatprep.subr.mxu0 0.0
    %7206 = vmatpush2.msra.mxu0 0.0
    %7207 = vmatprep.subr.mxu0 0.0
    %7208 = vmatpush2.msra.mxu0 0.0
    %7209 = vmatprep.subr.mxu0 0.0
    %7210 = vmatpush2.msra.mxu0 0.0
    %7211 = vmatprep.subr.mxu0 0.0
    %7212 = vmatpush2.msra.mxu0 0.0
    %7213 = vmatprep.subr.mxu0 0.0
    %7214 = vmatpush2.msra.mxu0 0.0
    %7215 = vmatprep.subr.mxu0 0.0
    %7216 = vmatpush2.msra.mxu0 0.0
    %7217 = vmatprep.subr.mxu0 0.0
    %7218 = vmatpush2.msra.mxu0 0.0
    %7219 = vmatprep.subr.mxu0 0.0
    %7220 = vmatpush2.msra.mxu0 0.0
    %7221 = vmatprep.subr.mxu0 0.0
    %7222 = vmatpush2.msra.mxu0 0.0
    %7223 = vmatprep.subr.mxu0 0.0
    %7224 = vmatpush2.msra.mxu0 0.0
    %7225 = vmatprep.subr.mxu0 0.0
    %7226 = vmatpush2.msra.mxu0 0.0
    %7227 = vmatprep.subr.mxu0 0.0
    %7228 = vmatpush2.msra.mxu0 0.0
    %7229 = vmatprep.mubr.f32.mxu0 0.0
    %7230 = vmatmul.mubr.f32.gmra.mxu0 %v7160
    %v7231 = vpop.f32.mrf.mxu0
    %v7232 = vadd.f32 0.0, %v7231
    %v7233 = vpop.f32.mrf.mxu0
    %v7234 = vadd.f32 0.0, %v7233
    %7235 = vdwg.mxu0
    %7236 = vmatprep.subr.mxu0 %v6468
    %7237 = vmatpush1.msra.mxu0 %v6467
    %7238 = vmatprep.subr.mxu0 %v6464
    %7239 = vmatpush1.msra.mxu0 %v6463
    %7240 = vmatprep.subr.mxu0 %v6460
    %7241 = vmatpush1.msra.mxu0 %v6459
    %7242 = vmatprep.subr.mxu0 %v6456
    %7243 = vmatpush1.msra.mxu0 %v6455
    %7244 = vmatprep.subr.mxu0 %v6452
    %7245 = vmatpush1.msra.mxu0 %v6451
    %7246 = vmatprep.subr.mxu0 %v6448
    %7247 = vmatpush1.msra.mxu0 %v6447
    %7248 = vmatprep.subr.mxu0 %v6444
    %7249 = vmatpush1.msra.mxu0 %v6443
    %7250 = vmatprep.subr.mxu0 %v6440
    %7251 = vmatpush1.msra.mxu0 %v6439
    %7252 = vmatprep.subr.mxu0 %v6436
    %7253 = vmatpush1.msra.mxu0 %v6435
    %7254 = vmatprep.subr.mxu0 %v6432
    %7255 = vmatpush1.msra.mxu0 %v6431
    %7256 = vmatprep.subr.mxu0 %v6428
    %7257 = vmatpush1.msra.mxu0 %v6427
    %7258 = vmatprep.subr.mxu0 %v6424
    %7259 = vmatpush1.msra.mxu0 %v6423
    %7260 = vmatprep.subr.mxu0 %v6420
    %7261 = vmatpush1.msra.mxu0 %v6419
    %7262 = vmatprep.subr.mxu0 %v6416
    %7263 = vmatpush1.msra.mxu0 %v6415
    %7264 = vmatprep.subr.mxu0 %v6412
    %7265 = vmatpush1.msra.mxu0 %v6411
    %7266 = vmatprep.subr.mxu0 %v6408
    %7267 = vmatpush1.msra.mxu0 %v6407
    %7268 = vmatprep.subr.mxu0 0.0
    %7269 = vmatpush2.msra.mxu0 0.0
    %7270 = vmatprep.subr.mxu0 0.0
    %7271 = vmatpush2.msra.mxu0 0.0
    %7272 = vmatprep.subr.mxu0 0.0
    %7273 = vmatpush2.msra.mxu0 0.0
    %7274 = vmatprep.subr.mxu0 0.0
    %7275 = vmatpush2.msra.mxu0 0.0
    %7276 = vmatprep.subr.mxu0 0.0
    %7277 = vmatpush2.msra.mxu0 0.0
    %7278 = vmatprep.subr.mxu0 0.0
    %7279 = vmatpush2.msra.mxu0 0.0
    %7280 = vmatprep.subr.mxu0 0.0
    %7281 = vmatpush2.msra.mxu0 0.0
    %7282 = vmatprep.subr.mxu0 0.0
    %7283 = vmatpush2.msra.mxu0 0.0
    %7284 = vmatprep.subr.mxu0 0.0
    %7285 = vmatpush2.msra.mxu0 0.0
    %7286 = vmatprep.subr.mxu0 0.0
    %7287 = vmatpush2.msra.mxu0 0.0
    %7288 = vmatprep.subr.mxu0 0.0
    %7289 = vmatpush2.msra.mxu0 0.0
    %7290 = vmatprep.subr.mxu0 0.0
    %7291 = vmatpush2.msra.mxu0 0.0
    %7292 = vmatprep.subr.mxu0 0.0
    %7293 = vmatpush2.msra.mxu0 0.0
    %7294 = vmatprep.subr.mxu0 0.0
    %7295 = vmatpush2.msra.mxu0 0.0
    %7296 = vmatprep.subr.mxu0 0.0
    %7297 = vmatpush2.msra.mxu0 0.0
    %7298 = vmatprep.subr.mxu0 0.0
    %7299 = vmatpush2.msra.mxu0 0.0
    %7300 = vmatprep.mubr.f32.mxu0 0.0
    %7301 = vmatmul.mubr.f32.gmra.mxu0 %v7160
    %v7302 = vpop.f32.mrf.mxu0
    %v7303 = vadd.f32 0.0, %v7302
    %v7304 = vpop.f32.mrf.mxu0
    %v7305 = vadd.f32 0.0, %v7304
    %7306 = vdwg.mxu0
    %v7307 = vadd.f32 %v7161, %v7232
    %v7308 = vadd.f32 %v7162, %v7234
    %v7309 = vadd.f32 %v7163, %v7303
    %v7310 = vadd.f32 %v7164, %v7305
    %v7311 = vxor.u32 %v7307, 2147483648
    %v7312 = vmul.f32 %v7311, 1.442695
    %v7313 = vpow.pop %v7312
    %v7314 = vadd.f32 %v7313, 1.0
    %v7315 = vrcp.pop %v7314
    %v7316 = vmul.f32 1.0, %v7315
    %v7317 = vxor.u32 %v7308, 2147483648
    %v7318 = vmul.f32 %v7317, 1.442695
    %v7319 = vpow.pop %v7318
    %v7320 = vadd.f32 %v7319, 1.0
    %v7321 = vrcp.pop %v7320
    %v7322 = vmul.f32 1.0, %v7321
    %v7323 = vtanh.pop %v7309
    %v7324 = vxor.u32 %v7310, 2147483648
    %v7325 = vmul.f32 %v7324, 1.442695
    %v7326 = vpow.pop %v7325
    %v7327 = vadd.f32 %v7326, 1.0
    %v7328 = vrcp.pop %v7327
    %v7329 = vmul.f32 1.0, %v7328
    %v7330 = vmul.f32 %v7322, %v7158
    %v7331 = vmul.f32 %v7316, %v7323
    %v7332 = vadd.f32 %v7330, %v7331
    %v7333 = vtanh.pop %v7332
    %v7334 = vmul.f32 %v7329, %v7333
    %v7335 = vld [vmem:[#allocation13] sm:$0xff]
    %v7336 = vld [vmem:[#allocation13 + $0x8] sm:$0xff]
    %v7337 = vld [vmem:[#allocation13 + $0x10] sm:$0xff]
    %v7338 = vld [vmem:[#allocation13 + $0x18] sm:$0xff]
    %v7339 = vld [vmem:[#allocation13 + $0x20] sm:$0xff]
    %v7340 = vld [vmem:[#allocation13 + $0x28] sm:$0xff]
    %v7341 = vld [vmem:[#allocation13 + $0x30] sm:$0xff]
    %v7342 = vld [vmem:[#allocation13 + $0x38] sm:$0xff]
    %v7343 = vld [vmem:[#allocation13 + $0x40] sm:$0xff]
    %v7344 = vld [vmem:[#allocation13 + $0x48] sm:$0xff]
    %v7345 = vld [vmem:[#allocation13 + $0x50] sm:$0xff]
    %v7346 = vld [vmem:[#allocation13 + $0x58] sm:$0xff]
    %v7347 = vld [vmem:[#allocation13 + $0x60] sm:$0xff]
    %v7348 = vld [vmem:[#allocation13 + $0x68] sm:$0xff]
    %v7349 = vld [vmem:[#allocation13 + $0x70] sm:$0xff]
    %v7350 = vld [vmem:[#allocation13 + $0x78] sm:$0xff]
    %v7351 = vld [vmem:[#allocation14] sm:$0x1]
    %v7353 = vlaneseq
    %v7354 = vshrl.u32 %v7353, 7
    %v7355 = vsub.s32 0, %v7354
    %v7356 = vrot.slane %v7351, %v7355
    %7358 = vmatprep.subr.mxu0 0.0
    %7359 = vmatpush1.msra.mxu0 %v7350
    %7360 = vmatprep.subr.mxu0 0.0
    %7361 = vmatpush1.msra.mxu0 %v7349
    %7362 = vmatprep.subr.mxu0 0.0
    %7363 = vmatpush1.msra.mxu0 %v7348
    %7364 = vmatprep.subr.mxu0 0.0
    %7365 = vmatpush1.msra.mxu0 %v7347
    %7366 = vmatprep.subr.mxu0 0.0
    %7367 = vmatpush1.msra.mxu0 %v7346
    %7368 = vmatprep.subr.mxu0 0.0
    %7369 = vmatpush1.msra.mxu0 %v7345
    %7370 = vmatprep.subr.mxu0 0.0
    %7371 = vmatpush1.msra.mxu0 %v7344
    %7372 = vmatprep.subr.mxu0 0.0
    %7373 = vmatpush1.msra.mxu0 %v7343
    %7374 = vmatprep.subr.mxu0 0.0
    %7375 = vmatpush1.msra.mxu0 %v7342
    %7376 = vmatprep.subr.mxu0 0.0
    %7377 = vmatpush1.msra.mxu0 %v7341
    %7378 = vmatprep.subr.mxu0 0.0
    %7379 = vmatpush1.msra.mxu0 %v7340
    %7380 = vmatprep.subr.mxu0 0.0
    %7381 = vmatpush1.msra.mxu0 %v7339
    %7382 = vmatprep.subr.mxu0 0.0
    %7383 = vmatpush1.msra.mxu0 %v7338
    %7384 = vmatprep.subr.mxu0 0.0
    %7385 = vmatpush1.msra.mxu0 %v7337
    %7386 = vmatprep.subr.mxu0 0.0
    %7387 = vmatpush1.msra.mxu0 %v7336
    %7388 = vmatprep.subr.mxu0 0.0
    %7389 = vmatpush1.msra.mxu0 %v7335
    %7390 = vmatprep.subr.mxu0 0.0
    %7391 = vmatpush2.msra.mxu0 0.0
    %7392 = vmatprep.subr.mxu0 0.0
    %7393 = vmatpush2.msra.mxu0 0.0
    %7394 = vmatprep.subr.mxu0 0.0
    %7395 = vmatpush2.msra.mxu0 0.0
    %7396 = vmatprep.subr.mxu0 0.0
    %7397 = vmatpush2.msra.mxu0 0.0
    %7398 = vmatprep.subr.mxu0 0.0
    %7399 = vmatpush2.msra.mxu0 0.0
    %7400 = vmatprep.subr.mxu0 0.0
    %7401 = vmatpush2.msra.mxu0 0.0
    %7402 = vmatprep.subr.mxu0 0.0
    %7403 = vmatpush2.msra.mxu0 0.0
    %7404 = vmatprep.subr.mxu0 0.0
    %7405 = vmatpush2.msra.mxu0 0.0
    %7406 = vmatprep.subr.mxu0 0.0
    %7407 = vmatpush2.msra.mxu0 0.0
    %7408 = vmatprep.subr.mxu0 0.0
    %7409 = vmatpush2.msra.mxu0 0.0
    %7410 = vmatprep.subr.mxu0 0.0
    %7411 = vmatpush2.msra.mxu0 0.0
    %7412 = vmatprep.subr.mxu0 0.0
    %7413 = vmatpush2.msra.mxu0 0.0
    %7414 = vmatprep.subr.mxu0 0.0
    %7415 = vmatpush2.msra.mxu0 0.0
    %7416 = vmatprep.subr.mxu0 0.0
    %7417 = vmatpush2.msra.mxu0 0.0
    %7418 = vmatprep.subr.mxu0 0.0
    %7419 = vmatpush2.msra.mxu0 0.0
    %7420 = vmatprep.subr.mxu0 0.0
    %7421 = vmatpush2.msra.mxu0 0.0
    %7422 = vmatprep.mubr.f32.mxu0 0.0
    %7423 = vmatmul.mubr.f32.gmra.mxu0 %v7334
    %v7424 = vpop.f32.mrf.mxu0
    %v7425 = vadd.f32 %v7356, %v7424
    %v7426 = vpop.f32.mrf.mxu0
    %7427 = vdwg.mxu0
    %v7428 = vxor.u32 %v7425, 2147483648
    %v7429 = vmul.f32 %v7428, 1.442695
    %v7430 = vpow.pop %v7429
    %v7431 = vadd.f32 %v7430, 1.0
    %v7432 = vrcp.pop %v7431
    %v7433 = vmul.f32 1.0, %v7432
    %7434 = vst [vmem:[#allocation16] sm:$0xff] %v7433
    // Predicated region
    $region50: #{tpu_custom_call.1} parent=1 // pred_check
      _
    $region51: #{tpu_custom_call.1} parent=1 // pred_check_branch
      %7436 = sbr.rel (0) target = $region53
    $region52: #{tpu_custom_call.1} parent=1 // pred_region
      %s7438 = ssub.s32 128, 128
      %7439 = vsyncadd [#allocation7], %s7438
      %s7441 = sshll.u32 [#allocation16], 4
      %s7442 = int_to_ptr.vmem [resolvable:$true] %s7441
      %7444 = dma.vmem_to_hbm [thread:$0]  %s7442, 128, %s6, [#allocation7]
    $region53: #{tpu_custom_call.1} parent=1 // pred_fallthru
      _
    // Predicated region
    $region54: #{tpu_custom_call.1} parent=1 // pred_check
      _
    $region55: #{tpu_custom_call.1} parent=1 // pred_check_branch
      %7446 = sbr.rel (0) target = $region57
    $region56: #{tpu_custom_call.1} parent=1 // pred_region
      %7447 = dma.done [#allocation7], 128
    $region57: #{tpu_custom_call.1} parent=1 // pred_fallthru
      _
    %7448 = vsyncpa [#allocation6], 1
    %7449 = vsyncpa [#allocation9], 1
    %7450 = vsyncpa [#allocation12], 1
    %7451 = vsyncpa [#allocation15], 1
    %7452 = vsyncpa [#allocation7], 1

</llo_original>
